<compile_context>
chip_gen: v7x
topology: tpu7x:2x2x1
jax: 0.10.0
libtpu: 0.0.40
codegen_flags: <defaults>
</compile_context>

<pallas_src>
import functools

import numpy as np
import jax
import jax.numpy as jnp
from jax.experimental import pallas as pl
from jax.experimental.pallas import tpu as pltpu


# ============================================================================
# Canvas bookkeeping (flattened, zero-bordered spatial maps)
# ============================================================================
def _canvas_meta(h, w):
    hp, wp = h + 2, w + 2
    p = hp * wp
    cs = wp + 1                 # first core row (flattened)
    cl = p - 2 * (wp + 1)       # core span length (includes wrap columns)
    return hp, wp, p, cs, cl


def _offs2(wp):                 # 2x2 taps (gy, gx) in row-major order
    return [-wp - 1, -wp, -1, 0]


def _offs3(wp):                 # 3x3 taps (dy, dx) in row-major order
    return [(dy - 1) * wp + (dx - 1) for dy in range(3) for dx in range(3)]


def _space_to_depth(x):         # (B,H,W,C) -> (B,H/2,W/2,4C), wrapper-side
    B, H, W, C = x.shape
    x = x.reshape(B, H // 2, 2, W // 2, 2, C).transpose(0, 1, 3, 2, 4, 5)
    return x.reshape(B, H // 2, W // 2, 4 * C)


def _to_canvas(x):              # (B,H,W,C) -> (B,(H+2)*(W+2),C), wrapper-side
    B, H, W, C = x.shape
    xp = jnp.pad(x, ((0, 0), (1, 1), (1, 1), (0, 0)))
    return xp.reshape(B, (H + 2) * (W + 2), C)


# ============================================================================
# Host-built spatial constants (selection matrices, masks)
# ============================================================================
def _spatial_constants(h0, w0, c_half):
    """Constants for feat0 resolution (h0,w0) and its /2 resolution."""
    _, wp0, _, cs0, cl0 = _canvas_meta(h0, w0)
    h1, w1 = h0 // 2, w0 // 2
    _, wp1, _, cs1, cl1 = _canvas_meta(h1, w1)

    def span_mask(cs, cl, wp, w):
        col = (np.arange(cl) + cs) % wp
        return ((col >= 1) & (col <= w)).astype(np.float32).reshape(cl, 1)

    mc0 = span_mask(cs0, cl0, wp0, w0)
    mc1 = span_mask(cs1, cl1, wp1, w1)

    # space_to_depth gather: row p*h1*w1 + y*w1 + x picks feat0 core pixel
    # (2y+py, 2x+px), parity p = py*2 + px, from the (h0,w0) core span.
    sel = np.zeros((4 * h1 * w1, cl0), np.float32)
    for py in range(2):
        for px in range(2):
            pidx = py * 2 + px
            for y in range(h1):
                for x in range(w1):
                    src = (2 * y + 1 + py) * wp0 + (2 * x + 1 + px) - cs0
                    sel[pidx * h1 * w1 + y * w1 + x, src] = 1.0

    # depth_to_space gather: (h0,w0) core-span row s pulls its parent (h1,w1)
    # core-span row; wrap columns stay all-zero.  gmask picks the sub-pixel
    # channel group (ky*2+kx)*c_half per destination row.
    seld = np.zeros((cl0, cl1), np.float32)
    gmask = np.zeros((cl0, 4 * c_half), np.float32)
    for s in range(cl0):
        r, c = divmod(cs0 + s, wp0)
        if 1 <= c <= w0:
            Y0, X0 = r - 1, c - 1
            y, ky = divmod(Y0, 2)
            x, kx = divmod(X0, 2)
            seld[s, (y + 1) * wp1 + (x + 1) - cs1] = 1.0
            g = ky * 2 + kx
            gmask[s, g * c_half:(g + 1) * c_half] = 1.0

    return dict(sel=jnp.asarray(sel, jnp.bfloat16),
                seld=jnp.asarray(seld, jnp.bfloat16),
                gmask=jnp.asarray(gmask, jnp.float32),
                mc0=jnp.asarray(mc0), mc1=jnp.asarray(mc1))


# ============================================================================
# The single fused kernel: expand + backbone + neck + head per batch element
# ============================================================================
def _fused_kernel(z0_ref,
                  w1_ref, s1_ref, b1_ref, w2_ref, s2_ref, b2_ref,
                  w3_ref, s3_ref, b3_ref, sel_ref,
                  w4_ref, s4_ref, b4_ref, w5_ref, s5_ref, b5_ref,
                  w6_ref, s6_ref, b6_ref, seld_ref, gm_ref,
                  wn0_ref, sn0_ref, bn0_ref, w8_ref, s8_ref, b8_ref,
                  w9_ref, b9_ref, mc0_ref, mc1_ref,
                  o_ref,
                  y1_scr, y2_scr, f0_scr, z1_scr, z4_scr, cat_scr,
                  *, h0, w0):
    f32, bf = jnp.float32, jnp.bfloat16
    _, wp0, _, cs0, cl0 = _canvas_meta(h0, w0)
    h1, w1 = h0 // 2, w0 // 2
    _, wp1, _, cs1, cl1 = _canvas_meta(h1, w1)
    o2_0, o3_0 = _offs2(wp0), _offs3(wp0)
    o2_1, o3_1 = _offs2(wp1), _offs3(wp1)

    # Zero the canvases whose borders are read by 2x2 / 3x3 taps (cheap, VMEM).
    for scr in (y1_scr, y2_scr, z1_scr, z4_scr, cat_scr):
        scr[...] = jnp.zeros_like(scr)

    mc0 = mc0_ref[...]
    mc1 = mc1_ref[...]

    def taps(scr, offs, cs, cl):
        return [scr[pl.ds(cs + o, cl), :] for o in offs]

    def conv(tap_slabs, w_ref, s_ref, b_ref, mask=None, relu=True):
        a = tap_slabs[0] if len(tap_slabs) == 1 else jnp.concatenate(
            tap_slabs, axis=-1)
        y = jnp.dot(a, w_ref[...], preferred_element_type=f32)
        y = y * s_ref[...] + b_ref[...]
        if relu:
            y = jnp.maximum(y, 0.0)
        if mask is not None:
            y = y * mask
        return y

    # L1: expand 1x1 conv (block-diag over the 4 s2d parities), 32 -> 128.
    y = conv([z0_ref[pl.ds(cs0, cl0), :]], w1_ref, s1_ref, b1_ref, mask=mc0)
    y1_scr[pl.ds(cs0, cl0), :] = y.astype(bf)

    # L2: backbone stage0 conv1 (3x3 stride2 == 2x2 taps on s2d), K=512 -> 32.
    y = conv(taps(y1_scr, o2_0, cs0, cl0), w2_ref, s2_ref, b2_ref, mask=mc0)
    y2_scr[pl.ds(cs0, cl0), :] = y.astype(bf)

    # L3: backbone stage0 conv2 (3x3), K=288 -> 32  (= feat0).
    y = conv(taps(y2_scr, o3_0, cs0, cl0), w3_ref, s3_ref, b3_ref)
    f0_scr[pl.ds(cs0, cl0), :] = y.astype(bf)

    # In-kernel space_to_depth: feat0 (h0,w0,32) -> z1 canvas (h1,w1,128)
    # via a one-hot gather matmul + lane concat of the 4 parities.
    g = jnp.dot(sel_ref[...], f0_scr[pl.ds(cs0, cl0), :],
                preferred_element_type=f32)
    n1 = h1 * w1
    packed = jnp.concatenate(
        [g[i * n1:(i + 1) * n1] for i in range(4)], axis=-1).astype(bf)
    for y_ in range(h1):
        z1_scr[pl.ds((y_ + 1) * wp1 + 1, w1), :] = \
            packed[y_ * w1:(y_ + 1) * w1, :]

    # L4: backbone stage1 conv1 (3x3 stride2 == 2x2 taps on s2d), K=512 -> 64.
    y = conv(taps(z1_scr, o2_1, cs1, cl1), w4_ref, s4_ref, b4_ref, mask=mc1)
    z4_scr[pl.ds(cs1, cl1), :] = y.astype(bf)

    # L5: backbone stage1 conv2 (3x3), K=576 -> 64 (kept as a register value).
    z5 = conv(taps(z4_scr, o3_1, cs1, cl1), w5_ref, s5_ref, b5_ref)

    # L6: neck deconv(2x2, s2) == 1x1 conv to the 4 sub-pixel groups, 64->128.
    npk = conv([z5.astype(bf)], w6_ref, s6_ref, b6_ref).astype(bf)

    # In-kernel depth_to_space: gather parent pixels onto the (h0,w0) span,
    # then pick each destination row's sub-pixel channel group.
    gu = jnp.dot(seld_ref[...], npk, preferred_element_type=f32)
    gu = gu * gm_ref[...]
    c_half = gu.shape[-1] // 4
    up1 = (gu[:, 0:c_half] + gu[:, c_half:2 * c_half]
           + gu[:, 2 * c_half:3 * c_half] + gu[:, 3 * c_half:4 * c_half])

    # L7: neck lateral 1x1 on feat0 (core span only), 32 -> 32, interleaved
    # with up1 into one 64-channel canvas (pre-interleave for the shared 3x3).
    u0 = conv([f0_scr[pl.ds(cs0, cl0), :]], wn0_ref, sn0_ref, bn0_ref, mask=mc0)
    cat_scr[pl.ds(cs0, cl0), :] = jnp.concatenate([u0, up1], axis=-1).astype(bf)

    # L8: head shared 3x3 on concat(up0, up1), K=576 -> 64.
    hs = conv(taps(cat_scr, o3_0, cs0, cl0), w8_ref, s8_ref, b8_ref)

    # L9: all six 1x1 head branches fused in one lane-dense 128-wide matmul.
    br = jnp.dot(hs.astype(bf), w9_ref[...], preferred_element_type=f32) \
        + b9_ref[...]

    # Store only the true core pixels, lane-dense (h0*w0, 128), f32, aligned.
    for y_ in range(h0):
        o_ref[pl.ds(y_ * w0, w0), :] = br[y_ * wp0:y_ * wp0 + w0, :]


# ============================================================================
# pallas_call wrapper
# ============================================================================
def _full_spec(a):
    nd = a.ndim
    return pl.BlockSpec(a.shape, lambda b, _nd=nd: (0,) * _nd)


def _fused_call(z0, wts, h0, w0):
    B, P0, Cz = z0.shape
    _, _, p0, _, cl0 = _canvas_meta(h0, w0)
    assert p0 == P0
    h1, w1 = h0 // 2, w0 // 2
    _, _, p1, _, cl1 = _canvas_meta(h1, w1)

    order = ("w1", "s1", "b1", "w2", "s2", "b2", "w3", "s3", "b3", "sel",
             "w4", "s4", "b4", "w5", "s5", "b5", "w6", "s6", "b6", "seld",
             "gmask", "wn0", "sn0", "bn0", "w8", "s8", "b8", "w9", "b9",
             "mc0", "mc1")
    consts = [wts[k] for k in order]
    operands = (z0, *consts)

    c1 = wts["w1"].shape[-1]          # 128
    cb0 = wts["w3"].shape[-1]         # 32
    cb1 = wts["w5"].shape[-1]         # 64
    c6 = wts["w6"].shape[-1]          # 128
    ccat = wts["w8"].shape[0] // 9    # 64
    cbr = wts["w9"].shape[-1]         # 128

    flops = 2 * B * (
        cl0 * Cz * c1
        + cl0 * 4 * c1 * cb0 + cl0 * 9 * cb0 * cb0
        + (4 * h1 * w1) * cl0 * cb0
        + cl1 * 4 * (4 * cb0) * cb1 + cl1 * 9 * cb1 * cb1 + cl1 * cb1 * c6
        + cl0 * cl1 * c6
        + cl0 * cb0 * cb0
        + cl0 * 9 * ccat * ccat + cl0 * ccat * cbr)
    bytes_accessed = int(
        sum(int(np.prod(a.shape)) * a.dtype.itemsize for a in operands)
        + B * h0 * w0 * cbr * 4)

    kern = functools.partial(_fused_kernel, h0=h0, w0=w0)
    return pl.pallas_call(
        kern,
        out_shape=jax.ShapeDtypeStruct((B, h0 * w0, cbr), jnp.float32),
        grid=(B,),
        in_specs=[pl.BlockSpec((None, P0, Cz), lambda b: (b, 0, 0))]
                 + [_full_spec(a) for a in consts],
        out_specs=pl.BlockSpec((None, h0 * w0, cbr), lambda b: (b, 0, 0)),
        scratch_shapes=[
            pltpu.VMEM((p0, c1), jnp.bfloat16),       # y1  (expand out, s2d)
            pltpu.VMEM((p0, cb0), jnp.bfloat16),      # y2  (stage0 conv1 out)
            pltpu.VMEM((p0, cb0), jnp.bfloat16),      # feat0
            pltpu.VMEM((p1, 4 * cb0), jnp.bfloat16),  # z1  (feat0 s2d-packed)
            pltpu.VMEM((p1, cb1), jnp.bfloat16),      # z4  (stage1 conv1 out)
            pltpu.VMEM((p0, ccat), jnp.bfloat16),     # cat (up0 | up1)
        ],
        compiler_params=pltpu.CompilerParams(
            dimension_semantics=("parallel",),
            vmem_limit_bytes=32 * 1024 * 1024),
        cost_estimate=pl.CostEstimate(
            flops=int(flops), transcendentals=0,
            bytes_accessed=bytes_accessed),
    )(*operands)


# ============================================================================
# Deterministic parameter construction (folded-BN, same structure as before)
# ============================================================================
def _conv_w(key, kh, kw, cin, cout):
    fan = kh * kw * cin
    return (jax.random.normal(key, (kh, kw, cin, cout), jnp.float32)
            / jnp.sqrt(jnp.float32(fan)))


def _bn(key, c, eps=1e-5):
    k1, k2, k3, k4 = jax.random.split(key, 4)
    gamma = 1.0 + 0.1 * jax.random.normal(k1, (c,), jnp.float32)
    beta = 0.1 * jax.random.normal(k2, (c,), jnp.float32)
    mean = 0.1 * jax.random.normal(k3, (c,), jnp.float32)
    var = jnp.abs(jax.random.normal(k4, (c,), jnp.float32)) + 0.5
    scale = gamma / jnp.sqrt(var + eps)
    bias = beta - mean * scale
    return scale, bias


def init_params(key, cfg):
    keys = iter(jax.random.split(key, 64))
    nxt = lambda: next(keys)

    in_ch = cfg["in_channels"] + cfg["expand_bev_channels"]
    mid = cfg["out_channels"]
    bb_ch = cfg["backbone_channels"]
    neck_ch = cfg["neck_channels"]
    num_cls = cfg["num_classes"]

    params = {}
    s, b = _bn(nxt(), mid)
    params["expand"] = {"w": _conv_w(nxt(), 1, 1, in_ch, mid),
                        "scale": s, "bias": b}

    backbone, prev = [], mid
    for c in bb_ch:
        stage = []
        for i in range(2):
            cin = prev if i == 0 else c
            s, b = _bn(nxt(), c)
            stage.append({"w": _conv_w(nxt(), 3, 3, cin, c),
                          "scale": s, "bias": b})
        backbone.append(stage)
        prev = c
    params["backbone"] = backbone

    s, b = _bn(nxt(), neck_ch[0])
    neck0 = {"w": _conv_w(nxt(), 1, 1, bb_ch[0], neck_ch[0]),
             "scale": s, "bias": b}
    s, b = _bn(nxt(), neck_ch[1])
    neck1 = {"w": jax.random.normal(nxt(), (bb_ch[1], 2, 2, neck_ch[1]),
                                    jnp.float32) / jnp.sqrt(float(bb_ch[1])),
             "scale": s, "bias": b}
    params["neck"] = [neck0, neck1]

    concat_ch = sum(neck_ch)
    s, b = _bn(nxt(), concat_ch)
    head = {"shared": {"w": _conv_w(nxt(), 3, 3, concat_ch, concat_ch),
                       "scale": s, "bias": b}}
    branch_dims = {"reg": 2, "height": 1, "dim": 3, "vel": 2,
                   "heatmap": num_cls, "rot": 2}
    for name, d in branch_dims.items():
        head[name] = {"w": _conv_w(nxt(), 1, 1, concat_ch, d),
                      "b": 0.01 * jax.random.normal(nxt(), (d,), jnp.float32)}
    params["head"] = head
    return params


# ============================================================================
# One-time weight repacking for the fused kernel
# ============================================================================
def _stack_3x3(w):                  # (3,3,cin,cout) -> (9*cin, cout)
    w = np.asarray(w, np.float32)
    return w.reshape(9 * w.shape[2], w.shape[3])


def _pack_stride2(w):               # (3,3,cin,cout) -> (4*4cin, cout)
    w = np.asarray(w, np.float32)
    cin, cout = w.shape[2], w.shape[3]
    mapping = {0: (0, 1), 1: (1, 0), 2: (1, 1)}     # 3x3 tap -> (2x2 tap, parity)
    out = np.zeros((2, 2, 4 * cin, cout), np.float32)
    for dy in range(3):
        gy, py = mapping[dy]
        for dx in range(3):
            gx, px = mapping[dx]
            par = py * 2 + px
            out[gy, gx, par * cin:(par + 1) * cin, :] = w[dy, dx]
    return out.reshape(4 * 4 * cin, cout)


def _block_diag4(w):                # (cin,cout) -> (4cin, 4cout)
    w = np.asarray(w, np.float32)
    cin, cout = w.shape
    out = np.zeros((4 * cin, 4 * cout), np.float32)
    for p in range(4):
        out[p * cin:(p + 1) * cin, p * cout:(p + 1) * cout] = w
    return out


def pack_params(params, cfg):
    bb, nk = cfg["backbone_channels"], cfg["neck_channels"]
    bf = jnp.bfloat16
    row = lambda v: jnp.asarray(np.asarray(v, np.float32).reshape(1, -1))

    e = params["expand"]
    s0c1, s0c2 = params["backbone"][0]
    s1c1, s1c2 = params["backbone"][1]
    n0, n1 = params["neck"]
    hd = params["head"]

    wts = dict(
        w1=jnp.asarray(_block_diag4(np.asarray(e["w"])[0, 0]), bf),
        s1=row(np.tile(np.asarray(e["scale"]), 4)),
        b1=row(np.tile(np.asarray(e["bias"]), 4)),
        w2=jnp.asarray(_pack_stride2(s0c1["w"]), bf),
        s2=row(s0c1["scale"]), b2=row(s0c1["bias"]),
        w3=jnp.asarray(_stack_3x3(s0c2["w"]), bf),
        s3=row(s0c2["scale"]), b3=row(s0c2["bias"]),
        w4=jnp.asarray(_pack_stride2(s1c1["w"]), bf),
        s4=row(s1c1["scale"]), b4=row(s1c1["bias"]),
        w5=jnp.asarray(_stack_3x3(s1c2["w"]), bf),
        s5=row(s1c2["scale"]), b5=row(s1c2["bias"]),
        w6=jnp.asarray(np.asarray(n1["w"], np.float32).reshape(bb[1], 4 * nk[1]), bf),
        s6=row(np.tile(np.asarray(n1["scale"]), 4)),
        b6=row(np.tile(np.asarray(n1["bias"]), 4)),
        wn0=jnp.asarray(np.asarray(n0["w"])[0, 0], bf),
        sn0=row(n0["scale"]), bn0=row(n0["bias"]),
        w8=jnp.asarray(_stack_3x3(hd["shared"]["w"]), bf),
        s8=row(hd["shared"]["scale"]), b8=row(hd["shared"]["bias"]),
    )

    # Fused head branches: [reg, height, dim, vel, heatmap, rot] -> 12 columns
    # lane-padded to 128 (zero weights / bias), sliced in the wrapper.
    order = ["reg", "height", "dim", "vel", "heatmap", "rot"]
    w9 = np.concatenate([np.asarray(hd[nm]["w"], np.float32)[0, 0]
                         for nm in order], axis=1)
    b9 = np.concatenate([np.asarray(hd[nm]["b"], np.float32)
                         for nm in order], axis=0)
    pad = 128 - w9.shape[1]
    w9 = np.pad(w9, ((0, 0), (0, pad)))
    b9 = np.pad(b9, ((0, pad),))
    wts["w9"] = jnp.asarray(w9, bf)
    wts["b9"] = jnp.asarray(b9.reshape(1, -1))
    return wts


# ============================================================================
# Backbone.forward
# ============================================================================
def make_forward(params, cfg):
    wts = pack_params(params, cfg)
    ncls = cfg["num_classes"]
    c_half = cfg["neck_channels"][1]

    @jax.jit
    def forward(x_nchw):
        B, _, H, W = x_nchw.shape
        h0, w0 = H // 2, W // 2

        # One tiny wrapper-side repack of the raw input: NHWC + s2d + canvas.
        x = jnp.transpose(x_nchw, (0, 2, 3, 1)).astype(jnp.bfloat16)
        z0 = _to_canvas(_space_to_depth(x))                # (B, (h0+2)(w0+2), 32)

        full = dict(wts)
        full.update(_spatial_constants(h0, w0, c_half))
        head = _fused_call(z0, full, h0, w0)               # (B, h0*w0, 128) f32
        head = head.reshape(B, h0, w0, head.shape[-1])

        bbox_preds = head[..., 0:8]                        # reg|height|dim|vel
        scores = head[..., 8:8 + ncls]                     # heatmap (raw logits)
        dir_scores = head[..., 8 + ncls:8 + ncls + 2]      # rot
        to_nchw = lambda t: jnp.transpose(t, (0, 3, 1, 2))
        return to_nchw(scores), to_nchw(bbox_preds), to_nchw(dir_scores)

    return forward


# ----------------------------------------------------------------------------
if __name__ == "__main__":
    cfg = {
        "in_channels": 4,
        "expand_bev_channels": 4,
        "out_channels": 32,
        "backbone_channels": [32, 64],
        "neck_channels": [32, 32],
        "num_classes": 2,
    }
    params = init_params(jax.random.PRNGKey(42), cfg)
    forward = make_forward(params, cfg)

    key = jax.random.PRNGKey(0)
    B, C, H, W = 2, cfg["in_channels"] + cfg["expand_bev_channels"], 16, 16
    x = jax.random.normal(key, (B, C, H, W), jnp.float32)

    scores, bbox_preds, dir_scores = forward(x)
    jax.block_until_ready((scores, bbox_preds, dir_scores))

    assert scores.shape == (B, cfg["num_classes"], H // 2, W // 2)
    assert bbox_preds.shape == (B, 2 + 1 + 3 + 2, H // 2, W // 2)
    assert dir_scores.shape == (B, 2, H // 2, W // 2)
    print("KERNEL_OK")
</pallas_src>

<mosaic_0001>
module attributes {stable_mosaic.version = 11 : i64} {
  func.func @_fused_kernel(%arg0: i32, %arg1: memref<1x100x32xbf16, #tpu.memory_space<vmem>>, %arg2: memref<32x128xbf16, #tpu.memory_space<vmem>>, %arg3: memref<1x128xf32, #tpu.memory_space<vmem>>, %arg4: memref<1x128xf32, #tpu.memory_space<vmem>>, %arg5: memref<512x32xbf16, #tpu.memory_space<vmem>>, %arg6: memref<1x32xf32, #tpu.memory_space<vmem>>, %arg7: memref<1x32xf32, #tpu.memory_space<vmem>>, %arg8: memref<288x32xbf16, #tpu.memory_space<vmem>>, %arg9: memref<1x32xf32, #tpu.memory_space<vmem>>, %arg10: memref<1x32xf32, #tpu.memory_space<vmem>>, %arg11: memref<64x78xbf16, #tpu.memory_space<vmem>>, %arg12: memref<512x64xbf16, #tpu.memory_space<vmem>>, %arg13: memref<1x64xf32, #tpu.memory_space<vmem>>, %arg14: memref<1x64xf32, #tpu.memory_space<vmem>>, %arg15: memref<576x64xbf16, #tpu.memory_space<vmem>>, %arg16: memref<1x64xf32, #tpu.memory_space<vmem>>, %arg17: memref<1x64xf32, #tpu.memory_space<vmem>>, %arg18: memref<64x128xbf16, #tpu.memory_space<vmem>>, %arg19: memref<1x128xf32, #tpu.memory_space<vmem>>, %arg20: memref<1x128xf32, #tpu.memory_space<vmem>>, %arg21: memref<78x22xbf16, #tpu.memory_space<vmem>>, %arg22: memref<78x128xf32, #tpu.memory_space<vmem>>, %arg23: memref<32x32xbf16, #tpu.memory_space<vmem>>, %arg24: memref<1x32xf32, #tpu.memory_space<vmem>>, %arg25: memref<1x32xf32, #tpu.memory_space<vmem>>, %arg26: memref<576x64xbf16, #tpu.memory_space<vmem>>, %arg27: memref<1x64xf32, #tpu.memory_space<vmem>>, %arg28: memref<1x64xf32, #tpu.memory_space<vmem>>, %arg29: memref<64x128xbf16, #tpu.memory_space<vmem>>, %arg30: memref<1x128xf32, #tpu.memory_space<vmem>>, %arg31: memref<78x1xf32, #tpu.memory_space<vmem>>, %arg32: memref<22x1xf32, #tpu.memory_space<vmem>>, %arg33: memref<1x64x128xf32, #tpu.memory_space<vmem>>, %arg34: memref<100x128xbf16, #tpu.memory_space<vmem>>, %arg35: memref<100x32xbf16, #tpu.memory_space<vmem>>, %arg36: memref<100x32xbf16, #tpu.memory_space<vmem>>, %arg37: memref<36x128xbf16, #tpu.memory_space<vmem>>, %arg38: memref<36x64xbf16, #tpu.memory_space<vmem>>, %arg39: memref<100x64xbf16, #tpu.memory_space<vmem>>) attributes {dimension_semantics = [#tpu.dimension_semantics<parallel>], iteration_bounds = array<i64: 2>, scalar_prefetch = 0 : i64, scratch_operands = 6 : i64, tpu.core_type = #tpu.core_type<tc>, window_params = [{transform_indices = @transform_0, window_bounds = array<i64: 1, 100, 32>}, {pipeline_mode = #tpu.pipeline_mode<synchronous>, transform_indices = @transform_1, window_bounds = array<i64: 32, 128>}, {pipeline_mode = #tpu.pipeline_mode<synchronous>, transform_indices = @transform_2, window_bounds = array<i64: 1, 128>}, {pipeline_mode = #tpu.pipeline_mode<synchronous>, transform_indices = @transform_3, window_bounds = array<i64: 1, 128>}, {pipeline_mode = #tpu.pipeline_mode<synchronous>, transform_indices = @transform_4, window_bounds = array<i64: 512, 32>}, {pipeline_mode = #tpu.pipeline_mode<synchronous>, transform_indices = @transform_5, window_bounds = array<i64: 1, 32>}, {pipeline_mode = #tpu.pipeline_mode<synchronous>, transform_indices = @transform_6, window_bounds = array<i64: 1, 32>}, {pipeline_mode = #tpu.pipeline_mode<synchronous>, transform_indices = @transform_7, window_bounds = array<i64: 288, 32>}, {pipeline_mode = #tpu.pipeline_mode<synchronous>, transform_indices = @transform_8, window_bounds = array<i64: 1, 32>}, {pipeline_mode = #tpu.pipeline_mode<synchronous>, transform_indices = @transform_9, window_bounds = array<i64: 1, 32>}, {pipeline_mode = #tpu.pipeline_mode<synchronous>, transform_indices = @transform_10, window_bounds = array<i64: 64, 78>}, {pipeline_mode = #tpu.pipeline_mode<synchronous>, transform_indices = @transform_11, window_bounds = array<i64: 512, 64>}, {pipeline_mode = #tpu.pipeline_mode<synchronous>, transform_indices = @transform_12, window_bounds = array<i64: 1, 64>}, {pipeline_mode = #tpu.pipeline_mode<synchronous>, transform_indices = @transform_13, window_bounds = array<i64: 1, 64>}, {pipeline_mode = #tpu.pipeline_mode<synchronous>, transform_indices = @transform_14, window_bounds = array<i64: 576, 64>}, {pipeline_mode = #tpu.pipeline_mode<synchronous>, transform_indices = @transform_15, window_bounds = array<i64: 1, 64>}, {pipeline_mode = #tpu.pipeline_mode<synchronous>, transform_indices = @transform_16, window_bounds = array<i64: 1, 64>}, {pipeline_mode = #tpu.pipeline_mode<synchronous>, transform_indices = @transform_17, window_bounds = array<i64: 64, 128>}, {pipeline_mode = #tpu.pipeline_mode<synchronous>, transform_indices = @transform_18, window_bounds = array<i64: 1, 128>}, {pipeline_mode = #tpu.pipeline_mode<synchronous>, transform_indices = @transform_19, window_bounds = array<i64: 1, 128>}, {pipeline_mode = #tpu.pipeline_mode<synchronous>, transform_indices = @transform_20, window_bounds = array<i64: 78, 22>}, {pipeline_mode = #tpu.pipeline_mode<synchronous>, transform_indices = @transform_21, window_bounds = array<i64: 78, 128>}, {pipeline_mode = #tpu.pipeline_mode<synchronous>, transform_indices = @transform_22, window_bounds = array<i64: 32, 32>}, {pipeline_mode = #tpu.pipeline_mode<synchronous>, transform_indices = @transform_23, window_bounds = array<i64: 1, 32>}, {pipeline_mode = #tpu.pipeline_mode<synchronous>, transform_indices = @transform_24, window_bounds = array<i64: 1, 32>}, {pipeline_mode = #tpu.pipeline_mode<synchronous>, transform_indices = @transform_25, window_bounds = array<i64: 576, 64>}, {pipeline_mode = #tpu.pipeline_mode<synchronous>, transform_indices = @transform_26, window_bounds = array<i64: 1, 64>}, {pipeline_mode = #tpu.pipeline_mode<synchronous>, transform_indices = @transform_27, window_bounds = array<i64: 1, 64>}, {pipeline_mode = #tpu.pipeline_mode<synchronous>, transform_indices = @transform_28, window_bounds = array<i64: 64, 128>}, {pipeline_mode = #tpu.pipeline_mode<synchronous>, transform_indices = @transform_29, window_bounds = array<i64: 1, 128>}, {pipeline_mode = #tpu.pipeline_mode<synchronous>, transform_indices = @transform_30, window_bounds = array<i64: 78, 1>}, {pipeline_mode = #tpu.pipeline_mode<synchronous>, transform_indices = @transform_31, window_bounds = array<i64: 22, 1>}, {transform_indices = @transform_32, window_bounds = array<i64: 1, 64, 128>}]} {
    %cst = arith.constant 0.000000e+00 : bf16
    %0 = vector.broadcast %cst : bf16 to vector<100x128xbf16>
    %c0 = arith.constant 0 : index
    %c0_0 = arith.constant 0 : index
    %1 = vector.load %arg34[%c0, %c0_0] : memref<100x128xbf16, #tpu.memory_space<vmem>>, vector<100x128xbf16>
    tpu.vector_store %arg34[%c0, %c0_0], %0 {strides = array<i32>} : memref<100x128xbf16, #tpu.memory_space<vmem>>, vector<100x128xbf16>,
    %cst_1 = arith.constant 0.000000e+00 : bf16
    %2 = vector.broadcast %cst_1 : bf16 to vector<100x32xbf16>
    %c0_2 = arith.constant 0 : index
    %c0_3 = arith.constant 0 : index
    %3 = vector.load %arg35[%c0_2, %c0_3] : memref<100x32xbf16, #tpu.memory_space<vmem>>, vector<100x32xbf16>
    tpu.vector_store %arg35[%c0_2, %c0_3], %2 {strides = array<i32>} : memref<100x32xbf16, #tpu.memory_space<vmem>>, vector<100x32xbf16>,
    %cst_4 = arith.constant 0.000000e+00 : bf16
    %4 = vector.broadcast %cst_4 : bf16 to vector<36x128xbf16>
    %c0_5 = arith.constant 0 : index
    %c0_6 = arith.constant 0 : index
    %5 = vector.load %arg37[%c0_5, %c0_6] : memref<36x128xbf16, #tpu.memory_space<vmem>>, vector<36x128xbf16>
    tpu.vector_store %arg37[%c0_5, %c0_6], %4 {strides = array<i32>} : memref<36x128xbf16, #tpu.memory_space<vmem>>, vector<36x128xbf16>,
    %cst_7 = arith.constant 0.000000e+00 : bf16
    %6 = vector.broadcast %cst_7 : bf16 to vector<36x64xbf16>
    %c0_8 = arith.constant 0 : index
    %c0_9 = arith.constant 0 : index
    %7 = vector.load %arg38[%c0_8, %c0_9] : memref<36x64xbf16, #tpu.memory_space<vmem>>, vector<36x64xbf16>
    tpu.vector_store %arg38[%c0_8, %c0_9], %6 {strides = array<i32>} : memref<36x64xbf16, #tpu.memory_space<vmem>>, vector<36x64xbf16>,
    %cst_10 = arith.constant 0.000000e+00 : bf16
    %8 = vector.broadcast %cst_10 : bf16 to vector<100x64xbf16>
    %c0_11 = arith.constant 0 : index
    %c0_12 = arith.constant 0 : index
    %9 = vector.load %arg39[%c0_11, %c0_12] : memref<100x64xbf16, #tpu.memory_space<vmem>>, vector<100x64xbf16>
    tpu.vector_store %arg39[%c0_11, %c0_12], %8 {strides = array<i32>} : memref<100x64xbf16, #tpu.memory_space<vmem>>, vector<100x64xbf16>,
    %c0_13 = arith.constant 0 : index
    %c0_14 = arith.constant 0 : index
    %10 = vector.load %arg31[%c0_13, %c0_14] : memref<78x1xf32, #tpu.memory_space<vmem>>, vector<78x1xf32>
    %c0_15 = arith.constant 0 : index
    %c0_16 = arith.constant 0 : index
    %11 = vector.load %arg32[%c0_15, %c0_16] : memref<22x1xf32, #tpu.memory_space<vmem>>, vector<22x1xf32>
    %c0_17 = arith.constant 0 : index
    %c11 = arith.constant 11 : index
    %c0_18 = arith.constant 0 : index
    %12 = vector.load %arg1[%c0_17, %c11, %c0_18] : memref<1x100x32xbf16, #tpu.memory_space<vmem>>, vector<1x78x32xbf16>
    %13 = vector.shape_cast %12 : vector<1x78x32xbf16> to vector<78x32xbf16>
    %c0_19 = arith.constant 0 : index
    %c0_20 = arith.constant 0 : index
    %14 = vector.load %arg2[%c0_19, %c0_20] : memref<32x128xbf16, #tpu.memory_space<vmem>>, vector<32x128xbf16>
    %cst_21 = arith.constant dense<0.000000e+00> : vector<78x128xf32>
    %15 = tpu.matmul %13, %14, %cst_21 {dimension_numbers = #tpu.dot_dimension_numbers<[1], [0], [0], [1], [0, 0, 1, 1], [], []>} : vector<78x32xbf16>, vector<32x128xbf16>, vector<78x128xf32> -> vector<78x128xf32>
    %c0_22 = arith.constant 0 : index
    %c0_23 = arith.constant 0 : index
    %16 = vector.load %arg3[%c0_22, %c0_23] : memref<1x128xf32, #tpu.memory_space<vmem>>, vector<1x128xf32>
    %17 = vector.broadcast %16 : vector<1x128xf32> to vector<78x128xf32>
    %18 = arith.mulf %15, %17 : vector<78x128xf32>
    %c0_24 = arith.constant 0 : index
    %c0_25 = arith.constant 0 : index
    %19 = vector.load %arg4[%c0_24, %c0_25] : memref<1x128xf32, #tpu.memory_space<vmem>>, vector<1x128xf32>
    %20 = vector.broadcast %19 : vector<1x128xf32> to vector<78x128xf32>
    %21 = arith.addf %18, %20 : vector<78x128xf32>
    %cst_26 = arith.constant 0.000000e+00 : f32
    %22 = vector.broadcast %cst_26 : f32 to vector<78x128xf32>
    %23 = arith.maximumf %21, %22 : vector<78x128xf32>
    %24 = vector.broadcast %10 : vector<78x1xf32> to vector<78x128xf32>
    %25 = arith.mulf %23, %24 : vector<78x128xf32>
    %26 = arith.truncf %25 : vector<78x128xf32> to vector<78x128xbf16>
    %c11_27 = arith.constant 11 : index
    %c0_28 = arith.constant 0 : index
    %27 = vector.load %arg34[%c11_27, %c0_28] : memref<100x128xbf16, #tpu.memory_space<vmem>>, vector<78x128xbf16>
    tpu.vector_store %arg34[%c11_27, %c0_28], %26 {strides = array<i32>} : memref<100x128xbf16, #tpu.memory_space<vmem>>, vector<78x128xbf16>,
    %c0_29 = arith.constant 0 : index
    %c0_30 = arith.constant 0 : index
    %28 = vector.load %arg34[%c0_29, %c0_30] : memref<100x128xbf16, #tpu.memory_space<vmem>>, vector<78x128xbf16>
    %c1 = arith.constant 1 : index
    %c0_31 = arith.constant 0 : index
    %29 = vector.load %arg34[%c1, %c0_31] : memref<100x128xbf16, #tpu.memory_space<vmem>>, vector<78x128xbf16>
    %c10 = arith.constant 10 : index
    %c0_32 = arith.constant 0 : index
    %30 = vector.load %arg34[%c10, %c0_32] : memref<100x128xbf16, #tpu.memory_space<vmem>>, vector<78x128xbf16>
    %c11_33 = arith.constant 11 : index
    %c0_34 = arith.constant 0 : index
    %31 = vector.load %arg34[%c11_33, %c0_34] : memref<100x128xbf16, #tpu.memory_space<vmem>>, vector<78x128xbf16>
    %32 = tpu.concatenate %28, %29, %30, %31 in 1 : vector<78x128xbf16>, vector<78x128xbf16>, vector<78x128xbf16>, vector<78x128xbf16> -> vector<78x512xbf16>
    %c0_35 = arith.constant 0 : index
    %c0_36 = arith.constant 0 : index
    %33 = vector.load %arg5[%c0_35, %c0_36] : memref<512x32xbf16, #tpu.memory_space<vmem>>, vector<512x32xbf16>
    %cst_37 = arith.constant dense<0.000000e+00> : vector<78x32xf32>
    %34 = tpu.matmul %32, %33, %cst_37 {dimension_numbers = #tpu.dot_dimension_numbers<[1], [0], [0], [1], [0, 0, 1, 1], [], []>} : vector<78x512xbf16>, vector<512x32xbf16>, vector<78x32xf32> -> vector<78x32xf32>
    %c0_38 = arith.constant 0 : index
    %c0_39 = arith.constant 0 : index
    %35 = vector.load %arg6[%c0_38, %c0_39] : memref<1x32xf32, #tpu.memory_space<vmem>>, vector<1x32xf32>
    %36 = vector.broadcast %35 : vector<1x32xf32> to vector<78x32xf32>
    %37 = arith.mulf %34, %36 : vector<78x32xf32>
    %c0_40 = arith.constant 0 : index
    %c0_41 = arith.constant 0 : index
    %38 = vector.load %arg7[%c0_40, %c0_41] : memref<1x32xf32, #tpu.memory_space<vmem>>, vector<1x32xf32>
    %39 = vector.broadcast %38 : vector<1x32xf32> to vector<78x32xf32>
    %40 = arith.addf %37, %39 : vector<78x32xf32>
    %cst_42 = arith.constant 0.000000e+00 : f32
    %41 = vector.broadcast %cst_42 : f32 to vector<78x32xf32>
    %42 = arith.maximumf %40, %41 : vector<78x32xf32>
    %43 = vector.broadcast %10 : vector<78x1xf32> to vector<78x32xf32>
    %44 = arith.mulf %42, %43 : vector<78x32xf32>
    %45 = arith.truncf %44 : vector<78x32xf32> to vector<78x32xbf16>
    %c11_43 = arith.constant 11 : index
    %c0_44 = arith.constant 0 : index
    %46 = vector.load %arg35[%c11_43, %c0_44] : memref<100x32xbf16, #tpu.memory_space<vmem>>, vector<78x32xbf16>
    tpu.vector_store %arg35[%c11_43, %c0_44], %45 {strides = array<i32>} : memref<100x32xbf16, #tpu.memory_space<vmem>>, vector<78x32xbf16>,
    %c0_45 = arith.constant 0 : index
    %c0_46 = arith.constant 0 : index
    %47 = vector.load %arg35[%c0_45, %c0_46] : memref<100x32xbf16, #tpu.memory_space<vmem>>, vector<78x32xbf16>
    %c1_47 = arith.constant 1 : index
    %c0_48 = arith.constant 0 : index
    %48 = vector.load %arg35[%c1_47, %c0_48] : memref<100x32xbf16, #tpu.memory_space<vmem>>, vector<78x32xbf16>
    %c2 = arith.constant 2 : index
    %c0_49 = arith.constant 0 : index
    %49 = vector.load %arg35[%c2, %c0_49] : memref<100x32xbf16, #tpu.memory_space<vmem>>, vector<78x32xbf16>
    %c10_50 = arith.constant 10 : index
    %c0_51 = arith.constant 0 : index
    %50 = vector.load %arg35[%c10_50, %c0_51] : memref<100x32xbf16, #tpu.memory_space<vmem>>, vector<78x32xbf16>
    %c11_52 = arith.constant 11 : index
    %c0_53 = arith.constant 0 : index
    %51 = vector.load %arg35[%c11_52, %c0_53] : memref<100x32xbf16, #tpu.memory_space<vmem>>, vector<78x32xbf16>
    %c12 = arith.constant 12 : index
    %c0_54 = arith.constant 0 : index
    %52 = vector.load %arg35[%c12, %c0_54] : memref<100x32xbf16, #tpu.memory_space<vmem>>, vector<78x32xbf16>
    %c20 = arith.constant 20 : index
    %c0_55 = arith.constant 0 : index
    %53 = vector.load %arg35[%c20, %c0_55] : memref<100x32xbf16, #tpu.memory_space<vmem>>, vector<78x32xbf16>
    %c21 = arith.constant 21 : index
    %c0_56 = arith.constant 0 : index
    %54 = vector.load %arg35[%c21, %c0_56] : memref<100x32xbf16, #tpu.memory_space<vmem>>, vector<78x32xbf16>
    %c22 = arith.constant 22 : index
    %c0_57 = arith.constant 0 : index
    %55 = vector.load %arg35[%c22, %c0_57] : memref<100x32xbf16, #tpu.memory_space<vmem>>, vector<78x32xbf16>
    %56 = tpu.concatenate %47, %48, %49, %50, %51, %52, %53, %54, %55 in 1 : vector<78x32xbf16>, vector<78x32xbf16>, vector<78x32xbf16>, vector<78x32xbf16>, vector<78x32xbf16>, vector<78x32xbf16>, vector<78x32xbf16>, vector<78x32xbf16>, vector<78x32xbf16> -> vector<78x288xbf16>
    %c0_58 = arith.constant 0 : index
    %c0_59 = arith.constant 0 : index
    %57 = vector.load %arg8[%c0_58, %c0_59] : memref<288x32xbf16, #tpu.memory_space<vmem>>, vector<288x32xbf16>
    %cst_60 = arith.constant dense<0.000000e+00> : vector<78x32xf32>
    %58 = tpu.matmul %56, %57, %cst_60 {dimension_numbers = #tpu.dot_dimension_numbers<[1], [0], [0], [1], [0, 0, 1, 1], [], []>} : vector<78x288xbf16>, vector<288x32xbf16>, vector<78x32xf32> -> vector<78x32xf32>
    %c0_61 = arith.constant 0 : index
    %c0_62 = arith.constant 0 : index
    %59 = vector.load %arg9[%c0_61, %c0_62] : memref<1x32xf32, #tpu.memory_space<vmem>>, vector<1x32xf32>
    %60 = vector.broadcast %59 : vector<1x32xf32> to vector<78x32xf32>
    %61 = arith.mulf %58, %60 : vector<78x32xf32>
    %c0_63 = arith.constant 0 : index
    %c0_64 = arith.constant 0 : index
    %62 = vector.load %arg10[%c0_63, %c0_64] : memref<1x32xf32, #tpu.memory_space<vmem>>, vector<1x32xf32>
    %63 = vector.broadcast %62 : vector<1x32xf32> to vector<78x32xf32>
    %64 = arith.addf %61, %63 : vector<78x32xf32>
    %cst_65 = arith.constant 0.000000e+00 : f32
    %65 = vector.broadcast %cst_65 : f32 to vector<78x32xf32>
    %66 = arith.maximumf %64, %65 : vector<78x32xf32>
    %67 = arith.truncf %66 : vector<78x32xf32> to vector<78x32xbf16>
    %c11_66 = arith.constant 11 : index
    %c0_67 = arith.constant 0 : index
    %68 = vector.load %arg36[%c11_66, %c0_67] : memref<100x32xbf16, #tpu.memory_space<vmem>>, vector<78x32xbf16>
    tpu.vector_store %arg36[%c11_66, %c0_67], %67 {strides = array<i32>} : memref<100x32xbf16, #tpu.memory_space<vmem>>, vector<78x32xbf16>,
    %c0_68 = arith.constant 0 : index
    %c0_69 = arith.constant 0 : index
    %69 = vector.load %arg11[%c0_68, %c0_69] : memref<64x78xbf16, #tpu.memory_space<vmem>>, vector<64x78xbf16>
    %c11_70 = arith.constant 11 : index
    %c0_71 = arith.constant 0 : index
    %70 = vector.load %arg36[%c11_70, %c0_71] : memref<100x32xbf16, #tpu.memory_space<vmem>>, vector<78x32xbf16>
    %cst_72 = arith.constant dense<0.000000e+00> : vector<64x32xf32>
    %71 = tpu.matmul %69, %70, %cst_72 {dimension_numbers = #tpu.dot_dimension_numbers<[1], [0], [0], [1], [0, 0, 1, 1], [], []>} : vector<64x78xbf16>, vector<78x32xbf16>, vector<64x32xf32> -> vector<64x32xf32>
    %72 = vector.extract_strided_slice %71 {offsets = [0, 0], sizes = [16, 32], strides = [1, 1]} : vector<64x32xf32> to vector<16x32xf32>
    %73 = vector.extract_strided_slice %71 {offsets = [16, 0], sizes = [16, 32], strides = [1, 1]} : vector<64x32xf32> to vector<16x32xf32>
    %74 = vector.extract_strided_slice %71 {offsets = [32, 0], sizes = [16, 32], strides = [1, 1]} : vector<64x32xf32> to vector<16x32xf32>
    %75 = vector.extract_strided_slice %71 {offsets = [48, 0], sizes = [16, 32], strides = [1, 1]} : vector<64x32xf32> to vector<16x32xf32>
    %76 = tpu.concatenate %72, %73, %74, %75 in 1 : vector<16x32xf32>, vector<16x32xf32>, vector<16x32xf32>, vector<16x32xf32> -> vector<16x128xf32>
    %77 = arith.truncf %76 : vector<16x128xf32> to vector<16x128xbf16>
    %78 = vector.extract_strided_slice %77 {offsets = [0, 0], sizes = [4, 128], strides = [1, 1]} : vector<16x128xbf16> to vector<4x128xbf16>
    %c7 = arith.constant 7 : index
    %c0_73 = arith.constant 0 : index
    %79 = vector.load %arg37[%c7, %c0_73] : memref<36x128xbf16, #tpu.memory_space<vmem>>, vector<4x128xbf16>
    tpu.vector_store %arg37[%c7, %c0_73], %78 {strides = array<i32>} : memref<36x128xbf16, #tpu.memory_space<vmem>>, vector<4x128xbf16>,
    %80 = vector.extract_strided_slice %77 {offsets = [4, 0], sizes = [4, 128], strides = [1, 1]} : vector<16x128xbf16> to vector<4x128xbf16>
    %c13 = arith.constant 13 : index
    %c0_74 = arith.constant 0 : index
    %81 = vector.load %arg37[%c13, %c0_74] : memref<36x128xbf16, #tpu.memory_space<vmem>>, vector<4x128xbf16>
    tpu.vector_store %arg37[%c13, %c0_74], %80 {strides = array<i32>} : memref<36x128xbf16, #tpu.memory_space<vmem>>, vector<4x128xbf16>,
    %82 = vector.extract_strided_slice %77 {offsets = [8, 0], sizes = [4, 128], strides = [1, 1]} : vector<16x128xbf16> to vector<4x128xbf16>
    %c19 = arith.constant 19 : index
    %c0_75 = arith.constant 0 : index
    %83 = vector.load %arg37[%c19, %c0_75] : memref<36x128xbf16, #tpu.memory_space<vmem>>, vector<4x128xbf16>
    tpu.vector_store %arg37[%c19, %c0_75], %82 {strides = array<i32>} : memref<36x128xbf16, #tpu.memory_space<vmem>>, vector<4x128xbf16>,
    %84 = vector.extract_strided_slice %77 {offsets = [12, 0], sizes = [4, 128], strides = [1, 1]} : vector<16x128xbf16> to vector<4x128xbf16>
    %c25 = arith.constant 25 : index
    %c0_76 = arith.constant 0 : index
    %85 = vector.load %arg37[%c25, %c0_76] : memref<36x128xbf16, #tpu.memory_space<vmem>>, vector<4x128xbf16>
    tpu.vector_store %arg37[%c25, %c0_76], %84 {strides = array<i32>} : memref<36x128xbf16, #tpu.memory_space<vmem>>, vector<4x128xbf16>,
    %c0_77 = arith.constant 0 : index
    %c0_78 = arith.constant 0 : index
    %86 = vector.load %arg37[%c0_77, %c0_78] : memref<36x128xbf16, #tpu.memory_space<vmem>>, vector<22x128xbf16>
    %c1_79 = arith.constant 1 : index
    %c0_80 = arith.constant 0 : index
    %87 = vector.load %arg37[%c1_79, %c0_80] : memref<36x128xbf16, #tpu.memory_space<vmem>>, vector<22x128xbf16>
    %c6 = arith.constant 6 : index
    %c0_81 = arith.constant 0 : index
    %88 = vector.load %arg37[%c6, %c0_81] : memref<36x128xbf16, #tpu.memory_space<vmem>>, vector<22x128xbf16>
    %c7_82 = arith.constant 7 : index
    %c0_83 = arith.constant 0 : index
    %89 = vector.load %arg37[%c7_82, %c0_83] : memref<36x128xbf16, #tpu.memory_space<vmem>>, vector<22x128xbf16>
    %90 = tpu.concatenate %86, %87, %88, %89 in 1 : vector<22x128xbf16>, vector<22x128xbf16>, vector<22x128xbf16>, vector<22x128xbf16> -> vector<22x512xbf16>
    %c0_84 = arith.constant 0 : index
    %c0_85 = arith.constant 0 : index
    %91 = vector.load %arg12[%c0_84, %c0_85] : memref<512x64xbf16, #tpu.memory_space<vmem>>, vector<512x64xbf16>
    %cst_86 = arith.constant dense<0.000000e+00> : vector<22x64xf32>
    %92 = tpu.matmul %90, %91, %cst_86 {dimension_numbers = #tpu.dot_dimension_numbers<[1], [0], [0], [1], [0, 0, 1, 1], [], []>} : vector<22x512xbf16>, vector<512x64xbf16>, vector<22x64xf32> -> vector<22x64xf32>
    %c0_87 = arith.constant 0 : index
    %c0_88 = arith.constant 0 : index
    %93 = vector.load %arg13[%c0_87, %c0_88] : memref<1x64xf32, #tpu.memory_space<vmem>>, vector<1x64xf32>
    %94 = vector.broadcast %93 : vector<1x64xf32> to vector<22x64xf32>
    %95 = arith.mulf %92, %94 : vector<22x64xf32>
    %c0_89 = arith.constant 0 : index
    %c0_90 = arith.constant 0 : index
    %96 = vector.load %arg14[%c0_89, %c0_90] : memref<1x64xf32, #tpu.memory_space<vmem>>, vector<1x64xf32>
    %97 = vector.broadcast %96 : vector<1x64xf32> to vector<22x64xf32>
    %98 = arith.addf %95, %97 : vector<22x64xf32>
    %cst_91 = arith.constant 0.000000e+00 : f32
    %99 = vector.broadcast %cst_91 : f32 to vector<22x64xf32>
    %100 = arith.maximumf %98, %99 : vector<22x64xf32>
    %101 = vector.broadcast %11 : vector<22x1xf32> to vector<22x64xf32>
    %102 = arith.mulf %100, %101 : vector<22x64xf32>
    %103 = arith.truncf %102 : vector<22x64xf32> to vector<22x64xbf16>
    %c7_92 = arith.constant 7 : index
    %c0_93 = arith.constant 0 : index
    %104 = vector.load %arg38[%c7_92, %c0_93] : memref<36x64xbf16, #tpu.memory_space<vmem>>, vector<22x64xbf16>
    tpu.vector_store %arg38[%c7_92, %c0_93], %103 {strides = array<i32>} : memref<36x64xbf16, #tpu.memory_space<vmem>>, vector<22x64xbf16>,
    %c0_94 = arith.constant 0 : index
    %c0_95 = arith.constant 0 : index
    %105 = vector.load %arg38[%c0_94, %c0_95] : memref<36x64xbf16, #tpu.memory_space<vmem>>, vector<22x64xbf16>
    %c1_96 = arith.constant 1 : index
    %c0_97 = arith.constant 0 : index
    %106 = vector.load %arg38[%c1_96, %c0_97] : memref<36x64xbf16, #tpu.memory_space<vmem>>, vector<22x64xbf16>
    %c2_98 = arith.constant 2 : index
    %c0_99 = arith.constant 0 : index
    %107 = vector.load %arg38[%c2_98, %c0_99] : memref<36x64xbf16, #tpu.memory_space<vmem>>, vector<22x64xbf16>
    %c6_100 = arith.constant 6 : index
    %c0_101 = arith.constant 0 : index
    %108 = vector.load %arg38[%c6_100, %c0_101] : memref<36x64xbf16, #tpu.memory_space<vmem>>, vector<22x64xbf16>
    %c7_102 = arith.constant 7 : index
    %c0_103 = arith.constant 0 : index
    %109 = vector.load %arg38[%c7_102, %c0_103] : memref<36x64xbf16, #tpu.memory_space<vmem>>, vector<22x64xbf16>
    %c8 = arith.constant 8 : index
    %c0_104 = arith.constant 0 : index
    %110 = vector.load %arg38[%c8, %c0_104] : memref<36x64xbf16, #tpu.memory_space<vmem>>, vector<22x64xbf16>
    %c12_105 = arith.constant 12 : index
    %c0_106 = arith.constant 0 : index
    %111 = vector.load %arg38[%c12_105, %c0_106] : memref<36x64xbf16, #tpu.memory_space<vmem>>, vector<22x64xbf16>
    %c13_107 = arith.constant 13 : index
    %c0_108 = arith.constant 0 : index
    %112 = vector.load %arg38[%c13_107, %c0_108] : memref<36x64xbf16, #tpu.memory_space<vmem>>, vector<22x64xbf16>
    %c14 = arith.constant 14 : index
    %c0_109 = arith.constant 0 : index
    %113 = vector.load %arg38[%c14, %c0_109] : memref<36x64xbf16, #tpu.memory_space<vmem>>, vector<22x64xbf16>
    %114 = tpu.concatenate %105, %106, %107, %108, %109, %110, %111, %112, %113 in 1 : vector<22x64xbf16>, vector<22x64xbf16>, vector<22x64xbf16>, vector<22x64xbf16>, vector<22x64xbf16>, vector<22x64xbf16>, vector<22x64xbf16>, vector<22x64xbf16>, vector<22x64xbf16> -> vector<22x576xbf16>
    %c0_110 = arith.constant 0 : index
    %c0_111 = arith.constant 0 : index
    %115 = vector.load %arg15[%c0_110, %c0_111] : memref<576x64xbf16, #tpu.memory_space<vmem>>, vector<576x64xbf16>
    %cst_112 = arith.constant dense<0.000000e+00> : vector<22x64xf32>
    %116 = tpu.matmul %114, %115, %cst_112 {dimension_numbers = #tpu.dot_dimension_numbers<[1], [0], [0], [1], [0, 0, 1, 1], [], []>} : vector<22x576xbf16>, vector<576x64xbf16>, vector<22x64xf32> -> vector<22x64xf32>
    %c0_113 = arith.constant 0 : index
    %c0_114 = arith.constant 0 : index
    %117 = vector.load %arg16[%c0_113, %c0_114] : memref<1x64xf32, #tpu.memory_space<vmem>>, vector<1x64xf32>
    %118 = vector.broadcast %117 : vector<1x64xf32> to vector<22x64xf32>
    %119 = arith.mulf %116, %118 : vector<22x64xf32>
    %c0_115 = arith.constant 0 : index
    %c0_116 = arith.constant 0 : index
    %120 = vector.load %arg17[%c0_115, %c0_116] : memref<1x64xf32, #tpu.memory_space<vmem>>, vector<1x64xf32>
    %121 = vector.broadcast %120 : vector<1x64xf32> to vector<22x64xf32>
    %122 = arith.addf %119, %121 : vector<22x64xf32>
    %cst_117 = arith.constant 0.000000e+00 : f32
    %123 = vector.broadcast %cst_117 : f32 to vector<22x64xf32>
    %124 = arith.maximumf %122, %123 : vector<22x64xf32>
    %125 = arith.truncf %124 : vector<22x64xf32> to vector<22x64xbf16>
    %c0_118 = arith.constant 0 : index
    %c0_119 = arith.constant 0 : index
    %126 = vector.load %arg18[%c0_118, %c0_119] : memref<64x128xbf16, #tpu.memory_space<vmem>>, vector<64x128xbf16>
    %cst_120 = arith.constant dense<0.000000e+00> : vector<22x128xf32>
    %127 = tpu.matmul %125, %126, %cst_120 {dimension_numbers = #tpu.dot_dimension_numbers<[1], [0], [0], [1], [0, 0, 1, 1], [], []>} : vector<22x64xbf16>, vector<64x128xbf16>, vector<22x128xf32> -> vector<22x128xf32>
    %c0_121 = arith.constant 0 : index
    %c0_122 = arith.constant 0 : index
    %128 = vector.load %arg19[%c0_121, %c0_122] : memref<1x128xf32, #tpu.memory_space<vmem>>, vector<1x128xf32>
    %129 = vector.broadcast %128 : vector<1x128xf32> to vector<22x128xf32>
    %130 = arith.mulf %127, %129 : vector<22x128xf32>
    %c0_123 = arith.constant 0 : index
    %c0_124 = arith.constant 0 : index
    %131 = vector.load %arg20[%c0_123, %c0_124] : memref<1x128xf32, #tpu.memory_space<vmem>>, vector<1x128xf32>
    %132 = vector.broadcast %131 : vector<1x128xf32> to vector<22x128xf32>
    %133 = arith.addf %130, %132 : vector<22x128xf32>
    %cst_125 = arith.constant 0.000000e+00 : f32
    %134 = vector.broadcast %cst_125 : f32 to vector<22x128xf32>
    %135 = arith.maximumf %133, %134 : vector<22x128xf32>
    %136 = arith.truncf %135 : vector<22x128xf32> to vector<22x128xbf16>
    %c0_126 = arith.constant 0 : index
    %c0_127 = arith.constant 0 : index
    %137 = vector.load %arg21[%c0_126, %c0_127] : memref<78x22xbf16, #tpu.memory_space<vmem>>, vector<78x22xbf16>
    %cst_128 = arith.constant dense<0.000000e+00> : vector<78x128xf32>
    %138 = tpu.matmul %137, %136, %cst_128 {dimension_numbers = #tpu.dot_dimension_numbers<[1], [0], [0], [1], [0, 0, 1, 1], [], []>} : vector<78x22xbf16>, vector<22x128xbf16>, vector<78x128xf32> -> vector<78x128xf32>
    %c0_129 = arith.constant 0 : index
    %c0_130 = arith.constant 0 : index
    %139 = vector.load %arg22[%c0_129, %c0_130] : memref<78x128xf32, #tpu.memory_space<vmem>>, vector<78x128xf32>
    %140 = arith.mulf %138, %139 : vector<78x128xf32>
    %141 = vector.extract_strided_slice %140 {offsets = [0, 0], sizes = [78, 32], strides = [1, 1]} : vector<78x128xf32> to vector<78x32xf32>
    %142 = vector.extract_strided_slice %140 {offsets = [0, 32], sizes = [78, 32], strides = [1, 1]} : vector<78x128xf32> to vector<78x32xf32>
    %143 = arith.addf %141, %142 : vector<78x32xf32>
    %144 = vector.extract_strided_slice %140 {offsets = [0, 64], sizes = [78, 32], strides = [1, 1]} : vector<78x128xf32> to vector<78x32xf32>
    %145 = arith.addf %143, %144 : vector<78x32xf32>
    %146 = vector.extract_strided_slice %140 {offsets = [0, 96], sizes = [78, 32], strides = [1, 1]} : vector<78x128xf32> to vector<78x32xf32>
    %147 = arith.addf %145, %146 : vector<78x32xf32>
    %c11_131 = arith.constant 11 : index
    %c0_132 = arith.constant 0 : index
    %148 = vector.load %arg36[%c11_131, %c0_132] : memref<100x32xbf16, #tpu.memory_space<vmem>>, vector<78x32xbf16>
    %c0_133 = arith.constant 0 : index
    %c0_134 = arith.constant 0 : index
    %149 = vector.load %arg23[%c0_133, %c0_134] : memref<32x32xbf16, #tpu.memory_space<vmem>>, vector<32x32xbf16>
    %cst_135 = arith.constant dense<0.000000e+00> : vector<78x32xf32>
    %150 = tpu.matmul %148, %149, %cst_135 {dimension_numbers = #tpu.dot_dimension_numbers<[1], [0], [0], [1], [0, 0, 1, 1], [], []>} : vector<78x32xbf16>, vector<32x32xbf16>, vector<78x32xf32> -> vector<78x32xf32>
    %c0_136 = arith.constant 0 : index
    %c0_137 = arith.constant 0 : index
    %151 = vector.load %arg24[%c0_136, %c0_137] : memref<1x32xf32, #tpu.memory_space<vmem>>, vector<1x32xf32>
    %152 = vector.broadcast %151 : vector<1x32xf32> to vector<78x32xf32>
    %153 = arith.mulf %150, %152 : vector<78x32xf32>
    %c0_138 = arith.constant 0 : index
    %c0_139 = arith.constant 0 : index
    %154 = vector.load %arg25[%c0_138, %c0_139] : memref<1x32xf32, #tpu.memory_space<vmem>>, vector<1x32xf32>
    %155 = vector.broadcast %154 : vector<1x32xf32> to vector<78x32xf32>
    %156 = arith.addf %153, %155 : vector<78x32xf32>
    %cst_140 = arith.constant 0.000000e+00 : f32
    %157 = vector.broadcast %cst_140 : f32 to vector<78x32xf32>
    %158 = arith.maximumf %156, %157 : vector<78x32xf32>
    %159 = vector.broadcast %10 : vector<78x1xf32> to vector<78x32xf32>
    %160 = arith.mulf %158, %159 : vector<78x32xf32>
    %161 = tpu.concatenate %160, %147 in 1 : vector<78x32xf32>, vector<78x32xf32> -> vector<78x64xf32>
    %162 = arith.truncf %161 : vector<78x64xf32> to vector<78x64xbf16>
    %c11_141 = arith.constant 11 : index
    %c0_142 = arith.constant 0 : index
    %163 = vector.load %arg39[%c11_141, %c0_142] : memref<100x64xbf16, #tpu.memory_space<vmem>>, vector<78x64xbf16>
    tpu.vector_store %arg39[%c11_141, %c0_142], %162 {strides = array<i32>} : memref<100x64xbf16, #tpu.memory_space<vmem>>, vector<78x64xbf16>,
    %c0_143 = arith.constant 0 : index
    %c0_144 = arith.constant 0 : index
    %164 = vector.load %arg39[%c0_143, %c0_144] : memref<100x64xbf16, #tpu.memory_space<vmem>>, vector<78x64xbf16>
    %c1_145 = arith.constant 1 : index
    %c0_146 = arith.constant 0 : index
    %165 = vector.load %arg39[%c1_145, %c0_146] : memref<100x64xbf16, #tpu.memory_space<vmem>>, vector<78x64xbf16>
    %c2_147 = arith.constant 2 : index
    %c0_148 = arith.constant 0 : index
    %166 = vector.load %arg39[%c2_147, %c0_148] : memref<100x64xbf16, #tpu.memory_space<vmem>>, vector<78x64xbf16>
    %c10_149 = arith.constant 10 : index
    %c0_150 = arith.constant 0 : index
    %167 = vector.load %arg39[%c10_149, %c0_150] : memref<100x64xbf16, #tpu.memory_space<vmem>>, vector<78x64xbf16>
    %c11_151 = arith.constant 11 : index
    %c0_152 = arith.constant 0 : index
    %168 = vector.load %arg39[%c11_151, %c0_152] : memref<100x64xbf16, #tpu.memory_space<vmem>>, vector<78x64xbf16>
    %c12_153 = arith.constant 12 : index
    %c0_154 = arith.constant 0 : index
    %169 = vector.load %arg39[%c12_153, %c0_154] : memref<100x64xbf16, #tpu.memory_space<vmem>>, vector<78x64xbf16>
    %c20_155 = arith.constant 20 : index
    %c0_156 = arith.constant 0 : index
    %170 = vector.load %arg39[%c20_155, %c0_156] : memref<100x64xbf16, #tpu.memory_space<vmem>>, vector<78x64xbf16>
    %c21_157 = arith.constant 21 : index
    %c0_158 = arith.constant 0 : index
    %171 = vector.load %arg39[%c21_157, %c0_158] : memref<100x64xbf16, #tpu.memory_space<vmem>>, vector<78x64xbf16>
    %c22_159 = arith.constant 22 : index
    %c0_160 = arith.constant 0 : index
    %172 = vector.load %arg39[%c22_159, %c0_160] : memref<100x64xbf16, #tpu.memory_space<vmem>>, vector<78x64xbf16>
    %173 = tpu.concatenate %164, %165, %166, %167, %168, %169, %170, %171, %172 in 1 : vector<78x64xbf16>, vector<78x64xbf16>, vector<78x64xbf16>, vector<78x64xbf16>, vector<78x64xbf16>, vector<78x64xbf16>, vector<78x64xbf16>, vector<78x64xbf16>, vector<78x64xbf16> -> vector<78x576xbf16>
    %c0_161 = arith.constant 0 : index
    %c0_162 = arith.constant 0 : index
    %174 = vector.load %arg26[%c0_161, %c0_162] : memref<576x64xbf16, #tpu.memory_space<vmem>>, vector<576x64xbf16>
    %cst_163 = arith.constant dense<0.000000e+00> : vector<78x64xf32>
    %175 = tpu.matmul %173, %174, %cst_163 {dimension_numbers = #tpu.dot_dimension_numbers<[1], [0], [0], [1], [0, 0, 1, 1], [], []>} : vector<78x576xbf16>, vector<576x64xbf16>, vector<78x64xf32> -> vector<78x64xf32>
    %c0_164 = arith.constant 0 : index
    %c0_165 = arith.constant 0 : index
    %176 = vector.load %arg27[%c0_164, %c0_165] : memref<1x64xf32, #tpu.memory_space<vmem>>, vector<1x64xf32>
    %177 = vector.broadcast %176 : vector<1x64xf32> to vector<78x64xf32>
    %178 = arith.mulf %175, %177 : vector<78x64xf32>
    %c0_166 = arith.constant 0 : index
    %c0_167 = arith.constant 0 : index
    %179 = vector.load %arg28[%c0_166, %c0_167] : memref<1x64xf32, #tpu.memory_space<vmem>>, vector<1x64xf32>
    %180 = vector.broadcast %179 : vector<1x64xf32> to vector<78x64xf32>
    %181 = arith.addf %178, %180 : vector<78x64xf32>
    %cst_168 = arith.constant 0.000000e+00 : f32
    %182 = vector.broadcast %cst_168 : f32 to vector<78x64xf32>
    %183 = arith.maximumf %181, %182 : vector<78x64xf32>
    %184 = arith.truncf %183 : vector<78x64xf32> to vector<78x64xbf16>
    %c0_169 = arith.constant 0 : index
    %c0_170 = arith.constant 0 : index
    %185 = vector.load %arg29[%c0_169, %c0_170] : memref<64x128xbf16, #tpu.memory_space<vmem>>, vector<64x128xbf16>
    %cst_171 = arith.constant dense<0.000000e+00> : vector<78x128xf32>
    %186 = tpu.matmul %184, %185, %cst_171 {dimension_numbers = #tpu.dot_dimension_numbers<[1], [0], [0], [1], [0, 0, 1, 1], [], []>} : vector<78x64xbf16>, vector<64x128xbf16>, vector<78x128xf32> -> vector<78x128xf32>
    %c0_172 = arith.constant 0 : index
    %c0_173 = arith.constant 0 : index
    %187 = vector.load %arg30[%c0_172, %c0_173] : memref<1x128xf32, #tpu.memory_space<vmem>>, vector<1x128xf32>
    %188 = vector.broadcast %187 : vector<1x128xf32> to vector<78x128xf32>
    %189 = arith.addf %186, %188 : vector<78x128xf32>
    %190 = vector.extract_strided_slice %189 {offsets = [0, 0], sizes = [8, 128], strides = [1, 1]} : vector<78x128xf32> to vector<8x128xf32>
    %c0_174 = arith.constant 0 : index
    %c0_175 = arith.constant 0 : index
    %c0_176 = arith.constant 0 : index
    %191 = vector.load %arg33[%c0_174, %c0_175, %c0_176] : memref<1x64x128xf32, #tpu.memory_space<vmem>>, vector<1x8x128xf32>
    %192 = vector.shape_cast %191 : vector<1x8x128xf32> to vector<8x128xf32>
    %193 = vector.shape_cast %190 : vector<8x128xf32> to vector<1x8x128xf32>
    tpu.vector_store %arg33[%c0_174, %c0_175, %c0_176], %193 {strides = array<i32>} : memref<1x64x128xf32, #tpu.memory_space<vmem>>, vector<1x8x128xf32>,
    %194 = vector.extract_strided_slice %189 {offsets = [10, 0], sizes = [8, 128], strides = [1, 1]} : vector<78x128xf32> to vector<8x128xf32>
    %c0_177 = arith.constant 0 : index
    %c8_178 = arith.constant 8 : index
    %c0_179 = arith.constant 0 : index
    %195 = vector.load %arg33[%c0_177, %c8_178, %c0_179] : memref<1x64x128xf32, #tpu.memory_space<vmem>>, vector<1x8x128xf32>
    %196 = vector.shape_cast %195 : vector<1x8x128xf32> to vector<8x128xf32>
    %197 = vector.shape_cast %194 : vector<8x128xf32> to vector<1x8x128xf32>
    tpu.vector_store %arg33[%c0_177, %c8_178, %c0_179], %197 {strides = array<i32>} : memref<1x64x128xf32, #tpu.memory_space<vmem>>, vector<1x8x128xf32>,
    %198 = vector.extract_strided_slice %189 {offsets = [20, 0], sizes = [8, 128], strides = [1, 1]} : vector<78x128xf32> to vector<8x128xf32>
    %c0_180 = arith.constant 0 : index
    %c16 = arith.constant 16 : index
    %c0_181 = arith.constant 0 : index
    %199 = vector.load %arg33[%c0_180, %c16, %c0_181] : memref<1x64x128xf32, #tpu.memory_space<vmem>>, vector<1x8x128xf32>
    %200 = vector.shape_cast %199 : vector<1x8x128xf32> to vector<8x128xf32>
    %201 = vector.shape_cast %198 : vector<8x128xf32> to vector<1x8x128xf32>
    tpu.vector_store %arg33[%c0_180, %c16, %c0_181], %201 {strides = array<i32>} : memref<1x64x128xf32, #tpu.memory_space<vmem>>, vector<1x8x128xf32>,
    %202 = vector.extract_strided_slice %189 {offsets = [30, 0], sizes = [8, 128], strides = [1, 1]} : vector<78x128xf32> to vector<8x128xf32>
    %c0_182 = arith.constant 0 : index
    %c24 = arith.constant 24 : index
    %c0_183 = arith.constant 0 : index
    %203 = vector.load %arg33[%c0_182, %c24, %c0_183] : memref<1x64x128xf32, #tpu.memory_space<vmem>>, vector<1x8x128xf32>
    %204 = vector.shape_cast %203 : vector<1x8x128xf32> to vector<8x128xf32>
    %205 = vector.shape_cast %202 : vector<8x128xf32> to vector<1x8x128xf32>
    tpu.vector_store %arg33[%c0_182, %c24, %c0_183], %205 {strides = array<i32>} : memref<1x64x128xf32, #tpu.memory_space<vmem>>, vector<1x8x128xf32>,
    %206 = vector.extract_strided_slice %189 {offsets = [40, 0], sizes = [8, 128], strides = [1, 1]} : vector<78x128xf32> to vector<8x128xf32>
    %c0_184 = arith.constant 0 : index
    %c32 = arith.constant 32 : index
    %c0_185 = arith.constant 0 : index
    %207 = vector.load %arg33[%c0_184, %c32, %c0_185] : memref<1x64x128xf32, #tpu.memory_space<vmem>>, vector<1x8x128xf32>
    %208 = vector.shape_cast %207 : vector<1x8x128xf32> to vector<8x128xf32>
    %209 = vector.shape_cast %206 : vector<8x128xf32> to vector<1x8x128xf32>
    tpu.vector_store %arg33[%c0_184, %c32, %c0_185], %209 {strides = array<i32>} : memref<1x64x128xf32, #tpu.memory_space<vmem>>, vector<1x8x128xf32>,
    %210 = vector.extract_strided_slice %189 {offsets = [50, 0], sizes = [8, 128], strides = [1, 1]} : vector<78x128xf32> to vector<8x128xf32>
    %c0_186 = arith.constant 0 : index
    %c40 = arith.constant 40 : index
    %c0_187 = arith.constant 0 : index
    %211 = vector.load %arg33[%c0_186, %c40, %c0_187] : memref<1x64x128xf32, #tpu.memory_space<vmem>>, vector<1x8x128xf32>
    %212 = vector.shape_cast %211 : vector<1x8x128xf32> to vector<8x128xf32>
    %213 = vector.shape_cast %210 : vector<8x128xf32> to vector<1x8x128xf32>
    tpu.vector_store %arg33[%c0_186, %c40, %c0_187], %213 {strides = array<i32>} : memref<1x64x128xf32, #tpu.memory_space<vmem>>, vector<1x8x128xf32>,
    %214 = vector.extract_strided_slice %189 {offsets = [60, 0], sizes = [8, 128], strides = [1, 1]} : vector<78x128xf32> to vector<8x128xf32>
    %c0_188 = arith.constant 0 : index
    %c48 = arith.constant 48 : index
    %c0_189 = arith.constant 0 : index
    %215 = vector.load %arg33[%c0_188, %c48, %c0_189] : memref<1x64x128xf32, #tpu.memory_space<vmem>>, vector<1x8x128xf32>
    %216 = vector.shape_cast %215 : vector<1x8x128xf32> to vector<8x128xf32>
    %217 = vector.shape_cast %214 : vector<8x128xf32> to vector<1x8x128xf32>
    tpu.vector_store %arg33[%c0_188, %c48, %c0_189], %217 {strides = array<i32>} : memref<1x64x128xf32, #tpu.memory_space<vmem>>, vector<1x8x128xf32>,
    %218 = vector.extract_strided_slice %189 {offsets = [70, 0], sizes = [8, 128], strides = [1, 1]} : vector<78x128xf32> to vector<8x128xf32>
    %c0_190 = arith.constant 0 : index
    %c56 = arith.constant 56 : index
    %c0_191 = arith.constant 0 : index
    %219 = vector.load %arg33[%c0_190, %c56, %c0_191] : memref<1x64x128xf32, #tpu.memory_space<vmem>>, vector<1x8x128xf32>
    %220 = vector.shape_cast %219 : vector<1x8x128xf32> to vector<8x128xf32>
    %221 = vector.shape_cast %218 : vector<8x128xf32> to vector<1x8x128xf32>
    tpu.vector_store %arg33[%c0_190, %c56, %c0_191], %221 {strides = array<i32>} : memref<1x64x128xf32, #tpu.memory_space<vmem>>, vector<1x8x128xf32>,
    return
  }
  func.func @transform_0(%arg0: i32) -> (i32, i32, i32) {
    %c0_i32 = arith.constant 0 : i32
    %c0_i32_0 = arith.constant 0 : i32
    %c0_i32_1 = arith.constant 0 : i32
    return %arg0, %c0_i32, %c0_i32_0 : i32, i32, i32
  }
  func.func @transform_1(%arg0: i32) -> (i32, i32) {
    %c0_i32 = arith.constant 0 : i32
    %c0_i32_0 = arith.constant 0 : i32
    %c0_i32_1 = arith.constant 0 : i32
    return %c0_i32, %c0_i32_0 : i32, i32
  }
  func.func @transform_2(%arg0: i32) -> (i32, i32) {
    %c0_i32 = arith.constant 0 : i32
    %c0_i32_0 = arith.constant 0 : i32
    %c0_i32_1 = arith.constant 0 : i32
    return %c0_i32, %c0_i32_0 : i32, i32
  }
  func.func @transform_3(%arg0: i32) -> (i32, i32) {
    %c0_i32 = arith.constant 0 : i32
    %c0_i32_0 = arith.constant 0 : i32
    %c0_i32_1 = arith.constant 0 : i32
    return %c0_i32, %c0_i32_0 : i32, i32
  }
  func.func @transform_4(%arg0: i32) -> (i32, i32) {
    %c0_i32 = arith.constant 0 : i32
    %c0_i32_0 = arith.constant 0 : i32
    %c0_i32_1 = arith.constant 0 : i32
    return %c0_i32, %c0_i32_0 : i32, i32
  }
  func.func @transform_5(%arg0: i32) -> (i32, i32) {
    %c0_i32 = arith.constant 0 : i32
    %c0_i32_0 = arith.constant 0 : i32
    %c0_i32_1 = arith.constant 0 : i32
    return %c0_i32, %c0_i32_0 : i32, i32
  }
  func.func @transform_6(%arg0: i32) -> (i32, i32) {
    %c0_i32 = arith.constant 0 : i32
    %c0_i32_0 = arith.constant 0 : i32
    %c0_i32_1 = arith.constant 0 : i32
    return %c0_i32, %c0_i32_0 : i32, i32
  }
  func.func @transform_7(%arg0: i32) -> (i32, i32) {
    %c0_i32 = arith.constant 0 : i32
    %c0_i32_0 = arith.constant 0 : i32
    %c0_i32_1 = arith.constant 0 : i32
    return %c0_i32, %c0_i32_0 : i32, i32
  }
  func.func @transform_8(%arg0: i32) -> (i32, i32) {
    %c0_i32 = arith.constant 0 : i32
    %c0_i32_0 = arith.constant 0 : i32
    %c0_i32_1 = arith.constant 0 : i32
    return %c0_i32, %c0_i32_0 : i32, i32
  }
  func.func @transform_9(%arg0: i32) -> (i32, i32) {
    %c0_i32 = arith.constant 0 : i32
    %c0_i32_0 = arith.constant 0 : i32
    %c0_i32_1 = arith.constant 0 : i32
    return %c0_i32, %c0_i32_0 : i32, i32
  }
  func.func @transform_10(%arg0: i32) -> (i32, i32) {
    %c0_i32 = arith.constant 0 : i32
    %c0_i32_0 = arith.constant 0 : i32
    %c0_i32_1 = arith.constant 0 : i32
    return %c0_i32, %c0_i32_0 : i32, i32
  }
  func.func @transform_11(%arg0: i32) -> (i32, i32) {
    %c0_i32 = arith.constant 0 : i32
    %c0_i32_0 = arith.constant 0 : i32
    %c0_i32_1 = arith.constant 0 : i32
    return %c0_i32, %c0_i32_0 : i32, i32
  }
  func.func @transform_12(%arg0: i32) -> (i32, i32) {
    %c0_i32 = arith.constant 0 : i32
    %c0_i32_0 = arith.constant 0 : i32
    %c0_i32_1 = arith.constant 0 : i32
    return %c0_i32, %c0_i32_0 : i32, i32
  }
  func.func @transform_13(%arg0: i32) -> (i32, i32) {
    %c0_i32 = arith.constant 0 : i32
    %c0_i32_0 = arith.constant 0 : i32
    %c0_i32_1 = arith.constant 0 : i32
    return %c0_i32, %c0_i32_0 : i32, i32
  }
  func.func @transform_14(%arg0: i32) -> (i32, i32) {
    %c0_i32 = arith.constant 0 : i32
    %c0_i32_0 = arith.constant 0 : i32
    %c0_i32_1 = arith.constant 0 : i32
    return %c0_i32, %c0_i32_0 : i32, i32
  }
  func.func @transform_15(%arg0: i32) -> (i32, i32) {
    %c0_i32 = arith.constant 0 : i32
    %c0_i32_0 = arith.constant 0 : i32
    %c0_i32_1 = arith.constant 0 : i32
    return %c0_i32, %c0_i32_0 : i32, i32
  }
  func.func @transform_16(%arg0: i32) -> (i32, i32) {
    %c0_i32 = arith.constant 0 : i32
    %c0_i32_0 = arith.constant 0 : i32
    %c0_i32_1 = arith.constant 0 : i32
    return %c0_i32, %c0_i32_0 : i32, i32
  }
  func.func @transform_17(%arg0: i32) -> (i32, i32) {
    %c0_i32 = arith.constant 0 : i32
    %c0_i32_0 = arith.constant 0 : i32
    %c0_i32_1 = arith.constant 0 : i32
    return %c0_i32, %c0_i32_0 : i32, i32
  }
  func.func @transform_18(%arg0: i32) -> (i32, i32) {
    %c0_i32 = arith.constant 0 : i32
    %c0_i32_0 = arith.constant 0 : i32
    %c0_i32_1 = arith.constant 0 : i32
    return %c0_i32, %c0_i32_0 : i32, i32
  }
  func.func @transform_19(%arg0: i32) -> (i32, i32) {
    %c0_i32 = arith.constant 0 : i32
    %c0_i32_0 = arith.constant 0 : i32
    %c0_i32_1 = arith.constant 0 : i32
    return %c0_i32, %c0_i32_0 : i32, i32
  }
  func.func @transform_20(%arg0: i32) -> (i32, i32) {
    %c0_i32 = arith.constant 0 : i32
    %c0_i32_0 = arith.constant 0 : i32
    %c0_i32_1 = arith.constant 0 : i32
    return %c0_i32, %c0_i32_0 : i32, i32
  }
  func.func @transform_21(%arg0: i32) -> (i32, i32) {
    %c0_i32 = arith.constant 0 : i32
    %c0_i32_0 = arith.constant 0 : i32
    %c0_i32_1 = arith.constant 0 : i32
    return %c0_i32, %c0_i32_0 : i32, i32
  }
  func.func @transform_22(%arg0: i32) -> (i32, i32) {
    %c0_i32 = arith.constant 0 : i32
    %c0_i32_0 = arith.constant 0 : i32
    %c0_i32_1 = arith.constant 0 : i32
    return %c0_i32, %c0_i32_0 : i32, i32
  }
  func.func @transform_23(%arg0: i32) -> (i32, i32) {
    %c0_i32 = arith.constant 0 : i32
    %c0_i32_0 = arith.constant 0 : i32
    %c0_i32_1 = arith.constant 0 : i32
    return %c0_i32, %c0_i32_0 : i32, i32
  }
  func.func @transform_24(%arg0: i32) -> (i32, i32) {
    %c0_i32 = arith.constant 0 : i32
    %c0_i32_0 = arith.constant 0 : i32
    %c0_i32_1 = arith.constant 0 : i32
    return %c0_i32, %c0_i32_0 : i32, i32
  }
  func.func @transform_25(%arg0: i32) -> (i32, i32) {
    %c0_i32 = arith.constant 0 : i32
    %c0_i32_0 = arith.constant 0 : i32
    %c0_i32_1 = arith.constant 0 : i32
    return %c0_i32, %c0_i32_0 : i32, i32
  }
  func.func @transform_26(%arg0: i32) -> (i32, i32) {
    %c0_i32 = arith.constant 0 : i32
    %c0_i32_0 = arith.constant 0 : i32
    %c0_i32_1 = arith.constant 0 : i32
    return %c0_i32, %c0_i32_0 : i32, i32
  }
  func.func @transform_27(%arg0: i32) -> (i32, i32) {
    %c0_i32 = arith.constant 0 : i32
    %c0_i32_0 = arith.constant 0 : i32
    %c0_i32_1 = arith.constant 0 : i32
    return %c0_i32, %c0_i32_0 : i32, i32
  }
  func.func @transform_28(%arg0: i32) -> (i32, i32) {
    %c0_i32 = arith.constant 0 : i32
    %c0_i32_0 = arith.constant 0 : i32
    %c0_i32_1 = arith.constant 0 : i32
    return %c0_i32, %c0_i32_0 : i32, i32
  }
  func.func @transform_29(%arg0: i32) -> (i32, i32) {
    %c0_i32 = arith.constant 0 : i32
    %c0_i32_0 = arith.constant 0 : i32
    %c0_i32_1 = arith.constant 0 : i32
    return %c0_i32, %c0_i32_0 : i32, i32
  }
  func.func @transform_30(%arg0: i32) -> (i32, i32) {
    %c0_i32 = arith.constant 0 : i32
    %c0_i32_0 = arith.constant 0 : i32
    %c0_i32_1 = arith.constant 0 : i32
    return %c0_i32, %c0_i32_0 : i32, i32
  }
  func.func @transform_31(%arg0: i32) -> (i32, i32) {
    %c0_i32 = arith.constant 0 : i32
    %c0_i32_0 = arith.constant 0 : i32
    %c0_i32_1 = arith.constant 0 : i32
    return %c0_i32, %c0_i32_0 : i32, i32
  }
  func.func @transform_32(%arg0: i32) -> (i32, i32, i32) {
    %c0_i32 = arith.constant 0 : i32
    %c0_i32_0 = arith.constant 0 : i32
    %c0_i32_1 = arith.constant 0 : i32
    return %arg0, %c0_i32, %c0_i32_0 : i32, i32, i32
  }
}

</mosaic_0001>

<llo_original>
// kernel: forward.1
$region0: #{forward.1}
  #allocation0 [shape = 'u32[]', space=smem, size = 0x4, offset = 0x4, fixed_abs, tag = 'smem constant byte address 0x4 - core index']
  #allocation1 [shape = 'u32[144,128]{1,0:T(1,128)}', space=vmem, size = 0x12000, scoped, tag = 'internal scratch']
  #allocation2 [shape = 'bf16[100,128]{1,0:T(8,128)(2,1)}', space=vmem, size = 0x6800, scoped, tag = 'scratch operand']
  #allocation3 [shape = 'bf16[100,32]{1,0:T(8,128)(2,1)}', space=vmem, size = 0x6800, scoped, tag = 'scratch operand']
  #allocation4 [shape = 'bf16[100,32]{1,0:T(8,128)(2,1)}', space=vmem, size = 0x6800, scoped, tag = 'scratch operand']
  #allocation5 [shape = 'bf16[36,128]{1,0:T(8,128)(2,1)}', space=vmem, size = 0x2800, scoped, tag = 'scratch operand']
  #allocation6 [shape = 'bf16[36,64]{1,0:T(8,128)(2,1)}', space=vmem, size = 0x2800, scoped, tag = 'scratch operand']
  #allocation7 [shape = 'bf16[100,64]{1,0:T(8,128)(2,1)}', space=vmem, size = 0x6800, scoped, tag = 'scratch operand']
  %s0 = inlined_call_operand.smem [shape: u32[33], index: -1, kind: input, shape index: {}]
  %s1 = sld [smem:[%s0]]
  %s2 = scalar_lea.smem %s0, 1
  %s3 = sld [smem:[%s2]]
  %s4 = scalar_lea.smem %s0, 2
  %s5 = sld [smem:[%s4]]
  %s6 = scalar_lea.smem %s0, 3
  %s7 = sld [smem:[%s6]]
  %s8 = scalar_lea.smem %s0, 4
  %s9 = sld [smem:[%s8]]
  %s10 = scalar_lea.smem %s0, 5
  %s11 = sld [smem:[%s10]]
  %s12 = scalar_lea.smem %s0, 6
  %s13 = sld [smem:[%s12]]
  %s14 = scalar_lea.smem %s0, 7
  %s15 = sld [smem:[%s14]]
  %s16 = scalar_lea.smem %s0, 8
  %s17 = sld [smem:[%s16]]
  %s18 = scalar_lea.smem %s0, 9
  %s19 = sld [smem:[%s18]]
  %s20 = scalar_lea.smem %s0, 10
  %s21 = sld [smem:[%s20]]
  %s22 = scalar_lea.smem %s0, 11
  %s23 = sld [smem:[%s22]]
  %s24 = scalar_lea.smem %s0, 12
  %s25 = sld [smem:[%s24]]
  %s26 = scalar_lea.smem %s0, 13
  %s27 = sld [smem:[%s26]]
  %s28 = scalar_lea.smem %s0, 14
  %s29 = sld [smem:[%s28]]
  %s30 = scalar_lea.smem %s0, 15
  %s31 = sld [smem:[%s30]]
  %s32 = scalar_lea.smem %s0, 16
  %s33 = sld [smem:[%s32]]
  %s34 = scalar_lea.smem %s0, 17
  %s35 = sld [smem:[%s34]]
  %s36 = scalar_lea.smem %s0, 18
  %s37 = sld [smem:[%s36]]
  %s38 = scalar_lea.smem %s0, 19
  %s39 = sld [smem:[%s38]]
  %s40 = scalar_lea.smem %s0, 20
  %s41 = sld [smem:[%s40]]
  %s42 = scalar_lea.smem %s0, 21
  %s43 = sld [smem:[%s42]]
  %s44 = scalar_lea.smem %s0, 22
  %s45 = sld [smem:[%s44]]
  %s46 = scalar_lea.smem %s0, 23
  %s47 = sld [smem:[%s46]]
  %s48 = scalar_lea.smem %s0, 24
  %s49 = sld [smem:[%s48]]
  %s50 = scalar_lea.smem %s0, 25
  %s51 = sld [smem:[%s50]]
  %s52 = scalar_lea.smem %s0, 26
  %s53 = sld [smem:[%s52]]
  %s54 = scalar_lea.smem %s0, 27
  %s55 = sld [smem:[%s54]]
  %s56 = scalar_lea.smem %s0, 28
  %s57 = sld [smem:[%s56]]
  %s58 = scalar_lea.smem %s0, 29
  %s59 = sld [smem:[%s58]]
  %s60 = scalar_lea.smem %s0, 30
  %s61 = sld [smem:[%s60]]
  %s62 = scalar_lea.smem %s0, 31
  %s63 = sld [smem:[%s62]]
  %s64 = scalar_lea.smem %s0, 32
  %s65 = sld [smem:[%s64]]
  %s66 = sld [smem:[#allocation0]]
  $region161: #{forward.1} parent=0
    _
  %s68 = ssub.s32 1, %s66
  %s69 = scalar_select 0, %s68, %s66
  loop: start=0, step=1, limit=4
  $region2: #{forward.1} parent=0 // loop_pre_header
    _
  $region3: #{forward.1} parent=0 // loop_header
    %s71 = sphi 0, %s75
    %p72 = scmp.ge.s32.totalorder %s71, 4
    %s81 = sphi 0, %s83
    %s84 = sphi 0, %s81
    %s85 = sphi 0, %s84
    %s101 = sphi 0, %s85
    %s105 = sphi 0, %s105
    %s107 = sphi 0, %s105
    %s108 = sphi 0, %s107
    %s122 = sphi 0, %s108
    %s126 = sphi 0, %s126
    %s128 = sphi 0, %s126
    %s129 = sphi 0, %s128
    %s143 = sphi 0, %s129
    %s147 = sphi 0, %s147
    %s149 = sphi 0, %s147
    %s150 = sphi 0, %s149
    %s164 = sphi 0, %s150
    %s168 = sphi 0, %s168
    %s170 = sphi 0, %s168
    %s171 = sphi 0, %s170
    %s185 = sphi 0, %s171
    %s189 = sphi 0, %s189
    %s191 = sphi 0, %s189
    %s192 = sphi 0, %s191
    %s206 = sphi 0, %s192
    %s210 = sphi 0, %s210
    %s212 = sphi 0, %s210
    %s213 = sphi 0, %s212
    %s227 = sphi 0, %s213
    %s231 = sphi 0, %s231
    %s233 = sphi 0, %s231
    %s234 = sphi 0, %s233
    %s248 = sphi 0, %s234
    %s252 = sphi 0, %s252
    %s254 = sphi 0, %s252
    %s255 = sphi 0, %s254
    %s269 = sphi 0, %s255
    %s273 = sphi 0, %s273
    %s275 = sphi 0, %s273
    %s276 = sphi 0, %s275
    %s290 = sphi 0, %s276
    %s294 = sphi 0, %s294
    %s296 = sphi 0, %s294
    %s297 = sphi 0, %s296
    %s311 = sphi 0, %s297
    %s315 = sphi 0, %s315
    %s317 = sphi 0, %s315
    %s318 = sphi 0, %s317
    %s332 = sphi 0, %s318
    %s336 = sphi 0, %s336
    %s338 = sphi 0, %s336
    %s339 = sphi 0, %s338
    %s353 = sphi 0, %s339
    %s357 = sphi 0, %s357
    %s359 = sphi 0, %s357
    %s360 = sphi 0, %s359
    %s374 = sphi 0, %s360
    %s378 = sphi 0, %s378
    %s380 = sphi 0, %s378
    %s381 = sphi 0, %s380
    %s395 = sphi 0, %s381
    %s399 = sphi 0, %s399
    %s401 = sphi 0, %s399
    %s402 = sphi 0, %s401
    %s416 = sphi 0, %s402
    %s420 = sphi 0, %s420
    %s422 = sphi 0, %s420
    %s423 = sphi 0, %s422
    %s437 = sphi 0, %s423
    %s441 = sphi 0, %s441
    %s443 = sphi 0, %s441
    %s444 = sphi 0, %s443
    %s458 = sphi 0, %s444
    %s462 = sphi 0, %s462
    %s464 = sphi 0, %s462
    %s465 = sphi 0, %s464
    %s479 = sphi 0, %s465
    %s483 = sphi 0, %s483
    %s485 = sphi 0, %s483
    %s486 = sphi 0, %s485
    %s500 = sphi 0, %s486
    %s504 = sphi 0, %s504
    %s506 = sphi 0, %s504
    %s507 = sphi 0, %s506
    %s521 = sphi 0, %s507
    %s525 = sphi 0, %s525
    %s527 = sphi 0, %s525
    %s528 = sphi 0, %s527
    %s542 = sphi 0, %s528
    %s546 = sphi 0, %s546
    %s548 = sphi 0, %s546
    %s549 = sphi 0, %s548
    %s563 = sphi 0, %s549
    %s567 = sphi 0, %s567
    %s569 = sphi 0, %s567
    %s570 = sphi 0, %s569
    %s584 = sphi 0, %s570
    %s588 = sphi 0, %s588
    %s590 = sphi 0, %s588
    %s591 = sphi 0, %s590
    %s605 = sphi 0, %s591
    %s609 = sphi 0, %s609
    %s611 = sphi 0, %s609
    %s612 = sphi 0, %s611
    %s626 = sphi 0, %s612
    %s630 = sphi 0, %s630
    %s632 = sphi 0, %s630
    %s633 = sphi 0, %s632
    %s647 = sphi 0, %s633
    %s651 = sphi 0, %s651
    %s653 = sphi 0, %s651
    %s654 = sphi 0, %s653
    %s668 = sphi 0, %s654
    %s672 = sphi 0, %s672
    %s674 = sphi 0, %s672
    %s675 = sphi 0, %s674
    %s689 = sphi 0, %s675
    %s693 = sphi 0, %s693
    %s695 = sphi 0, %s693
    %s696 = sphi 0, %s695
    %s710 = sphi 0, %s696
    %s714 = sphi 0, %s714
    %s716 = sphi 0, %s714
    %s717 = sphi 0, %s716
    %s731 = sphi 0, %s717
    %s735 = sphi 0, %s735
    %s737 = sphi 0, %s735
    %s738 = sphi 0, %s737
    %s752 = sphi 0, %s738
    %s758 = sphi 0, %s760
    %s761 = sphi 0, %s758
    %s762 = sphi 0, %s761
    %s778 = sphi 0, %s762
  $region4: #{forward.1} parent=0 // loop_header_branch
    %74 = sbr.rel (%p72) target = $region8
  $region5: #{forward.1} parent=0 // loop_body
    %s76 = ssub.s32 %s71, 1
    %s77 = ssub.s32 %s71, 2
    %s78 = sadd.s32 %s71, 1
    %s79 = ssub.s32 %s71, %s78
    %p80 = scmp.eq.s32.totalorder %s79, 0
    %s82 = sadd.s32 %s81, 1
    %s83 = scalar_select %p80, %s81, %s82
    %p86 = pneg %p80
    %p87 = scmp.eq.s32.totalorder %s71, 1
    %p88 = por %p86, %p87
    %p89 = scmp.ne.s32.totalorder %s81, %s84
    %p90 = scmp.eq.s32.totalorder %s71, 0
    %p91 = por %p89, %p90
    %p92 = scmp.ne.s32.totalorder %s81, %s84
    %p93 = scmp.eq.s32.totalorder %s76, 1
    %p94 = por %p92, %p93
    %p95 = scmp.ne.s32.totalorder %s84, %s85
    %p96 = scmp.eq.s32.totalorder %s76, 0
    %p97 = por %p95, %p96
    %p98 = scmp.ne.s32.totalorder %s84, %s85
    %p99 = scmp.eq.s32.totalorder %s77, 1
    %p100 = por %p98, %p99
    %p102 = scmp.ne.s32.totalorder %s85, %s101
    %p103 = scmp.eq.s32.totalorder %s77, 0
    %p104 = por %p102, %p103
    %s106 = sadd.s32 %s105, 1
    %p109 = scmp.eq.s32.totalorder %s71, 1
    %p110 = scmp.ne.s32.totalorder %s105, %s107
    %p111 = scmp.eq.s32.totalorder %s71, 0
    %p112 = por %p110, %p111
    %p113 = scmp.ne.s32.totalorder %s105, %s107
    %p114 = scmp.eq.s32.totalorder %s76, 1
    %p115 = por %p113, %p114
    %p116 = scmp.ne.s32.totalorder %s107, %s108
    %p117 = scmp.eq.s32.totalorder %s76, 0
    %p118 = por %p116, %p117
    %p119 = scmp.ne.s32.totalorder %s107, %s108
    %p120 = scmp.eq.s32.totalorder %s77, 1
    %p121 = por %p119, %p120
    %p123 = scmp.ne.s32.totalorder %s108, %s122
    %p124 = scmp.eq.s32.totalorder %s77, 0
    %p125 = por %p123, %p124
    %s127 = sadd.s32 %s126, 1
    %p130 = scmp.eq.s32.totalorder %s71, 1
    %p131 = scmp.ne.s32.totalorder %s126, %s128
    %p132 = scmp.eq.s32.totalorder %s71, 0
    %p133 = por %p131, %p132
    %p134 = scmp.ne.s32.totalorder %s126, %s128
    %p135 = scmp.eq.s32.totalorder %s76, 1
    %p136 = por %p134, %p135
    %p137 = scmp.ne.s32.totalorder %s128, %s129
    %p138 = scmp.eq.s32.totalorder %s76, 0
    %p139 = por %p137, %p138
    %p140 = scmp.ne.s32.totalorder %s128, %s129
    %p141 = scmp.eq.s32.totalorder %s77, 1
    %p142 = por %p140, %p141
    %p144 = scmp.ne.s32.totalorder %s129, %s143
    %p145 = scmp.eq.s32.totalorder %s77, 0
    %p146 = por %p144, %p145
    %s148 = sadd.s32 %s147, 1
    %p151 = scmp.eq.s32.totalorder %s71, 1
    %p152 = scmp.ne.s32.totalorder %s147, %s149
    %p153 = scmp.eq.s32.totalorder %s71, 0
    %p154 = por %p152, %p153
    %p155 = scmp.ne.s32.totalorder %s147, %s149
    %p156 = scmp.eq.s32.totalorder %s76, 1
    %p157 = por %p155, %p156
    %p158 = scmp.ne.s32.totalorder %s149, %s150
    %p159 = scmp.eq.s32.totalorder %s76, 0
    %p160 = por %p158, %p159
    %p161 = scmp.ne.s32.totalorder %s149, %s150
    %p162 = scmp.eq.s32.totalorder %s77, 1
    %p163 = por %p161, %p162
    %p165 = scmp.ne.s32.totalorder %s150, %s164
    %p166 = scmp.eq.s32.totalorder %s77, 0
    %p167 = por %p165, %p166
    %s169 = sadd.s32 %s168, 1
    %p172 = scmp.eq.s32.totalorder %s71, 1
    %p173 = scmp.ne.s32.totalorder %s168, %s170
    %p174 = scmp.eq.s32.totalorder %s71, 0
    %p175 = por %p173, %p174
    %p176 = scmp.ne.s32.totalorder %s168, %s170
    %p177 = scmp.eq.s32.totalorder %s76, 1
    %p178 = por %p176, %p177
    %p179 = scmp.ne.s32.totalorder %s170, %s171
    %p180 = scmp.eq.s32.totalorder %s76, 0
    %p181 = por %p179, %p180
    %p182 = scmp.ne.s32.totalorder %s170, %s171
    %p183 = scmp.eq.s32.totalorder %s77, 1
    %p184 = por %p182, %p183
    %p186 = scmp.ne.s32.totalorder %s171, %s185
    %p187 = scmp.eq.s32.totalorder %s77, 0
    %p188 = por %p186, %p187
    %s190 = sadd.s32 %s189, 1
    %p193 = scmp.eq.s32.totalorder %s71, 1
    %p194 = scmp.ne.s32.totalorder %s189, %s191
    %p195 = scmp.eq.s32.totalorder %s71, 0
    %p196 = por %p194, %p195
    %p197 = scmp.ne.s32.totalorder %s189, %s191
    %p198 = scmp.eq.s32.totalorder %s76, 1
    %p199 = por %p197, %p198
    %p200 = scmp.ne.s32.totalorder %s191, %s192
    %p201 = scmp.eq.s32.totalorder %s76, 0
    %p202 = por %p200, %p201
    %p203 = scmp.ne.s32.totalorder %s191, %s192
    %p204 = scmp.eq.s32.totalorder %s77, 1
    %p205 = por %p203, %p204
    %p207 = scmp.ne.s32.totalorder %s192, %s206
    %p208 = scmp.eq.s32.totalorder %s77, 0
    %p209 = por %p207, %p208
    %s211 = sadd.s32 %s210, 1
    %p214 = scmp.eq.s32.totalorder %s71, 1
    %p215 = scmp.ne.s32.totalorder %s210, %s212
    %p216 = scmp.eq.s32.totalorder %s71, 0
    %p217 = por %p215, %p216
    %p218 = scmp.ne.s32.totalorder %s210, %s212
    %p219 = scmp.eq.s32.totalorder %s76, 1
    %p220 = por %p218, %p219
    %p221 = scmp.ne.s32.totalorder %s212, %s213
    %p222 = scmp.eq.s32.totalorder %s76, 0
    %p223 = por %p221, %p222
    %p224 = scmp.ne.s32.totalorder %s212, %s213
    %p225 = scmp.eq.s32.totalorder %s77, 1
    %p226 = por %p224, %p225
    %p228 = scmp.ne.s32.totalorder %s213, %s227
    %p229 = scmp.eq.s32.totalorder %s77, 0
    %p230 = por %p228, %p229
    %s232 = sadd.s32 %s231, 1
    %p235 = scmp.eq.s32.totalorder %s71, 1
    %p236 = scmp.ne.s32.totalorder %s231, %s233
    %p237 = scmp.eq.s32.totalorder %s71, 0
    %p238 = por %p236, %p237
    %p239 = scmp.ne.s32.totalorder %s231, %s233
    %p240 = scmp.eq.s32.totalorder %s76, 1
    %p241 = por %p239, %p240
    %p242 = scmp.ne.s32.totalorder %s233, %s234
    %p243 = scmp.eq.s32.totalorder %s76, 0
    %p244 = por %p242, %p243
    %p245 = scmp.ne.s32.totalorder %s233, %s234
    %p246 = scmp.eq.s32.totalorder %s77, 1
    %p247 = por %p245, %p246
    %p249 = scmp.ne.s32.totalorder %s234, %s248
    %p250 = scmp.eq.s32.totalorder %s77, 0
    %p251 = por %p249, %p250
    %s253 = sadd.s32 %s252, 1
    %p256 = scmp.eq.s32.totalorder %s71, 1
    %p257 = scmp.ne.s32.totalorder %s252, %s254
    %p258 = scmp.eq.s32.totalorder %s71, 0
    %p259 = por %p257, %p258
    %p260 = scmp.ne.s32.totalorder %s252, %s254
    %p261 = scmp.eq.s32.totalorder %s76, 1
    %p262 = por %p260, %p261
    %p263 = scmp.ne.s32.totalorder %s254, %s255
    %p264 = scmp.eq.s32.totalorder %s76, 0
    %p265 = por %p263, %p264
    %p266 = scmp.ne.s32.totalorder %s254, %s255
    %p267 = scmp.eq.s32.totalorder %s77, 1
    %p268 = por %p266, %p267
    %p270 = scmp.ne.s32.totalorder %s255, %s269
    %p271 = scmp.eq.s32.totalorder %s77, 0
    %p272 = por %p270, %p271
    %s274 = sadd.s32 %s273, 1
    %p277 = scmp.eq.s32.totalorder %s71, 1
    %p278 = scmp.ne.s32.totalorder %s273, %s275
    %p279 = scmp.eq.s32.totalorder %s71, 0
    %p280 = por %p278, %p279
    %p281 = scmp.ne.s32.totalorder %s273, %s275
    %p282 = scmp.eq.s32.totalorder %s76, 1
    %p283 = por %p281, %p282
    %p284 = scmp.ne.s32.totalorder %s275, %s276
    %p285 = scmp.eq.s32.totalorder %s76, 0
    %p286 = por %p284, %p285
    %p287 = scmp.ne.s32.totalorder %s275, %s276
    %p288 = scmp.eq.s32.totalorder %s77, 1
    %p289 = por %p287, %p288
    %p291 = scmp.ne.s32.totalorder %s276, %s290
    %p292 = scmp.eq.s32.totalorder %s77, 0
    %p293 = por %p291, %p292
    %s295 = sadd.s32 %s294, 1
    %p298 = scmp.eq.s32.totalorder %s71, 1
    %p299 = scmp.ne.s32.totalorder %s294, %s296
    %p300 = scmp.eq.s32.totalorder %s71, 0
    %p301 = por %p299, %p300
    %p302 = scmp.ne.s32.totalorder %s294, %s296
    %p303 = scmp.eq.s32.totalorder %s76, 1
    %p304 = por %p302, %p303
    %p305 = scmp.ne.s32.totalorder %s296, %s297
    %p306 = scmp.eq.s32.totalorder %s76, 0
    %p307 = por %p305, %p306
    %p308 = scmp.ne.s32.totalorder %s296, %s297
    %p309 = scmp.eq.s32.totalorder %s77, 1
    %p310 = por %p308, %p309
    %p312 = scmp.ne.s32.totalorder %s297, %s311
    %p313 = scmp.eq.s32.totalorder %s77, 0
    %p314 = por %p312, %p313
    %s316 = sadd.s32 %s315, 1
    %p319 = scmp.eq.s32.totalorder %s71, 1
    %p320 = scmp.ne.s32.totalorder %s315, %s317
    %p321 = scmp.eq.s32.totalorder %s71, 0
    %p322 = por %p320, %p321
    %p323 = scmp.ne.s32.totalorder %s315, %s317
    %p324 = scmp.eq.s32.totalorder %s76, 1
    %p325 = por %p323, %p324
    %p326 = scmp.ne.s32.totalorder %s317, %s318
    %p327 = scmp.eq.s32.totalorder %s76, 0
    %p328 = por %p326, %p327
    %p329 = scmp.ne.s32.totalorder %s317, %s318
    %p330 = scmp.eq.s32.totalorder %s77, 1
    %p331 = por %p329, %p330
    %p333 = scmp.ne.s32.totalorder %s318, %s332
    %p334 = scmp.eq.s32.totalorder %s77, 0
    %p335 = por %p333, %p334
    %s337 = sadd.s32 %s336, 1
    %p340 = scmp.eq.s32.totalorder %s71, 1
    %p341 = scmp.ne.s32.totalorder %s336, %s338
    %p342 = scmp.eq.s32.totalorder %s71, 0
    %p343 = por %p341, %p342
    %p344 = scmp.ne.s32.totalorder %s336, %s338
    %p345 = scmp.eq.s32.totalorder %s76, 1
    %p346 = por %p344, %p345
    %p347 = scmp.ne.s32.totalorder %s338, %s339
    %p348 = scmp.eq.s32.totalorder %s76, 0
    %p349 = por %p347, %p348
    %p350 = scmp.ne.s32.totalorder %s338, %s339
    %p351 = scmp.eq.s32.totalorder %s77, 1
    %p352 = por %p350, %p351
    %p354 = scmp.ne.s32.totalorder %s339, %s353
    %p355 = scmp.eq.s32.totalorder %s77, 0
    %p356 = por %p354, %p355
    %s358 = sadd.s32 %s357, 1
    %p361 = scmp.eq.s32.totalorder %s71, 1
    %p362 = scmp.ne.s32.totalorder %s357, %s359
    %p363 = scmp.eq.s32.totalorder %s71, 0
    %p364 = por %p362, %p363
    %p365 = scmp.ne.s32.totalorder %s357, %s359
    %p366 = scmp.eq.s32.totalorder %s76, 1
    %p367 = por %p365, %p366
    %p368 = scmp.ne.s32.totalorder %s359, %s360
    %p369 = scmp.eq.s32.totalorder %s76, 0
    %p370 = por %p368, %p369
    %p371 = scmp.ne.s32.totalorder %s359, %s360
    %p372 = scmp.eq.s32.totalorder %s77, 1
    %p373 = por %p371, %p372
    %p375 = scmp.ne.s32.totalorder %s360, %s374
    %p376 = scmp.eq.s32.totalorder %s77, 0
    %p377 = por %p375, %p376
    %s379 = sadd.s32 %s378, 1
    %p382 = scmp.eq.s32.totalorder %s71, 1
    %p383 = scmp.ne.s32.totalorder %s378, %s380
    %p384 = scmp.eq.s32.totalorder %s71, 0
    %p385 = por %p383, %p384
    %p386 = scmp.ne.s32.totalorder %s378, %s380
    %p387 = scmp.eq.s32.totalorder %s76, 1
    %p388 = por %p386, %p387
    %p389 = scmp.ne.s32.totalorder %s380, %s381
    %p390 = scmp.eq.s32.totalorder %s76, 0
    %p391 = por %p389, %p390
    %p392 = scmp.ne.s32.totalorder %s380, %s381
    %p393 = scmp.eq.s32.totalorder %s77, 1
    %p394 = por %p392, %p393
    %p396 = scmp.ne.s32.totalorder %s381, %s395
    %p397 = scmp.eq.s32.totalorder %s77, 0
    %p398 = por %p396, %p397
    %s400 = sadd.s32 %s399, 1
    %p403 = scmp.eq.s32.totalorder %s71, 1
    %p404 = scmp.ne.s32.totalorder %s399, %s401
    %p405 = scmp.eq.s32.totalorder %s71, 0
    %p406 = por %p404, %p405
    %p407 = scmp.ne.s32.totalorder %s399, %s401
    %p408 = scmp.eq.s32.totalorder %s76, 1
    %p409 = por %p407, %p408
    %p410 = scmp.ne.s32.totalorder %s401, %s402
    %p411 = scmp.eq.s32.totalorder %s76, 0
    %p412 = por %p410, %p411
    %p413 = scmp.ne.s32.totalorder %s401, %s402
    %p414 = scmp.eq.s32.totalorder %s77, 1
    %p415 = por %p413, %p414
    %p417 = scmp.ne.s32.totalorder %s402, %s416
    %p418 = scmp.eq.s32.totalorder %s77, 0
    %p419 = por %p417, %p418
    %s421 = sadd.s32 %s420, 1
    %p424 = scmp.eq.s32.totalorder %s71, 1
    %p425 = scmp.ne.s32.totalorder %s420, %s422
    %p426 = scmp.eq.s32.totalorder %s71, 0
    %p427 = por %p425, %p426
    %p428 = scmp.ne.s32.totalorder %s420, %s422
    %p429 = scmp.eq.s32.totalorder %s76, 1
    %p430 = por %p428, %p429
    %p431 = scmp.ne.s32.totalorder %s422, %s423
    %p432 = scmp.eq.s32.totalorder %s76, 0
    %p433 = por %p431, %p432
    %p434 = scmp.ne.s32.totalorder %s422, %s423
    %p435 = scmp.eq.s32.totalorder %s77, 1
    %p436 = por %p434, %p435
    %p438 = scmp.ne.s32.totalorder %s423, %s437
    %p439 = scmp.eq.s32.totalorder %s77, 0
    %p440 = por %p438, %p439
    %s442 = sadd.s32 %s441, 1
    %p445 = scmp.eq.s32.totalorder %s71, 1
    %p446 = scmp.ne.s32.totalorder %s441, %s443
    %p447 = scmp.eq.s32.totalorder %s71, 0
    %p448 = por %p446, %p447
    %p449 = scmp.ne.s32.totalorder %s441, %s443
    %p450 = scmp.eq.s32.totalorder %s76, 1
    %p451 = por %p449, %p450
    %p452 = scmp.ne.s32.totalorder %s443, %s444
    %p453 = scmp.eq.s32.totalorder %s76, 0
    %p454 = por %p452, %p453
    %p455 = scmp.ne.s32.totalorder %s443, %s444
    %p456 = scmp.eq.s32.totalorder %s77, 1
    %p457 = por %p455, %p456
    %p459 = scmp.ne.s32.totalorder %s444, %s458
    %p460 = scmp.eq.s32.totalorder %s77, 0
    %p461 = por %p459, %p460
    %s463 = sadd.s32 %s462, 1
    %p466 = scmp.eq.s32.totalorder %s71, 1
    %p467 = scmp.ne.s32.totalorder %s462, %s464
    %p468 = scmp.eq.s32.totalorder %s71, 0
    %p469 = por %p467, %p468
    %p470 = scmp.ne.s32.totalorder %s462, %s464
    %p471 = scmp.eq.s32.totalorder %s76, 1
    %p472 = por %p470, %p471
    %p473 = scmp.ne.s32.totalorder %s464, %s465
    %p474 = scmp.eq.s32.totalorder %s76, 0
    %p475 = por %p473, %p474
    %p476 = scmp.ne.s32.totalorder %s464, %s465
    %p477 = scmp.eq.s32.totalorder %s77, 1
    %p478 = por %p476, %p477
    %p480 = scmp.ne.s32.totalorder %s465, %s479
    %p481 = scmp.eq.s32.totalorder %s77, 0
    %p482 = por %p480, %p481
    %s484 = sadd.s32 %s483, 1
    %p487 = scmp.eq.s32.totalorder %s71, 1
    %p488 = scmp.ne.s32.totalorder %s483, %s485
    %p489 = scmp.eq.s32.totalorder %s71, 0
    %p490 = por %p488, %p489
    %p491 = scmp.ne.s32.totalorder %s483, %s485
    %p492 = scmp.eq.s32.totalorder %s76, 1
    %p493 = por %p491, %p492
    %p494 = scmp.ne.s32.totalorder %s485, %s486
    %p495 = scmp.eq.s32.totalorder %s76, 0
    %p496 = por %p494, %p495
    %p497 = scmp.ne.s32.totalorder %s485, %s486
    %p498 = scmp.eq.s32.totalorder %s77, 1
    %p499 = por %p497, %p498
    %p501 = scmp.ne.s32.totalorder %s486, %s500
    %p502 = scmp.eq.s32.totalorder %s77, 0
    %p503 = por %p501, %p502
    %s505 = sadd.s32 %s504, 1
    %p508 = scmp.eq.s32.totalorder %s71, 1
    %p509 = scmp.ne.s32.totalorder %s504, %s506
    %p510 = scmp.eq.s32.totalorder %s71, 0
    %p511 = por %p509, %p510
    %p512 = scmp.ne.s32.totalorder %s504, %s506
    %p513 = scmp.eq.s32.totalorder %s76, 1
    %p514 = por %p512, %p513
    %p515 = scmp.ne.s32.totalorder %s506, %s507
    %p516 = scmp.eq.s32.totalorder %s76, 0
    %p517 = por %p515, %p516
    %p518 = scmp.ne.s32.totalorder %s506, %s507
    %p519 = scmp.eq.s32.totalorder %s77, 1
    %p520 = por %p518, %p519
    %p522 = scmp.ne.s32.totalorder %s507, %s521
    %p523 = scmp.eq.s32.totalorder %s77, 0
    %p524 = por %p522, %p523
    %s526 = sadd.s32 %s525, 1
    %p529 = scmp.eq.s32.totalorder %s71, 1
    %p530 = scmp.ne.s32.totalorder %s525, %s527
    %p531 = scmp.eq.s32.totalorder %s71, 0
    %p532 = por %p530, %p531
    %p533 = scmp.ne.s32.totalorder %s525, %s527
    %p534 = scmp.eq.s32.totalorder %s76, 1
    %p535 = por %p533, %p534
    %p536 = scmp.ne.s32.totalorder %s527, %s528
    %p537 = scmp.eq.s32.totalorder %s76, 0
    %p538 = por %p536, %p537
    %p539 = scmp.ne.s32.totalorder %s527, %s528
    %p540 = scmp.eq.s32.totalorder %s77, 1
    %p541 = por %p539, %p540
    %p543 = scmp.ne.s32.totalorder %s528, %s542
    %p544 = scmp.eq.s32.totalorder %s77, 0
    %p545 = por %p543, %p544
    %s547 = sadd.s32 %s546, 1
    %p550 = scmp.eq.s32.totalorder %s71, 1
    %p551 = scmp.ne.s32.totalorder %s546, %s548
    %p552 = scmp.eq.s32.totalorder %s71, 0
    %p553 = por %p551, %p552
    %p554 = scmp.ne.s32.totalorder %s546, %s548
    %p555 = scmp.eq.s32.totalorder %s76, 1
    %p556 = por %p554, %p555
    %p557 = scmp.ne.s32.totalorder %s548, %s549
    %p558 = scmp.eq.s32.totalorder %s76, 0
    %p559 = por %p557, %p558
    %p560 = scmp.ne.s32.totalorder %s548, %s549
    %p561 = scmp.eq.s32.totalorder %s77, 1
    %p562 = por %p560, %p561
    %p564 = scmp.ne.s32.totalorder %s549, %s563
    %p565 = scmp.eq.s32.totalorder %s77, 0
    %p566 = por %p564, %p565
    %s568 = sadd.s32 %s567, 1
    %p571 = scmp.eq.s32.totalorder %s71, 1
    %p572 = scmp.ne.s32.totalorder %s567, %s569
    %p573 = scmp.eq.s32.totalorder %s71, 0
    %p574 = por %p572, %p573
    %p575 = scmp.ne.s32.totalorder %s567, %s569
    %p576 = scmp.eq.s32.totalorder %s76, 1
    %p577 = por %p575, %p576
    %p578 = scmp.ne.s32.totalorder %s569, %s570
    %p579 = scmp.eq.s32.totalorder %s76, 0
    %p580 = por %p578, %p579
    %p581 = scmp.ne.s32.totalorder %s569, %s570
    %p582 = scmp.eq.s32.totalorder %s77, 1
    %p583 = por %p581, %p582
    %p585 = scmp.ne.s32.totalorder %s570, %s584
    %p586 = scmp.eq.s32.totalorder %s77, 0
    %p587 = por %p585, %p586
    %s589 = sadd.s32 %s588, 1
    %p592 = scmp.eq.s32.totalorder %s71, 1
    %p593 = scmp.ne.s32.totalorder %s588, %s590
    %p594 = scmp.eq.s32.totalorder %s71, 0
    %p595 = por %p593, %p594
    %p596 = scmp.ne.s32.totalorder %s588, %s590
    %p597 = scmp.eq.s32.totalorder %s76, 1
    %p598 = por %p596, %p597
    %p599 = scmp.ne.s32.totalorder %s590, %s591
    %p600 = scmp.eq.s32.totalorder %s76, 0
    %p601 = por %p599, %p600
    %p602 = scmp.ne.s32.totalorder %s590, %s591
    %p603 = scmp.eq.s32.totalorder %s77, 1
    %p604 = por %p602, %p603
    %p606 = scmp.ne.s32.totalorder %s591, %s605
    %p607 = scmp.eq.s32.totalorder %s77, 0
    %p608 = por %p606, %p607
    %s610 = sadd.s32 %s609, 1
    %p613 = scmp.eq.s32.totalorder %s71, 1
    %p614 = scmp.ne.s32.totalorder %s609, %s611
    %p615 = scmp.eq.s32.totalorder %s71, 0
    %p616 = por %p614, %p615
    %p617 = scmp.ne.s32.totalorder %s609, %s611
    %p618 = scmp.eq.s32.totalorder %s76, 1
    %p619 = por %p617, %p618
    %p620 = scmp.ne.s32.totalorder %s611, %s612
    %p621 = scmp.eq.s32.totalorder %s76, 0
    %p622 = por %p620, %p621
    %p623 = scmp.ne.s32.totalorder %s611, %s612
    %p624 = scmp.eq.s32.totalorder %s77, 1
    %p625 = por %p623, %p624
    %p627 = scmp.ne.s32.totalorder %s612, %s626
    %p628 = scmp.eq.s32.totalorder %s77, 0
    %p629 = por %p627, %p628
    %s631 = sadd.s32 %s630, 1
    %p634 = scmp.eq.s32.totalorder %s71, 1
    %p635 = scmp.ne.s32.totalorder %s630, %s632
    %p636 = scmp.eq.s32.totalorder %s71, 0
    %p637 = por %p635, %p636
    %p638 = scmp.ne.s32.totalorder %s630, %s632
    %p639 = scmp.eq.s32.totalorder %s76, 1
    %p640 = por %p638, %p639
    %p641 = scmp.ne.s32.totalorder %s632, %s633
    %p642 = scmp.eq.s32.totalorder %s76, 0
    %p643 = por %p641, %p642
    %p644 = scmp.ne.s32.totalorder %s632, %s633
    %p645 = scmp.eq.s32.totalorder %s77, 1
    %p646 = por %p644, %p645
    %p648 = scmp.ne.s32.totalorder %s633, %s647
    %p649 = scmp.eq.s32.totalorder %s77, 0
    %p650 = por %p648, %p649
    %s652 = sadd.s32 %s651, 1
    %p655 = scmp.eq.s32.totalorder %s71, 1
    %p656 = scmp.ne.s32.totalorder %s651, %s653
    %p657 = scmp.eq.s32.totalorder %s71, 0
    %p658 = por %p656, %p657
    %p659 = scmp.ne.s32.totalorder %s651, %s653
    %p660 = scmp.eq.s32.totalorder %s76, 1
    %p661 = por %p659, %p660
    %p662 = scmp.ne.s32.totalorder %s653, %s654
    %p663 = scmp.eq.s32.totalorder %s76, 0
    %p664 = por %p662, %p663
    %p665 = scmp.ne.s32.totalorder %s653, %s654
    %p666 = scmp.eq.s32.totalorder %s77, 1
    %p667 = por %p665, %p666
    %p669 = scmp.ne.s32.totalorder %s654, %s668
    %p670 = scmp.eq.s32.totalorder %s77, 0
    %p671 = por %p669, %p670
    %s673 = sadd.s32 %s672, 1
    %p676 = scmp.eq.s32.totalorder %s71, 1
    %p677 = scmp.ne.s32.totalorder %s672, %s674
    %p678 = scmp.eq.s32.totalorder %s71, 0
    %p679 = por %p677, %p678
    %p680 = scmp.ne.s32.totalorder %s672, %s674
    %p681 = scmp.eq.s32.totalorder %s76, 1
    %p682 = por %p680, %p681
    %p683 = scmp.ne.s32.totalorder %s674, %s675
    %p684 = scmp.eq.s32.totalorder %s76, 0
    %p685 = por %p683, %p684
    %p686 = scmp.ne.s32.totalorder %s674, %s675
    %p687 = scmp.eq.s32.totalorder %s77, 1
    %p688 = por %p686, %p687
    %p690 = scmp.ne.s32.totalorder %s675, %s689
    %p691 = scmp.eq.s32.totalorder %s77, 0
    %p692 = por %p690, %p691
    %s694 = sadd.s32 %s693, 1
    %p697 = scmp.eq.s32.totalorder %s71, 1
    %p698 = scmp.ne.s32.totalorder %s693, %s695
    %p699 = scmp.eq.s32.totalorder %s71, 0
    %p700 = por %p698, %p699
    %p701 = scmp.ne.s32.totalorder %s693, %s695
    %p702 = scmp.eq.s32.totalorder %s76, 1
    %p703 = por %p701, %p702
    %p704 = scmp.ne.s32.totalorder %s695, %s696
    %p705 = scmp.eq.s32.totalorder %s76, 0
    %p706 = por %p704, %p705
    %p707 = scmp.ne.s32.totalorder %s695, %s696
    %p708 = scmp.eq.s32.totalorder %s77, 1
    %p709 = por %p707, %p708
    %p711 = scmp.ne.s32.totalorder %s696, %s710
    %p712 = scmp.eq.s32.totalorder %s77, 0
    %p713 = por %p711, %p712
    %s715 = sadd.s32 %s714, 1
    %p718 = scmp.eq.s32.totalorder %s71, 1
    %p719 = scmp.ne.s32.totalorder %s714, %s716
    %p720 = scmp.eq.s32.totalorder %s71, 0
    %p721 = por %p719, %p720
    %p722 = scmp.ne.s32.totalorder %s714, %s716
    %p723 = scmp.eq.s32.totalorder %s76, 1
    %p724 = por %p722, %p723
    %p725 = scmp.ne.s32.totalorder %s716, %s717
    %p726 = scmp.eq.s32.totalorder %s76, 0
    %p727 = por %p725, %p726
    %p728 = scmp.ne.s32.totalorder %s716, %s717
    %p729 = scmp.eq.s32.totalorder %s77, 1
    %p730 = por %p728, %p729
    %p732 = scmp.ne.s32.totalorder %s717, %s731
    %p733 = scmp.eq.s32.totalorder %s77, 0
    %p734 = por %p732, %p733
    %s736 = sadd.s32 %s735, 1
    %p739 = scmp.eq.s32.totalorder %s71, 1
    %p740 = scmp.ne.s32.totalorder %s735, %s737
    %p741 = scmp.eq.s32.totalorder %s71, 0
    %p742 = por %p740, %p741
    %p743 = scmp.ne.s32.totalorder %s735, %s737
    %p744 = scmp.eq.s32.totalorder %s76, 1
    %p745 = por %p743, %p744
    %p746 = scmp.ne.s32.totalorder %s737, %s738
    %p747 = scmp.eq.s32.totalorder %s76, 0
    %p748 = por %p746, %p747
    %p749 = scmp.ne.s32.totalorder %s737, %s738
    %p750 = scmp.eq.s32.totalorder %s77, 1
    %p751 = por %p749, %p750
    %p753 = scmp.ne.s32.totalorder %s738, %s752
    %p754 = scmp.eq.s32.totalorder %s77, 0
    %p755 = por %p753, %p754
    %s756 = ssub.s32 %s71, %s78
    %p757 = scmp.eq.s32.totalorder %s756, 0
    %s759 = sadd.s32 %s758, 1
    %s760 = scalar_select %p757, %s758, %s759
    %p763 = pneg %p757
    %p764 = scmp.eq.s32.totalorder %s71, 1
    %p765 = por %p763, %p764
    %p766 = scmp.ne.s32.totalorder %s758, %s761
    %p767 = scmp.eq.s32.totalorder %s71, 0
    %p768 = por %p766, %p767
    %p769 = scmp.ne.s32.totalorder %s758, %s761
    %p770 = scmp.eq.s32.totalorder %s76, 1
    %p771 = por %p769, %p770
    %p772 = scmp.ne.s32.totalorder %s761, %s762
    %p773 = scmp.eq.s32.totalorder %s76, 0
    %p774 = por %p772, %p773
    %p775 = scmp.ne.s32.totalorder %s761, %s762
    %p776 = scmp.eq.s32.totalorder %s77, 1
    %p777 = por %p775, %p776
    %p779 = scmp.ne.s32.totalorder %s762, %s778
    %p780 = scmp.eq.s32.totalorder %s77, 0
    %p781 = por %p779, %p780
    %p782 = scmp.le.s32.totalorder 1, %s71
    %p783 = scmp.lt.s32.totalorder %s71, 3
    %p784 = pnand %p782, %p783
    %p785 = pneg %p784
    // Predicated region
    $region9: #{forward.1} parent=5 // pred_check
      _
    $region10: #{forward.1} parent=5 // pred_check_branch
      %787 = sbr.rel (%p784) target = $region12
    $region11: #{forward.1} parent=5 // pred_region
      %s788 = ssub.s32 %s71, 1
      // Predicated region
      $region13: #{forward.1} parent=11 // pred_check
        %p789 = pneg %p118
      $region14: #{forward.1} parent=11 // pred_check_branch
        %791 = sbr.rel (%p789) target = $region16
      $region15: #{forward.1} parent=11 // pred_region
        _
      $region16: #{forward.1} parent=11 // pred_fallthru
        _
      // Predicated region
      $region17: #{forward.1} parent=11 // pred_check
        %p792 = pneg %p139
      $region18: #{forward.1} parent=11 // pred_check_branch
        %794 = sbr.rel (%p792) target = $region20
      $region19: #{forward.1} parent=11 // pred_region
        _
      $region20: #{forward.1} parent=11 // pred_fallthru
        _
      // Predicated region
      $region21: #{forward.1} parent=11 // pred_check
        %p795 = pneg %p160
      $region22: #{forward.1} parent=11 // pred_check_branch
        %797 = sbr.rel (%p795) target = $region24
      $region23: #{forward.1} parent=11 // pred_region
        _
      $region24: #{forward.1} parent=11 // pred_fallthru
        _
      // Predicated region
      $region25: #{forward.1} parent=11 // pred_check
        %p798 = pneg %p181
      $region26: #{forward.1} parent=11 // pred_check_branch
        %800 = sbr.rel (%p798) target = $region28
      $region27: #{forward.1} parent=11 // pred_region
        _
      $region28: #{forward.1} parent=11 // pred_fallthru
        _
      // Predicated region
      $region29: #{forward.1} parent=11 // pred_check
        %p801 = pneg %p202
      $region30: #{forward.1} parent=11 // pred_check_branch
        %803 = sbr.rel (%p801) target = $region32
      $region31: #{forward.1} parent=11 // pred_region
        _
      $region32: #{forward.1} parent=11 // pred_fallthru
        _
      // Predicated region
      $region33: #{forward.1} parent=11 // pred_check
        %p804 = pneg %p223
      $region34: #{forward.1} parent=11 // pred_check_branch
        %806 = sbr.rel (%p804) target = $region36
      $region35: #{forward.1} parent=11 // pred_region
        _
      $region36: #{forward.1} parent=11 // pred_fallthru
        _
      // Predicated region
      $region37: #{forward.1} parent=11 // pred_check
        %p807 = pneg %p244
      $region38: #{forward.1} parent=11 // pred_check_branch
        %809 = sbr.rel (%p807) target = $region40
      $region39: #{forward.1} parent=11 // pred_region
        _
      $region40: #{forward.1} parent=11 // pred_fallthru
        _
      // Predicated region
      $region41: #{forward.1} parent=11 // pred_check
        %p810 = pneg %p265
      $region42: #{forward.1} parent=11 // pred_check_branch
        %812 = sbr.rel (%p810) target = $region44
      $region43: #{forward.1} parent=11 // pred_region
        _
      $region44: #{forward.1} parent=11 // pred_fallthru
        _
      // Predicated region
      $region45: #{forward.1} parent=11 // pred_check
        %p813 = pneg %p286
      $region46: #{forward.1} parent=11 // pred_check_branch
        %815 = sbr.rel (%p813) target = $region48
      $region47: #{forward.1} parent=11 // pred_region
        _
      $region48: #{forward.1} parent=11 // pred_fallthru
        _
      // Predicated region
      $region49: #{forward.1} parent=11 // pred_check
        %p816 = pneg %p307
      $region50: #{forward.1} parent=11 // pred_check_branch
        %818 = sbr.rel (%p816) target = $region52
      $region51: #{forward.1} parent=11 // pred_region
        _
      $region52: #{forward.1} parent=11 // pred_fallthru
        _
      // Predicated region
      $region53: #{forward.1} parent=11 // pred_check
        %p819 = pneg %p328
      $region54: #{forward.1} parent=11 // pred_check_branch
        %821 = sbr.rel (%p819) target = $region56
      $region55: #{forward.1} parent=11 // pred_region
        _
      $region56: #{forward.1} parent=11 // pred_fallthru
        _
      // Predicated region
      $region57: #{forward.1} parent=11 // pred_check
        %p822 = pneg %p349
      $region58: #{forward.1} parent=11 // pred_check_branch
        %824 = sbr.rel (%p822) target = $region60
      $region59: #{forward.1} parent=11 // pred_region
        _
      $region60: #{forward.1} parent=11 // pred_fallthru
        _
      // Predicated region
      $region61: #{forward.1} parent=11 // pred_check
        %p825 = pneg %p370
      $region62: #{forward.1} parent=11 // pred_check_branch
        %827 = sbr.rel (%p825) target = $region64
      $region63: #{forward.1} parent=11 // pred_region
        _
      $region64: #{forward.1} parent=11 // pred_fallthru
        _
      // Predicated region
      $region65: #{forward.1} parent=11 // pred_check
        %p828 = pneg %p391
      $region66: #{forward.1} parent=11 // pred_check_branch
        %830 = sbr.rel (%p828) target = $region68
      $region67: #{forward.1} parent=11 // pred_region
        _
      $region68: #{forward.1} parent=11 // pred_fallthru
        _
      // Predicated region
      $region69: #{forward.1} parent=11 // pred_check
        %p831 = pneg %p412
      $region70: #{forward.1} parent=11 // pred_check_branch
        %833 = sbr.rel (%p831) target = $region72
      $region71: #{forward.1} parent=11 // pred_region
        _
      $region72: #{forward.1} parent=11 // pred_fallthru
        _
      // Predicated region
      $region73: #{forward.1} parent=11 // pred_check
        %p834 = pneg %p433
      $region74: #{forward.1} parent=11 // pred_check_branch
        %836 = sbr.rel (%p834) target = $region76
      $region75: #{forward.1} parent=11 // pred_region
        _
      $region76: #{forward.1} parent=11 // pred_fallthru
        _
      // Predicated region
      $region77: #{forward.1} parent=11 // pred_check
        %p837 = pneg %p454
      $region78: #{forward.1} parent=11 // pred_check_branch
        %839 = sbr.rel (%p837) target = $region80
      $region79: #{forward.1} parent=11 // pred_region
        _
      $region80: #{forward.1} parent=11 // pred_fallthru
        _
      // Predicated region
      $region81: #{forward.1} parent=11 // pred_check
        %p840 = pneg %p475
      $region82: #{forward.1} parent=11 // pred_check_branch
        %842 = sbr.rel (%p840) target = $region84
      $region83: #{forward.1} parent=11 // pred_region
        _
      $region84: #{forward.1} parent=11 // pred_fallthru
        _
      // Predicated region
      $region85: #{forward.1} parent=11 // pred_check
        %p843 = pneg %p496
      $region86: #{forward.1} parent=11 // pred_check_branch
        %845 = sbr.rel (%p843) target = $region88
      $region87: #{forward.1} parent=11 // pred_region
        _
      $region88: #{forward.1} parent=11 // pred_fallthru
        _
      // Predicated region
      $region89: #{forward.1} parent=11 // pred_check
        %p846 = pneg %p517
      $region90: #{forward.1} parent=11 // pred_check_branch
        %848 = sbr.rel (%p846) target = $region92
      $region91: #{forward.1} parent=11 // pred_region
        _
      $region92: #{forward.1} parent=11 // pred_fallthru
        _
      // Predicated region
      $region93: #{forward.1} parent=11 // pred_check
        %p849 = pneg %p538
      $region94: #{forward.1} parent=11 // pred_check_branch
        %851 = sbr.rel (%p849) target = $region96
      $region95: #{forward.1} parent=11 // pred_region
        _
      $region96: #{forward.1} parent=11 // pred_fallthru
        _
      // Predicated region
      $region97: #{forward.1} parent=11 // pred_check
        %p852 = pneg %p559
      $region98: #{forward.1} parent=11 // pred_check_branch
        %854 = sbr.rel (%p852) target = $region100
      $region99: #{forward.1} parent=11 // pred_region
        _
      $region100: #{forward.1} parent=11 // pred_fallthru
        _
      // Predicated region
      $region101: #{forward.1} parent=11 // pred_check
        %p855 = pneg %p580
      $region102: #{forward.1} parent=11 // pred_check_branch
        %857 = sbr.rel (%p855) target = $region104
      $region103: #{forward.1} parent=11 // pred_region
        _
      $region104: #{forward.1} parent=11 // pred_fallthru
        _
      // Predicated region
      $region105: #{forward.1} parent=11 // pred_check
        %p858 = pneg %p601
      $region106: #{forward.1} parent=11 // pred_check_branch
        %860 = sbr.rel (%p858) target = $region108
      $region107: #{forward.1} parent=11 // pred_region
        _
      $region108: #{forward.1} parent=11 // pred_fallthru
        _
      // Predicated region
      $region109: #{forward.1} parent=11 // pred_check
        %p861 = pneg %p622
      $region110: #{forward.1} parent=11 // pred_check_branch
        %863 = sbr.rel (%p861) target = $region112
      $region111: #{forward.1} parent=11 // pred_region
        _
      $region112: #{forward.1} parent=11 // pred_fallthru
        _
      // Predicated region
      $region113: #{forward.1} parent=11 // pred_check
        %p864 = pneg %p643
      $region114: #{forward.1} parent=11 // pred_check_branch
        %866 = sbr.rel (%p864) target = $region116
      $region115: #{forward.1} parent=11 // pred_region
        _
      $region116: #{forward.1} parent=11 // pred_fallthru
        _
      // Predicated region
      $region117: #{forward.1} parent=11 // pred_check
        %p867 = pneg %p664
      $region118: #{forward.1} parent=11 // pred_check_branch
        %869 = sbr.rel (%p867) target = $region120
      $region119: #{forward.1} parent=11 // pred_region
        _
      $region120: #{forward.1} parent=11 // pred_fallthru
        _
      // Predicated region
      $region121: #{forward.1} parent=11 // pred_check
        %p870 = pneg %p685
      $region122: #{forward.1} parent=11 // pred_check_branch
        %872 = sbr.rel (%p870) target = $region124
      $region123: #{forward.1} parent=11 // pred_region
        _
      $region124: #{forward.1} parent=11 // pred_fallthru
        _
      // Predicated region
      $region125: #{forward.1} parent=11 // pred_check
        %p873 = pneg %p706
      $region126: #{forward.1} parent=11 // pred_check_branch
        %875 = sbr.rel (%p873) target = $region128
      $region127: #{forward.1} parent=11 // pred_region
        _
      $region128: #{forward.1} parent=11 // pred_fallthru
        _
      // Predicated region
      $region129: #{forward.1} parent=11 // pred_check
        %p876 = pneg %p727
      $region130: #{forward.1} parent=11 // pred_check_branch
        %878 = sbr.rel (%p876) target = $region132
      $region131: #{forward.1} parent=11 // pred_region
        _
      $region132: #{forward.1} parent=11 // pred_fallthru
        _
      // Predicated region
      $region133: #{forward.1} parent=11 // pred_check
        %p879 = pneg %p748
      $region134: #{forward.1} parent=11 // pred_check_branch
        %881 = sbr.rel (%p879) target = $region136
      $region135: #{forward.1} parent=11 // pred_region
        _
      $region136: #{forward.1} parent=11 // pred_fallthru
        _
    $region12: #{forward.1} parent=5 // pred_fallthru
      _
    %p882 = scmp.lt.s32.totalorder %s71, 2
    // Predicated region
    $region137: #{forward.1} parent=5 // pred_check
      %p883 = pneg %p882
    $region138: #{forward.1} parent=5 // pred_check_branch
      %885 = sbr.rel (%p883) target = $region140
    $region139: #{forward.1} parent=5 // pred_region
      // Predicated region
      $region141: #{forward.1} parent=139 // pred_check
        %p886 = pneg %p91
      $region142: #{forward.1} parent=139 // pred_check_branch
        %888 = sbr.rel (%p886) target = $region144
      $region143: #{forward.1} parent=139 // pred_region
        %p889 = scmp.lt.s32.totalorder %s71, 1
        %s890 = scalar_select %p889, %s71, 1
        %s891 = smul.addr %s890, 13
        %s892 = smul.addr %s891, 4
        %s893 = scalar_lea.vmem %s1, %s892
      $region144: #{forward.1} parent=139 // pred_fallthru
        _
    $region140: #{forward.1} parent=5 // pred_fallthru
      _
    %p894 = scmp.le.s32.totalorder 1, %s71
    %p895 = scmp.lt.s32.totalorder %s71, 3
    %p896 = pnand %p894, %p895
    %p897 = pneg %p896
    // Predicated region
    $region145: #{forward.1} parent=5 // pred_check
      _
    $region146: #{forward.1} parent=5 // pred_check_branch
      %899 = sbr.rel (%p896) target = $region148
    $region147: #{forward.1} parent=5 // pred_region
      %s900 = ssub.s32 %s71, 1
      %p901 = scmp.lt.s32.totalorder %s76, 1
      %s902 = scalar_select %p901, %s76, 1
      %s903 = smul.addr %s902, 13
      %s904 = smul.addr %s903, 4
      %s905 = scalar_lea.vmem %s1, %s904
      %p906 = pneg %p97
      %p907 = pneg %p94
      %p908 = pneg %p118
      %p909 = pneg %p115
      %p910 = pneg %p139
      %p911 = pneg %p136
      %p912 = pneg %p160
      %p913 = pneg %p157
      %p914 = pneg %p181
      %p915 = pneg %p178
      %p916 = pneg %p202
      %p917 = pneg %p199
      %p918 = pneg %p223
      %p919 = pneg %p220
      %p920 = pneg %p244
      %p921 = pneg %p241
      %p922 = pneg %p265
      %p923 = pneg %p262
      %p924 = pneg %p286
      %p925 = pneg %p283
      %p926 = pneg %p307
      %p927 = pneg %p304
      %p928 = pneg %p328
      %p929 = pneg %p325
      %p930 = pneg %p349
      %p931 = pneg %p346
      %p932 = pneg %p370
      %p933 = pneg %p367
      %p934 = pneg %p391
      %p935 = pneg %p388
      %p936 = pneg %p412
      %p937 = pneg %p409
      %p938 = pneg %p433
      %p939 = pneg %p430
      %p940 = pneg %p454
      %p941 = pneg %p451
      %p942 = pneg %p475
      %p943 = pneg %p472
      %p944 = pneg %p496
      %p945 = pneg %p493
      %p946 = pneg %p517
      %p947 = pneg %p514
      %p948 = pneg %p538
      %p949 = pneg %p535
      %p950 = pneg %p559
      %p951 = pneg %p556
      %p952 = pneg %p580
      %p953 = pneg %p577
      %p954 = pneg %p601
      %p955 = pneg %p598
      %p956 = pneg %p622
      %p957 = pneg %p619
      %p958 = pneg %p643
      %p959 = pneg %p640
      %p960 = pneg %p664
      %p961 = pneg %p661
      %p962 = pneg %p685
      %p963 = pneg %p682
      %p964 = pneg %p706
      %p965 = pneg %p703
      %p966 = pneg %p727
      %p967 = pneg %p724
      %p968 = pneg %p748
      %p969 = pneg %p745
      %p970 = pneg %p774
      %p971 = pneg %p771
      %p972 = scmp.lt.s32.totalorder %s76, 1
      %s973 = scalar_select %p972, %s76, 1
      %s974 = smul.addr %s973, 8
      %s975 = smul.addr %s974, 8
      %s976 = scalar_lea.vmem %s65, %s975
      %p977 = scmp.lt.s32.totalorder %s76, 1
      %s978 = scalar_select %p977, %s76, 1
      %s979 = smul.addr %s978, 13
      %s980 = smul.addr %s979, 4
      %s981 = scalar_lea.vmem %s1, %s980
      %p982 = scmp.lt.s32.totalorder %s76, 1
      %s983 = scalar_select %p982, %s76, 1
      %s984 = smul.addr %s983, 8
      %s985 = smul.addr %s984, 8
      %s986 = scalar_lea.vmem %s65, %s985
      %988 = vst [vmem:[#allocation2] sm:$0xf] 0
      %989 = vst [vmem:[#allocation2 + $0x4] sm:$0xf] 0
      %990 = vst [vmem:[#allocation2 + $0x8] sm:$0xf] 0
      %991 = vst [vmem:[#allocation2 + $0xc] sm:$0xf] 0
      %992 = vst [vmem:[#allocation2 + $0x10] sm:$0xf] 0
      %993 = vst [vmem:[#allocation2 + $0x14] sm:$0xf] 0
      %994 = vst [vmem:[#allocation2 + $0x18] sm:$0xf] 0
      %995 = vst [vmem:[#allocation2 + $0x1c] sm:$0xf] 0
      %996 = vst [vmem:[#allocation2 + $0x20] sm:$0xf] 0
      %997 = vst [vmem:[#allocation2 + $0x24] sm:$0xf] 0
      %998 = vst [vmem:[#allocation2 + $0x28] sm:$0xf] 0
      %999 = vst [vmem:[#allocation2 + $0x2c] sm:$0xf] 0
      %1000 = vst [vmem:[#allocation2 + $0x30] sm:$0x3] 0
      %vm1001 = vcmask 257024
      %1002 = vst.msk [vmem:[#allocation3] sm:$0xf] %vm1001, 0
      %1003 = vst.msk [vmem:[#allocation3 + $0x4] sm:$0xf] %vm1001, 0
      %1004 = vst.msk [vmem:[#allocation3 + $0x8] sm:$0xf] %vm1001, 0
      %1005 = vst.msk [vmem:[#allocation3 + $0xc] sm:$0xf] %vm1001, 0
      %1006 = vst.msk [vmem:[#allocation3 + $0x10] sm:$0xf] %vm1001, 0
      %1007 = vst.msk [vmem:[#allocation3 + $0x14] sm:$0xf] %vm1001, 0
      %1008 = vst.msk [vmem:[#allocation3 + $0x18] sm:$0xf] %vm1001, 0
      %1009 = vst.msk [vmem:[#allocation3 + $0x1c] sm:$0xf] %vm1001, 0
      %1010 = vst.msk [vmem:[#allocation3 + $0x20] sm:$0xf] %vm1001, 0
      %1011 = vst.msk [vmem:[#allocation3 + $0x24] sm:$0xf] %vm1001, 0
      %1012 = vst.msk [vmem:[#allocation3 + $0x28] sm:$0xf] %vm1001, 0
      %1013 = vst.msk [vmem:[#allocation3 + $0x2c] sm:$0xf] %vm1001, 0
      %vm1014 = vcmask 254976
      %1015 = vst.msk [vmem:[#allocation3 + $0x30] sm:$0x3] %vm1014, 0
      %1016 = vst [vmem:[#allocation5] sm:$0xf] 0
      %1017 = vst [vmem:[#allocation5 + $0x4] sm:$0xf] 0
      %1018 = vst [vmem:[#allocation5 + $0x8] sm:$0xf] 0
      %1019 = vst [vmem:[#allocation5 + $0xc] sm:$0xf] 0
      %1020 = vst [vmem:[#allocation5 + $0x10] sm:$0x3] 0
      %vm1021 = vcmask 519168
      %1022 = vst.msk [vmem:[#allocation6] sm:$0xf] %vm1021, 0
      %1023 = vst.msk [vmem:[#allocation6 + $0x4] sm:$0xf] %vm1021, 0
      %1024 = vst.msk [vmem:[#allocation6 + $0x8] sm:$0xf] %vm1021, 0
      %1025 = vst.msk [vmem:[#allocation6 + $0xc] sm:$0xf] %vm1021, 0
      %vm1026 = vcmask 517120
      %1027 = vst.msk [vmem:[#allocation6 + $0x10] sm:$0x3] %vm1026, 0
      %1028 = vst.msk [vmem:[#allocation7] sm:$0xf] %vm1021, 0
      %1029 = vst.msk [vmem:[#allocation7 + $0x4] sm:$0xf] %vm1021, 0
      %1030 = vst.msk [vmem:[#allocation7 + $0x8] sm:$0xf] %vm1021, 0
      %1031 = vst.msk [vmem:[#allocation7 + $0xc] sm:$0xf] %vm1021, 0
      %1032 = vst.msk [vmem:[#allocation7 + $0x10] sm:$0xf] %vm1021, 0
      %1033 = vst.msk [vmem:[#allocation7 + $0x14] sm:$0xf] %vm1021, 0
      %1034 = vst.msk [vmem:[#allocation7 + $0x18] sm:$0xf] %vm1021, 0
      %1035 = vst.msk [vmem:[#allocation7 + $0x1c] sm:$0xf] %vm1021, 0
      %1036 = vst.msk [vmem:[#allocation7 + $0x20] sm:$0xf] %vm1021, 0
      %1037 = vst.msk [vmem:[#allocation7 + $0x24] sm:$0xf] %vm1021, 0
      %1038 = vst.msk [vmem:[#allocation7 + $0x28] sm:$0xf] %vm1021, 0
      %1039 = vst.msk [vmem:[#allocation7 + $0x2c] sm:$0xf] %vm1021, 0
      %1040 = vst.msk [vmem:[#allocation7 + $0x30] sm:$0x3] %vm1026, 0
      %v1041 = vld [vmem:[%s61] sm:$0xff]
      %v1042 = vld [vmem:[%s61 + $0x8] sm:$0xff]
      %v1043 = vld [vmem:[%s61 + $0x10] sm:$0xff]
      %v1044 = vld [vmem:[%s61 + $0x18] sm:$0xff]
      %v1045 = vld [vmem:[%s61 + $0x20] sm:$0xff]
      %v1046 = vld [vmem:[%s61 + $0x28] sm:$0xff]
      %v1047 = vld [vmem:[%s61 + $0x30] sm:$0xff]
      %v1048 = vld [vmem:[%s61 + $0x38] sm:$0xff]
      %v1049 = vld [vmem:[%s61 + $0x40] sm:$0xff]
      %v1050 = vld [vmem:[%s61 + $0x48] sm:$0x3f]
      %v1051 = vld [vmem:[%s63] sm:$0xff]
      %v1052 = vld [vmem:[%s63 + $0x8] sm:$0xff]
      %v1053 = vld [vmem:[%s63 + $0x10] sm:$0x3f]
      %v1054 = vld [vmem:[%s981 + $0x4] sm:$0xe]
      %v1055 = vld [vmem:[%s981 + $0x8] sm:$0xf]
      %v1056 = vld [vmem:[%s981 + $0xc] sm:$0xf]
      %v1057 = vld [vmem:[%s981 + $0x10] sm:$0xf]
      %v1058 = vld [vmem:[%s981 + $0x14] sm:$0xf]
      %v1059 = vld [vmem:[%s981 + $0x18] sm:$0xf]
      %v1060 = vld [vmem:[%s981 + $0x1c] sm:$0xf]
      %v1061 = vld [vmem:[%s981 + $0x20] sm:$0xf]
      %v1062 = vld [vmem:[%s981 + $0x24] sm:$0xf]
      %v1063 = vld [vmem:[%s981 + $0x28] sm:$0xf]
      %v1064 = vld [vmem:[%s981 + $0x2c] sm:$0x1]
      %v1065 = vld [vmem:[%s3] sm:$0xf]
      %v1066 = vld [vmem:[%s3 + $0x4] sm:$0xf]
      %v1067 = vld [vmem:[%s3 + $0x8] sm:$0xf]
      %v1068 = vld [vmem:[%s3 + $0xc] sm:$0xf]
      %v1080 = vunpack.c.l.b16 %v1054
      %v1081 = vunpack.c.l.b16 %v1055
      %v1082 = vunpack.c.l.b16 %v1056
      %v1083 = vunpack.c.l.b16 %v1057
      %v1084 = vunpack.c.l.b16 %v1058
      %v1085 = vunpack.c.l.b16 %v1059
      %v1086 = vunpack.c.l.b16 %v1060
      %v1087 = vunpack.c.l.b16 %v1061
      %v1088 = vunpack.c.l.b16 %v1062
      %v1089 = vunpack.c.l.b16 %v1063
      %v1090 = vunpack.c.l.b16 %v1064
      %v1091 = vpack.c.b16 %v1081, %v1080
      %v1092 = vpack.c.b16 %v1083, %v1082
      %v1093 = vpack.c.b16 %v1085, %v1084
      %v1094 = vpack.c.b16 %v1087, %v1086
      %v1095 = vpack.c.b16 %v1089, %v1088
      %v1096 = vpack.c.b16 %v1090, %v1090
      %vm1097 = vsmask.f32 6400
      %v1099 = vshrl.u32 %v1091, 16
      %v1101 = vrot.slane %v1099, 1
      %v1102 = vshll.u32 %v1091, 16
      %v1104 = vrot.slane %v1102, 2
      %v1105 = vor.u32 %v1101, %v1104
      %v1107 = vshrl.u32 %v1092, 16
      %v1109 = vrot.slane %v1107, 1
      %v1110 = vshll.u32 %v1092, 16
      %v1112 = vrot.slane %v1110, 2
      %v1113 = vor.u32 %v1109, %v1112
      %v1114 = vsel %vm1097, %v1105, %v1113
      %v1116 = vshrl.u32 %v1093, 16
      %v1118 = vrot.slane %v1116, 1
      %v1119 = vshll.u32 %v1093, 16
      %v1121 = vrot.slane %v1119, 2
      %v1122 = vor.u32 %v1118, %v1121
      %v1123 = vsel %vm1097, %v1113, %v1122
      %v1125 = vshrl.u32 %v1094, 16
      %v1127 = vrot.slane %v1125, 1
      %v1128 = vshll.u32 %v1094, 16
      %v1130 = vrot.slane %v1128, 2
      %v1131 = vor.u32 %v1127, %v1130
      %v1132 = vsel %vm1097, %v1122, %v1131
      %v1134 = vshrl.u32 %v1095, 16
      %v1136 = vrot.slane %v1134, 1
      %v1137 = vshll.u32 %v1095, 16
      %v1139 = vrot.slane %v1137, 2
      %v1140 = vor.u32 %v1136, %v1139
      %v1141 = vsel %vm1097, %v1131, %v1140
      %v1143 = vshll.u32 %v1096, 16
      %v1145 = vrot.slane %v1143, 2
      %v1146 = vsel %vm1097, %v1140, %v1145
      %v1151 = vunpack.c.l.b16 %v1065
      %v1152 = vunpack.c.l.b16 %v1066
      %v1153 = vunpack.c.l.b16 %v1067
      %v1154 = vunpack.c.l.b16 %v1068
      %v1155 = vpack.c.b16 %v1152, %v1151
      %v1156 = vpack.c.b16 %v1154, %v1153
      %vm1159 = vcmask 261120
      %v1161 = vsel %vm1159, %v1114, 0
      %v1164 = vsel %vm1159, %v1123, 0
      %v1167 = vsel %vm1159, %v1132, 0
      %v1170 = vsel %vm1159, %v1141, 0
      %v1173 = vsel %vm1159, %v1146, 0
      %1175 = vmatprep.subr.bf16.mxu0 0
      %1176 = vmatpush1.bf16.msra.mxu0 %v1155
      %1177 = vmatprep.subr.bf16.mxu0 0
      %1178 = vmatpush1.bf16.msra.mxu0 %v1156
      %1179 = vmatprep.subr.bf16.mxu0 0
      %1180 = vmatpush1.bf16.msra.mxu0 0
      %1181 = vmatprep.subr.bf16.mxu0 0
      %1182 = vmatpush1.bf16.msra.mxu0 0
      %1183 = vmatprep.subr.bf16.mxu0 0
      %1184 = vmatpush1.bf16.msra.mxu0 0
      %1185 = vmatprep.subr.bf16.mxu0 0
      %1186 = vmatpush1.bf16.msra.mxu0 0
      %1187 = vmatprep.subr.bf16.mxu0 0
      %1188 = vmatpush1.bf16.msra.mxu0 0
      %1189 = vmatprep.subr.bf16.mxu0 0
      %1190 = vmatpush1.bf16.msra.mxu0 0
      %1191 = vmatprep.subr.bf16.mxu0 0
      %1192 = vmatpush1.bf16.msra.mxu0 0
      %1193 = vmatprep.subr.bf16.mxu0 0
      %1194 = vmatpush1.bf16.msra.mxu0 0
      %1195 = vmatprep.subr.bf16.mxu0 0
      %1196 = vmatpush1.bf16.msra.mxu0 0
      %1197 = vmatprep.subr.bf16.mxu0 0
      %1198 = vmatpush1.bf16.msra.mxu0 0
      %1199 = vmatprep.subr.bf16.mxu0 0
      %1200 = vmatpush1.bf16.msra.mxu0 0
      %1201 = vmatprep.subr.bf16.mxu0 0
      %1202 = vmatpush1.bf16.msra.mxu0 0
      %1203 = vmatprep.subr.bf16.mxu0 0
      %1204 = vmatpush1.bf16.msra.mxu0 0
      %1205 = vmatprep.subr.bf16.mxu0 0
      %1206 = vmatpush1.bf16.msra.mxu0 0
      %1207 = vmatprep.mubr.bf16.mxu0 0
      %1208 = vmatmul.mubr.bf16.gmra.mrb[0].mxu0 %v1161
      %v1209 = vpop.f32.mrb[0].mxu0
      %v1210 = vadd.f32 0.0, %v1209
      %v1211 = vpop.f32.mrb[0].mxu0
      %v1212 = vpop.f32.mrb[0].mxu0
      %v1213 = vadd.f32 0.0, %v1212
      %v1214 = vpop.f32.mrb[0].mxu0
      %1215 = vmatprep.mubr.bf16.mxu0 0
      %1216 = vmatmul.mubr.bf16.gmra.mrb[0].mxu0 %v1164
      %v1217 = vpop.f32.mrb[0].mxu0
      %v1218 = vadd.f32 0.0, %v1217
      %v1219 = vpop.f32.mrb[0].mxu0
      %v1220 = vpop.f32.mrb[0].mxu0
      %v1221 = vadd.f32 0.0, %v1220
      %v1222 = vpop.f32.mrb[0].mxu0
      %1223 = vmatprep.mubr.bf16.mxu0 0
      %1224 = vmatmul.mubr.bf16.gmra.mrb[0].mxu0 %v1167
      %v1225 = vpop.f32.mrb[0].mxu0
      %v1226 = vadd.f32 0.0, %v1225
      %v1227 = vpop.f32.mrb[0].mxu0
      %v1228 = vpop.f32.mrb[0].mxu0
      %v1229 = vadd.f32 0.0, %v1228
      %v1230 = vpop.f32.mrb[0].mxu0
      %1231 = vmatprep.mubr.bf16.mxu0 0
      %1232 = vmatmul.mubr.bf16.gmra.mrb[0].mxu0 %v1170
      %v1233 = vpop.f32.mrb[0].mxu0
      %v1234 = vadd.f32 0.0, %v1233
      %v1235 = vpop.f32.mrb[0].mxu0
      %v1236 = vpop.f32.mrb[0].mxu0
      %v1237 = vadd.f32 0.0, %v1236
      %v1238 = vpop.f32.mrb[0].mxu0
      %1239 = vmatprep.mubr.bf16.mxu0 0
      %1240 = vmatmul.mubr.bf16.gmra.mrb[0].mxu0 %v1173
      %v1241 = vpop.f32.mrb[0].mxu0
      %v1242 = vadd.f32 0.0, %v1241
      %v1243 = vpop.f32.mrb[0].mxu0
      %v1244 = vpop.f32.mrb[0].mxu0
      %v1245 = vadd.f32 0.0, %v1244
      %v1246 = vpop.f32.mrb[0].mxu0
      %1247 = vdwg.mxu0
      %v1248 = vld [vmem:[%s5] sm:$0x1]
      %v1250 = vlaneseq
      %v1251 = vshrl.u32 %v1250, 7
      %v1252 = vsub.s32 0, %v1251
      %v1253 = vrot.slane %v1248, %v1252
      %v1255 = vmul.f32 %v1210, %v1253
      %v1256 = vmul.f32 %v1213, %v1253
      %v1257 = vmul.f32 %v1218, %v1253
      %v1258 = vmul.f32 %v1221, %v1253
      %v1259 = vmul.f32 %v1226, %v1253
      %v1260 = vmul.f32 %v1229, %v1253
      %v1261 = vmul.f32 %v1234, %v1253
      %v1262 = vmul.f32 %v1237, %v1253
      %v1263 = vmul.f32 %v1242, %v1253
      %v1264 = vmul.f32 %v1245, %v1253
      %v1265 = vld [vmem:[%s7] sm:$0x1]
      %v1267 = vlaneseq
      %v1268 = vshrl.u32 %v1267, 7
      %v1269 = vsub.s32 0, %v1268
      %v1270 = vrot.slane %v1265, %v1269
      %v1272 = vadd.f32 %v1255, %v1270
      %v1273 = vadd.f32 %v1256, %v1270
      %v1274 = vadd.f32 %v1257, %v1270
      %v1275 = vadd.f32 %v1258, %v1270
      %v1276 = vadd.f32 %v1259, %v1270
      %v1277 = vadd.f32 %v1260, %v1270
      %v1278 = vadd.f32 %v1261, %v1270
      %v1279 = vadd.f32 %v1262, %v1270
      %v1280 = vadd.f32 %v1263, %v1270
      %v1281 = vadd.f32 %v1264, %v1270
      %v1282 = vmax.f32 %v1272, 0.0
      %v1283 = vmax.f32 %v1273, 0.0
      %v1284 = vmax.f32 %v1274, 0.0
      %v1285 = vmax.f32 %v1275, 0.0
      %v1286 = vmax.f32 %v1276, 0.0
      %v1287 = vmax.f32 %v1277, 0.0
      %v1288 = vmax.f32 %v1278, 0.0
      %v1289 = vmax.f32 %v1279, 0.0
      %v1290 = vmax.f32 %v1280, 0.0
      %v1291 = vmax.f32 %v1281, 0.0
      %1293 = vset.pattern.permute.xlu0 0
      %1294 = vperm.xlu0 %1293, %v1041
      %v1295 = vpop.permute.xlu0 %1294
      %1298 = vset.pattern.permute.xlu0 0
      %1299 = vperm.xlu0 %1298, %v1042
      %v1300 = vpop.permute.xlu0 %1299
      %1303 = vset.pattern.permute.xlu0 0
      %1304 = vperm.xlu0 %1303, %v1043
      %v1305 = vpop.permute.xlu0 %1304
      %1308 = vset.pattern.permute.xlu0 0
      %1309 = vperm.xlu0 %1308, %v1044
      %v1310 = vpop.permute.xlu0 %1309
      %1313 = vset.pattern.permute.xlu0 0
      %1314 = vperm.xlu0 %1313, %v1045
      %v1315 = vpop.permute.xlu0 %1314
      %1318 = vset.pattern.permute.xlu0 0
      %1319 = vperm.xlu0 %1318, %v1046
      %v1320 = vpop.permute.xlu0 %1319
      %1323 = vset.pattern.permute.xlu0 0
      %1324 = vperm.xlu0 %1323, %v1047
      %v1325 = vpop.permute.xlu0 %1324
      %1328 = vset.pattern.permute.xlu0 0
      %1329 = vperm.xlu0 %1328, %v1048
      %v1330 = vpop.permute.xlu0 %1329
      %1333 = vset.pattern.permute.xlu0 0
      %1334 = vperm.xlu0 %1333, %v1049
      %v1335 = vpop.permute.xlu0 %1334
      %1338 = vset.pattern.permute.xlu0 0
      %1339 = vperm.xlu0 %1338, %v1050
      %v1340 = vpop.permute.xlu0 %1339
      %v1342 = vmul.f32 %v1282, %v1295
      %v1343 = vmul.f32 %v1283, %v1300
      %v1344 = vmul.f32 %v1284, %v1305
      %v1345 = vmul.f32 %v1285, %v1310
      %v1346 = vmul.f32 %v1286, %v1315
      %v1347 = vmul.f32 %v1287, %v1320
      %v1348 = vmul.f32 %v1288, %v1325
      %v1349 = vmul.f32 %v1289, %v1330
      %v1350 = vmul.f32 %v1290, %v1335
      %v1351 = vmul.f32 %v1291, %v1340
      %v1352 = vpack.c.bf16 %v1343, %v1342
      %v1353 = vpack.c.bf16 %v1345, %v1344
      %v1354 = vpack.c.bf16 %v1347, %v1346
      %v1355 = vpack.c.bf16 %v1349, %v1348
      %v1356 = vpack.c.bf16 %v1351, %v1350
      %v1362 = vunpack.c.l.b16 %v1352
      %v1363 = vunpack.c.h.b16 %v1352
      %v1364 = vunpack.c.l.b16 %v1353
      %v1365 = vunpack.c.h.b16 %v1353
      %v1366 = vunpack.c.l.b16 %v1354
      %v1367 = vunpack.c.h.b16 %v1354
      %v1368 = vunpack.c.l.b16 %v1355
      %v1369 = vunpack.c.h.b16 %v1355
      %v1370 = vunpack.c.l.b16 %v1356
      %v1371 = vunpack.c.h.b16 %v1356
      %v1372 = vpack.c.b16 %v1362, %v1362
      %v1373 = vpack.c.b16 %v1363, %v1363
      %v1374 = vpack.c.b16 %v1364, %v1364
      %v1375 = vpack.c.b16 %v1365, %v1365
      %v1376 = vpack.c.b16 %v1366, %v1366
      %v1377 = vpack.c.b16 %v1367, %v1367
      %v1378 = vpack.c.b16 %v1368, %v1368
      %v1379 = vpack.c.b16 %v1369, %v1369
      %v1380 = vpack.c.b16 %v1370, %v1370
      %v1381 = vpack.c.b16 %v1371, %v1371
      %vm1382 = vsmask.f32 1280
      %vm1383 = vsmask.f32 5392
      %vm1384 = vmor %vm1382, %vm1383
      %v1386 = vshrl.u32 %v1372, 16
      %v1388 = vrot.slane %v1386, 6
      %v1389 = vshll.u32 %v1372, 16
      %v1391 = vrot.slane %v1389, 7
      %v1392 = vor.u32 %v1388, %v1391
      %v1393 = vrot.slane %v1392, 4
      %v1395 = vshrl.u32 %v1373, 16
      %v1397 = vrot.slane %v1395, 6
      %v1398 = vshll.u32 %v1373, 16
      %v1400 = vrot.slane %v1398, 7
      %v1401 = vor.u32 %v1397, %v1400
      %v1402 = vsel %vm1384, %v1393, %v1401
      %v1403 = vrot.slane %v1401, 4
      %v1405 = vshrl.u32 %v1374, 16
      %v1407 = vrot.slane %v1405, 6
      %v1408 = vshll.u32 %v1374, 16
      %v1410 = vrot.slane %v1408, 7
      %v1411 = vor.u32 %v1407, %v1410
      %v1412 = vsel %vm1384, %v1403, %v1411
      %v1413 = vrot.slane %v1411, 4
      %v1415 = vshrl.u32 %v1375, 16
      %v1417 = vrot.slane %v1415, 6
      %v1418 = vshll.u32 %v1375, 16
      %v1420 = vrot.slane %v1418, 7
      %v1421 = vor.u32 %v1417, %v1420
      %v1422 = vsel %vm1384, %v1413, %v1421
      %v1423 = vrot.slane %v1421, 4
      %v1425 = vshrl.u32 %v1376, 16
      %v1427 = vrot.slane %v1425, 6
      %v1428 = vshll.u32 %v1376, 16
      %v1430 = vrot.slane %v1428, 7
      %v1431 = vor.u32 %v1427, %v1430
      %v1432 = vsel %vm1384, %v1423, %v1431
      %v1433 = vrot.slane %v1431, 4
      %v1435 = vshrl.u32 %v1377, 16
      %v1437 = vrot.slane %v1435, 6
      %v1438 = vshll.u32 %v1377, 16
      %v1440 = vrot.slane %v1438, 7
      %v1441 = vor.u32 %v1437, %v1440
      %v1442 = vsel %vm1384, %v1433, %v1441
      %v1443 = vrot.slane %v1441, 4
      %v1445 = vshrl.u32 %v1378, 16
      %v1447 = vrot.slane %v1445, 6
      %v1448 = vshll.u32 %v1378, 16
      %v1450 = vrot.slane %v1448, 7
      %v1451 = vor.u32 %v1447, %v1450
      %v1452 = vsel %vm1384, %v1443, %v1451
      %v1453 = vrot.slane %v1451, 4
      %v1455 = vshrl.u32 %v1379, 16
      %v1457 = vrot.slane %v1455, 6
      %v1458 = vshll.u32 %v1379, 16
      %v1460 = vrot.slane %v1458, 7
      %v1461 = vor.u32 %v1457, %v1460
      %v1462 = vsel %vm1384, %v1453, %v1461
      %v1463 = vrot.slane %v1461, 4
      %v1465 = vshrl.u32 %v1380, 16
      %v1467 = vrot.slane %v1465, 6
      %v1468 = vshll.u32 %v1380, 16
      %v1470 = vrot.slane %v1468, 7
      %v1471 = vor.u32 %v1467, %v1470
      %v1472 = vsel %vm1384, %v1463, %v1471
      %v1473 = vrot.slane %v1471, 4
      %v1475 = vshrl.u32 %v1381, 16
      %v1477 = vrot.slane %v1475, 6
      %v1478 = vshll.u32 %v1381, 16
      %v1480 = vrot.slane %v1478, 7
      %v1481 = vor.u32 %v1477, %v1480
      %v1482 = vsel %vm1384, %v1473, %v1481
      %v1483 = vrot.slane %v1477, 4
      %vm1495 = vcmask 1043457
      %vm1496 = vsmask.f32 7942
      %vm1497 = vmand %vm1495, %vm1496
      %v1498 = vld [vmem:[#allocation2 + $0x4] sm:$0xe]
      %v1499 = vsel %vm1497, %v1392, %v1498
      %1500 = vst [vmem:[#allocation2 + $0x4] sm:$0xe] %v1499
      %1501 = vst [vmem:[#allocation2 + $0x8] sm:$0xf] %v1402
      %1502 = vst [vmem:[#allocation2 + $0xc] sm:$0xf] %v1412
      %1503 = vst [vmem:[#allocation2 + $0x10] sm:$0xf] %v1422
      %1504 = vst [vmem:[#allocation2 + $0x14] sm:$0xf] %v1432
      %1505 = vst [vmem:[#allocation2 + $0x18] sm:$0xf] %v1442
      %1506 = vst [vmem:[#allocation2 + $0x1c] sm:$0xf] %v1452
      %1507 = vst [vmem:[#allocation2 + $0x20] sm:$0xf] %v1462
      %1508 = vst [vmem:[#allocation2 + $0x24] sm:$0xf] %v1472
      %1509 = vst [vmem:[#allocation2 + $0x28] sm:$0xf] %v1482
      %vm1510 = vcmask 1040384
      %vm1511 = vsmask.f32 256
      %vm1512 = vmand %vm1510, %vm1511
      %v1513 = vld [vmem:[#allocation2 + $0x2c] sm:$0x1]
      %v1514 = vsel %vm1512, %v1483, %v1513
      %1515 = vst [vmem:[#allocation2 + $0x2c] sm:$0x1] %v1514
      %v1516 = vld [vmem:[#allocation2] sm:$0xf]
      %v1517 = vld [vmem:[#allocation2 + $0x4] sm:$0xf]
      %v1518 = vld [vmem:[#allocation2 + $0x8] sm:$0xf]
      %v1519 = vld [vmem:[#allocation2 + $0xc] sm:$0xf]
      %v1520 = vld [vmem:[#allocation2 + $0x10] sm:$0xf]
      %v1521 = vld [vmem:[#allocation2 + $0x14] sm:$0xf]
      %v1522 = vld [vmem:[#allocation2 + $0x18] sm:$0xf]
      %v1523 = vld [vmem:[#allocation2 + $0x1c] sm:$0xf]
      %v1524 = vld [vmem:[#allocation2 + $0x20] sm:$0xf]
      %v1525 = vld [vmem:[#allocation2 + $0x24] sm:$0x7]
      %v1526 = vld [vmem:[#allocation2 + $0x24] sm:$0xf]
      %v1527 = vld [vmem:[#allocation2 + $0x4] sm:$0xe]
      %v1528 = vld [vmem:[#allocation2 + $0x28] sm:$0xf]
      %v1529 = vld [vmem:[#allocation2 + $0x2c] sm:$0x1]
      %v1540 = vunpack.c.l.b16 %v1516
      %v1541 = vunpack.c.l.b16 %v1517
      %v1542 = vunpack.c.l.b16 %v1518
      %v1543 = vunpack.c.l.b16 %v1519
      %v1544 = vunpack.c.l.b16 %v1520
      %v1545 = vunpack.c.l.b16 %v1521
      %v1546 = vunpack.c.l.b16 %v1522
      %v1547 = vunpack.c.l.b16 %v1523
      %v1548 = vunpack.c.l.b16 %v1524
      %v1549 = vunpack.c.l.b16 %v1525
      %v1550 = vpack.c.b16 %v1541, %v1540
      %v1551 = vpack.c.b16 %v1543, %v1542
      %v1552 = vpack.c.b16 %v1545, %v1544
      %v1553 = vpack.c.b16 %v1547, %v1546
      %v1554 = vpack.c.b16 %v1549, %v1548
      %v1561 = vunpack.c.l.b16 %v1526
      %v1562 = vpack.c.b16 %v1561, %v1548
      %vm1563 = vsmask.f32 7424
      %v1565 = vshrl.u32 %v1550, 16
      %v1567 = vshll.u32 %v1550, 16
      %v1569 = vrot.slane %v1567, 1
      %v1570 = vor.u32 %v1565, %v1569
      %v1572 = vshll.u32 %v1551, 16
      %v1574 = vrot.slane %v1572, 1
      %v1575 = vsel %vm1563, %v1570, %v1574
      %v1576 = vshrl.u32 %v1551, 16
      %v1578 = vor.u32 %v1576, %v1574
      %v1580 = vshll.u32 %v1552, 16
      %v1582 = vrot.slane %v1580, 1
      %v1583 = vsel %vm1563, %v1578, %v1582
      %v1584 = vshrl.u32 %v1552, 16
      %v1586 = vor.u32 %v1584, %v1582
      %v1588 = vshll.u32 %v1553, 16
      %v1590 = vrot.slane %v1588, 1
      %v1591 = vsel %vm1563, %v1586, %v1590
      %v1592 = vshrl.u32 %v1553, 16
      %v1594 = vor.u32 %v1592, %v1590
      %v1596 = vshll.u32 %v1562, 16
      %v1598 = vrot.slane %v1596, 1
      %v1599 = vsel %vm1563, %v1594, %v1598
      %v1600 = vshrl.u32 %v1562, 16
      %v1602 = vor.u32 %v1600, %v1598
      %v1610 = vunpack.c.l.b16 %v1527
      %v1611 = vunpack.c.l.b16 %v1528
      %v1612 = vpack.c.b16 %v1542, %v1610
      %v1613 = vpack.c.b16 %v1544, %v1543
      %v1614 = vpack.c.b16 %v1546, %v1545
      %v1615 = vpack.c.b16 %v1548, %v1547
      %v1616 = vpack.c.b16 %v1611, %v1561
      %vm1617 = vcmask 1046528
      %v1618 = vrot.slane %v1612, 1
      %v1619 = vrot.slane %v1613, 1
      %v1620 = vsel %vm1617, %v1618, %v1619
      %v1621 = vrot.slane %v1614, 1
      %v1622 = vsel %vm1617, %v1619, %v1621
      %v1623 = vrot.slane %v1615, 1
      %v1624 = vsel %vm1617, %v1621, %v1623
      %v1625 = vrot.slane %v1616, 1
      %v1626 = vsel %vm1617, %v1623, %v1625
      %v1633 = vunpack.c.l.b16 %v1529
      %v1634 = vpack.c.b16 %v1633, %v1633
      %v1636 = vshrl.u32 %v1612, 16
      %v1638 = vrot.slane %v1636, 1
      %v1639 = vshll.u32 %v1612, 16
      %v1641 = vrot.slane %v1639, 2
      %v1642 = vor.u32 %v1638, %v1641
      %v1644 = vshrl.u32 %v1613, 16
      %v1646 = vrot.slane %v1644, 1
      %v1647 = vshll.u32 %v1613, 16
      %v1649 = vrot.slane %v1647, 2
      %v1650 = vor.u32 %v1646, %v1649
      %v1651 = vsel %vm1097, %v1642, %v1650
      %v1653 = vshrl.u32 %v1614, 16
      %v1655 = vrot.slane %v1653, 1
      %v1656 = vshll.u32 %v1614, 16
      %v1658 = vrot.slane %v1656, 2
      %v1659 = vor.u32 %v1655, %v1658
      %v1660 = vsel %vm1097, %v1650, %v1659
      %v1662 = vshrl.u32 %v1615, 16
      %v1664 = vrot.slane %v1662, 1
      %v1665 = vshll.u32 %v1615, 16
      %v1667 = vrot.slane %v1665, 2
      %v1668 = vor.u32 %v1664, %v1667
      %v1669 = vsel %vm1097, %v1659, %v1668
      %v1671 = vshrl.u32 %v1616, 16
      %v1673 = vrot.slane %v1671, 1
      %v1674 = vshll.u32 %v1616, 16
      %v1676 = vrot.slane %v1674, 2
      %v1677 = vor.u32 %v1673, %v1676
      %v1678 = vsel %vm1097, %v1668, %v1677
      %v1680 = vshll.u32 %v1634, 16
      %v1682 = vrot.slane %v1680, 2
      %v1683 = vsel %vm1097, %v1677, %v1682
      %v1689 = vld [vmem:[%s9] sm:$0xf]
      %v1690 = vld [vmem:[%s9 + $0x4] sm:$0xf]
      %v1691 = vld [vmem:[%s9 + $0x8] sm:$0xf]
      %v1692 = vld [vmem:[%s9 + $0xc] sm:$0xf]
      %v1693 = vld [vmem:[%s9 + $0x10] sm:$0xf]
      %v1694 = vld [vmem:[%s9 + $0x14] sm:$0xf]
      %v1695 = vld [vmem:[%s9 + $0x18] sm:$0xf]
      %v1696 = vld [vmem:[%s9 + $0x1c] sm:$0xf]
      %v1697 = vld [vmem:[%s9 + $0x20] sm:$0xf]
      %v1698 = vld [vmem:[%s9 + $0x24] sm:$0xf]
      %v1699 = vld [vmem:[%s9 + $0x28] sm:$0xf]
      %v1700 = vld [vmem:[%s9 + $0x2c] sm:$0xf]
      %v1701 = vld [vmem:[%s9 + $0x30] sm:$0xf]
      %v1702 = vld [vmem:[%s9 + $0x34] sm:$0xf]
      %v1703 = vld [vmem:[%s9 + $0x38] sm:$0xf]
      %v1704 = vld [vmem:[%s9 + $0x3c] sm:$0xf]
      %v1705 = vld [vmem:[%s9 + $0x40] sm:$0xf]
      %v1706 = vld [vmem:[%s9 + $0x44] sm:$0xf]
      %v1707 = vld [vmem:[%s9 + $0x48] sm:$0xf]
      %v1708 = vld [vmem:[%s9 + $0x4c] sm:$0xf]
      %v1709 = vld [vmem:[%s9 + $0x50] sm:$0xf]
      %v1710 = vld [vmem:[%s9 + $0x54] sm:$0xf]
      %v1711 = vld [vmem:[%s9 + $0x58] sm:$0xf]
      %v1712 = vld [vmem:[%s9 + $0x5c] sm:$0xf]
      %v1713 = vld [vmem:[%s9 + $0x60] sm:$0xf]
      %v1714 = vld [vmem:[%s9 + $0x64] sm:$0xf]
      %v1715 = vld [vmem:[%s9 + $0x68] sm:$0xf]
      %v1716 = vld [vmem:[%s9 + $0x6c] sm:$0xf]
      %v1717 = vld [vmem:[%s9 + $0x70] sm:$0xf]
      %v1718 = vld [vmem:[%s9 + $0x74] sm:$0xf]
      %v1719 = vld [vmem:[%s9 + $0x78] sm:$0xf]
      %v1720 = vld [vmem:[%s9 + $0x7c] sm:$0xf]
      %v1721 = vld [vmem:[%s9 + $0x80] sm:$0xf]
      %v1722 = vld [vmem:[%s9 + $0x84] sm:$0xf]
      %v1723 = vld [vmem:[%s9 + $0x88] sm:$0xf]
      %v1724 = vld [vmem:[%s9 + $0x8c] sm:$0xf]
      %v1725 = vld [vmem:[%s9 + $0x90] sm:$0xf]
      %v1726 = vld [vmem:[%s9 + $0x94] sm:$0xf]
      %v1727 = vld [vmem:[%s9 + $0x98] sm:$0xf]
      %v1728 = vld [vmem:[%s9 + $0x9c] sm:$0xf]
      %v1729 = vld [vmem:[%s9 + $0xa0] sm:$0xf]
      %v1730 = vld [vmem:[%s9 + $0xa4] sm:$0xf]
      %v1731 = vld [vmem:[%s9 + $0xa8] sm:$0xf]
      %v1732 = vld [vmem:[%s9 + $0xac] sm:$0xf]
      %v1733 = vld [vmem:[%s9 + $0xb0] sm:$0xf]
      %v1734 = vld [vmem:[%s9 + $0xb4] sm:$0xf]
      %v1735 = vld [vmem:[%s9 + $0xb8] sm:$0xf]
      %v1736 = vld [vmem:[%s9 + $0xbc] sm:$0xf]
      %v1737 = vld [vmem:[%s9 + $0xc0] sm:$0xf]
      %v1738 = vld [vmem:[%s9 + $0xc4] sm:$0xf]
      %v1739 = vld [vmem:[%s9 + $0xc8] sm:$0xf]
      %v1740 = vld [vmem:[%s9 + $0xcc] sm:$0xf]
      %v1741 = vld [vmem:[%s9 + $0xd0] sm:$0xf]
      %v1742 = vld [vmem:[%s9 + $0xd4] sm:$0xf]
      %v1743 = vld [vmem:[%s9 + $0xd8] sm:$0xf]
      %v1744 = vld [vmem:[%s9 + $0xdc] sm:$0xf]
      %v1745 = vld [vmem:[%s9 + $0xe0] sm:$0xf]
      %v1746 = vld [vmem:[%s9 + $0xe4] sm:$0xf]
      %v1747 = vld [vmem:[%s9 + $0xe8] sm:$0xf]
      %v1748 = vld [vmem:[%s9 + $0xec] sm:$0xf]
      %v1749 = vld [vmem:[%s9 + $0xf0] sm:$0xf]
      %v1750 = vld [vmem:[%s9 + $0xf4] sm:$0xf]
      %v1751 = vld [vmem:[%s9 + $0xf8] sm:$0xf]
      %v1752 = vld [vmem:[%s9 + $0xfc] sm:$0xf]
      %v1817 = vunpack.c.l.b16 %v1689
      %v1818 = vunpack.c.l.b16 %v1690
      %v1819 = vunpack.c.l.b16 %v1691
      %v1820 = vunpack.c.l.b16 %v1692
      %v1821 = vunpack.c.l.b16 %v1693
      %v1822 = vunpack.c.l.b16 %v1694
      %v1823 = vunpack.c.l.b16 %v1695
      %v1824 = vunpack.c.l.b16 %v1696
      %v1825 = vunpack.c.l.b16 %v1697
      %v1826 = vunpack.c.l.b16 %v1698
      %v1827 = vunpack.c.l.b16 %v1699
      %v1828 = vunpack.c.l.b16 %v1700
      %v1829 = vunpack.c.l.b16 %v1701
      %v1830 = vunpack.c.l.b16 %v1702
      %v1831 = vunpack.c.l.b16 %v1703
      %v1832 = vunpack.c.l.b16 %v1704
      %v1833 = vunpack.c.l.b16 %v1705
      %v1834 = vunpack.c.l.b16 %v1706
      %v1835 = vunpack.c.l.b16 %v1707
      %v1836 = vunpack.c.l.b16 %v1708
      %v1837 = vunpack.c.l.b16 %v1709
      %v1838 = vunpack.c.l.b16 %v1710
      %v1839 = vunpack.c.l.b16 %v1711
      %v1840 = vunpack.c.l.b16 %v1712
      %v1841 = vunpack.c.l.b16 %v1713
      %v1842 = vunpack.c.l.b16 %v1714
      %v1843 = vunpack.c.l.b16 %v1715
      %v1844 = vunpack.c.l.b16 %v1716
      %v1845 = vunpack.c.l.b16 %v1717
      %v1846 = vunpack.c.l.b16 %v1718
      %v1847 = vunpack.c.l.b16 %v1719
      %v1848 = vunpack.c.l.b16 %v1720
      %v1849 = vunpack.c.l.b16 %v1721
      %v1850 = vunpack.c.l.b16 %v1722
      %v1851 = vunpack.c.l.b16 %v1723
      %v1852 = vunpack.c.l.b16 %v1724
      %v1853 = vunpack.c.l.b16 %v1725
      %v1854 = vunpack.c.l.b16 %v1726
      %v1855 = vunpack.c.l.b16 %v1727
      %v1856 = vunpack.c.l.b16 %v1728
      %v1857 = vunpack.c.l.b16 %v1729
      %v1858 = vunpack.c.l.b16 %v1730
      %v1859 = vunpack.c.l.b16 %v1731
      %v1860 = vunpack.c.l.b16 %v1732
      %v1861 = vunpack.c.l.b16 %v1733
      %v1862 = vunpack.c.l.b16 %v1734
      %v1863 = vunpack.c.l.b16 %v1735
      %v1864 = vunpack.c.l.b16 %v1736
      %v1865 = vunpack.c.l.b16 %v1737
      %v1866 = vunpack.c.l.b16 %v1738
      %v1867 = vunpack.c.l.b16 %v1739
      %v1868 = vunpack.c.l.b16 %v1740
      %v1869 = vunpack.c.l.b16 %v1741
      %v1870 = vunpack.c.l.b16 %v1742
      %v1871 = vunpack.c.l.b16 %v1743
      %v1872 = vunpack.c.l.b16 %v1744
      %v1873 = vunpack.c.l.b16 %v1745
      %v1874 = vunpack.c.l.b16 %v1746
      %v1875 = vunpack.c.l.b16 %v1747
      %v1876 = vunpack.c.l.b16 %v1748
      %v1877 = vunpack.c.l.b16 %v1749
      %v1878 = vunpack.c.l.b16 %v1750
      %v1879 = vunpack.c.l.b16 %v1751
      %v1880 = vunpack.c.l.b16 %v1752
      %v1881 = vpack.c.b16 %v1818, %v1817
      %v1882 = vpack.c.b16 %v1820, %v1819
      %v1883 = vpack.c.b16 %v1822, %v1821
      %v1884 = vpack.c.b16 %v1824, %v1823
      %v1885 = vpack.c.b16 %v1826, %v1825
      %v1886 = vpack.c.b16 %v1828, %v1827
      %v1887 = vpack.c.b16 %v1830, %v1829
      %v1888 = vpack.c.b16 %v1832, %v1831
      %v1889 = vpack.c.b16 %v1834, %v1833
      %v1890 = vpack.c.b16 %v1836, %v1835
      %v1891 = vpack.c.b16 %v1838, %v1837
      %v1892 = vpack.c.b16 %v1840, %v1839
      %v1893 = vpack.c.b16 %v1842, %v1841
      %v1894 = vpack.c.b16 %v1844, %v1843
      %v1895 = vpack.c.b16 %v1846, %v1845
      %v1896 = vpack.c.b16 %v1848, %v1847
      %v1897 = vpack.c.b16 %v1850, %v1849
      %v1898 = vpack.c.b16 %v1852, %v1851
      %v1899 = vpack.c.b16 %v1854, %v1853
      %v1900 = vpack.c.b16 %v1856, %v1855
      %v1901 = vpack.c.b16 %v1858, %v1857
      %v1902 = vpack.c.b16 %v1860, %v1859
      %v1903 = vpack.c.b16 %v1862, %v1861
      %v1904 = vpack.c.b16 %v1864, %v1863
      %v1905 = vpack.c.b16 %v1866, %v1865
      %v1906 = vpack.c.b16 %v1868, %v1867
      %v1907 = vpack.c.b16 %v1870, %v1869
      %v1908 = vpack.c.b16 %v1872, %v1871
      %v1909 = vpack.c.b16 %v1874, %v1873
      %v1910 = vpack.c.b16 %v1876, %v1875
      %v1911 = vpack.c.b16 %v1878, %v1877
      %v1912 = vpack.c.b16 %v1880, %v1879
      %1945 = vmatprep.subr.bf16.mxu0 0
      %1946 = vmatpush1.bf16.msra.mxu0 %v1881
      %1947 = vmatprep.subr.bf16.mxu0 0
      %1948 = vmatpush1.bf16.msra.mxu0 %v1882
      %1949 = vmatprep.subr.bf16.mxu0 0
      %1950 = vmatpush1.bf16.msra.mxu0 %v1883
      %1951 = vmatprep.subr.bf16.mxu0 0
      %1952 = vmatpush1.bf16.msra.mxu0 %v1884
      %1953 = vmatprep.subr.bf16.mxu0 0
      %1954 = vmatpush1.bf16.msra.mxu0 %v1885
      %1955 = vmatprep.subr.bf16.mxu0 0
      %1956 = vmatpush1.bf16.msra.mxu0 %v1886
      %1957 = vmatprep.subr.bf16.mxu0 0
      %1958 = vmatpush1.bf16.msra.mxu0 %v1887
      %1959 = vmatprep.subr.bf16.mxu0 0
      %1960 = vmatpush1.bf16.msra.mxu0 %v1888
      %1961 = vmatprep.subr.bf16.mxu0 0
      %1962 = vmatpush1.bf16.msra.mxu0 %v1889
      %1963 = vmatprep.subr.bf16.mxu0 0
      %1964 = vmatpush1.bf16.msra.mxu0 %v1890
      %1965 = vmatprep.subr.bf16.mxu0 0
      %1966 = vmatpush1.bf16.msra.mxu0 %v1891
      %1967 = vmatprep.subr.bf16.mxu0 0
      %1968 = vmatpush1.bf16.msra.mxu0 %v1892
      %1969 = vmatprep.subr.bf16.mxu0 0
      %1970 = vmatpush1.bf16.msra.mxu0 %v1893
      %1971 = vmatprep.subr.bf16.mxu0 0
      %1972 = vmatpush1.bf16.msra.mxu0 %v1894
      %1973 = vmatprep.subr.bf16.mxu0 0
      %1974 = vmatpush1.bf16.msra.mxu0 %v1895
      %1975 = vmatprep.subr.bf16.mxu0 0
      %1976 = vmatpush1.bf16.msra.mxu0 %v1896
      %1977 = vmatprep.mubr.bf16.mxu0 %v1575
      %1978 = vmatmul.mubr.bf16.gmra.mrb[0].mxu0 %v1550
      %v1979 = vpop.f32.mrb[0].mxu0
      %v1980 = vadd.f32 0.0, %v1979
      %v1981 = vpop.f32.mrb[0].mxu0
      %v1982 = vpop.f32.mrb[0].mxu0
      %v1983 = vadd.f32 0.0, %v1982
      %v1984 = vpop.f32.mrb[0].mxu0
      %1985 = vmatprep.mubr.bf16.mxu0 %v1583
      %1986 = vmatmul.mubr.bf16.gmra.mrb[0].mxu0 %v1551
      %v1987 = vpop.f32.mrb[0].mxu0
      %v1988 = vadd.f32 0.0, %v1987
      %v1989 = vpop.f32.mrb[0].mxu0
      %v1990 = vpop.f32.mrb[0].mxu0
      %v1991 = vadd.f32 0.0, %v1990
      %v1992 = vpop.f32.mrb[0].mxu0
      %1993 = vmatprep.mubr.bf16.mxu0 %v1591
      %1994 = vmatmul.mubr.bf16.gmra.mrb[0].mxu0 %v1552
      %v1995 = vpop.f32.mrb[0].mxu0
      %v1996 = vadd.f32 0.0, %v1995
      %v1997 = vpop.f32.mrb[0].mxu0
      %v1998 = vpop.f32.mrb[0].mxu0
      %v1999 = vadd.f32 0.0, %v1998
      %v2000 = vpop.f32.mrb[0].mxu0
      %2001 = vmatprep.mubr.bf16.mxu0 %v1599
      %2002 = vmatmul.mubr.bf16.gmra.mrb[0].mxu0 %v1553
      %v2003 = vpop.f32.mrb[0].mxu0
      %v2004 = vadd.f32 0.0, %v2003
      %v2005 = vpop.f32.mrb[0].mxu0
      %v2006 = vpop.f32.mrb[0].mxu0
      %v2007 = vadd.f32 0.0, %v2006
      %v2008 = vpop.f32.mrb[0].mxu0
      %2009 = vmatprep.mubr.bf16.mxu0 %v1602
      %2010 = vmatmul.mubr.bf16.gmra.mrb[0].mxu0 %v1554
      %v2011 = vpop.f32.mrb[0].mxu0
      %v2012 = vadd.f32 0.0, %v2011
      %v2013 = vpop.f32.mrb[0].mxu0
      %v2014 = vpop.f32.mrb[0].mxu0
      %v2015 = vadd.f32 0.0, %v2014
      %v2016 = vpop.f32.mrb[0].mxu0
      %2017 = vdwg.mxu0
      %2018 = vmatprep.subr.bf16.mxu0 0
      %2019 = vmatpush1.bf16.msra.mxu0 %v1897
      %2020 = vmatprep.subr.bf16.mxu0 0
      %2021 = vmatpush1.bf16.msra.mxu0 %v1898
      %2022 = vmatprep.subr.bf16.mxu0 0
      %2023 = vmatpush1.bf16.msra.mxu0 %v1899
      %2024 = vmatprep.subr.bf16.mxu0 0
      %2025 = vmatpush1.bf16.msra.mxu0 %v1900
      %2026 = vmatprep.subr.bf16.mxu0 0
      %2027 = vmatpush1.bf16.msra.mxu0 %v1901
      %2028 = vmatprep.subr.bf16.mxu0 0
      %2029 = vmatpush1.bf16.msra.mxu0 %v1902
      %2030 = vmatprep.subr.bf16.mxu0 0
      %2031 = vmatpush1.bf16.msra.mxu0 %v1903
      %2032 = vmatprep.subr.bf16.mxu0 0
      %2033 = vmatpush1.bf16.msra.mxu0 %v1904
      %2034 = vmatprep.subr.bf16.mxu0 0
      %2035 = vmatpush1.bf16.msra.mxu0 %v1905
      %2036 = vmatprep.subr.bf16.mxu0 0
      %2037 = vmatpush1.bf16.msra.mxu0 %v1906
      %2038 = vmatprep.subr.bf16.mxu0 0
      %2039 = vmatpush1.bf16.msra.mxu0 %v1907
      %2040 = vmatprep.subr.bf16.mxu0 0
      %2041 = vmatpush1.bf16.msra.mxu0 %v1908
      %2042 = vmatprep.subr.bf16.mxu0 0
      %2043 = vmatpush1.bf16.msra.mxu0 %v1909
      %2044 = vmatprep.subr.bf16.mxu0 0
      %2045 = vmatpush1.bf16.msra.mxu0 %v1910
      %2046 = vmatprep.subr.bf16.mxu0 0
      %2047 = vmatpush1.bf16.msra.mxu0 %v1911
      %2048 = vmatprep.subr.bf16.mxu0 0
      %2049 = vmatpush1.bf16.msra.mxu0 %v1912
      %2050 = vmatprep.mubr.bf16.mxu0 %v1651
      %2051 = vmatmul.mubr.bf16.gmra.mrb[0].mxu0 %v1620
      %v2052 = vpop.f32.mrb[0].mxu0
      %v2053 = vadd.f32 %v1980, %v2052
      %v2054 = vpop.f32.mrb[0].mxu0
      %v2055 = vpop.f32.mrb[0].mxu0
      %v2056 = vadd.f32 %v1983, %v2055
      %v2057 = vpop.f32.mrb[0].mxu0
      %2058 = vmatprep.mubr.bf16.mxu0 %v1660
      %2059 = vmatmul.mubr.bf16.gmra.mrb[0].mxu0 %v1622
      %v2060 = vpop.f32.mrb[0].mxu0
      %v2061 = vadd.f32 %v1988, %v2060
      %v2062 = vpop.f32.mrb[0].mxu0
      %v2063 = vpop.f32.mrb[0].mxu0
      %v2064 = vadd.f32 %v1991, %v2063
      %v2065 = vpop.f32.mrb[0].mxu0
      %2066 = vmatprep.mubr.bf16.mxu0 %v1669
      %2067 = vmatmul.mubr.bf16.gmra.mrb[0].mxu0 %v1624
      %v2068 = vpop.f32.mrb[0].mxu0
      %v2069 = vadd.f32 %v1996, %v2068
      %v2070 = vpop.f32.mrb[0].mxu0
      %v2071 = vpop.f32.mrb[0].mxu0
      %v2072 = vadd.f32 %v1999, %v2071
      %v2073 = vpop.f32.mrb[0].mxu0
      %2074 = vmatprep.mubr.bf16.mxu0 %v1678
      %2075 = vmatmul.mubr.bf16.gmra.mrb[0].mxu0 %v1626
      %v2076 = vpop.f32.mrb[0].mxu0
      %v2077 = vadd.f32 %v2004, %v2076
      %v2078 = vpop.f32.mrb[0].mxu0
      %v2079 = vpop.f32.mrb[0].mxu0
      %v2080 = vadd.f32 %v2007, %v2079
      %v2081 = vpop.f32.mrb[0].mxu0
      %2082 = vmatprep.mubr.bf16.mxu0 %v1683
      %2083 = vmatmul.mubr.bf16.gmra.mrb[0].mxu0 %v1625
      %v2084 = vpop.f32.mrb[0].mxu0
      %v2085 = vadd.f32 %v2012, %v2084
      %v2086 = vpop.f32.mrb[0].mxu0
      %v2087 = vpop.f32.mrb[0].mxu0
      %v2088 = vadd.f32 %v2015, %v2087
      %v2089 = vpop.f32.mrb[0].mxu0
      %2090 = vdwg.mxu0
      %v2091 = vld [vmem:[%s11] sm:$0x1]
      %v2093 = vlaneseq
      %v2094 = vshrl.u32 %v2093, 7
      %v2095 = vsub.s32 0, %v2094
      %v2096 = vrot.slane %v2091, %v2095
      %v2098 = vmul.f32 %v2053, %v2096
      %v2099 = vmul.f32 %v2056, %v2096
      %v2100 = vmul.f32 %v2061, %v2096
      %v2101 = vmul.f32 %v2064, %v2096
      %v2102 = vmul.f32 %v2069, %v2096
      %v2103 = vmul.f32 %v2072, %v2096
      %v2104 = vmul.f32 %v2077, %v2096
      %v2105 = vmul.f32 %v2080, %v2096
      %v2106 = vmul.f32 %v2085, %v2096
      %v2107 = vmul.f32 %v2088, %v2096
      %v2108 = vld [vmem:[%s13] sm:$0x1]
      %v2110 = vlaneseq
      %v2111 = vshrl.u32 %v2110, 7
      %v2112 = vsub.s32 0, %v2111
      %v2113 = vrot.slane %v2108, %v2112
      %v2115 = vadd.f32 %v2098, %v2113
      %v2116 = vadd.f32 %v2099, %v2113
      %v2117 = vadd.f32 %v2100, %v2113
      %v2118 = vadd.f32 %v2101, %v2113
      %v2119 = vadd.f32 %v2102, %v2113
      %v2120 = vadd.f32 %v2103, %v2113
      %v2121 = vadd.f32 %v2104, %v2113
      %v2122 = vadd.f32 %v2105, %v2113
      %v2123 = vadd.f32 %v2106, %v2113
      %v2124 = vadd.f32 %v2107, %v2113
      %v2125 = vmax.f32 %v2115, 0.0
      %v2126 = vmax.f32 %v2116, 0.0
      %v2127 = vmax.f32 %v2117, 0.0
      %v2128 = vmax.f32 %v2118, 0.0
      %v2129 = vmax.f32 %v2119, 0.0
      %v2130 = vmax.f32 %v2120, 0.0
      %v2131 = vmax.f32 %v2121, 0.0
      %v2132 = vmax.f32 %v2122, 0.0
      %v2133 = vmax.f32 %v2123, 0.0
      %v2134 = vmax.f32 %v2124, 0.0
      %v2135 = vmul.f32 %v2125, %v1295
      %v2136 = vmul.f32 %v2126, %v1300
      %v2137 = vmul.f32 %v2127, %v1305
      %v2138 = vmul.f32 %v2128, %v1310
      %v2139 = vmul.f32 %v2129, %v1315
      %v2140 = vmul.f32 %v2130, %v1320
      %v2141 = vmul.f32 %v2131, %v1325
      %v2142 = vmul.f32 %v2132, %v1330
      %v2143 = vmul.f32 %v2133, %v1335
      %v2144 = vmul.f32 %v2134, %v1340
      %v2145 = vpack.c.bf16 %v2136, %v2135
      %v2146 = vpack.c.bf16 %v2138, %v2137
      %v2147 = vpack.c.bf16 %v2140, %v2139
      %v2148 = vpack.c.bf16 %v2142, %v2141
      %v2149 = vpack.c.bf16 %v2144, %v2143
      %v2155 = vunpack.c.l.b16 %v2145
      %v2156 = vunpack.c.h.b16 %v2145
      %v2157 = vunpack.c.l.b16 %v2146
      %v2158 = vunpack.c.h.b16 %v2146
      %v2159 = vunpack.c.l.b16 %v2147
      %v2160 = vunpack.c.h.b16 %v2147
      %v2161 = vunpack.c.l.b16 %v2148
      %v2162 = vunpack.c.h.b16 %v2148
      %v2163 = vunpack.c.l.b16 %v2149
      %v2164 = vunpack.c.h.b16 %v2149
      %v2165 = vpack.c.b16 %v2155, %v2155
      %v2166 = vpack.c.b16 %v2156, %v2156
      %v2167 = vpack.c.b16 %v2157, %v2157
      %v2168 = vpack.c.b16 %v2158, %v2158
      %v2169 = vpack.c.b16 %v2159, %v2159
      %v2170 = vpack.c.b16 %v2160, %v2160
      %v2171 = vpack.c.b16 %v2161, %v2161
      %v2172 = vpack.c.b16 %v2162, %v2162
      %v2173 = vpack.c.b16 %v2163, %v2163
      %v2174 = vpack.c.b16 %v2164, %v2164
      %v2176 = vshrl.u32 %v2165, 16
      %v2178 = vrot.slane %v2176, 6
      %v2179 = vshll.u32 %v2165, 16
      %v2181 = vrot.slane %v2179, 7
      %v2182 = vor.u32 %v2178, %v2181
      %v2183 = vrot.slane %v2182, 4
      %v2185 = vshrl.u32 %v2166, 16
      %v2187 = vrot.slane %v2185, 6
      %v2188 = vshll.u32 %v2166, 16
      %v2190 = vrot.slane %v2188, 7
      %v2191 = vor.u32 %v2187, %v2190
      %v2192 = vsel %vm1384, %v2183, %v2191
      %v2193 = vrot.slane %v2191, 4
      %v2195 = vshrl.u32 %v2167, 16
      %v2197 = vrot.slane %v2195, 6
      %v2198 = vshll.u32 %v2167, 16
      %v2200 = vrot.slane %v2198, 7
      %v2201 = vor.u32 %v2197, %v2200
      %v2202 = vsel %vm1384, %v2193, %v2201
      %v2203 = vrot.slane %v2201, 4
      %v2205 = vshrl.u32 %v2168, 16
      %v2207 = vrot.slane %v2205, 6
      %v2208 = vshll.u32 %v2168, 16
      %v2210 = vrot.slane %v2208, 7
      %v2211 = vor.u32 %v2207, %v2210
      %v2212 = vsel %vm1384, %v2203, %v2211
      %v2213 = vrot.slane %v2211, 4
      %v2215 = vshrl.u32 %v2169, 16
      %v2217 = vrot.slane %v2215, 6
      %v2218 = vshll.u32 %v2169, 16
      %v2220 = vrot.slane %v2218, 7
      %v2221 = vor.u32 %v2217, %v2220
      %v2222 = vsel %vm1384, %v2213, %v2221
      %v2223 = vrot.slane %v2221, 4
      %v2225 = vshrl.u32 %v2170, 16
      %v2227 = vrot.slane %v2225, 6
      %v2228 = vshll.u32 %v2170, 16
      %v2230 = vrot.slane %v2228, 7
      %v2231 = vor.u32 %v2227, %v2230
      %v2232 = vsel %vm1384, %v2223, %v2231
      %v2233 = vrot.slane %v2231, 4
      %v2235 = vshrl.u32 %v2171, 16
      %v2237 = vrot.slane %v2235, 6
      %v2238 = vshll.u32 %v2171, 16
      %v2240 = vrot.slane %v2238, 7
      %v2241 = vor.u32 %v2237, %v2240
      %v2242 = vsel %vm1384, %v2233, %v2241
      %v2243 = vrot.slane %v2241, 4
      %v2245 = vshrl.u32 %v2172, 16
      %v2247 = vrot.slane %v2245, 6
      %v2248 = vshll.u32 %v2172, 16
      %v2250 = vrot.slane %v2248, 7
      %v2251 = vor.u32 %v2247, %v2250
      %v2252 = vsel %vm1384, %v2243, %v2251
      %v2253 = vrot.slane %v2251, 4
      %v2255 = vshrl.u32 %v2173, 16
      %v2257 = vrot.slane %v2255, 6
      %v2258 = vshll.u32 %v2173, 16
      %v2260 = vrot.slane %v2258, 7
      %v2261 = vor.u32 %v2257, %v2260
      %v2262 = vsel %vm1384, %v2253, %v2261
      %v2263 = vrot.slane %v2261, 4
      %v2265 = vshrl.u32 %v2174, 16
      %v2267 = vrot.slane %v2265, 6
      %v2268 = vshll.u32 %v2174, 16
      %v2270 = vrot.slane %v2268, 7
      %v2271 = vor.u32 %v2267, %v2270
      %v2272 = vsel %vm1384, %v2263, %v2271
      %v2273 = vrot.slane %v2267, 4
      %vm2285 = vcmask 257025
      %vm2286 = vmand %vm2285, %vm1496
      %v2287 = vld [vmem:[#allocation3 + $0x4] sm:$0xe]
      %v2288 = vsel %vm2286, %v2182, %v2287
      %2289 = vst [vmem:[#allocation3 + $0x4] sm:$0xe] %v2288
      %2290 = vst.msk [vmem:[#allocation3 + $0x8] sm:$0xf] %vm1001, %v2192
      %2291 = vst.msk [vmem:[#allocation3 + $0xc] sm:$0xf] %vm1001, %v2202
      %2292 = vst.msk [vmem:[#allocation3 + $0x10] sm:$0xf] %vm1001, %v2212
      %2293 = vst.msk [vmem:[#allocation3 + $0x14] sm:$0xf] %vm1001, %v2222
      %2294 = vst.msk [vmem:[#allocation3 + $0x18] sm:$0xf] %vm1001, %v2232
      %2295 = vst.msk [vmem:[#allocation3 + $0x1c] sm:$0xf] %vm1001, %v2242
      %2296 = vst.msk [vmem:[#allocation3 + $0x20] sm:$0xf] %vm1001, %v2252
      %2297 = vst.msk [vmem:[#allocation3 + $0x24] sm:$0xf] %vm1001, %v2262
      %2298 = vst.msk [vmem:[#allocation3 + $0x28] sm:$0xf] %vm1001, %v2272
      %vm2299 = vcmask 253952
      %vm2300 = vmand %vm2299, %vm1511
      %v2301 = vld [vmem:[#allocation3 + $0x2c] sm:$0x1]
      %v2302 = vsel %vm2300, %v2273, %v2301
      %2303 = vst [vmem:[#allocation3 + $0x2c] sm:$0x1] %v2302
      %v2304 = vld [vmem:[#allocation3] sm:$0xf]
      %v2305 = vld [vmem:[#allocation3 + $0x4] sm:$0xf]
      %v2306 = vld [vmem:[#allocation3 + $0x8] sm:$0xf]
      %v2307 = vld [vmem:[#allocation3 + $0xc] sm:$0xf]
      %v2308 = vld [vmem:[#allocation3 + $0x10] sm:$0xf]
      %v2309 = vld [vmem:[#allocation3 + $0x14] sm:$0xf]
      %v2310 = vld [vmem:[#allocation3 + $0x18] sm:$0xf]
      %v2311 = vld [vmem:[#allocation3 + $0x1c] sm:$0xf]
      %v2312 = vld [vmem:[#allocation3 + $0x20] sm:$0xf]
      %v2313 = vld [vmem:[#allocation3 + $0x24] sm:$0x7]
      %v2314 = vld [vmem:[#allocation3 + $0x24] sm:$0xf]
      %v2315 = vld [vmem:[#allocation3] sm:$0xe]
      %v2316 = vld [vmem:[#allocation3 + $0x4] sm:$0xe]
      %v2317 = vld [vmem:[#allocation3 + $0x28] sm:$0xf]
      %v2318 = vld [vmem:[#allocation3 + $0x2c] sm:$0x1]
      %v2319 = vld [vmem:[#allocation3 + $0x4] sm:$0xc]
      %v2320 = vld [vmem:[#allocation3 + $0x8] sm:$0xc]
      %v2321 = vld [vmem:[#allocation3 + $0x2c] sm:$0xf]
      %v2322 = vld [vmem:[#allocation3 + $0x30] sm:$0x1]
      %v2323 = vld [vmem:[#allocation3 + $0x30] sm:$0x3]
      %v2324 = vld [vmem:[#allocation3 + $0x8] sm:$0x8]
      %v2335 = vunpack.c.l.b16 %v2304
      %v2336 = vunpack.c.l.b16 %v2305
      %v2337 = vunpack.c.l.b16 %v2306
      %v2338 = vunpack.c.l.b16 %v2307
      %v2339 = vunpack.c.l.b16 %v2308
      %v2340 = vunpack.c.l.b16 %v2309
      %v2341 = vunpack.c.l.b16 %v2310
      %v2342 = vunpack.c.l.b16 %v2311
      %v2343 = vunpack.c.l.b16 %v2312
      %v2344 = vunpack.c.l.b16 %v2313
      %v2345 = vpack.c.b16 %v2336, %v2335
      %v2346 = vpack.c.b16 %v2338, %v2337
      %v2347 = vpack.c.b16 %v2340, %v2339
      %v2348 = vpack.c.b16 %v2342, %v2341
      %v2349 = vpack.c.b16 %v2344, %v2343
      %v2351 = vunpack.c.l.b16 %v2314
      %v2352 = vpack.c.b16 %v2351, %v2343
      %v2354 = vshrl.u32 %v2345, 16
      %v2356 = vshll.u32 %v2345, 16
      %v2358 = vrot.slane %v2356, 1
      %v2359 = vor.u32 %v2354, %v2358
      %v2361 = vshll.u32 %v2346, 16
      %v2363 = vrot.slane %v2361, 1
      %v2364 = vsel %vm1563, %v2359, %v2363
      %v2365 = vshrl.u32 %v2346, 16
      %v2367 = vor.u32 %v2365, %v2363
      %v2369 = vshll.u32 %v2347, 16
      %v2371 = vrot.slane %v2369, 1
      %v2372 = vsel %vm1563, %v2367, %v2371
      %v2373 = vshrl.u32 %v2347, 16
      %v2375 = vor.u32 %v2373, %v2371
      %v2377 = vshll.u32 %v2348, 16
      %v2379 = vrot.slane %v2377, 1
      %v2380 = vsel %vm1563, %v2375, %v2379
      %v2381 = vshrl.u32 %v2348, 16
      %v2383 = vor.u32 %v2381, %v2379
      %v2385 = vshll.u32 %v2352, 16
      %v2387 = vrot.slane %v2385, 1
      %v2388 = vsel %vm1563, %v2383, %v2387
      %v2389 = vshrl.u32 %v2352, 16
      %v2391 = vor.u32 %v2389, %v2387
      %2392 = vrot.lane.b32.xlu0 %v2364, 32
      %v2393 = vpop.permute.xlu0 %2392
      %2394 = vrot.lane.b32.xlu0 %v2372, 32
      %v2395 = vpop.permute.xlu0 %2394
      %2396 = vrot.lane.b32.xlu0 %v2380, 32
      %v2397 = vpop.permute.xlu0 %2396
      %2398 = vrot.lane.b32.xlu0 %v2388, 32
      %v2399 = vpop.permute.xlu0 %2398
      %2400 = vrot.lane.b32.xlu0 %v2391, 32
      %v2401 = vpop.permute.xlu0 %2400
      %v2403 = vunpack.c.l.b16 %v2315
      %v2404 = vpack.c.b16 %v2336, %v2403
      %v2405 = vrot.slane %v2404, 1
      %v2406 = vrot.slane %v2346, 1
      %v2407 = vsel %vm1617, %v2405, %v2406
      %v2408 = vrot.slane %v2347, 1
      %v2409 = vsel %vm1617, %v2406, %v2408
      %v2410 = vrot.slane %v2348, 1
      %v2411 = vsel %vm1617, %v2408, %v2410
      %v2412 = vrot.slane %v2352, 1
      %v2413 = vsel %vm1617, %v2410, %v2412
      %2414 = vrot.lane.b32.xlu0 %v2407, 64
      %v2415 = vpop.permute.xlu0 %2414
      %2416 = vrot.lane.b32.xlu0 %v2409, 64
      %v2417 = vpop.permute.xlu0 %2416
      %2418 = vrot.lane.b32.xlu0 %v2411, 64
      %v2419 = vpop.permute.xlu0 %2418
      %2420 = vrot.lane.b32.xlu0 %v2413, 64
      %v2421 = vpop.permute.xlu0 %2420
      %2422 = vrot.lane.b32.xlu0 %v2412, 64
      %v2423 = vpop.permute.xlu0 %2422
      %v2426 = vunpack.c.l.b16 %v2316
      %v2427 = vunpack.c.l.b16 %v2317
      %v2428 = vpack.c.b16 %v2337, %v2426
      %v2429 = vpack.c.b16 %v2339, %v2338
      %v2430 = vpack.c.b16 %v2341, %v2340
      %v2431 = vpack.c.b16 %v2343, %v2342
      %v2432 = vpack.c.b16 %v2427, %v2351
      %v2433 = vrot.slane %v2428, 1
      %v2434 = vrot.slane %v2429, 1
      %v2435 = vsel %vm1617, %v2433, %v2434
      %v2436 = vrot.slane %v2430, 1
      %v2437 = vsel %vm1617, %v2434, %v2436
      %v2438 = vrot.slane %v2431, 1
      %v2439 = vsel %vm1617, %v2436, %v2438
      %v2440 = vrot.slane %v2432, 1
      %v2441 = vsel %vm1617, %v2438, %v2440
      %2442 = vrot.lane.b32.xlu0 %v2435, 96
      %v2443 = vpop.permute.xlu0 %2442
      %2444 = vrot.lane.b32.xlu0 %v2437, 96
      %v2445 = vpop.permute.xlu0 %2444
      %2446 = vrot.lane.b32.xlu0 %v2439, 96
      %v2447 = vpop.permute.xlu0 %2446
      %2448 = vrot.lane.b32.xlu0 %v2441, 96
      %v2449 = vpop.permute.xlu0 %2448
      %2450 = vrot.lane.b32.xlu0 %v2440, 96
      %v2451 = vpop.permute.xlu0 %2450
      %v2453 = vunpack.c.l.b16 %v2318
      %v2454 = vpack.c.b16 %v2453, %v2453
      %v2456 = vshrl.u32 %v2428, 16
      %v2458 = vrot.slane %v2456, 1
      %v2459 = vshll.u32 %v2428, 16
      %v2461 = vrot.slane %v2459, 2
      %v2462 = vor.u32 %v2458, %v2461
      %v2464 = vshrl.u32 %v2429, 16
      %v2466 = vrot.slane %v2464, 1
      %v2467 = vshll.u32 %v2429, 16
      %v2469 = vrot.slane %v2467, 2
      %v2470 = vor.u32 %v2466, %v2469
      %v2471 = vsel %vm1097, %v2462, %v2470
      %v2473 = vshrl.u32 %v2430, 16
      %v2475 = vrot.slane %v2473, 1
      %v2476 = vshll.u32 %v2430, 16
      %v2478 = vrot.slane %v2476, 2
      %v2479 = vor.u32 %v2475, %v2478
      %v2480 = vsel %vm1097, %v2470, %v2479
      %v2482 = vshrl.u32 %v2431, 16
      %v2484 = vrot.slane %v2482, 1
      %v2485 = vshll.u32 %v2431, 16
      %v2487 = vrot.slane %v2485, 2
      %v2488 = vor.u32 %v2484, %v2487
      %v2489 = vsel %vm1097, %v2479, %v2488
      %v2491 = vshrl.u32 %v2432, 16
      %v2493 = vrot.slane %v2491, 1
      %v2494 = vshll.u32 %v2432, 16
      %v2496 = vrot.slane %v2494, 2
      %v2497 = vor.u32 %v2493, %v2496
      %v2498 = vsel %vm1097, %v2488, %v2497
      %v2500 = vshll.u32 %v2454, 16
      %v2502 = vrot.slane %v2500, 2
      %v2503 = vsel %vm1097, %v2497, %v2502
      %v2505 = vunpack.c.l.b16 %v2319
      %v2506 = vpack.c.b16 %v2337, %v2505
      %vm2507 = vcmask 1045504
      %v2508 = vrot.slane %v2506, 2
      %v2509 = vrot.slane %v2429, 2
      %v2510 = vsel %vm2507, %v2508, %v2509
      %v2511 = vrot.slane %v2430, 2
      %v2512 = vsel %vm2507, %v2509, %v2511
      %v2513 = vrot.slane %v2431, 2
      %v2514 = vsel %vm2507, %v2511, %v2513
      %v2515 = vrot.slane %v2432, 2
      %v2516 = vsel %vm2507, %v2513, %v2515
      %v2517 = vrot.slane %v2454, 2
      %v2518 = vsel %vm2507, %v2515, %v2517
      %2519 = vrot.lane.b32.xlu0 %v2510, 32
      %v2520 = vpop.permute.xlu0 %2519
      %2521 = vrot.lane.b32.xlu0 %v2512, 32
      %v2522 = vpop.permute.xlu0 %2521
      %2523 = vrot.lane.b32.xlu0 %v2514, 32
      %v2524 = vpop.permute.xlu0 %2523
      %2525 = vrot.lane.b32.xlu0 %v2516, 32
      %v2526 = vpop.permute.xlu0 %2525
      %2527 = vrot.lane.b32.xlu0 %v2518, 32
      %v2528 = vpop.permute.xlu0 %2527
      %v2532 = vunpack.c.l.b16 %v2320
      %v2533 = vunpack.c.l.b16 %v2321
      %v2534 = vunpack.c.l.b16 %v2322
      %v2535 = vpack.c.b16 %v2338, %v2532
      %v2536 = vpack.c.b16 %v2533, %v2427
      %v2537 = vpack.c.b16 %v2534, %v2534
      %v2538 = vrot.slane %v2535, 2
      %v2539 = vrot.slane %v2347, 2
      %v2540 = vsel %vm2507, %v2538, %v2539
      %v2541 = vrot.slane %v2348, 2
      %v2542 = vsel %vm2507, %v2539, %v2541
      %v2543 = vrot.slane %v2352, 2
      %v2544 = vsel %vm2507, %v2541, %v2543
      %v2545 = vrot.slane %v2536, 2
      %v2546 = vsel %vm2507, %v2543, %v2545
      %v2547 = vrot.slane %v2537, 2
      %v2548 = vsel %vm2507, %v2545, %v2547
      %2549 = vrot.lane.b32.xlu0 %v2540, 64
      %v2550 = vpop.permute.xlu0 %2549
      %2551 = vrot.lane.b32.xlu0 %v2542, 64
      %v2552 = vpop.permute.xlu0 %2551
      %2553 = vrot.lane.b32.xlu0 %v2544, 64
      %v2554 = vpop.permute.xlu0 %2553
      %2555 = vrot.lane.b32.xlu0 %v2546, 64
      %v2556 = vpop.permute.xlu0 %2555
      %2557 = vrot.lane.b32.xlu0 %v2548, 64
      %v2558 = vpop.permute.xlu0 %2557
      %v2560 = vunpack.c.l.b16 %v2323
      %v2561 = vpack.c.b16 %v2560, %v2560
      %vm2562 = vsmask.f32 5376
      %v2564 = vshrl.u32 %v2535, 16
      %v2566 = vrot.slane %v2564, 2
      %v2567 = vshll.u32 %v2535, 16
      %v2569 = vrot.slane %v2567, 3
      %v2570 = vor.u32 %v2566, %v2569
      %v2571 = vrot.slane %v2373, 2
      %v2572 = vrot.slane %v2369, 3
      %v2573 = vor.u32 %v2571, %v2572
      %v2574 = vsel %vm2562, %v2570, %v2573
      %v2575 = vrot.slane %v2381, 2
      %v2576 = vrot.slane %v2377, 3
      %v2577 = vor.u32 %v2575, %v2576
      %v2578 = vsel %vm2562, %v2573, %v2577
      %v2579 = vrot.slane %v2389, 2
      %v2580 = vrot.slane %v2385, 3
      %v2581 = vor.u32 %v2579, %v2580
      %v2582 = vsel %vm2562, %v2577, %v2581
      %v2584 = vshrl.u32 %v2536, 16
      %v2586 = vrot.slane %v2584, 2
      %v2587 = vshll.u32 %v2536, 16
      %v2589 = vrot.slane %v2587, 3
      %v2590 = vor.u32 %v2586, %v2589
      %v2591 = vsel %vm2562, %v2581, %v2590
      %v2593 = vshrl.u32 %v2561, 16
      %v2595 = vrot.slane %v2593, 2
      %v2596 = vshll.u32 %v2561, 16
      %v2598 = vrot.slane %v2596, 3
      %v2599 = vor.u32 %v2595, %v2598
      %v2600 = vsel %vm2562, %v2590, %v2599
      %2601 = vrot.lane.b32.xlu0 %v2574, 96
      %v2602 = vpop.permute.xlu0 %2601
      %2603 = vrot.lane.b32.xlu0 %v2578, 96
      %v2604 = vpop.permute.xlu0 %2603
      %2605 = vrot.lane.b32.xlu0 %v2582, 96
      %v2606 = vpop.permute.xlu0 %2605
      %2607 = vrot.lane.b32.xlu0 %v2591, 96
      %v2608 = vpop.permute.xlu0 %2607
      %2609 = vrot.lane.b32.xlu0 %v2600, 96
      %v2610 = vpop.permute.xlu0 %2609
      %v2612 = vunpack.c.l.b16 %v2324
      %v2613 = vpack.c.b16 %v2338, %v2612
      %vm2614 = vcmask 1044480
      %v2615 = vrot.slane %v2613, 3
      %v2616 = vrot.slane %v2347, 3
      %v2617 = vsel %vm2614, %v2615, %v2616
      %v2618 = vrot.slane %v2348, 3
      %v2619 = vsel %vm2614, %v2616, %v2618
      %v2620 = vrot.slane %v2352, 3
      %v2621 = vsel %vm2614, %v2618, %v2620
      %v2622 = vrot.slane %v2536, 3
      %v2623 = vsel %vm2614, %v2620, %v2622
      %v2624 = vrot.slane %v2561, 3
      %v2625 = vsel %vm2614, %v2622, %v2624
      %v2627 = vsel %vm1159, %v2345, %v2393
      %v2629 = vsel %vm1159, %v2346, %v2395
      %v2631 = vsel %vm1159, %v2347, %v2397
      %v2633 = vsel %vm1159, %v2348, %v2399
      %v2636 = vsel %vm1159, %v2349, %v2401
      %vm2637 = vcmask 523264
      %v2639 = vsel %vm2637, %v2627, %v2415
      %v2641 = vsel %vm2637, %v2629, %v2417
      %v2643 = vsel %vm2637, %v2631, %v2419
      %v2645 = vsel %vm2637, %v2633, %v2421
      %v2647 = vsel %vm2637, %v2636, %v2423
      %vm2648 = vcmask 785408
      %v2650 = vsel %vm2648, %v2639, %v2443
      %v2653 = vsel %vm2648, %v2641, %v2445
      %v2656 = vsel %vm2648, %v2643, %v2447
      %v2659 = vsel %vm2648, %v2645, %v2449
      %v2662 = vsel %vm2648, %v2647, %v2451
      %v2666 = vsel %vm1159, %v2471, %v2520
      %v2669 = vsel %vm1159, %v2480, %v2522
      %v2672 = vsel %vm1159, %v2489, %v2524
      %v2675 = vsel %vm1159, %v2498, %v2526
      %v2678 = vsel %vm1159, %v2503, %v2528
      %v2680 = vsel %vm2637, %v2666, %v2550
      %v2682 = vsel %vm2637, %v2669, %v2552
      %v2684 = vsel %vm2637, %v2672, %v2554
      %v2686 = vsel %vm2637, %v2675, %v2556
      %v2688 = vsel %vm2637, %v2678, %v2558
      %v2690 = vsel %vm2648, %v2680, %v2602
      %v2693 = vsel %vm2648, %v2682, %v2604
      %v2696 = vsel %vm2648, %v2684, %v2606
      %v2699 = vsel %vm2648, %v2686, %v2608
      %v2702 = vsel %vm2648, %v2688, %v2610
      %v2704 = vld [vmem:[%s15] sm:$0xf]
      %v2705 = vld [vmem:[%s15 + $0x4] sm:$0xf]
      %v2706 = vld [vmem:[%s15 + $0x8] sm:$0xf]
      %v2707 = vld [vmem:[%s15 + $0xc] sm:$0xf]
      %v2708 = vld [vmem:[%s15 + $0x10] sm:$0xf]
      %v2709 = vld [vmem:[%s15 + $0x14] sm:$0xf]
      %v2710 = vld [vmem:[%s15 + $0x18] sm:$0xf]
      %v2711 = vld [vmem:[%s15 + $0x1c] sm:$0xf]
      %v2712 = vld [vmem:[%s15 + $0x20] sm:$0xf]
      %v2713 = vld [vmem:[%s15 + $0x24] sm:$0xf]
      %v2714 = vld [vmem:[%s15 + $0x28] sm:$0xf]
      %v2715 = vld [vmem:[%s15 + $0x2c] sm:$0xf]
      %v2716 = vld [vmem:[%s15 + $0x30] sm:$0xf]
      %v2717 = vld [vmem:[%s15 + $0x34] sm:$0xf]
      %v2718 = vld [vmem:[%s15 + $0x38] sm:$0xf]
      %v2719 = vld [vmem:[%s15 + $0x3c] sm:$0xf]
      %v2720 = vld [vmem:[%s15 + $0x40] sm:$0xf]
      %v2721 = vld [vmem:[%s15 + $0x44] sm:$0xf]
      %v2722 = vld [vmem:[%s15 + $0x48] sm:$0xf]
      %v2723 = vld [vmem:[%s15 + $0x4c] sm:$0xf]
      %v2724 = vld [vmem:[%s15 + $0x50] sm:$0xf]
      %v2725 = vld [vmem:[%s15 + $0x54] sm:$0xf]
      %v2726 = vld [vmem:[%s15 + $0x58] sm:$0xf]
      %v2727 = vld [vmem:[%s15 + $0x5c] sm:$0xf]
      %v2728 = vld [vmem:[%s15 + $0x60] sm:$0xf]
      %v2729 = vld [vmem:[%s15 + $0x64] sm:$0xf]
      %v2730 = vld [vmem:[%s15 + $0x68] sm:$0xf]
      %v2731 = vld [vmem:[%s15 + $0x6c] sm:$0xf]
      %v2732 = vld [vmem:[%s15 + $0x70] sm:$0xf]
      %v2733 = vld [vmem:[%s15 + $0x74] sm:$0xf]
      %v2734 = vld [vmem:[%s15 + $0x78] sm:$0xf]
      %v2735 = vld [vmem:[%s15 + $0x7c] sm:$0xf]
      %v2736 = vld [vmem:[%s15 + $0x80] sm:$0xf]
      %v2737 = vld [vmem:[%s15 + $0x84] sm:$0xf]
      %v2738 = vld [vmem:[%s15 + $0x88] sm:$0xf]
      %v2739 = vld [vmem:[%s15 + $0x8c] sm:$0xf]
      %v2776 = vunpack.c.l.b16 %v2704
      %v2777 = vunpack.c.l.b16 %v2705
      %v2778 = vunpack.c.l.b16 %v2706
      %v2779 = vunpack.c.l.b16 %v2707
      %v2780 = vunpack.c.l.b16 %v2708
      %v2781 = vunpack.c.l.b16 %v2709
      %v2782 = vunpack.c.l.b16 %v2710
      %v2783 = vunpack.c.l.b16 %v2711
      %v2784 = vunpack.c.l.b16 %v2712
      %v2785 = vunpack.c.l.b16 %v2713
      %v2786 = vunpack.c.l.b16 %v2714
      %v2787 = vunpack.c.l.b16 %v2715
      %v2788 = vunpack.c.l.b16 %v2716
      %v2789 = vunpack.c.l.b16 %v2717
      %v2790 = vunpack.c.l.b16 %v2718
      %v2791 = vunpack.c.l.b16 %v2719
      %v2792 = vunpack.c.l.b16 %v2720
      %v2793 = vunpack.c.l.b16 %v2721
      %v2794 = vunpack.c.l.b16 %v2722
      %v2795 = vunpack.c.l.b16 %v2723
      %v2796 = vunpack.c.l.b16 %v2724
      %v2797 = vunpack.c.l.b16 %v2725
      %v2798 = vunpack.c.l.b16 %v2726
      %v2799 = vunpack.c.l.b16 %v2727
      %v2800 = vunpack.c.l.b16 %v2728
      %v2801 = vunpack.c.l.b16 %v2729
      %v2802 = vunpack.c.l.b16 %v2730
      %v2803 = vunpack.c.l.b16 %v2731
      %v2804 = vunpack.c.l.b16 %v2732
      %v2805 = vunpack.c.l.b16 %v2733
      %v2806 = vunpack.c.l.b16 %v2734
      %v2807 = vunpack.c.l.b16 %v2735
      %v2808 = vunpack.c.l.b16 %v2736
      %v2809 = vunpack.c.l.b16 %v2737
      %v2810 = vunpack.c.l.b16 %v2738
      %v2811 = vunpack.c.l.b16 %v2739
      %v2812 = vpack.c.b16 %v2777, %v2776
      %v2813 = vpack.c.b16 %v2779, %v2778
      %v2814 = vpack.c.b16 %v2781, %v2780
      %v2815 = vpack.c.b16 %v2783, %v2782
      %v2816 = vpack.c.b16 %v2785, %v2784
      %v2817 = vpack.c.b16 %v2787, %v2786
      %v2818 = vpack.c.b16 %v2789, %v2788
      %v2819 = vpack.c.b16 %v2791, %v2790
      %v2820 = vpack.c.b16 %v2793, %v2792
      %v2821 = vpack.c.b16 %v2795, %v2794
      %v2822 = vpack.c.b16 %v2797, %v2796
      %v2823 = vpack.c.b16 %v2799, %v2798
      %v2824 = vpack.c.b16 %v2801, %v2800
      %v2825 = vpack.c.b16 %v2803, %v2802
      %v2826 = vpack.c.b16 %v2805, %v2804
      %v2827 = vpack.c.b16 %v2807, %v2806
      %v2828 = vpack.c.b16 %v2809, %v2808
      %v2829 = vpack.c.b16 %v2811, %v2810
      %v2849 = vsel %vm1159, %v2617, 0
      %v2852 = vsel %vm1159, %v2619, 0
      %v2855 = vsel %vm1159, %v2621, 0
      %v2858 = vsel %vm1159, %v2623, 0
      %v2861 = vsel %vm1159, %v2625, 0
      %2863 = vmatprep.subr.bf16.mxu0 0
      %2864 = vmatpush1.bf16.msra.mxu0 %v2812
      %2865 = vmatprep.subr.bf16.mxu0 0
      %2866 = vmatpush1.bf16.msra.mxu0 %v2813
      %2867 = vmatprep.subr.bf16.mxu0 0
      %2868 = vmatpush1.bf16.msra.mxu0 %v2814
      %2869 = vmatprep.subr.bf16.mxu0 0
      %2870 = vmatpush1.bf16.msra.mxu0 %v2815
      %2871 = vmatprep.subr.bf16.mxu0 0
      %2872 = vmatpush1.bf16.msra.mxu0 %v2816
      %2873 = vmatprep.subr.bf16.mxu0 0
      %2874 = vmatpush1.bf16.msra.mxu0 %v2817
      %2875 = vmatprep.subr.bf16.mxu0 0
      %2876 = vmatpush1.bf16.msra.mxu0 %v2818
      %2877 = vmatprep.subr.bf16.mxu0 0
      %2878 = vmatpush1.bf16.msra.mxu0 %v2819
      %2879 = vmatprep.subr.bf16.mxu0 0
      %2880 = vmatpush1.bf16.msra.mxu0 %v2820
      %2881 = vmatprep.subr.bf16.mxu0 0
      %2882 = vmatpush1.bf16.msra.mxu0 %v2821
      %2883 = vmatprep.subr.bf16.mxu0 0
      %2884 = vmatpush1.bf16.msra.mxu0 %v2822
      %2885 = vmatprep.subr.bf16.mxu0 0
      %2886 = vmatpush1.bf16.msra.mxu0 %v2823
      %2887 = vmatprep.subr.bf16.mxu0 0
      %2888 = vmatpush1.bf16.msra.mxu0 %v2824
      %2889 = vmatprep.subr.bf16.mxu0 0
      %2890 = vmatpush1.bf16.msra.mxu0 %v2825
      %2891 = vmatprep.subr.bf16.mxu0 0
      %2892 = vmatpush1.bf16.msra.mxu0 %v2826
      %2893 = vmatprep.subr.bf16.mxu0 0
      %2894 = vmatpush1.bf16.msra.mxu0 %v2827
      %2895 = vmatprep.mubr.bf16.mxu0 %v2690
      %2896 = vmatmul.mubr.bf16.gmra.mrb[0].mxu0 %v2650
      %v2897 = vpop.f32.mrb[0].mxu0
      %v2898 = vadd.f32 0.0, %v2897
      %v2899 = vpop.f32.mrb[0].mxu0
      %v2900 = vpop.f32.mrb[0].mxu0
      %v2901 = vadd.f32 0.0, %v2900
      %v2902 = vpop.f32.mrb[0].mxu0
      %2903 = vmatprep.mubr.bf16.mxu0 %v2693
      %2904 = vmatmul.mubr.bf16.gmra.mrb[0].mxu0 %v2653
      %v2905 = vpop.f32.mrb[0].mxu0
      %v2906 = vadd.f32 0.0, %v2905
      %v2907 = vpop.f32.mrb[0].mxu0
      %v2908 = vpop.f32.mrb[0].mxu0
      %v2909 = vadd.f32 0.0, %v2908
      %v2910 = vpop.f32.mrb[0].mxu0
      %2911 = vmatprep.mubr.bf16.mxu0 %v2696
      %2912 = vmatmul.mubr.bf16.gmra.mrb[0].mxu0 %v2656
      %v2913 = vpop.f32.mrb[0].mxu0
      %v2914 = vadd.f32 0.0, %v2913
      %v2915 = vpop.f32.mrb[0].mxu0
      %v2916 = vpop.f32.mrb[0].mxu0
      %v2917 = vadd.f32 0.0, %v2916
      %v2918 = vpop.f32.mrb[0].mxu0
      %2919 = vmatprep.mubr.bf16.mxu0 %v2699
      %2920 = vmatmul.mubr.bf16.gmra.mrb[0].mxu0 %v2659
      %v2921 = vpop.f32.mrb[0].mxu0
      %v2922 = vadd.f32 0.0, %v2921
      %v2923 = vpop.f32.mrb[0].mxu0
      %v2924 = vpop.f32.mrb[0].mxu0
      %v2925 = vadd.f32 0.0, %v2924
      %v2926 = vpop.f32.mrb[0].mxu0
      %2927 = vmatprep.mubr.bf16.mxu0 %v2702
      %2928 = vmatmul.mubr.bf16.gmra.mrb[0].mxu0 %v2662
      %v2929 = vpop.f32.mrb[0].mxu0
      %v2930 = vadd.f32 0.0, %v2929
      %v2931 = vpop.f32.mrb[0].mxu0
      %v2932 = vpop.f32.mrb[0].mxu0
      %v2933 = vadd.f32 0.0, %v2932
      %v2934 = vpop.f32.mrb[0].mxu0
      %2935 = vdwg.mxu0
      %2936 = vmatprep.subr.bf16.mxu0 0
      %2937 = vmatpush1.bf16.msra.mxu0 %v2828
      %2938 = vmatprep.subr.bf16.mxu0 0
      %2939 = vmatpush1.bf16.msra.mxu0 %v2829
      %2940 = vmatprep.subr.bf16.mxu0 0
      %2941 = vmatpush1.bf16.msra.mxu0 0
      %2942 = vmatprep.subr.bf16.mxu0 0
      %2943 = vmatpush1.bf16.msra.mxu0 0
      %2944 = vmatprep.subr.bf16.mxu0 0
      %2945 = vmatpush1.bf16.msra.mxu0 0
      %2946 = vmatprep.subr.bf16.mxu0 0
      %2947 = vmatpush1.bf16.msra.mxu0 0
      %2948 = vmatprep.subr.bf16.mxu0 0
      %2949 = vmatpush1.bf16.msra.mxu0 0
      %2950 = vmatprep.subr.bf16.mxu0 0
      %2951 = vmatpush1.bf16.msra.mxu0 0
      %2952 = vmatprep.subr.bf16.mxu0 0
      %2953 = vmatpush1.bf16.msra.mxu0 0
      %2954 = vmatprep.subr.bf16.mxu0 0
      %2955 = vmatpush1.bf16.msra.mxu0 0
      %2956 = vmatprep.subr.bf16.mxu0 0
      %2957 = vmatpush1.bf16.msra.mxu0 0
      %2958 = vmatprep.subr.bf16.mxu0 0
      %2959 = vmatpush1.bf16.msra.mxu0 0
      %2960 = vmatprep.subr.bf16.mxu0 0
      %2961 = vmatpush1.bf16.msra.mxu0 0
      %2962 = vmatprep.subr.bf16.mxu0 0
      %2963 = vmatpush1.bf16.msra.mxu0 0
      %2964 = vmatprep.subr.bf16.mxu0 0
      %2965 = vmatpush1.bf16.msra.mxu0 0
      %2966 = vmatprep.subr.bf16.mxu0 0
      %2967 = vmatpush1.bf16.msra.mxu0 0
      %2968 = vmatprep.mubr.bf16.mxu0 0
      %2969 = vmatmul.mubr.bf16.gmra.mrb[0].mxu0 %v2849
      %v2970 = vpop.f32.mrb[0].mxu0
      %v2971 = vadd.f32 %v2898, %v2970
      %v2972 = vpop.f32.mrb[0].mxu0
      %v2973 = vpop.f32.mrb[0].mxu0
      %v2974 = vadd.f32 %v2901, %v2973
      %v2975 = vpop.f32.mrb[0].mxu0
      %2976 = vmatprep.mubr.bf16.mxu0 0
      %2977 = vmatmul.mubr.bf16.gmra.mrb[0].mxu0 %v2852
      %v2978 = vpop.f32.mrb[0].mxu0
      %v2979 = vadd.f32 %v2906, %v2978
      %v2980 = vpop.f32.mrb[0].mxu0
      %v2981 = vpop.f32.mrb[0].mxu0
      %v2982 = vadd.f32 %v2909, %v2981
      %v2983 = vpop.f32.mrb[0].mxu0
      %2984 = vmatprep.mubr.bf16.mxu0 0
      %2985 = vmatmul.mubr.bf16.gmra.mrb[0].mxu0 %v2855
      %v2986 = vpop.f32.mrb[0].mxu0
      %v2987 = vadd.f32 %v2914, %v2986
      %v2988 = vpop.f32.mrb[0].mxu0
      %v2989 = vpop.f32.mrb[0].mxu0
      %v2990 = vadd.f32 %v2917, %v2989
      %v2991 = vpop.f32.mrb[0].mxu0
      %2992 = vmatprep.mubr.bf16.mxu0 0
      %2993 = vmatmul.mubr.bf16.gmra.mrb[0].mxu0 %v2858
      %v2994 = vpop.f32.mrb[0].mxu0
      %v2995 = vadd.f32 %v2922, %v2994
      %v2996 = vpop.f32.mrb[0].mxu0
      %v2997 = vpop.f32.mrb[0].mxu0
      %v2998 = vadd.f32 %v2925, %v2997
      %v2999 = vpop.f32.mrb[0].mxu0
      %3000 = vmatprep.mubr.bf16.mxu0 0
      %3001 = vmatmul.mubr.bf16.gmra.mrb[0].mxu0 %v2861
      %v3002 = vpop.f32.mrb[0].mxu0
      %v3003 = vadd.f32 %v2930, %v3002
      %v3004 = vpop.f32.mrb[0].mxu0
      %v3005 = vpop.f32.mrb[0].mxu0
      %v3006 = vadd.f32 %v2933, %v3005
      %v3007 = vpop.f32.mrb[0].mxu0
      %3008 = vdwg.mxu0
      %v3009 = vld [vmem:[%s17] sm:$0x1]
      %v3011 = vlaneseq
      %v3012 = vshrl.u32 %v3011, 7
      %v3013 = vsub.s32 0, %v3012
      %v3014 = vrot.slane %v3009, %v3013
      %v3016 = vmul.f32 %v2971, %v3014
      %v3017 = vmul.f32 %v2974, %v3014
      %v3018 = vmul.f32 %v2979, %v3014
      %v3019 = vmul.f32 %v2982, %v3014
      %v3020 = vmul.f32 %v2987, %v3014
      %v3021 = vmul.f32 %v2990, %v3014
      %v3022 = vmul.f32 %v2995, %v3014
      %v3023 = vmul.f32 %v2998, %v3014
      %v3024 = vmul.f32 %v3003, %v3014
      %v3025 = vmul.f32 %v3006, %v3014
      %v3026 = vld [vmem:[%s19] sm:$0x1]
      %v3028 = vlaneseq
      %v3029 = vshrl.u32 %v3028, 7
      %v3030 = vsub.s32 0, %v3029
      %v3031 = vrot.slane %v3026, %v3030
      %v3033 = vadd.f32 %v3016, %v3031
      %v3034 = vadd.f32 %v3017, %v3031
      %v3035 = vadd.f32 %v3018, %v3031
      %v3036 = vadd.f32 %v3019, %v3031
      %v3037 = vadd.f32 %v3020, %v3031
      %v3038 = vadd.f32 %v3021, %v3031
      %v3039 = vadd.f32 %v3022, %v3031
      %v3040 = vadd.f32 %v3023, %v3031
      %v3041 = vadd.f32 %v3024, %v3031
      %v3042 = vadd.f32 %v3025, %v3031
      %v3043 = vmax.f32 %v3033, 0.0
      %v3044 = vmax.f32 %v3034, 0.0
      %v3045 = vmax.f32 %v3035, 0.0
      %v3046 = vmax.f32 %v3036, 0.0
      %v3047 = vmax.f32 %v3037, 0.0
      %v3048 = vmax.f32 %v3038, 0.0
      %v3049 = vmax.f32 %v3039, 0.0
      %v3050 = vmax.f32 %v3040, 0.0
      %v3051 = vmax.f32 %v3041, 0.0
      %v3052 = vmax.f32 %v3042, 0.0
      %v3053 = vpack.c.bf16 %v3044, %v3043
      %v3054 = vpack.c.bf16 %v3046, %v3045
      %v3055 = vpack.c.bf16 %v3048, %v3047
      %v3056 = vpack.c.bf16 %v3050, %v3049
      %v3057 = vpack.c.bf16 %v3052, %v3051
      %v3063 = vunpack.c.l.b16 %v3053
      %v3064 = vunpack.c.h.b16 %v3053
      %v3065 = vunpack.c.l.b16 %v3054
      %v3066 = vunpack.c.h.b16 %v3054
      %v3067 = vunpack.c.l.b16 %v3055
      %v3068 = vunpack.c.h.b16 %v3055
      %v3069 = vunpack.c.l.b16 %v3056
      %v3070 = vunpack.c.h.b16 %v3056
      %v3071 = vunpack.c.l.b16 %v3057
      %v3072 = vunpack.c.h.b16 %v3057
      %v3073 = vpack.c.b16 %v3063, %v3063
      %v3074 = vpack.c.b16 %v3064, %v3064
      %v3075 = vpack.c.b16 %v3065, %v3065
      %v3076 = vpack.c.b16 %v3066, %v3066
      %v3077 = vpack.c.b16 %v3067, %v3067
      %v3078 = vpack.c.b16 %v3068, %v3068
      %v3079 = vpack.c.b16 %v3069, %v3069
      %v3080 = vpack.c.b16 %v3070, %v3070
      %v3081 = vpack.c.b16 %v3071, %v3071
      %v3082 = vpack.c.b16 %v3072, %v3072
      %v3084 = vshrl.u32 %v3073, 16
      %v3086 = vrot.slane %v3084, 6
      %v3087 = vshll.u32 %v3073, 16
      %v3089 = vrot.slane %v3087, 7
      %v3090 = vor.u32 %v3086, %v3089
      %v3091 = vrot.slane %v3090, 4
      %v3093 = vshrl.u32 %v3074, 16
      %v3095 = vrot.slane %v3093, 6
      %v3096 = vshll.u32 %v3074, 16
      %v3098 = vrot.slane %v3096, 7
      %v3099 = vor.u32 %v3095, %v3098
      %v3100 = vsel %vm1384, %v3091, %v3099
      %v3101 = vrot.slane %v3099, 4
      %v3103 = vshrl.u32 %v3075, 16
      %v3105 = vrot.slane %v3103, 6
      %v3106 = vshll.u32 %v3075, 16
      %v3108 = vrot.slane %v3106, 7
      %v3109 = vor.u32 %v3105, %v3108
      %v3110 = vsel %vm1384, %v3101, %v3109
      %v3111 = vrot.slane %v3109, 4
      %v3113 = vshrl.u32 %v3076, 16
      %v3115 = vrot.slane %v3113, 6
      %v3116 = vshll.u32 %v3076, 16
      %v3118 = vrot.slane %v3116, 7
      %v3119 = vor.u32 %v3115, %v3118
      %v3120 = vsel %vm1384, %v3111, %v3119
      %v3121 = vrot.slane %v3119, 4
      %v3123 = vshrl.u32 %v3077, 16
      %v3125 = vrot.slane %v3123, 6
      %v3126 = vshll.u32 %v3077, 16
      %v3128 = vrot.slane %v3126, 7
      %v3129 = vor.u32 %v3125, %v3128
      %v3130 = vsel %vm1384, %v3121, %v3129
      %v3131 = vrot.slane %v3129, 4
      %v3133 = vshrl.u32 %v3078, 16
      %v3135 = vrot.slane %v3133, 6
      %v3136 = vshll.u32 %v3078, 16
      %v3138 = vrot.slane %v3136, 7
      %v3139 = vor.u32 %v3135, %v3138
      %v3140 = vsel %vm1384, %v3131, %v3139
      %v3141 = vrot.slane %v3139, 4
      %v3143 = vshrl.u32 %v3079, 16
      %v3145 = vrot.slane %v3143, 6
      %v3146 = vshll.u32 %v3079, 16
      %v3148 = vrot.slane %v3146, 7
      %v3149 = vor.u32 %v3145, %v3148
      %v3150 = vsel %vm1384, %v3141, %v3149
      %v3151 = vrot.slane %v3149, 4
      %v3153 = vshrl.u32 %v3080, 16
      %v3155 = vrot.slane %v3153, 6
      %v3156 = vshll.u32 %v3080, 16
      %v3158 = vrot.slane %v3156, 7
      %v3159 = vor.u32 %v3155, %v3158
      %v3160 = vsel %vm1384, %v3151, %v3159
      %v3161 = vrot.slane %v3159, 4
      %v3163 = vshrl.u32 %v3081, 16
      %v3165 = vrot.slane %v3163, 6
      %v3166 = vshll.u32 %v3081, 16
      %v3168 = vrot.slane %v3166, 7
      %v3169 = vor.u32 %v3165, %v3168
      %v3170 = vsel %vm1384, %v3161, %v3169
      %v3171 = vrot.slane %v3169, 4
      %v3173 = vshrl.u32 %v3082, 16
      %v3175 = vrot.slane %v3173, 6
      %v3176 = vshll.u32 %v3082, 16
      %v3178 = vrot.slane %v3176, 7
      %v3179 = vor.u32 %v3175, %v3178
      %v3180 = vsel %vm1384, %v3171, %v3179
      %v3181 = vrot.slane %v3175, 4
      %v3193 = vld [vmem:[#allocation4 + $0x4] sm:$0xe]
      %v3194 = vsel %vm2286, %v3090, %v3193
      %3195 = vst [vmem:[#allocation4 + $0x4] sm:$0xe] %v3194
      %3196 = vst.msk [vmem:[#allocation4 + $0x8] sm:$0xf] %vm1001, %v3100
      %3197 = vst.msk [vmem:[#allocation4 + $0xc] sm:$0xf] %vm1001, %v3110
      %3198 = vst.msk [vmem:[#allocation4 + $0x10] sm:$0xf] %vm1001, %v3120
      %3199 = vst.msk [vmem:[#allocation4 + $0x14] sm:$0xf] %vm1001, %v3130
      %3200 = vst.msk [vmem:[#allocation4 + $0x18] sm:$0xf] %vm1001, %v3140
      %3201 = vst.msk [vmem:[#allocation4 + $0x1c] sm:$0xf] %vm1001, %v3150
      %3202 = vst.msk [vmem:[#allocation4 + $0x20] sm:$0xf] %vm1001, %v3160
      %3203 = vst.msk [vmem:[#allocation4 + $0x24] sm:$0xf] %vm1001, %v3170
      %3204 = vst.msk [vmem:[#allocation4 + $0x28] sm:$0xf] %vm1001, %v3180
      %v3205 = vld [vmem:[#allocation4 + $0x2c] sm:$0x1]
      %v3206 = vsel %vm2300, %v3181, %v3205
      %3207 = vst [vmem:[#allocation4 + $0x2c] sm:$0x1] %v3206
      %v3208 = vld [vmem:[%s21] sm:$0xf]
      %v3209 = vld [vmem:[%s21 + $0x4] sm:$0xf]
      %v3210 = vld [vmem:[%s21 + $0x8] sm:$0xf]
      %v3211 = vld [vmem:[%s21 + $0xc] sm:$0xf]
      %v3212 = vld [vmem:[%s21 + $0x10] sm:$0xf]
      %v3213 = vld [vmem:[%s21 + $0x14] sm:$0xf]
      %v3214 = vld [vmem:[%s21 + $0x18] sm:$0xf]
      %v3215 = vld [vmem:[%s21 + $0x1c] sm:$0xf]
      %v3216 = vld [vmem:[#allocation4 + $0x4] sm:$0xe]
      %v3217 = vld [vmem:[#allocation4 + $0x8] sm:$0xf]
      %v3218 = vld [vmem:[#allocation4 + $0xc] sm:$0xf]
      %v3219 = vld [vmem:[#allocation4 + $0x10] sm:$0xf]
      %v3220 = vld [vmem:[#allocation4 + $0x14] sm:$0xf]
      %v3221 = vld [vmem:[#allocation4 + $0x18] sm:$0xf]
      %v3222 = vld [vmem:[#allocation4 + $0x1c] sm:$0xf]
      %v3223 = vld [vmem:[#allocation4 + $0x20] sm:$0xf]
      %v3224 = vld [vmem:[#allocation4 + $0x24] sm:$0xf]
      %v3225 = vld [vmem:[#allocation4 + $0x28] sm:$0xf]
      %v3226 = vld [vmem:[#allocation4 + $0x2c] sm:$0x1]
      %v3235 = vunpack.c.l.b16 %v3208
      %v3236 = vunpack.c.l.b16 %v3209
      %v3237 = vunpack.c.l.b16 %v3210
      %v3238 = vunpack.c.l.b16 %v3211
      %v3239 = vunpack.c.l.b16 %v3212
      %v3240 = vunpack.c.l.b16 %v3213
      %v3241 = vunpack.c.l.b16 %v3214
      %v3242 = vunpack.c.l.b16 %v3215
      %v3243 = vpack.c.b16 %v3236, %v3235
      %v3244 = vpack.c.b16 %v3238, %v3237
      %v3245 = vpack.c.b16 %v3240, %v3239
      %v3246 = vpack.c.b16 %v3242, %v3241
      %v3258 = vunpack.c.l.b16 %v3216
      %v3259 = vunpack.c.l.b16 %v3217
      %v3260 = vunpack.c.l.b16 %v3218
      %v3261 = vunpack.c.l.b16 %v3219
      %v3262 = vunpack.c.l.b16 %v3220
      %v3263 = vunpack.c.l.b16 %v3221
      %v3264 = vunpack.c.l.b16 %v3222
      %v3265 = vunpack.c.l.b16 %v3223
      %v3266 = vunpack.c.l.b16 %v3224
      %v3267 = vunpack.c.l.b16 %v3225
      %v3268 = vunpack.c.l.b16 %v3226
      %v3269 = vpack.c.b16 %v3259, %v3258
      %v3270 = vpack.c.b16 %v3261, %v3260
      %v3271 = vpack.c.b16 %v3263, %v3262
      %v3272 = vpack.c.b16 %v3265, %v3264
      %v3273 = vpack.c.b16 %v3267, %v3266
      %v3274 = vpack.c.b16 %v3268, %v3268
      %v3276 = vshrl.u32 %v3269, 16
      %v3278 = vrot.slane %v3276, 1
      %v3279 = vshll.u32 %v3269, 16
      %v3281 = vrot.slane %v3279, 2
      %v3282 = vor.u32 %v3278, %v3281
      %v3284 = vshrl.u32 %v3270, 16
      %v3286 = vrot.slane %v3284, 1
      %v3287 = vshll.u32 %v3270, 16
      %v3289 = vrot.slane %v3287, 2
      %v3290 = vor.u32 %v3286, %v3289
      %v3291 = vsel %vm1097, %v3282, %v3290
      %v3293 = vshrl.u32 %v3271, 16
      %v3295 = vrot.slane %v3293, 1
      %v3296 = vshll.u32 %v3271, 16
      %v3298 = vrot.slane %v3296, 2
      %v3299 = vor.u32 %v3295, %v3298
      %v3300 = vsel %vm1097, %v3290, %v3299
      %v3302 = vshrl.u32 %v3272, 16
      %v3304 = vrot.slane %v3302, 1
      %v3305 = vshll.u32 %v3272, 16
      %v3307 = vrot.slane %v3305, 2
      %v3308 = vor.u32 %v3304, %v3307
      %v3309 = vsel %vm1097, %v3299, %v3308
      %v3311 = vshrl.u32 %v3273, 16
      %v3313 = vrot.slane %v3311, 1
      %v3314 = vshll.u32 %v3273, 16
      %v3316 = vrot.slane %v3314, 2
      %v3317 = vor.u32 %v3313, %v3316
      %v3318 = vsel %vm1097, %v3308, %v3317
      %v3320 = vshll.u32 %v3274, 16
      %v3322 = vrot.slane %v3320, 2
      %v3323 = vsel %vm1097, %v3317, %v3322
      %vm3328 = vcmask 637952
      %v3330 = vsel %vm3328, %v3243, 0
      %v3333 = vsel %vm3328, %v3244, 0
      %v3336 = vsel %vm3328, %v3245, 0
      %v3339 = vsel %vm3328, %v3246, 0
      %vm3341 = vcmask 1046528
      %v3343 = vsel %vm3341, %v3323, 0
      %3345 = vmatprep.subr.bf16.mxu0 0
      %3346 = vmatpush1.bf16.msra.mxu0 %v3291
      %3347 = vmatprep.subr.bf16.mxu0 0
      %3348 = vmatpush1.bf16.msra.mxu0 %v3300
      %3349 = vmatprep.subr.bf16.mxu0 0
      %3350 = vmatpush1.bf16.msra.mxu0 %v3309
      %3351 = vmatprep.subr.bf16.mxu0 0
      %3352 = vmatpush1.bf16.msra.mxu0 %v3318
      %3353 = vmatprep.subr.bf16.mxu0 0
      %3354 = vmatpush1.bf16.msra.mxu0 %v3343
      %3355 = vmatprep.subr.bf16.mxu0 0
      %3356 = vmatpush1.bf16.msra.mxu0 0
      %3357 = vmatprep.subr.bf16.mxu0 0
      %3358 = vmatpush1.bf16.msra.mxu0 0
      %3359 = vmatprep.subr.bf16.mxu0 0
      %3360 = vmatpush1.bf16.msra.mxu0 0
      %3361 = vmatprep.subr.bf16.mxu0 0
      %3362 = vmatpush1.bf16.msra.mxu0 0
      %3363 = vmatprep.subr.bf16.mxu0 0
      %3364 = vmatpush1.bf16.msra.mxu0 0
      %3365 = vmatprep.subr.bf16.mxu0 0
      %3366 = vmatpush1.bf16.msra.mxu0 0
      %3367 = vmatprep.subr.bf16.mxu0 0
      %3368 = vmatpush1.bf16.msra.mxu0 0
      %3369 = vmatprep.subr.bf16.mxu0 0
      %3370 = vmatpush1.bf16.msra.mxu0 0
      %3371 = vmatprep.subr.bf16.mxu0 0
      %3372 = vmatpush1.bf16.msra.mxu0 0
      %3373 = vmatprep.subr.bf16.mxu0 0
      %3374 = vmatpush1.bf16.msra.mxu0 0
      %3375 = vmatprep.subr.bf16.mxu0 0
      %3376 = vmatpush1.bf16.msra.mxu0 0
      %3377 = vmatprep.mubr.bf16.mxu0 0
      %3378 = vmatmul.mubr.bf16.gmra.mrb[0].mxu0 %v3330
      %v3379 = vpop.f32.mrb[0].mxu0
      %v3380 = vadd.f32 0.0, %v3379
      %v3381 = vpop.f32.mrb[0].mxu0
      %v3382 = vpop.f32.mrb[0].mxu0
      %v3383 = vadd.f32 0.0, %v3382
      %v3384 = vpop.f32.mrb[0].mxu0
      %3385 = vmatprep.mubr.bf16.mxu0 0
      %3386 = vmatmul.mubr.bf16.gmra.mrb[0].mxu0 %v3333
      %v3387 = vpop.f32.mrb[0].mxu0
      %v3388 = vadd.f32 0.0, %v3387
      %v3389 = vpop.f32.mrb[0].mxu0
      %v3390 = vpop.f32.mrb[0].mxu0
      %v3391 = vadd.f32 0.0, %v3390
      %v3392 = vpop.f32.mrb[0].mxu0
      %3393 = vmatprep.mubr.bf16.mxu0 0
      %3394 = vmatmul.mubr.bf16.gmra.mrb[0].mxu0 %v3336
      %v3395 = vpop.f32.mrb[0].mxu0
      %v3396 = vadd.f32 0.0, %v3395
      %v3397 = vpop.f32.mrb[0].mxu0
      %v3398 = vpop.f32.mrb[0].mxu0
      %v3399 = vadd.f32 0.0, %v3398
      %v3400 = vpop.f32.mrb[0].mxu0
      %3401 = vmatprep.mubr.bf16.mxu0 0
      %3402 = vmatmul.mubr.bf16.gmra.mrb[0].mxu0 %v3339
      %v3403 = vpop.f32.mrb[0].mxu0
      %v3404 = vadd.f32 0.0, %v3403
      %v3405 = vpop.f32.mrb[0].mxu0
      %v3406 = vpop.f32.mrb[0].mxu0
      %v3407 = vadd.f32 0.0, %v3406
      %v3408 = vpop.f32.mrb[0].mxu0
      %3409 = vdwg.mxu0
      %3412 = vrot.lane.b32.xlu0 %v3388, 32
      %v3413 = vpop.permute.xlu0 %3412
      %3414 = vrot.lane.b32.xlu0 %v3391, 32
      %v3415 = vpop.permute.xlu0 %3414
      %3420 = vrot.lane.b32.xlu0 %v3396, 64
      %v3421 = vpop.permute.xlu0 %3420
      %3422 = vrot.lane.b32.xlu0 %v3399, 64
      %v3423 = vpop.permute.xlu0 %3422
      %3428 = vrot.lane.b32.xlu0 %v3404, 96
      %v3429 = vpop.permute.xlu0 %3428
      %3430 = vrot.lane.b32.xlu0 %v3407, 96
      %v3431 = vpop.permute.xlu0 %3430
      %v3434 = vsel %vm1159, %v3380, %v3413
      %v3435 = vsel %vm1159, %v3383, %v3415
      %v3436 = vsel %vm2637, %v3434, %v3421
      %v3437 = vsel %vm2637, %v3435, %v3423
      %v3438 = vsel %vm2648, %v3436, %v3429
      %v3439 = vsel %vm2648, %v3437, %v3431
      %v3440 = vpack.c.bf16 %v3439, %v3438
      %v3442 = vunpack.c.l.b16 %v3440
      %v3443 = vpack.c.b16 %v3442, %v3442
      %v3445 = vshll.u32 %v3443, 16
      %v3447 = vrot.slane %v3445, 5
      %v3448 = vshrl.u32 %v3443, 16
      %v3450 = vrot.slane %v3448, 4
      %v3451 = vor.u32 %v3450, %v3447
      %v3452 = vrot.slane %v3451, 4
      %vm3455 = vcmask 1043459
      %vm3456 = vsmask.f32 7950
      %vm3457 = vmand %vm3455, %vm3456
      %v3458 = vld [vmem:[#allocation5] sm:$0x8]
      %v3459 = vsel %vm3457, %v3447, %v3458
      %3460 = vst [vmem:[#allocation5] sm:$0x8] %v3459
      %vm3461 = vcmask 1041408
      %vm3462 = vmand %vm3461, %vm1382
      %v3463 = vld [vmem:[#allocation5 + $0x4] sm:$0x3]
      %v3464 = vsel %vm3462, %v3452, %v3463
      %3465 = vst [vmem:[#allocation5 + $0x4] sm:$0x3] %v3464
      %v3466 = vrot.slane %v3448, 7
      %v3467 = vor.u32 %v3466, %v3445
      %v3468 = vrot.slane %v3466, 4
      %vm3471 = vcmask 1043458
      %vm3472 = vsmask.f32 7946
      %vm3473 = vmand %vm3471, %vm3472
      %v3474 = vld [vmem:[#allocation5 + $0x4] sm:$0xc]
      %v3475 = vsel %vm3473, %v3467, %v3474
      %3476 = vst [vmem:[#allocation5 + $0x4] sm:$0xc] %v3475
      %v3477 = vld [vmem:[#allocation5 + $0x8] sm:$0x1]
      %v3478 = vsel %vm1512, %v3468, %v3477
      %3479 = vst [vmem:[#allocation5 + $0x8] sm:$0x1] %v3478
      %v3480 = vunpack.c.h.b16 %v3440
      %v3481 = vpack.c.b16 %v3480, %v3480
      %v3483 = vshrl.u32 %v3481, 16
      %v3485 = vrot.slane %v3483, 6
      %v3486 = vshll.u32 %v3481, 16
      %v3488 = vrot.slane %v3486, 7
      %v3489 = vor.u32 %v3485, %v3488
      %vm3491 = vsmask.f32 3334
      %vm3492 = vmand %vm1495, %vm3491
      %v3493 = vld [vmem:[#allocation5 + $0x8] sm:$0xe]
      %v3494 = vsel %vm3492, %v3489, %v3493
      %3495 = vst [vmem:[#allocation5 + $0x8] sm:$0xe] %v3494
      %v3496 = vrot.slane %v3483, 5
      %v3497 = vrot.slane %v3486, 6
      %v3498 = vor.u32 %v3496, %v3497
      %v3499 = vrot.slane %v3498, 4
      %vm3501 = vcmask 1042432
      %vm3502 = vsmask.f32 2306
      %vm3503 = vmand %vm3501, %vm3502
      %v3504 = vld [vmem:[#allocation5 + $0xc] sm:$0x7]
      %v3505 = vsel %vm3503, %v3499, %v3504
      %3506 = vst [vmem:[#allocation5 + $0xc] sm:$0x7] %v3505
      %v3507 = vld [vmem:[#allocation5] sm:$0xf]
      %v3508 = vld [vmem:[#allocation5 + $0x4] sm:$0xf]
      %v3509 = vld [vmem:[#allocation5 + $0x8] sm:$0x7]
      %v3510 = vld [vmem:[#allocation5 + $0x8] sm:$0xf]
      %v3511 = vld [vmem:[#allocation5] sm:$0x8]
      %v3512 = vld [vmem:[#allocation5 + $0xc] sm:$0x3]
      %v3513 = vld [vmem:[#allocation5 + $0xc] sm:$0x7]
      %v3517 = vunpack.c.l.b16 %v3507
      %v3518 = vunpack.c.l.b16 %v3508
      %v3519 = vunpack.c.l.b16 %v3509
      %v3520 = vpack.c.b16 %v3518, %v3517
      %v3521 = vpack.c.b16 %v3519, %v3519
      %v3525 = vunpack.c.l.b16 %v3510
      %v3526 = vpack.c.b16 %v3525, %v3525
      %v3528 = vshrl.u32 %v3520, 16
      %v3530 = vshll.u32 %v3520, 16
      %v3532 = vrot.slane %v3530, 1
      %v3533 = vor.u32 %v3528, %v3532
      %v3535 = vshll.u32 %v3526, 16
      %v3537 = vrot.slane %v3535, 1
      %v3538 = vsel %vm1563, %v3533, %v3537
      %v3539 = vshrl.u32 %v3526, 16
      %v3541 = vor.u32 %v3539, %v3537
      %v3546 = vunpack.c.l.b16 %v3511
      %v3547 = vunpack.c.l.b16 %v3512
      %v3548 = vpack.c.b16 %v3518, %v3546
      %v3549 = vpack.c.b16 %v3547, %v3525
      %v3550 = vrot.slane %v3548, 3
      %v3551 = vrot.slane %v3549, 3
      %v3552 = vsel %vm2614, %v3550, %v3551
      %v3556 = vunpack.c.l.b16 %v3513
      %v3557 = vpack.c.b16 %v3556, %v3525
      %vm3558 = vsmask.f32 4352
      %v3560 = vshrl.u32 %v3548, 16
      %v3562 = vrot.slane %v3560, 3
      %v3563 = vshll.u32 %v3548, 16
      %v3565 = vrot.slane %v3563, 4
      %v3566 = vor.u32 %v3562, %v3565
      %v3568 = vshrl.u32 %v3557, 16
      %v3570 = vrot.slane %v3568, 3
      %v3571 = vshll.u32 %v3557, 16
      %v3573 = vrot.slane %v3571, 4
      %v3574 = vor.u32 %v3570, %v3573
      %v3575 = vsel %vm3558, %v3566, %v3574
      %v3578 = vld [vmem:[%s23] sm:$0xf]
      %v3579 = vld [vmem:[%s23 + $0x4] sm:$0xf]
      %v3580 = vld [vmem:[%s23 + $0x8] sm:$0xf]
      %v3581 = vld [vmem:[%s23 + $0xc] sm:$0xf]
      %v3582 = vld [vmem:[%s23 + $0x10] sm:$0xf]
      %v3583 = vld [vmem:[%s23 + $0x14] sm:$0xf]
      %v3584 = vld [vmem:[%s23 + $0x18] sm:$0xf]
      %v3585 = vld [vmem:[%s23 + $0x1c] sm:$0xf]
      %v3586 = vld [vmem:[%s23 + $0x20] sm:$0xf]
      %v3587 = vld [vmem:[%s23 + $0x24] sm:$0xf]
      %v3588 = vld [vmem:[%s23 + $0x28] sm:$0xf]
      %v3589 = vld [vmem:[%s23 + $0x2c] sm:$0xf]
      %v3590 = vld [vmem:[%s23 + $0x30] sm:$0xf]
      %v3591 = vld [vmem:[%s23 + $0x34] sm:$0xf]
      %v3592 = vld [vmem:[%s23 + $0x38] sm:$0xf]
      %v3593 = vld [vmem:[%s23 + $0x3c] sm:$0xf]
      %v3594 = vld [vmem:[%s23 + $0x40] sm:$0xf]
      %v3595 = vld [vmem:[%s23 + $0x44] sm:$0xf]
      %v3596 = vld [vmem:[%s23 + $0x48] sm:$0xf]
      %v3597 = vld [vmem:[%s23 + $0x4c] sm:$0xf]
      %v3598 = vld [vmem:[%s23 + $0x50] sm:$0xf]
      %v3599 = vld [vmem:[%s23 + $0x54] sm:$0xf]
      %v3600 = vld [vmem:[%s23 + $0x58] sm:$0xf]
      %v3601 = vld [vmem:[%s23 + $0x5c] sm:$0xf]
      %v3602 = vld [vmem:[%s23 + $0x60] sm:$0xf]
      %v3603 = vld [vmem:[%s23 + $0x64] sm:$0xf]
      %v3604 = vld [vmem:[%s23 + $0x68] sm:$0xf]
      %v3605 = vld [vmem:[%s23 + $0x6c] sm:$0xf]
      %v3606 = vld [vmem:[%s23 + $0x70] sm:$0xf]
      %v3607 = vld [vmem:[%s23 + $0x74] sm:$0xf]
      %v3608 = vld [vmem:[%s23 + $0x78] sm:$0xf]
      %v3609 = vld [vmem:[%s23 + $0x7c] sm:$0xf]
      %v3610 = vld [vmem:[%s23 + $0x80] sm:$0xf]
      %v3611 = vld [vmem:[%s23 + $0x84] sm:$0xf]
      %v3612 = vld [vmem:[%s23 + $0x88] sm:$0xf]
      %v3613 = vld [vmem:[%s23 + $0x8c] sm:$0xf]
      %v3614 = vld [vmem:[%s23 + $0x90] sm:$0xf]
      %v3615 = vld [vmem:[%s23 + $0x94] sm:$0xf]
      %v3616 = vld [vmem:[%s23 + $0x98] sm:$0xf]
      %v3617 = vld [vmem:[%s23 + $0x9c] sm:$0xf]
      %v3618 = vld [vmem:[%s23 + $0xa0] sm:$0xf]
      %v3619 = vld [vmem:[%s23 + $0xa4] sm:$0xf]
      %v3620 = vld [vmem:[%s23 + $0xa8] sm:$0xf]
      %v3621 = vld [vmem:[%s23 + $0xac] sm:$0xf]
      %v3622 = vld [vmem:[%s23 + $0xb0] sm:$0xf]
      %v3623 = vld [vmem:[%s23 + $0xb4] sm:$0xf]
      %v3624 = vld [vmem:[%s23 + $0xb8] sm:$0xf]
      %v3625 = vld [vmem:[%s23 + $0xbc] sm:$0xf]
      %v3626 = vld [vmem:[%s23 + $0xc0] sm:$0xf]
      %v3627 = vld [vmem:[%s23 + $0xc4] sm:$0xf]
      %v3628 = vld [vmem:[%s23 + $0xc8] sm:$0xf]
      %v3629 = vld [vmem:[%s23 + $0xcc] sm:$0xf]
      %v3630 = vld [vmem:[%s23 + $0xd0] sm:$0xf]
      %v3631 = vld [vmem:[%s23 + $0xd4] sm:$0xf]
      %v3632 = vld [vmem:[%s23 + $0xd8] sm:$0xf]
      %v3633 = vld [vmem:[%s23 + $0xdc] sm:$0xf]
      %v3634 = vld [vmem:[%s23 + $0xe0] sm:$0xf]
      %v3635 = vld [vmem:[%s23 + $0xe4] sm:$0xf]
      %v3636 = vld [vmem:[%s23 + $0xe8] sm:$0xf]
      %v3637 = vld [vmem:[%s23 + $0xec] sm:$0xf]
      %v3638 = vld [vmem:[%s23 + $0xf0] sm:$0xf]
      %v3639 = vld [vmem:[%s23 + $0xf4] sm:$0xf]
      %v3640 = vld [vmem:[%s23 + $0xf8] sm:$0xf]
      %v3641 = vld [vmem:[%s23 + $0xfc] sm:$0xf]
      %v3706 = vunpack.c.l.b16 %v3578
      %v3707 = vunpack.c.l.b16 %v3579
      %v3708 = vunpack.c.l.b16 %v3580
      %v3709 = vunpack.c.l.b16 %v3581
      %v3710 = vunpack.c.l.b16 %v3582
      %v3711 = vunpack.c.l.b16 %v3583
      %v3712 = vunpack.c.l.b16 %v3584
      %v3713 = vunpack.c.l.b16 %v3585
      %v3714 = vunpack.c.l.b16 %v3586
      %v3715 = vunpack.c.l.b16 %v3587
      %v3716 = vunpack.c.l.b16 %v3588
      %v3717 = vunpack.c.l.b16 %v3589
      %v3718 = vunpack.c.l.b16 %v3590
      %v3719 = vunpack.c.l.b16 %v3591
      %v3720 = vunpack.c.l.b16 %v3592
      %v3721 = vunpack.c.l.b16 %v3593
      %v3722 = vunpack.c.l.b16 %v3594
      %v3723 = vunpack.c.l.b16 %v3595
      %v3724 = vunpack.c.l.b16 %v3596
      %v3725 = vunpack.c.l.b16 %v3597
      %v3726 = vunpack.c.l.b16 %v3598
      %v3727 = vunpack.c.l.b16 %v3599
      %v3728 = vunpack.c.l.b16 %v3600
      %v3729 = vunpack.c.l.b16 %v3601
      %v3730 = vunpack.c.l.b16 %v3602
      %v3731 = vunpack.c.l.b16 %v3603
      %v3732 = vunpack.c.l.b16 %v3604
      %v3733 = vunpack.c.l.b16 %v3605
      %v3734 = vunpack.c.l.b16 %v3606
      %v3735 = vunpack.c.l.b16 %v3607
      %v3736 = vunpack.c.l.b16 %v3608
      %v3737 = vunpack.c.l.b16 %v3609
      %v3738 = vunpack.c.l.b16 %v3610
      %v3739 = vunpack.c.l.b16 %v3611
      %v3740 = vunpack.c.l.b16 %v3612
      %v3741 = vunpack.c.l.b16 %v3613
      %v3742 = vunpack.c.l.b16 %v3614
      %v3743 = vunpack.c.l.b16 %v3615
      %v3744 = vunpack.c.l.b16 %v3616
      %v3745 = vunpack.c.l.b16 %v3617
      %v3746 = vunpack.c.l.b16 %v3618
      %v3747 = vunpack.c.l.b16 %v3619
      %v3748 = vunpack.c.l.b16 %v3620
      %v3749 = vunpack.c.l.b16 %v3621
      %v3750 = vunpack.c.l.b16 %v3622
      %v3751 = vunpack.c.l.b16 %v3623
      %v3752 = vunpack.c.l.b16 %v3624
      %v3753 = vunpack.c.l.b16 %v3625
      %v3754 = vunpack.c.l.b16 %v3626
      %v3755 = vunpack.c.l.b16 %v3627
      %v3756 = vunpack.c.l.b16 %v3628
      %v3757 = vunpack.c.l.b16 %v3629
      %v3758 = vunpack.c.l.b16 %v3630
      %v3759 = vunpack.c.l.b16 %v3631
      %v3760 = vunpack.c.l.b16 %v3632
      %v3761 = vunpack.c.l.b16 %v3633
      %v3762 = vunpack.c.l.b16 %v3634
      %v3763 = vunpack.c.l.b16 %v3635
      %v3764 = vunpack.c.l.b16 %v3636
      %v3765 = vunpack.c.l.b16 %v3637
      %v3766 = vunpack.c.l.b16 %v3638
      %v3767 = vunpack.c.l.b16 %v3639
      %v3768 = vunpack.c.l.b16 %v3640
      %v3769 = vunpack.c.l.b16 %v3641
      %v3770 = vpack.c.b16 %v3707, %v3706
      %v3771 = vpack.c.b16 %v3709, %v3708
      %v3772 = vpack.c.b16 %v3711, %v3710
      %v3773 = vpack.c.b16 %v3713, %v3712
      %v3774 = vpack.c.b16 %v3715, %v3714
      %v3775 = vpack.c.b16 %v3717, %v3716
      %v3776 = vpack.c.b16 %v3719, %v3718
      %v3777 = vpack.c.b16 %v3721, %v3720
      %v3778 = vpack.c.b16 %v3723, %v3722
      %v3779 = vpack.c.b16 %v3725, %v3724
      %v3780 = vpack.c.b16 %v3727, %v3726
      %v3781 = vpack.c.b16 %v3729, %v3728
      %v3782 = vpack.c.b16 %v3731, %v3730
      %v3783 = vpack.c.b16 %v3733, %v3732
      %v3784 = vpack.c.b16 %v3735, %v3734
      %v3785 = vpack.c.b16 %v3737, %v3736
      %v3786 = vpack.c.b16 %v3739, %v3738
      %v3787 = vpack.c.b16 %v3741, %v3740
      %v3788 = vpack.c.b16 %v3743, %v3742
      %v3789 = vpack.c.b16 %v3745, %v3744
      %v3790 = vpack.c.b16 %v3747, %v3746
      %v3791 = vpack.c.b16 %v3749, %v3748
      %v3792 = vpack.c.b16 %v3751, %v3750
      %v3793 = vpack.c.b16 %v3753, %v3752
      %v3794 = vpack.c.b16 %v3755, %v3754
      %v3795 = vpack.c.b16 %v3757, %v3756
      %v3796 = vpack.c.b16 %v3759, %v3758
      %v3797 = vpack.c.b16 %v3761, %v3760
      %v3798 = vpack.c.b16 %v3763, %v3762
      %v3799 = vpack.c.b16 %v3765, %v3764
      %v3800 = vpack.c.b16 %v3767, %v3766
      %v3801 = vpack.c.b16 %v3769, %v3768
      %3834 = vmatprep.subr.bf16.mxu0 0
      %3835 = vmatpush1.bf16.msra.mxu0 %v3770
      %3836 = vmatprep.subr.bf16.mxu0 0
      %3837 = vmatpush1.bf16.msra.mxu0 %v3771
      %3838 = vmatprep.subr.bf16.mxu0 0
      %3839 = vmatpush1.bf16.msra.mxu0 %v3772
      %3840 = vmatprep.subr.bf16.mxu0 0
      %3841 = vmatpush1.bf16.msra.mxu0 %v3773
      %3842 = vmatprep.subr.bf16.mxu0 0
      %3843 = vmatpush1.bf16.msra.mxu0 %v3774
      %3844 = vmatprep.subr.bf16.mxu0 0
      %3845 = vmatpush1.bf16.msra.mxu0 %v3775
      %3846 = vmatprep.subr.bf16.mxu0 0
      %3847 = vmatpush1.bf16.msra.mxu0 %v3776
      %3848 = vmatprep.subr.bf16.mxu0 0
      %3849 = vmatpush1.bf16.msra.mxu0 %v3777
      %3850 = vmatprep.subr.bf16.mxu0 0
      %3851 = vmatpush1.bf16.msra.mxu0 %v3778
      %3852 = vmatprep.subr.bf16.mxu0 0
      %3853 = vmatpush1.bf16.msra.mxu0 %v3779
      %3854 = vmatprep.subr.bf16.mxu0 0
      %3855 = vmatpush1.bf16.msra.mxu0 %v3780
      %3856 = vmatprep.subr.bf16.mxu0 0
      %3857 = vmatpush1.bf16.msra.mxu0 %v3781
      %3858 = vmatprep.subr.bf16.mxu0 0
      %3859 = vmatpush1.bf16.msra.mxu0 %v3782
      %3860 = vmatprep.subr.bf16.mxu0 0
      %3861 = vmatpush1.bf16.msra.mxu0 %v3783
      %3862 = vmatprep.subr.bf16.mxu0 0
      %3863 = vmatpush1.bf16.msra.mxu0 %v3784
      %3864 = vmatprep.subr.bf16.mxu0 0
      %3865 = vmatpush1.bf16.msra.mxu0 %v3785
      %3866 = vmatprep.mubr.bf16.mxu0 %v3538
      %3867 = vmatmul.mubr.bf16.gmra.mrb[0].mxu0 %v3520
      %v3868 = vpop.f32.mrb[0].mxu0
      %v3869 = vadd.f32 0.0, %v3868
      %v3870 = vpop.f32.mrb[0].mxu0
      %v3871 = vpop.f32.mrb[0].mxu0
      %v3872 = vadd.f32 0.0, %v3871
      %v3873 = vpop.f32.mrb[0].mxu0
      %3874 = vmatprep.mubr.bf16.mxu0 %v3541
      %3875 = vmatmul.mubr.bf16.gmra.mrb[0].mxu0 %v3521
      %v3876 = vpop.f32.mrb[0].mxu0
      %v3877 = vadd.f32 0.0, %v3876
      %v3878 = vpop.f32.mrb[0].mxu0
      %v3879 = vpop.f32.mrb[0].mxu0
      %v3880 = vpop.f32.mrb[0].mxu0
      %3881 = vdwg.mxu0
      %3882 = vmatprep.subr.bf16.mxu0 0
      %3883 = vmatpush1.bf16.msra.mxu0 %v3786
      %3884 = vmatprep.subr.bf16.mxu0 0
      %3885 = vmatpush1.bf16.msra.mxu0 %v3787
      %3886 = vmatprep.subr.bf16.mxu0 0
      %3887 = vmatpush1.bf16.msra.mxu0 %v3788
      %3888 = vmatprep.subr.bf16.mxu0 0
      %3889 = vmatpush1.bf16.msra.mxu0 %v3789
      %3890 = vmatprep.subr.bf16.mxu0 0
      %3891 = vmatpush1.bf16.msra.mxu0 %v3790
      %3892 = vmatprep.subr.bf16.mxu0 0
      %3893 = vmatpush1.bf16.msra.mxu0 %v3791
      %3894 = vmatprep.subr.bf16.mxu0 0
      %3895 = vmatpush1.bf16.msra.mxu0 %v3792
      %3896 = vmatprep.subr.bf16.mxu0 0
      %3897 = vmatpush1.bf16.msra.mxu0 %v3793
      %3898 = vmatprep.subr.bf16.mxu0 0
      %3899 = vmatpush1.bf16.msra.mxu0 %v3794
      %3900 = vmatprep.subr.bf16.mxu0 0
      %3901 = vmatpush1.bf16.msra.mxu0 %v3795
      %3902 = vmatprep.subr.bf16.mxu0 0
      %3903 = vmatpush1.bf16.msra.mxu0 %v3796
      %3904 = vmatprep.subr.bf16.mxu0 0
      %3905 = vmatpush1.bf16.msra.mxu0 %v3797
      %3906 = vmatprep.subr.bf16.mxu0 0
      %3907 = vmatpush1.bf16.msra.mxu0 %v3798
      %3908 = vmatprep.subr.bf16.mxu0 0
      %3909 = vmatpush1.bf16.msra.mxu0 %v3799
      %3910 = vmatprep.subr.bf16.mxu0 0
      %3911 = vmatpush1.bf16.msra.mxu0 %v3800
      %3912 = vmatprep.subr.bf16.mxu0 0
      %3913 = vmatpush1.bf16.msra.mxu0 %v3801
      %3914 = vmatprep.mubr.bf16.mxu0 %v3575
      %3915 = vmatmul.mubr.bf16.gmra.mrb[0].mxu0 %v3552
      %v3916 = vpop.f32.mrb[0].mxu0
      %v3917 = vadd.f32 %v3869, %v3916
      %v3918 = vpop.f32.mrb[0].mxu0
      %v3919 = vpop.f32.mrb[0].mxu0
      %v3920 = vadd.f32 %v3872, %v3919
      %v3921 = vpop.f32.mrb[0].mxu0
      %3922 = vmatprep.mubr.bf16.mxu0 %v3574
      %3923 = vmatmul.mubr.bf16.gmra.mrb[0].mxu0 %v3551
      %v3924 = vpop.f32.mrb[0].mxu0
      %v3925 = vadd.f32 %v3877, %v3924
      %v3926 = vpop.f32.mrb[0].mxu0
      %v3927 = vpop.f32.mrb[0].mxu0
      %v3928 = vpop.f32.mrb[0].mxu0
      %3929 = vdwg.mxu0
      %v3930 = vld [vmem:[%s25] sm:$0x1]
      %v3932 = vlaneseq
      %v3933 = vshrl.u32 %v3932, 7
      %v3934 = vsub.s32 0, %v3933
      %v3935 = vrot.slane %v3930, %v3934
      %v3937 = vmul.f32 %v3917, %v3935
      %v3938 = vmul.f32 %v3920, %v3935
      %v3939 = vmul.f32 %v3925, %v3935
      %v3940 = vld [vmem:[%s27] sm:$0x1]
      %v3942 = vlaneseq
      %v3943 = vshrl.u32 %v3942, 7
      %v3944 = vsub.s32 0, %v3943
      %v3945 = vrot.slane %v3940, %v3944
      %v3947 = vadd.f32 %v3937, %v3945
      %v3948 = vadd.f32 %v3938, %v3945
      %v3949 = vadd.f32 %v3939, %v3945
      %v3950 = vmax.f32 %v3947, 0.0
      %v3951 = vmax.f32 %v3948, 0.0
      %v3952 = vmax.f32 %v3949, 0.0
      %3954 = vset.pattern.permute.xlu0 0
      %3955 = vperm.xlu0 %3954, %v1051
      %v3956 = vpop.permute.xlu0 %3955
      %3959 = vset.pattern.permute.xlu0 0
      %3960 = vperm.xlu0 %3959, %v1052
      %v3961 = vpop.permute.xlu0 %3960
      %3964 = vset.pattern.permute.xlu0 0
      %3965 = vperm.xlu0 %3964, %v1053
      %v3966 = vpop.permute.xlu0 %3965
      %v3968 = vmul.f32 %v3950, %v3956
      %v3969 = vmul.f32 %v3951, %v3961
      %v3970 = vmul.f32 %v3952, %v3966
      %v3971 = vpack.c.bf16 %v3969, %v3968
      %v3972 = vpack.c.bf16 %v3970, %v3970
      %v3975 = vunpack.c.l.b16 %v3971
      %v3976 = vunpack.c.h.b16 %v3971
      %v3977 = vunpack.c.l.b16 %v3972
      %v3978 = vpack.c.b16 %v3975, %v3975
      %v3979 = vpack.c.b16 %v3976, %v3976
      %v3980 = vpack.c.b16 %v3977, %v3977
      %vm3981 = vsmask.f32 3328
      %vm3982 = vsmask.f32 7440
      %vm3983 = vmor %vm3981, %vm3982
      %v3985 = vshll.u32 %v3978, 16
      %v3987 = vrot.slane %v3985, 5
      %v3988 = vshrl.u32 %v3978, 16
      %v3990 = vrot.slane %v3988, 4
      %v3991 = vor.u32 %v3990, %v3987
      %v3992 = vrot.slane %v3991, 4
      %v3994 = vshll.u32 %v3979, 16
      %v3996 = vrot.slane %v3994, 5
      %v3997 = vsel %vm3983, %v3992, %v3996
      %v3998 = vshrl.u32 %v3979, 16
      %v4000 = vrot.slane %v3998, 4
      %v4001 = vor.u32 %v4000, %v3996
      %v4002 = vrot.slane %v4001, 4
      %v4004 = vshll.u32 %v3980, 16
      %v4006 = vrot.slane %v4004, 5
      %v4007 = vsel %vm3983, %v4002, %v4006
      %v4008 = vshrl.u32 %v3980, 16
      %v4010 = vrot.slane %v4008, 4
      %v4011 = vor.u32 %v4010, %v4006
      %v4012 = vrot.slane %v4011, 4
      %vm4017 = vcmask 519171
      %vm4018 = vmand %vm4017, %vm3456
      %v4019 = vld [vmem:[#allocation6] sm:$0x8]
      %v4020 = vsel %vm4018, %v3987, %v4019
      %4021 = vst [vmem:[#allocation6] sm:$0x8] %v4020
      %4022 = vst.msk [vmem:[#allocation6 + $0x4] sm:$0xf] %vm1021, %v3997
      %4023 = vst.msk [vmem:[#allocation6 + $0x8] sm:$0xf] %vm1021, %v4007
      %vm4024 = vcmask 518144
      %vm4025 = vsmask.f32 2304
      %vm4026 = vmand %vm4024, %vm4025
      %v4027 = vld [vmem:[#allocation6 + $0xc] sm:$0x7]
      %v4028 = vsel %vm4026, %v4012, %v4027
      %4029 = vst [vmem:[#allocation6 + $0xc] sm:$0x7] %v4028
      %v4030 = vld [vmem:[#allocation6] sm:$0xf]
      %v4031 = vld [vmem:[#allocation6 + $0x4] sm:$0xf]
      %v4032 = vld [vmem:[#allocation6 + $0x8] sm:$0x7]
      %v4033 = vld [vmem:[#allocation6 + $0x8] sm:$0xf]
      %v4034 = vld [vmem:[#allocation6] sm:$0xe]
      %v4035 = vld [vmem:[#allocation6] sm:$0x8]
      %v4036 = vld [vmem:[#allocation6 + $0xc] sm:$0x3]
      %v4037 = vld [vmem:[#allocation6 + $0xc] sm:$0x7]
      %v4038 = vld [vmem:[#allocation6 + $0x4] sm:$0xc]
      %v4039 = vld [vmem:[#allocation6 + $0xc] sm:$0xf]
      %v4040 = vld [vmem:[#allocation6 + $0x10] sm:$0x1]
      %v4041 = vld [vmem:[#allocation6 + $0x10] sm:$0x3]
      %v4042 = vld [vmem:[#allocation6 + $0x4] sm:$0x8]
      %v4046 = vunpack.c.l.b16 %v4030
      %v4047 = vunpack.c.l.b16 %v4031
      %v4048 = vunpack.c.l.b16 %v4032
      %v4049 = vpack.c.b16 %v4047, %v4046
      %v4050 = vpack.c.b16 %v4048, %v4048
      %v4052 = vunpack.c.l.b16 %v4033
      %v4053 = vpack.c.b16 %v4052, %v4052
      %v4055 = vshrl.u32 %v4049, 16
      %v4057 = vshll.u32 %v4049, 16
      %v4059 = vrot.slane %v4057, 1
      %v4060 = vor.u32 %v4055, %v4059
      %v4062 = vshll.u32 %v4053, 16
      %v4064 = vrot.slane %v4062, 1
      %v4065 = vsel %vm1563, %v4060, %v4064
      %v4066 = vshrl.u32 %v4053, 16
      %v4068 = vor.u32 %v4066, %v4064
      %4069 = vrot.lane.b32.xlu0 %v4065, 64
      %v4070 = vpop.permute.xlu0 %4069
      %4071 = vrot.lane.b32.xlu0 %v4068, 64
      %v4072 = vpop.permute.xlu0 %4071
      %v4074 = vunpack.c.l.b16 %v4034
      %v4075 = vpack.c.b16 %v4047, %v4074
      %v4076 = vrot.slane %v4075, 1
      %v4077 = vrot.slane %v4053, 1
      %v4078 = vsel %vm1617, %v4076, %v4077
      %v4081 = vunpack.c.l.b16 %v4035
      %v4082 = vunpack.c.l.b16 %v4036
      %v4083 = vpack.c.b16 %v4047, %v4081
      %v4084 = vpack.c.b16 %v4082, %v4052
      %v4085 = vrot.slane %v4083, 3
      %v4086 = vrot.slane %v4084, 3
      %v4087 = vsel %vm2614, %v4085, %v4086
      %4088 = vrot.lane.b32.xlu0 %v4087, 64
      %v4089 = vpop.permute.xlu0 %4088
      %4090 = vrot.lane.b32.xlu0 %v4086, 64
      %v4091 = vpop.permute.xlu0 %4090
      %v4093 = vunpack.c.l.b16 %v4037
      %v4094 = vpack.c.b16 %v4093, %v4052
      %v4096 = vshrl.u32 %v4083, 16
      %v4098 = vrot.slane %v4096, 3
      %v4099 = vshll.u32 %v4083, 16
      %v4101 = vrot.slane %v4099, 4
      %v4102 = vor.u32 %v4098, %v4101
      %v4104 = vshrl.u32 %v4094, 16
      %v4106 = vrot.slane %v4104, 3
      %v4107 = vshll.u32 %v4094, 16
      %v4109 = vrot.slane %v4107, 4
      %v4110 = vor.u32 %v4106, %v4109
      %v4111 = vsel %vm3558, %v4102, %v4110
      %v4112 = vpack.c.b16 %v4052, %v4047
      %v4113 = vpack.c.b16 %v4093, %v4093
      %4114 = vrot.lane.b32.xlu0 %v4112, 64
      %v4115 = vpop.permute.xlu0 %4114
      %4116 = vrot.lane.b32.xlu0 %v4113, 64
      %v4117 = vpop.permute.xlu0 %4116
      %v4121 = vunpack.c.l.b16 %v4038
      %v4122 = vunpack.c.l.b16 %v4039
      %v4123 = vunpack.c.l.b16 %v4040
      %v4124 = vpack.c.b16 %v4052, %v4121
      %v4125 = vpack.c.b16 %v4123, %v4122
      %v4126 = vrot.slane %v4124, 2
      %v4127 = vrot.slane %v4125, 2
      %v4128 = vsel %vm2507, %v4126, %v4127
      %v4130 = vunpack.c.l.b16 %v4041
      %v4131 = vpack.c.b16 %v4130, %v4122
      %v4133 = vshrl.u32 %v4124, 16
      %v4135 = vrot.slane %v4133, 2
      %v4136 = vshll.u32 %v4124, 16
      %v4138 = vrot.slane %v4136, 3
      %v4139 = vor.u32 %v4135, %v4138
      %v4141 = vshrl.u32 %v4131, 16
      %v4143 = vrot.slane %v4141, 2
      %v4144 = vshll.u32 %v4131, 16
      %v4146 = vrot.slane %v4144, 3
      %v4147 = vor.u32 %v4143, %v4146
      %v4148 = vsel %vm2562, %v4139, %v4147
      %4149 = vrot.lane.b32.xlu0 %v4148, 64
      %v4150 = vpop.permute.xlu0 %4149
      %4151 = vrot.lane.b32.xlu0 %v4147, 64
      %v4152 = vpop.permute.xlu0 %4151
      %v4154 = vunpack.c.l.b16 %v4042
      %v4155 = vpack.c.b16 %v4052, %v4154
      %v4156 = vrot.slane %v4155, 3
      %v4157 = vrot.slane %v4131, 3
      %v4158 = vsel %vm2614, %v4156, %v4157
      %v4160 = vsel %vm2637, %v4049, %v4070
      %v4164 = vsel %vm2637, %v4050, %v4072
      %v4168 = vsel %vm2637, %v4078, %v4089
      %v4172 = vsel %vm2637, %v4077, %v4091
      %v4176 = vsel %vm2637, %v4111, %v4115
      %v4180 = vsel %vm2637, %v4110, %v4117
      %v4184 = vsel %vm2637, %v4128, %v4150
      %v4188 = vsel %vm2637, %v4127, %v4152
      %v4190 = vld [vmem:[%s29] sm:$0xf]
      %v4191 = vld [vmem:[%s29 + $0x4] sm:$0xf]
      %v4192 = vld [vmem:[%s29 + $0x8] sm:$0xf]
      %v4193 = vld [vmem:[%s29 + $0xc] sm:$0xf]
      %v4194 = vld [vmem:[%s29 + $0x10] sm:$0xf]
      %v4195 = vld [vmem:[%s29 + $0x14] sm:$0xf]
      %v4196 = vld [vmem:[%s29 + $0x18] sm:$0xf]
      %v4197 = vld [vmem:[%s29 + $0x1c] sm:$0xf]
      %v4198 = vld [vmem:[%s29 + $0x20] sm:$0xf]
      %v4199 = vld [vmem:[%s29 + $0x24] sm:$0xf]
      %v4200 = vld [vmem:[%s29 + $0x28] sm:$0xf]
      %v4201 = vld [vmem:[%s29 + $0x2c] sm:$0xf]
      %v4202 = vld [vmem:[%s29 + $0x30] sm:$0xf]
      %v4203 = vld [vmem:[%s29 + $0x34] sm:$0xf]
      %v4204 = vld [vmem:[%s29 + $0x38] sm:$0xf]
      %v4205 = vld [vmem:[%s29 + $0x3c] sm:$0xf]
      %v4206 = vld [vmem:[%s29 + $0x40] sm:$0xf]
      %v4207 = vld [vmem:[%s29 + $0x44] sm:$0xf]
      %v4208 = vld [vmem:[%s29 + $0x48] sm:$0xf]
      %v4209 = vld [vmem:[%s29 + $0x4c] sm:$0xf]
      %v4210 = vld [vmem:[%s29 + $0x50] sm:$0xf]
      %v4211 = vld [vmem:[%s29 + $0x54] sm:$0xf]
      %v4212 = vld [vmem:[%s29 + $0x58] sm:$0xf]
      %v4213 = vld [vmem:[%s29 + $0x5c] sm:$0xf]
      %v4214 = vld [vmem:[%s29 + $0x60] sm:$0xf]
      %v4215 = vld [vmem:[%s29 + $0x64] sm:$0xf]
      %v4216 = vld [vmem:[%s29 + $0x68] sm:$0xf]
      %v4217 = vld [vmem:[%s29 + $0x6c] sm:$0xf]
      %v4218 = vld [vmem:[%s29 + $0x70] sm:$0xf]
      %v4219 = vld [vmem:[%s29 + $0x74] sm:$0xf]
      %v4220 = vld [vmem:[%s29 + $0x78] sm:$0xf]
      %v4221 = vld [vmem:[%s29 + $0x7c] sm:$0xf]
      %v4222 = vld [vmem:[%s29 + $0x80] sm:$0xf]
      %v4223 = vld [vmem:[%s29 + $0x84] sm:$0xf]
      %v4224 = vld [vmem:[%s29 + $0x88] sm:$0xf]
      %v4225 = vld [vmem:[%s29 + $0x8c] sm:$0xf]
      %v4226 = vld [vmem:[%s29 + $0x90] sm:$0xf]
      %v4227 = vld [vmem:[%s29 + $0x94] sm:$0xf]
      %v4228 = vld [vmem:[%s29 + $0x98] sm:$0xf]
      %v4229 = vld [vmem:[%s29 + $0x9c] sm:$0xf]
      %v4230 = vld [vmem:[%s29 + $0xa0] sm:$0xf]
      %v4231 = vld [vmem:[%s29 + $0xa4] sm:$0xf]
      %v4232 = vld [vmem:[%s29 + $0xa8] sm:$0xf]
      %v4233 = vld [vmem:[%s29 + $0xac] sm:$0xf]
      %v4234 = vld [vmem:[%s29 + $0xb0] sm:$0xf]
      %v4235 = vld [vmem:[%s29 + $0xb4] sm:$0xf]
      %v4236 = vld [vmem:[%s29 + $0xb8] sm:$0xf]
      %v4237 = vld [vmem:[%s29 + $0xbc] sm:$0xf]
      %v4238 = vld [vmem:[%s29 + $0xc0] sm:$0xf]
      %v4239 = vld [vmem:[%s29 + $0xc4] sm:$0xf]
      %v4240 = vld [vmem:[%s29 + $0xc8] sm:$0xf]
      %v4241 = vld [vmem:[%s29 + $0xcc] sm:$0xf]
      %v4242 = vld [vmem:[%s29 + $0xd0] sm:$0xf]
      %v4243 = vld [vmem:[%s29 + $0xd4] sm:$0xf]
      %v4244 = vld [vmem:[%s29 + $0xd8] sm:$0xf]
      %v4245 = vld [vmem:[%s29 + $0xdc] sm:$0xf]
      %v4246 = vld [vmem:[%s29 + $0xe0] sm:$0xf]
      %v4247 = vld [vmem:[%s29 + $0xe4] sm:$0xf]
      %v4248 = vld [vmem:[%s29 + $0xe8] sm:$0xf]
      %v4249 = vld [vmem:[%s29 + $0xec] sm:$0xf]
      %v4250 = vld [vmem:[%s29 + $0xf0] sm:$0xf]
      %v4251 = vld [vmem:[%s29 + $0xf4] sm:$0xf]
      %v4252 = vld [vmem:[%s29 + $0xf8] sm:$0xf]
      %v4253 = vld [vmem:[%s29 + $0xfc] sm:$0xf]
      %v4254 = vld [vmem:[%s29 + $0x100] sm:$0xf]
      %v4255 = vld [vmem:[%s29 + $0x104] sm:$0xf]
      %v4256 = vld [vmem:[%s29 + $0x108] sm:$0xf]
      %v4257 = vld [vmem:[%s29 + $0x10c] sm:$0xf]
      %v4258 = vld [vmem:[%s29 + $0x110] sm:$0xf]
      %v4259 = vld [vmem:[%s29 + $0x114] sm:$0xf]
      %v4260 = vld [vmem:[%s29 + $0x118] sm:$0xf]
      %v4261 = vld [vmem:[%s29 + $0x11c] sm:$0xf]
      %v4334 = vunpack.c.l.b16 %v4190
      %v4335 = vunpack.c.l.b16 %v4191
      %v4336 = vunpack.c.l.b16 %v4192
      %v4337 = vunpack.c.l.b16 %v4193
      %v4338 = vunpack.c.l.b16 %v4194
      %v4339 = vunpack.c.l.b16 %v4195
      %v4340 = vunpack.c.l.b16 %v4196
      %v4341 = vunpack.c.l.b16 %v4197
      %v4342 = vunpack.c.l.b16 %v4198
      %v4343 = vunpack.c.l.b16 %v4199
      %v4344 = vunpack.c.l.b16 %v4200
      %v4345 = vunpack.c.l.b16 %v4201
      %v4346 = vunpack.c.l.b16 %v4202
      %v4347 = vunpack.c.l.b16 %v4203
      %v4348 = vunpack.c.l.b16 %v4204
      %v4349 = vunpack.c.l.b16 %v4205
      %v4350 = vunpack.c.l.b16 %v4206
      %v4351 = vunpack.c.l.b16 %v4207
      %v4352 = vunpack.c.l.b16 %v4208
      %v4353 = vunpack.c.l.b16 %v4209
      %v4354 = vunpack.c.l.b16 %v4210
      %v4355 = vunpack.c.l.b16 %v4211
      %v4356 = vunpack.c.l.b16 %v4212
      %v4357 = vunpack.c.l.b16 %v4213
      %v4358 = vunpack.c.l.b16 %v4214
      %v4359 = vunpack.c.l.b16 %v4215
      %v4360 = vunpack.c.l.b16 %v4216
      %v4361 = vunpack.c.l.b16 %v4217
      %v4362 = vunpack.c.l.b16 %v4218
      %v4363 = vunpack.c.l.b16 %v4219
      %v4364 = vunpack.c.l.b16 %v4220
      %v4365 = vunpack.c.l.b16 %v4221
      %v4366 = vunpack.c.l.b16 %v4222
      %v4367 = vunpack.c.l.b16 %v4223
      %v4368 = vunpack.c.l.b16 %v4224
      %v4369 = vunpack.c.l.b16 %v4225
      %v4370 = vunpack.c.l.b16 %v4226
      %v4371 = vunpack.c.l.b16 %v4227
      %v4372 = vunpack.c.l.b16 %v4228
      %v4373 = vunpack.c.l.b16 %v4229
      %v4374 = vunpack.c.l.b16 %v4230
      %v4375 = vunpack.c.l.b16 %v4231
      %v4376 = vunpack.c.l.b16 %v4232
      %v4377 = vunpack.c.l.b16 %v4233
      %v4378 = vunpack.c.l.b16 %v4234
      %v4379 = vunpack.c.l.b16 %v4235
      %v4380 = vunpack.c.l.b16 %v4236
      %v4381 = vunpack.c.l.b16 %v4237
      %v4382 = vunpack.c.l.b16 %v4238
      %v4383 = vunpack.c.l.b16 %v4239
      %v4384 = vunpack.c.l.b16 %v4240
      %v4385 = vunpack.c.l.b16 %v4241
      %v4386 = vunpack.c.l.b16 %v4242
      %v4387 = vunpack.c.l.b16 %v4243
      %v4388 = vunpack.c.l.b16 %v4244
      %v4389 = vunpack.c.l.b16 %v4245
      %v4390 = vunpack.c.l.b16 %v4246
      %v4391 = vunpack.c.l.b16 %v4247
      %v4392 = vunpack.c.l.b16 %v4248
      %v4393 = vunpack.c.l.b16 %v4249
      %v4394 = vunpack.c.l.b16 %v4250
      %v4395 = vunpack.c.l.b16 %v4251
      %v4396 = vunpack.c.l.b16 %v4252
      %v4397 = vunpack.c.l.b16 %v4253
      %v4398 = vunpack.c.l.b16 %v4254
      %v4399 = vunpack.c.l.b16 %v4255
      %v4400 = vunpack.c.l.b16 %v4256
      %v4401 = vunpack.c.l.b16 %v4257
      %v4402 = vunpack.c.l.b16 %v4258
      %v4403 = vunpack.c.l.b16 %v4259
      %v4404 = vunpack.c.l.b16 %v4260
      %v4405 = vunpack.c.l.b16 %v4261
      %v4406 = vpack.c.b16 %v4335, %v4334
      %v4407 = vpack.c.b16 %v4337, %v4336
      %v4408 = vpack.c.b16 %v4339, %v4338
      %v4409 = vpack.c.b16 %v4341, %v4340
      %v4410 = vpack.c.b16 %v4343, %v4342
      %v4411 = vpack.c.b16 %v4345, %v4344
      %v4412 = vpack.c.b16 %v4347, %v4346
      %v4413 = vpack.c.b16 %v4349, %v4348
      %v4414 = vpack.c.b16 %v4351, %v4350
      %v4415 = vpack.c.b16 %v4353, %v4352
      %v4416 = vpack.c.b16 %v4355, %v4354
      %v4417 = vpack.c.b16 %v4357, %v4356
      %v4418 = vpack.c.b16 %v4359, %v4358
      %v4419 = vpack.c.b16 %v4361, %v4360
      %v4420 = vpack.c.b16 %v4363, %v4362
      %v4421 = vpack.c.b16 %v4365, %v4364
      %v4422 = vpack.c.b16 %v4367, %v4366
      %v4423 = vpack.c.b16 %v4369, %v4368
      %v4424 = vpack.c.b16 %v4371, %v4370
      %v4425 = vpack.c.b16 %v4373, %v4372
      %v4426 = vpack.c.b16 %v4375, %v4374
      %v4427 = vpack.c.b16 %v4377, %v4376
      %v4428 = vpack.c.b16 %v4379, %v4378
      %v4429 = vpack.c.b16 %v4381, %v4380
      %v4430 = vpack.c.b16 %v4383, %v4382
      %v4431 = vpack.c.b16 %v4385, %v4384
      %v4432 = vpack.c.b16 %v4387, %v4386
      %v4433 = vpack.c.b16 %v4389, %v4388
      %v4434 = vpack.c.b16 %v4391, %v4390
      %v4435 = vpack.c.b16 %v4393, %v4392
      %v4436 = vpack.c.b16 %v4395, %v4394
      %v4437 = vpack.c.b16 %v4397, %v4396
      %v4438 = vpack.c.b16 %v4399, %v4398
      %v4439 = vpack.c.b16 %v4401, %v4400
      %v4440 = vpack.c.b16 %v4403, %v4402
      %v4441 = vpack.c.b16 %v4405, %v4404
      %v4479 = vsel %vm2637, %v4158, 0
      %v4482 = vsel %vm2637, %v4157, 0
      %4484 = vmatprep.subr.bf16.mxu0 0
      %4485 = vmatpush1.bf16.msra.mxu0 %v4406
      %4486 = vmatprep.subr.bf16.mxu0 0
      %4487 = vmatpush1.bf16.msra.mxu0 %v4407
      %4488 = vmatprep.subr.bf16.mxu0 0
      %4489 = vmatpush1.bf16.msra.mxu0 %v4408
      %4490 = vmatprep.subr.bf16.mxu0 0
      %4491 = vmatpush1.bf16.msra.mxu0 %v4409
      %4492 = vmatprep.subr.bf16.mxu0 0
      %4493 = vmatpush1.bf16.msra.mxu0 %v4410
      %4494 = vmatprep.subr.bf16.mxu0 0
      %4495 = vmatpush1.bf16.msra.mxu0 %v4411
      %4496 = vmatprep.subr.bf16.mxu0 0
      %4497 = vmatpush1.bf16.msra.mxu0 %v4412
      %4498 = vmatprep.subr.bf16.mxu0 0
      %4499 = vmatpush1.bf16.msra.mxu0 %v4413
      %4500 = vmatprep.subr.bf16.mxu0 0
      %4501 = vmatpush1.bf16.msra.mxu0 %v4414
      %4502 = vmatprep.subr.bf16.mxu0 0
      %4503 = vmatpush1.bf16.msra.mxu0 %v4415
      %4504 = vmatprep.subr.bf16.mxu0 0
      %4505 = vmatpush1.bf16.msra.mxu0 %v4416
      %4506 = vmatprep.subr.bf16.mxu0 0
      %4507 = vmatpush1.bf16.msra.mxu0 %v4417
      %4508 = vmatprep.subr.bf16.mxu0 0
      %4509 = vmatpush1.bf16.msra.mxu0 %v4418
      %4510 = vmatprep.subr.bf16.mxu0 0
      %4511 = vmatpush1.bf16.msra.mxu0 %v4419
      %4512 = vmatprep.subr.bf16.mxu0 0
      %4513 = vmatpush1.bf16.msra.mxu0 %v4420
      %4514 = vmatprep.subr.bf16.mxu0 0
      %4515 = vmatpush1.bf16.msra.mxu0 %v4421
      %4516 = vmatprep.mubr.bf16.mxu0 %v4168
      %4517 = vmatmul.mubr.bf16.gmra.mrb[0].mxu0 %v4160
      %v4518 = vpop.f32.mrb[0].mxu0
      %v4519 = vadd.f32 0.0, %v4518
      %v4520 = vpop.f32.mrb[0].mxu0
      %v4521 = vpop.f32.mrb[0].mxu0
      %v4522 = vadd.f32 0.0, %v4521
      %v4523 = vpop.f32.mrb[0].mxu0
      %4524 = vmatprep.mubr.bf16.mxu0 %v4172
      %4525 = vmatmul.mubr.bf16.gmra.mrb[0].mxu0 %v4164
      %v4526 = vpop.f32.mrb[0].mxu0
      %v4527 = vadd.f32 0.0, %v4526
      %v4528 = vpop.f32.mrb[0].mxu0
      %v4529 = vpop.f32.mrb[0].mxu0
      %v4530 = vpop.f32.mrb[0].mxu0
      %4531 = vdwg.mxu0
      %4532 = vmatprep.subr.bf16.mxu0 0
      %4533 = vmatpush1.bf16.msra.mxu0 %v4422
      %4534 = vmatprep.subr.bf16.mxu0 0
      %4535 = vmatpush1.bf16.msra.mxu0 %v4423
      %4536 = vmatprep.subr.bf16.mxu0 0
      %4537 = vmatpush1.bf16.msra.mxu0 %v4424
      %4538 = vmatprep.subr.bf16.mxu0 0
      %4539 = vmatpush1.bf16.msra.mxu0 %v4425
      %4540 = vmatprep.subr.bf16.mxu0 0
      %4541 = vmatpush1.bf16.msra.mxu0 %v4426
      %4542 = vmatprep.subr.bf16.mxu0 0
      %4543 = vmatpush1.bf16.msra.mxu0 %v4427
      %4544 = vmatprep.subr.bf16.mxu0 0
      %4545 = vmatpush1.bf16.msra.mxu0 %v4428
      %4546 = vmatprep.subr.bf16.mxu0 0
      %4547 = vmatpush1.bf16.msra.mxu0 %v4429
      %4548 = vmatprep.subr.bf16.mxu0 0
      %4549 = vmatpush1.bf16.msra.mxu0 %v4430
      %4550 = vmatprep.subr.bf16.mxu0 0
      %4551 = vmatpush1.bf16.msra.mxu0 %v4431
      %4552 = vmatprep.subr.bf16.mxu0 0
      %4553 = vmatpush1.bf16.msra.mxu0 %v4432
      %4554 = vmatprep.subr.bf16.mxu0 0
      %4555 = vmatpush1.bf16.msra.mxu0 %v4433
      %4556 = vmatprep.subr.bf16.mxu0 0
      %4557 = vmatpush1.bf16.msra.mxu0 %v4434
      %4558 = vmatprep.subr.bf16.mxu0 0
      %4559 = vmatpush1.bf16.msra.mxu0 %v4435
      %4560 = vmatprep.subr.bf16.mxu0 0
      %4561 = vmatpush1.bf16.msra.mxu0 %v4436
      %4562 = vmatprep.subr.bf16.mxu0 0
      %4563 = vmatpush1.bf16.msra.mxu0 %v4437
      %4564 = vmatprep.mubr.bf16.mxu0 %v4184
      %4565 = vmatmul.mubr.bf16.gmra.mrb[0].mxu0 %v4176
      %v4566 = vpop.f32.mrb[0].mxu0
      %v4567 = vadd.f32 %v4519, %v4566
      %v4568 = vpop.f32.mrb[0].mxu0
      %v4569 = vpop.f32.mrb[0].mxu0
      %v4570 = vadd.f32 %v4522, %v4569
      %v4571 = vpop.f32.mrb[0].mxu0
      %4572 = vmatprep.mubr.bf16.mxu0 %v4188
      %4573 = vmatmul.mubr.bf16.gmra.mrb[0].mxu0 %v4180
      %v4574 = vpop.f32.mrb[0].mxu0
      %v4575 = vadd.f32 %v4527, %v4574
      %v4576 = vpop.f32.mrb[0].mxu0
      %v4577 = vpop.f32.mrb[0].mxu0
      %v4578 = vpop.f32.mrb[0].mxu0
      %4579 = vdwg.mxu0
      %4580 = vmatprep.subr.bf16.mxu0 0
      %4581 = vmatpush1.bf16.msra.mxu0 %v4438
      %4582 = vmatprep.subr.bf16.mxu0 0
      %4583 = vmatpush1.bf16.msra.mxu0 %v4439
      %4584 = vmatprep.subr.bf16.mxu0 0
      %4585 = vmatpush1.bf16.msra.mxu0 %v4440
      %4586 = vmatprep.subr.bf16.mxu0 0
      %4587 = vmatpush1.bf16.msra.mxu0 %v4441
      %4588 = vmatprep.subr.bf16.mxu0 0
      %4589 = vmatpush1.bf16.msra.mxu0 0
      %4590 = vmatprep.subr.bf16.mxu0 0
      %4591 = vmatpush1.bf16.msra.mxu0 0
      %4592 = vmatprep.subr.bf16.mxu0 0
      %4593 = vmatpush1.bf16.msra.mxu0 0
      %4594 = vmatprep.subr.bf16.mxu0 0
      %4595 = vmatpush1.bf16.msra.mxu0 0
      %4596 = vmatprep.subr.bf16.mxu0 0
      %4597 = vmatpush1.bf16.msra.mxu0 0
      %4598 = vmatprep.subr.bf16.mxu0 0
      %4599 = vmatpush1.bf16.msra.mxu0 0
      %4600 = vmatprep.subr.bf16.mxu0 0
      %4601 = vmatpush1.bf16.msra.mxu0 0
      %4602 = vmatprep.subr.bf16.mxu0 0
      %4603 = vmatpush1.bf16.msra.mxu0 0
      %4604 = vmatprep.subr.bf16.mxu0 0
      %4605 = vmatpush1.bf16.msra.mxu0 0
      %4606 = vmatprep.subr.bf16.mxu0 0
      %4607 = vmatpush1.bf16.msra.mxu0 0
      %4608 = vmatprep.subr.bf16.mxu0 0
      %4609 = vmatpush1.bf16.msra.mxu0 0
      %4610 = vmatprep.subr.bf16.mxu0 0
      %4611 = vmatpush1.bf16.msra.mxu0 0
      %4612 = vmatprep.mubr.bf16.mxu0 0
      %4613 = vmatmul.mubr.bf16.gmra.mrb[0].mxu0 %v4479
      %v4614 = vpop.f32.mrb[0].mxu0
      %v4615 = vadd.f32 %v4567, %v4614
      %v4616 = vpop.f32.mrb[0].mxu0
      %v4617 = vpop.f32.mrb[0].mxu0
      %v4618 = vadd.f32 %v4570, %v4617
      %v4619 = vpop.f32.mrb[0].mxu0
      %4620 = vmatprep.mubr.bf16.mxu0 0
      %4621 = vmatmul.mubr.bf16.gmra.mrb[0].mxu0 %v4482
      %v4622 = vpop.f32.mrb[0].mxu0
      %v4623 = vadd.f32 %v4575, %v4622
      %v4624 = vpop.f32.mrb[0].mxu0
      %v4625 = vpop.f32.mrb[0].mxu0
      %v4626 = vpop.f32.mrb[0].mxu0
      %4627 = vdwg.mxu0
      %v4628 = vld [vmem:[%s31] sm:$0x1]
      %v4630 = vlaneseq
      %v4631 = vshrl.u32 %v4630, 7
      %v4632 = vsub.s32 0, %v4631
      %v4633 = vrot.slane %v4628, %v4632
      %v4635 = vmul.f32 %v4615, %v4633
      %v4636 = vmul.f32 %v4618, %v4633
      %v4637 = vmul.f32 %v4623, %v4633
      %v4638 = vld [vmem:[%s33] sm:$0x1]
      %v4640 = vlaneseq
      %v4641 = vshrl.u32 %v4640, 7
      %v4642 = vsub.s32 0, %v4641
      %v4643 = vrot.slane %v4638, %v4642
      %v4645 = vadd.f32 %v4635, %v4643
      %v4646 = vadd.f32 %v4636, %v4643
      %v4647 = vadd.f32 %v4637, %v4643
      %v4648 = vmax.f32 %v4645, 0.0
      %v4649 = vmax.f32 %v4646, 0.0
      %v4650 = vmax.f32 %v4647, 0.0
      %v4651 = vpack.c.bf16 %v4649, %v4648
      %v4652 = vpack.c.bf16 %v4650, %v4650
      %v4653 = vld [vmem:[%s35] sm:$0xf]
      %v4654 = vld [vmem:[%s35 + $0x4] sm:$0xf]
      %v4655 = vld [vmem:[%s35 + $0x8] sm:$0xf]
      %v4656 = vld [vmem:[%s35 + $0xc] sm:$0xf]
      %v4657 = vld [vmem:[%s35 + $0x10] sm:$0xf]
      %v4658 = vld [vmem:[%s35 + $0x14] sm:$0xf]
      %v4659 = vld [vmem:[%s35 + $0x18] sm:$0xf]
      %v4660 = vld [vmem:[%s35 + $0x1c] sm:$0xf]
      %v4669 = vunpack.c.l.b16 %v4653
      %v4670 = vunpack.c.l.b16 %v4654
      %v4671 = vunpack.c.l.b16 %v4655
      %v4672 = vunpack.c.l.b16 %v4656
      %v4673 = vunpack.c.l.b16 %v4657
      %v4674 = vunpack.c.l.b16 %v4658
      %v4675 = vunpack.c.l.b16 %v4659
      %v4676 = vunpack.c.l.b16 %v4660
      %v4677 = vpack.c.b16 %v4670, %v4669
      %v4678 = vpack.c.b16 %v4672, %v4671
      %v4679 = vpack.c.b16 %v4674, %v4673
      %v4680 = vpack.c.b16 %v4676, %v4675
      %v4686 = vsel %vm2637, %v4651, 0
      %v4689 = vsel %vm2637, %v4652, 0
      %4691 = vmatprep.subr.bf16.mxu0 0
      %4692 = vmatpush1.bf16.msra.mxu0 %v4677
      %4693 = vmatprep.subr.bf16.mxu0 0
      %4694 = vmatpush1.bf16.msra.mxu0 %v4678
      %4695 = vmatprep.subr.bf16.mxu0 0
      %4696 = vmatpush1.bf16.msra.mxu0 %v4679
      %4697 = vmatprep.subr.bf16.mxu0 0
      %4698 = vmatpush1.bf16.msra.mxu0 %v4680
      %4699 = vmatprep.subr.bf16.mxu0 0
      %4700 = vmatpush1.bf16.msra.mxu0 0
      %4701 = vmatprep.subr.bf16.mxu0 0
      %4702 = vmatpush1.bf16.msra.mxu0 0
      %4703 = vmatprep.subr.bf16.mxu0 0
      %4704 = vmatpush1.bf16.msra.mxu0 0
      %4705 = vmatprep.subr.bf16.mxu0 0
      %4706 = vmatpush1.bf16.msra.mxu0 0
      %4707 = vmatprep.subr.bf16.mxu0 0
      %4708 = vmatpush1.bf16.msra.mxu0 0
      %4709 = vmatprep.subr.bf16.mxu0 0
      %4710 = vmatpush1.bf16.msra.mxu0 0
      %4711 = vmatprep.subr.bf16.mxu0 0
      %4712 = vmatpush1.bf16.msra.mxu0 0
      %4713 = vmatprep.subr.bf16.mxu0 0
      %4714 = vmatpush1.bf16.msra.mxu0 0
      %4715 = vmatprep.subr.bf16.mxu0 0
      %4716 = vmatpush1.bf16.msra.mxu0 0
      %4717 = vmatprep.subr.bf16.mxu0 0
      %4718 = vmatpush1.bf16.msra.mxu0 0
      %4719 = vmatprep.subr.bf16.mxu0 0
      %4720 = vmatpush1.bf16.msra.mxu0 0
      %4721 = vmatprep.subr.bf16.mxu0 0
      %4722 = vmatpush1.bf16.msra.mxu0 0
      %4723 = vmatprep.mubr.bf16.mxu0 0
      %4724 = vmatmul.mubr.bf16.gmra.mrb[0].mxu0 %v4686
      %v4725 = vpop.f32.mrb[0].mxu0
      %v4726 = vadd.f32 0.0, %v4725
      %v4727 = vpop.f32.mrb[0].mxu0
      %v4728 = vpop.f32.mrb[0].mxu0
      %v4729 = vadd.f32 0.0, %v4728
      %v4730 = vpop.f32.mrb[0].mxu0
      %4731 = vmatprep.mubr.bf16.mxu0 0
      %4732 = vmatmul.mubr.bf16.gmra.mrb[0].mxu0 %v4689
      %v4733 = vpop.f32.mrb[0].mxu0
      %v4734 = vadd.f32 0.0, %v4733
      %v4735 = vpop.f32.mrb[0].mxu0
      %v4736 = vpop.f32.mrb[0].mxu0
      %v4737 = vpop.f32.mrb[0].mxu0
      %4738 = vdwg.mxu0
      %v4739 = vld [vmem:[%s37] sm:$0x1]
      %v4741 = vlaneseq
      %v4742 = vshrl.u32 %v4741, 7
      %v4743 = vsub.s32 0, %v4742
      %v4744 = vrot.slane %v4739, %v4743
      %v4746 = vmul.f32 %v4726, %v4744
      %v4747 = vmul.f32 %v4729, %v4744
      %v4748 = vmul.f32 %v4734, %v4744
      %v4749 = vld [vmem:[%s39] sm:$0x1]
      %v4751 = vlaneseq
      %v4752 = vshrl.u32 %v4751, 7
      %v4753 = vsub.s32 0, %v4752
      %v4754 = vrot.slane %v4749, %v4753
      %v4756 = vadd.f32 %v4746, %v4754
      %v4757 = vadd.f32 %v4747, %v4754
      %v4758 = vadd.f32 %v4748, %v4754
      %v4759 = vmax.f32 %v4756, 0.0
      %v4760 = vmax.f32 %v4757, 0.0
      %v4761 = vmax.f32 %v4758, 0.0
      %v4762 = vpack.c.bf16 %v4760, %v4759
      %v4763 = vpack.c.bf16 %v4761, %v4761
      %v4764 = vld [vmem:[%s41] sm:$0xf]
      %v4765 = vld [vmem:[%s41 + $0x4] sm:$0xf]
      %v4766 = vld [vmem:[%s41 + $0x8] sm:$0xf]
      %v4767 = vld [vmem:[%s41 + $0xc] sm:$0xf]
      %v4768 = vld [vmem:[%s41 + $0x10] sm:$0xf]
      %v4769 = vld [vmem:[%s41 + $0x14] sm:$0xf]
      %v4770 = vld [vmem:[%s41 + $0x18] sm:$0xf]
      %v4771 = vld [vmem:[%s41 + $0x1c] sm:$0xf]
      %v4772 = vld [vmem:[%s41 + $0x20] sm:$0xf]
      %v4773 = vld [vmem:[%s41 + $0x24] sm:$0x7]
      %v4784 = vunpack.c.l.b16 %v4764
      %v4785 = vunpack.c.l.b16 %v4765
      %v4786 = vunpack.c.l.b16 %v4766
      %v4787 = vunpack.c.l.b16 %v4767
      %v4788 = vunpack.c.l.b16 %v4768
      %v4789 = vunpack.c.l.b16 %v4769
      %v4790 = vunpack.c.l.b16 %v4770
      %v4791 = vunpack.c.l.b16 %v4771
      %v4792 = vunpack.c.l.b16 %v4772
      %v4793 = vunpack.c.l.b16 %v4773
      %v4794 = vpack.c.b16 %v4785, %v4784
      %v4795 = vpack.c.b16 %v4787, %v4786
      %v4796 = vpack.c.b16 %v4789, %v4788
      %v4797 = vpack.c.b16 %v4791, %v4790
      %v4798 = vpack.c.b16 %v4793, %v4792
      %vm4799 = vcmask 179200
      %v4801 = vsel %vm4799, %v4794, 0
      %v4804 = vsel %vm4799, %v4795, 0
      %v4807 = vsel %vm4799, %v4796, 0
      %v4810 = vsel %vm4799, %v4797, 0
      %v4813 = vsel %vm4799, %v4798, 0
      %vm4815 = vcmask 1042432
      %v4817 = vsel %vm4815, %v4763, 0
      %4819 = vmatprep.subr.bf16.mxu0 0
      %4820 = vmatpush1.bf16.msra.mxu0 %v4762
      %4821 = vmatprep.subr.bf16.mxu0 0
      %4822 = vmatpush1.bf16.msra.mxu0 %v4817
      %4823 = vmatprep.subr.bf16.mxu0 0
      %4824 = vmatpush1.bf16.msra.mxu0 0
      %4825 = vmatprep.subr.bf16.mxu0 0
      %4826 = vmatpush1.bf16.msra.mxu0 0
      %4827 = vmatprep.subr.bf16.mxu0 0
      %4828 = vmatpush1.bf16.msra.mxu0 0
      %4829 = vmatprep.subr.bf16.mxu0 0
      %4830 = vmatpush1.bf16.msra.mxu0 0
      %4831 = vmatprep.subr.bf16.mxu0 0
      %4832 = vmatpush1.bf16.msra.mxu0 0
      %4833 = vmatprep.subr.bf16.mxu0 0
      %4834 = vmatpush1.bf16.msra.mxu0 0
      %4835 = vmatprep.subr.bf16.mxu0 0
      %4836 = vmatpush1.bf16.msra.mxu0 0
      %4837 = vmatprep.subr.bf16.mxu0 0
      %4838 = vmatpush1.bf16.msra.mxu0 0
      %4839 = vmatprep.subr.bf16.mxu0 0
      %4840 = vmatpush1.bf16.msra.mxu0 0
      %4841 = vmatprep.subr.bf16.mxu0 0
      %4842 = vmatpush1.bf16.msra.mxu0 0
      %4843 = vmatprep.subr.bf16.mxu0 0
      %4844 = vmatpush1.bf16.msra.mxu0 0
      %4845 = vmatprep.subr.bf16.mxu0 0
      %4846 = vmatpush1.bf16.msra.mxu0 0
      %4847 = vmatprep.subr.bf16.mxu0 0
      %4848 = vmatpush1.bf16.msra.mxu0 0
      %4849 = vmatprep.subr.bf16.mxu0 0
      %4850 = vmatpush1.bf16.msra.mxu0 0
      %4851 = vmatprep.mubr.bf16.mxu0 0
      %4852 = vmatmul.mubr.bf16.gmra.mrb[0].mxu0 %v4801
      %v4853 = vpop.f32.mrb[0].mxu0
      %v4854 = vadd.f32 0.0, %v4853
      %v4855 = vpop.f32.mrb[0].mxu0
      %v4856 = vpop.f32.mrb[0].mxu0
      %v4857 = vadd.f32 0.0, %v4856
      %v4858 = vpop.f32.mrb[0].mxu0
      %4859 = vmatprep.mubr.bf16.mxu0 0
      %4860 = vmatmul.mubr.bf16.gmra.mrb[0].mxu0 %v4804
      %v4861 = vpop.f32.mrb[0].mxu0
      %v4862 = vadd.f32 0.0, %v4861
      %v4863 = vpop.f32.mrb[0].mxu0
      %v4864 = vpop.f32.mrb[0].mxu0
      %v4865 = vadd.f32 0.0, %v4864
      %v4866 = vpop.f32.mrb[0].mxu0
      %4867 = vmatprep.mubr.bf16.mxu0 0
      %4868 = vmatmul.mubr.bf16.gmra.mrb[0].mxu0 %v4807
      %v4869 = vpop.f32.mrb[0].mxu0
      %v4870 = vadd.f32 0.0, %v4869
      %v4871 = vpop.f32.mrb[0].mxu0
      %v4872 = vpop.f32.mrb[0].mxu0
      %v4873 = vadd.f32 0.0, %v4872
      %v4874 = vpop.f32.mrb[0].mxu0
      %4875 = vmatprep.mubr.bf16.mxu0 0
      %4876 = vmatmul.mubr.bf16.gmra.mrb[0].mxu0 %v4810
      %v4877 = vpop.f32.mrb[0].mxu0
      %v4878 = vadd.f32 0.0, %v4877
      %v4879 = vpop.f32.mrb[0].mxu0
      %v4880 = vpop.f32.mrb[0].mxu0
      %v4881 = vadd.f32 0.0, %v4880
      %v4882 = vpop.f32.mrb[0].mxu0
      %4883 = vmatprep.mubr.bf16.mxu0 0
      %4884 = vmatmul.mubr.bf16.gmra.mrb[0].mxu0 %v4813
      %v4885 = vpop.f32.mrb[0].mxu0
      %v4886 = vadd.f32 0.0, %v4885
      %v4887 = vpop.f32.mrb[0].mxu0
      %v4888 = vpop.f32.mrb[0].mxu0
      %v4889 = vadd.f32 0.0, %v4888
      %v4890 = vpop.f32.mrb[0].mxu0
      %4891 = vdwg.mxu0
      %v4892 = vld [vmem:[%s43] sm:$0xff]
      %v4893 = vld [vmem:[%s43 + $0x8] sm:$0xff]
      %v4894 = vld [vmem:[%s43 + $0x10] sm:$0xff]
      %v4895 = vld [vmem:[%s43 + $0x18] sm:$0xff]
      %v4896 = vld [vmem:[%s43 + $0x20] sm:$0xff]
      %v4897 = vld [vmem:[%s43 + $0x28] sm:$0xff]
      %v4898 = vld [vmem:[%s43 + $0x30] sm:$0xff]
      %v4899 = vld [vmem:[%s43 + $0x38] sm:$0xff]
      %v4900 = vld [vmem:[%s43 + $0x40] sm:$0xff]
      %v4901 = vld [vmem:[%s43 + $0x48] sm:$0x3f]
      %v4902 = vmul.f32 %v4854, %v4892
      %v4903 = vmul.f32 %v4857, %v4893
      %v4904 = vmul.f32 %v4862, %v4894
      %v4905 = vmul.f32 %v4865, %v4895
      %v4906 = vmul.f32 %v4870, %v4896
      %v4907 = vmul.f32 %v4873, %v4897
      %v4908 = vmul.f32 %v4878, %v4898
      %v4909 = vmul.f32 %v4881, %v4899
      %v4910 = vmul.f32 %v4886, %v4900
      %v4911 = vmul.f32 %v4889, %v4901
      %4922 = vrot.lane.b32.xlu0 %v4902, 96
      %v4923 = vpop.permute.xlu0 %4922
      %4924 = vrot.lane.b32.xlu0 %v4903, 96
      %v4925 = vpop.permute.xlu0 %4924
      %4926 = vrot.lane.b32.xlu0 %v4904, 96
      %v4927 = vpop.permute.xlu0 %4926
      %4928 = vrot.lane.b32.xlu0 %v4905, 96
      %v4929 = vpop.permute.xlu0 %4928
      %4930 = vrot.lane.b32.xlu0 %v4906, 96
      %v4931 = vpop.permute.xlu0 %4930
      %4932 = vrot.lane.b32.xlu0 %v4907, 96
      %v4933 = vpop.permute.xlu0 %4932
      %4934 = vrot.lane.b32.xlu0 %v4908, 96
      %v4935 = vpop.permute.xlu0 %4934
      %4936 = vrot.lane.b32.xlu0 %v4909, 96
      %v4937 = vpop.permute.xlu0 %4936
      %4938 = vrot.lane.b32.xlu0 %v4910, 96
      %v4939 = vpop.permute.xlu0 %4938
      %4940 = vrot.lane.b32.xlu0 %v4911, 96
      %v4941 = vpop.permute.xlu0 %4940
      %v4952 = vadd.f32 %v4902, %v4923
      %v4953 = vadd.f32 %v4903, %v4925
      %v4954 = vadd.f32 %v4904, %v4927
      %v4955 = vadd.f32 %v4905, %v4929
      %v4956 = vadd.f32 %v4906, %v4931
      %v4957 = vadd.f32 %v4907, %v4933
      %v4958 = vadd.f32 %v4908, %v4935
      %v4959 = vadd.f32 %v4909, %v4937
      %v4960 = vadd.f32 %v4910, %v4939
      %v4961 = vadd.f32 %v4911, %v4941
      %4962 = vrot.lane.b32.xlu0 %v4902, 64
      %v4963 = vpop.permute.xlu0 %4962
      %4964 = vrot.lane.b32.xlu0 %v4903, 64
      %v4965 = vpop.permute.xlu0 %4964
      %4966 = vrot.lane.b32.xlu0 %v4904, 64
      %v4967 = vpop.permute.xlu0 %4966
      %4968 = vrot.lane.b32.xlu0 %v4905, 64
      %v4969 = vpop.permute.xlu0 %4968
      %4970 = vrot.lane.b32.xlu0 %v4906, 64
      %v4971 = vpop.permute.xlu0 %4970
      %4972 = vrot.lane.b32.xlu0 %v4907, 64
      %v4973 = vpop.permute.xlu0 %4972
      %4974 = vrot.lane.b32.xlu0 %v4908, 64
      %v4975 = vpop.permute.xlu0 %4974
      %4976 = vrot.lane.b32.xlu0 %v4909, 64
      %v4977 = vpop.permute.xlu0 %4976
      %4978 = vrot.lane.b32.xlu0 %v4910, 64
      %v4979 = vpop.permute.xlu0 %4978
      %4980 = vrot.lane.b32.xlu0 %v4911, 64
      %v4981 = vpop.permute.xlu0 %4980
      %v4992 = vadd.f32 %v4952, %v4963
      %v4993 = vadd.f32 %v4953, %v4965
      %v4994 = vadd.f32 %v4954, %v4967
      %v4995 = vadd.f32 %v4955, %v4969
      %v4996 = vadd.f32 %v4956, %v4971
      %v4997 = vadd.f32 %v4957, %v4973
      %v4998 = vadd.f32 %v4958, %v4975
      %v4999 = vadd.f32 %v4959, %v4977
      %v5000 = vadd.f32 %v4960, %v4979
      %v5001 = vadd.f32 %v4961, %v4981
      %5002 = vrot.lane.b32.xlu0 %v4902, 32
      %v5003 = vpop.permute.xlu0 %5002
      %5004 = vrot.lane.b32.xlu0 %v4903, 32
      %v5005 = vpop.permute.xlu0 %5004
      %5006 = vrot.lane.b32.xlu0 %v4904, 32
      %v5007 = vpop.permute.xlu0 %5006
      %5008 = vrot.lane.b32.xlu0 %v4905, 32
      %v5009 = vpop.permute.xlu0 %5008
      %5010 = vrot.lane.b32.xlu0 %v4906, 32
      %v5011 = vpop.permute.xlu0 %5010
      %5012 = vrot.lane.b32.xlu0 %v4907, 32
      %v5013 = vpop.permute.xlu0 %5012
      %5014 = vrot.lane.b32.xlu0 %v4908, 32
      %v5015 = vpop.permute.xlu0 %5014
      %5016 = vrot.lane.b32.xlu0 %v4909, 32
      %v5017 = vpop.permute.xlu0 %5016
      %5018 = vrot.lane.b32.xlu0 %v4910, 32
      %v5019 = vpop.permute.xlu0 %5018
      %5020 = vrot.lane.b32.xlu0 %v4911, 32
      %v5021 = vpop.permute.xlu0 %5020
      %v5032 = vadd.f32 %v4992, %v5003
      %v5033 = vadd.f32 %v4993, %v5005
      %v5034 = vadd.f32 %v4994, %v5007
      %v5035 = vadd.f32 %v4995, %v5009
      %v5036 = vadd.f32 %v4996, %v5011
      %v5037 = vadd.f32 %v4997, %v5013
      %v5038 = vadd.f32 %v4998, %v5015
      %v5039 = vadd.f32 %v4999, %v5017
      %v5040 = vadd.f32 %v5000, %v5019
      %v5041 = vadd.f32 %v5001, %v5021
      %v5042 = vld [vmem:[#allocation4 + $0x4] sm:$0xe]
      %v5043 = vld [vmem:[#allocation4 + $0x8] sm:$0xf]
      %v5044 = vld [vmem:[#allocation4 + $0xc] sm:$0xf]
      %v5045 = vld [vmem:[#allocation4 + $0x10] sm:$0xf]
      %v5046 = vld [vmem:[#allocation4 + $0x14] sm:$0xf]
      %v5047 = vld [vmem:[#allocation4 + $0x18] sm:$0xf]
      %v5048 = vld [vmem:[#allocation4 + $0x1c] sm:$0xf]
      %v5049 = vld [vmem:[#allocation4 + $0x20] sm:$0xf]
      %v5050 = vld [vmem:[#allocation4 + $0x24] sm:$0xf]
      %v5051 = vld [vmem:[#allocation4 + $0x28] sm:$0xf]
      %v5052 = vld [vmem:[#allocation4 + $0x2c] sm:$0x1]
      %v5053 = vld [vmem:[%s45] sm:$0xf]
      %v5054 = vld [vmem:[%s45 + $0x4] sm:$0xf]
      %v5055 = vld [vmem:[%s45 + $0x8] sm:$0xf]
      %v5056 = vld [vmem:[%s45 + $0xc] sm:$0xf]
      %v5068 = vunpack.c.l.b16 %v5042
      %v5069 = vunpack.c.l.b16 %v5043
      %v5070 = vunpack.c.l.b16 %v5044
      %v5071 = vunpack.c.l.b16 %v5045
      %v5072 = vunpack.c.l.b16 %v5046
      %v5073 = vunpack.c.l.b16 %v5047
      %v5074 = vunpack.c.l.b16 %v5048
      %v5075 = vunpack.c.l.b16 %v5049
      %v5076 = vunpack.c.l.b16 %v5050
      %v5077 = vunpack.c.l.b16 %v5051
      %v5078 = vunpack.c.l.b16 %v5052
      %v5079 = vpack.c.b16 %v5069, %v5068
      %v5080 = vpack.c.b16 %v5071, %v5070
      %v5081 = vpack.c.b16 %v5073, %v5072
      %v5082 = vpack.c.b16 %v5075, %v5074
      %v5083 = vpack.c.b16 %v5077, %v5076
      %v5084 = vpack.c.b16 %v5078, %v5078
      %v5086 = vshrl.u32 %v5079, 16
      %v5088 = vrot.slane %v5086, 1
      %v5089 = vshll.u32 %v5079, 16
      %v5091 = vrot.slane %v5089, 2
      %v5092 = vor.u32 %v5088, %v5091
      %v5094 = vshrl.u32 %v5080, 16
      %v5096 = vrot.slane %v5094, 1
      %v5097 = vshll.u32 %v5080, 16
      %v5099 = vrot.slane %v5097, 2
      %v5100 = vor.u32 %v5096, %v5099
      %v5101 = vsel %vm1097, %v5092, %v5100
      %v5103 = vshrl.u32 %v5081, 16
      %v5105 = vrot.slane %v5103, 1
      %v5106 = vshll.u32 %v5081, 16
      %v5108 = vrot.slane %v5106, 2
      %v5109 = vor.u32 %v5105, %v5108
      %v5110 = vsel %vm1097, %v5100, %v5109
      %v5112 = vshrl.u32 %v5082, 16
      %v5114 = vrot.slane %v5112, 1
      %v5115 = vshll.u32 %v5082, 16
      %v5117 = vrot.slane %v5115, 2
      %v5118 = vor.u32 %v5114, %v5117
      %v5119 = vsel %vm1097, %v5109, %v5118
      %v5121 = vshrl.u32 %v5083, 16
      %v5123 = vrot.slane %v5121, 1
      %v5124 = vshll.u32 %v5083, 16
      %v5126 = vrot.slane %v5124, 2
      %v5127 = vor.u32 %v5123, %v5126
      %v5128 = vsel %vm1097, %v5118, %v5127
      %v5130 = vshll.u32 %v5084, 16
      %v5132 = vrot.slane %v5130, 2
      %v5133 = vsel %vm1097, %v5127, %v5132
      %v5138 = vunpack.c.l.b16 %v5053
      %v5139 = vunpack.c.l.b16 %v5054
      %v5140 = vunpack.c.l.b16 %v5055
      %v5141 = vunpack.c.l.b16 %v5056
      %v5142 = vpack.c.b16 %v5139, %v5138
      %v5143 = vpack.c.b16 %v5141, %v5140
      %v5147 = vsel %vm1159, %v5101, 0
      %v5150 = vsel %vm1159, %v5110, 0
      %v5153 = vsel %vm1159, %v5119, 0
      %v5156 = vsel %vm1159, %v5128, 0
      %v5159 = vsel %vm1159, %v5133, 0
      %5161 = vmatprep.subr.bf16.mxu0 0
      %5162 = vmatpush1.bf16.msra.mxu0 %v5142
      %5163 = vmatprep.subr.bf16.mxu0 0
      %5164 = vmatpush1.bf16.msra.mxu0 %v5143
      %5165 = vmatprep.subr.bf16.mxu0 0
      %5166 = vmatpush1.bf16.msra.mxu0 0
      %5167 = vmatprep.subr.bf16.mxu0 0
      %5168 = vmatpush1.bf16.msra.mxu0 0
      %5169 = vmatprep.subr.bf16.mxu0 0
      %5170 = vmatpush1.bf16.msra.mxu0 0
      %5171 = vmatprep.subr.bf16.mxu0 0
      %5172 = vmatpush1.bf16.msra.mxu0 0
      %5173 = vmatprep.subr.bf16.mxu0 0
      %5174 = vmatpush1.bf16.msra.mxu0 0
      %5175 = vmatprep.subr.bf16.mxu0 0
      %5176 = vmatpush1.bf16.msra.mxu0 0
      %5177 = vmatprep.subr.bf16.mxu0 0
      %5178 = vmatpush1.bf16.msra.mxu0 0
      %5179 = vmatprep.subr.bf16.mxu0 0
      %5180 = vmatpush1.bf16.msra.mxu0 0
      %5181 = vmatprep.subr.bf16.mxu0 0
      %5182 = vmatpush1.bf16.msra.mxu0 0
      %5183 = vmatprep.subr.bf16.mxu0 0
      %5184 = vmatpush1.bf16.msra.mxu0 0
      %5185 = vmatprep.subr.bf16.mxu0 0
      %5186 = vmatpush1.bf16.msra.mxu0 0
      %5187 = vmatprep.subr.bf16.mxu0 0
      %5188 = vmatpush1.bf16.msra.mxu0 0
      %5189 = vmatprep.subr.bf16.mxu0 0
      %5190 = vmatpush1.bf16.msra.mxu0 0
      %5191 = vmatprep.subr.bf16.mxu0 0
      %5192 = vmatpush1.bf16.msra.mxu0 0
      %5193 = vmatprep.mubr.bf16.mxu0 0
      %5194 = vmatmul.mubr.bf16.gmra.mrb[0].mxu0 %v5147
      %v5195 = vpop.f32.mrb[0].mxu0
      %v5196 = vadd.f32 0.0, %v5195
      %v5197 = vpop.f32.mrb[0].mxu0
      %v5198 = vpop.f32.mrb[0].mxu0
      %v5199 = vadd.f32 0.0, %v5198
      %v5200 = vpop.f32.mrb[0].mxu0
      %5201 = vmatprep.mubr.bf16.mxu0 0
      %5202 = vmatmul.mubr.bf16.gmra.mrb[0].mxu0 %v5150
      %v5203 = vpop.f32.mrb[0].mxu0
      %v5204 = vadd.f32 0.0, %v5203
      %v5205 = vpop.f32.mrb[0].mxu0
      %v5206 = vpop.f32.mrb[0].mxu0
      %v5207 = vadd.f32 0.0, %v5206
      %v5208 = vpop.f32.mrb[0].mxu0
      %5209 = vmatprep.mubr.bf16.mxu0 0
      %5210 = vmatmul.mubr.bf16.gmra.mrb[0].mxu0 %v5153
      %v5211 = vpop.f32.mrb[0].mxu0
      %v5212 = vadd.f32 0.0, %v5211
      %v5213 = vpop.f32.mrb[0].mxu0
      %v5214 = vpop.f32.mrb[0].mxu0
      %v5215 = vadd.f32 0.0, %v5214
      %v5216 = vpop.f32.mrb[0].mxu0
      %5217 = vmatprep.mubr.bf16.mxu0 0
      %5218 = vmatmul.mubr.bf16.gmra.mrb[0].mxu0 %v5156
      %v5219 = vpop.f32.mrb[0].mxu0
      %v5220 = vadd.f32 0.0, %v5219
      %v5221 = vpop.f32.mrb[0].mxu0
      %v5222 = vpop.f32.mrb[0].mxu0
      %v5223 = vadd.f32 0.0, %v5222
      %v5224 = vpop.f32.mrb[0].mxu0
      %5225 = vmatprep.mubr.bf16.mxu0 0
      %5226 = vmatmul.mubr.bf16.gmra.mrb[0].mxu0 %v5159
      %v5227 = vpop.f32.mrb[0].mxu0
      %v5228 = vadd.f32 0.0, %v5227
      %v5229 = vpop.f32.mrb[0].mxu0
      %v5230 = vpop.f32.mrb[0].mxu0
      %v5231 = vadd.f32 0.0, %v5230
      %v5232 = vpop.f32.mrb[0].mxu0
      %5233 = vdwg.mxu0
      %v5234 = vld [vmem:[%s47] sm:$0x1]
      %v5236 = vlaneseq
      %v5237 = vshrl.u32 %v5236, 7
      %v5238 = vsub.s32 0, %v5237
      %v5239 = vrot.slane %v5234, %v5238
      %v5241 = vmul.f32 %v5196, %v5239
      %v5242 = vmul.f32 %v5199, %v5239
      %v5243 = vmul.f32 %v5204, %v5239
      %v5244 = vmul.f32 %v5207, %v5239
      %v5245 = vmul.f32 %v5212, %v5239
      %v5246 = vmul.f32 %v5215, %v5239
      %v5247 = vmul.f32 %v5220, %v5239
      %v5248 = vmul.f32 %v5223, %v5239
      %v5249 = vmul.f32 %v5228, %v5239
      %v5250 = vmul.f32 %v5231, %v5239
      %v5251 = vld [vmem:[%s49] sm:$0x1]
      %v5253 = vlaneseq
      %v5254 = vshrl.u32 %v5253, 7
      %v5255 = vsub.s32 0, %v5254
      %v5256 = vrot.slane %v5251, %v5255
      %v5258 = vadd.f32 %v5241, %v5256
      %v5259 = vadd.f32 %v5242, %v5256
      %v5260 = vadd.f32 %v5243, %v5256
      %v5261 = vadd.f32 %v5244, %v5256
      %v5262 = vadd.f32 %v5245, %v5256
      %v5263 = vadd.f32 %v5246, %v5256
      %v5264 = vadd.f32 %v5247, %v5256
      %v5265 = vadd.f32 %v5248, %v5256
      %v5266 = vadd.f32 %v5249, %v5256
      %v5267 = vadd.f32 %v5250, %v5256
      %v5268 = vmax.f32 %v5258, 0.0
      %v5269 = vmax.f32 %v5259, 0.0
      %v5270 = vmax.f32 %v5260, 0.0
      %v5271 = vmax.f32 %v5261, 0.0
      %v5272 = vmax.f32 %v5262, 0.0
      %v5273 = vmax.f32 %v5263, 0.0
      %v5274 = vmax.f32 %v5264, 0.0
      %v5275 = vmax.f32 %v5265, 0.0
      %v5276 = vmax.f32 %v5266, 0.0
      %v5277 = vmax.f32 %v5267, 0.0
      %v5278 = vmul.f32 %v5268, %v1295
      %v5279 = vmul.f32 %v5269, %v1300
      %v5280 = vmul.f32 %v5270, %v1305
      %v5281 = vmul.f32 %v5271, %v1310
      %v5282 = vmul.f32 %v5272, %v1315
      %v5283 = vmul.f32 %v5273, %v1320
      %v5284 = vmul.f32 %v5274, %v1325
      %v5285 = vmul.f32 %v5275, %v1330
      %v5286 = vmul.f32 %v5276, %v1335
      %v5287 = vmul.f32 %v5277, %v1340
      %5298 = vrot.lane.b32.xlu0 %v5032, 32
      %v5299 = vpop.permute.xlu0 %5298
      %5300 = vrot.lane.b32.xlu0 %v5033, 32
      %v5301 = vpop.permute.xlu0 %5300
      %5302 = vrot.lane.b32.xlu0 %v5034, 32
      %v5303 = vpop.permute.xlu0 %5302
      %5304 = vrot.lane.b32.xlu0 %v5035, 32
      %v5305 = vpop.permute.xlu0 %5304
      %5306 = vrot.lane.b32.xlu0 %v5036, 32
      %v5307 = vpop.permute.xlu0 %5306
      %5308 = vrot.lane.b32.xlu0 %v5037, 32
      %v5309 = vpop.permute.xlu0 %5308
      %5310 = vrot.lane.b32.xlu0 %v5038, 32
      %v5311 = vpop.permute.xlu0 %5310
      %5312 = vrot.lane.b32.xlu0 %v5039, 32
      %v5313 = vpop.permute.xlu0 %5312
      %5314 = vrot.lane.b32.xlu0 %v5040, 32
      %v5315 = vpop.permute.xlu0 %5314
      %5316 = vrot.lane.b32.xlu0 %v5041, 32
      %v5317 = vpop.permute.xlu0 %5316
      %v5328 = vsel %vm1159, %v5278, %v5299
      %v5329 = vsel %vm1159, %v5279, %v5301
      %v5330 = vsel %vm1159, %v5280, %v5303
      %v5331 = vsel %vm1159, %v5281, %v5305
      %v5332 = vsel %vm1159, %v5282, %v5307
      %v5333 = vsel %vm1159, %v5283, %v5309
      %v5334 = vsel %vm1159, %v5284, %v5311
      %v5335 = vsel %vm1159, %v5285, %v5313
      %v5336 = vsel %vm1159, %v5286, %v5315
      %v5337 = vsel %vm1159, %v5287, %v5317
      %v5338 = vpack.c.bf16 %v5329, %v5328
      %v5339 = vpack.c.bf16 %v5331, %v5330
      %v5340 = vpack.c.bf16 %v5333, %v5332
      %v5341 = vpack.c.bf16 %v5335, %v5334
      %v5342 = vpack.c.bf16 %v5337, %v5336
      %v5348 = vunpack.c.l.b16 %v5338
      %v5349 = vunpack.c.h.b16 %v5338
      %v5350 = vunpack.c.l.b16 %v5339
      %v5351 = vunpack.c.h.b16 %v5339
      %v5352 = vunpack.c.l.b16 %v5340
      %v5353 = vunpack.c.h.b16 %v5340
      %v5354 = vunpack.c.l.b16 %v5341
      %v5355 = vunpack.c.h.b16 %v5341
      %v5356 = vunpack.c.l.b16 %v5342
      %v5357 = vunpack.c.h.b16 %v5342
      %v5358 = vpack.c.b16 %v5348, %v5348
      %v5359 = vpack.c.b16 %v5349, %v5349
      %v5360 = vpack.c.b16 %v5350, %v5350
      %v5361 = vpack.c.b16 %v5351, %v5351
      %v5362 = vpack.c.b16 %v5352, %v5352
      %v5363 = vpack.c.b16 %v5353, %v5353
      %v5364 = vpack.c.b16 %v5354, %v5354
      %v5365 = vpack.c.b16 %v5355, %v5355
      %v5366 = vpack.c.b16 %v5356, %v5356
      %v5367 = vpack.c.b16 %v5357, %v5357
      %v5369 = vshrl.u32 %v5358, 16
      %v5371 = vrot.slane %v5369, 6
      %v5372 = vshll.u32 %v5358, 16
      %v5374 = vrot.slane %v5372, 7
      %v5375 = vor.u32 %v5371, %v5374
      %v5376 = vrot.slane %v5375, 4
      %v5378 = vshrl.u32 %v5359, 16
      %v5380 = vrot.slane %v5378, 6
      %v5381 = vshll.u32 %v5359, 16
      %v5383 = vrot.slane %v5381, 7
      %v5384 = vor.u32 %v5380, %v5383
      %v5385 = vsel %vm1384, %v5376, %v5384
      %v5386 = vrot.slane %v5384, 4
      %v5388 = vshrl.u32 %v5360, 16
      %v5390 = vrot.slane %v5388, 6
      %v5391 = vshll.u32 %v5360, 16
      %v5393 = vrot.slane %v5391, 7
      %v5394 = vor.u32 %v5390, %v5393
      %v5395 = vsel %vm1384, %v5386, %v5394
      %v5396 = vrot.slane %v5394, 4
      %v5398 = vshrl.u32 %v5361, 16
      %v5400 = vrot.slane %v5398, 6
      %v5401 = vshll.u32 %v5361, 16
      %v5403 = vrot.slane %v5401, 7
      %v5404 = vor.u32 %v5400, %v5403
      %v5405 = vsel %vm1384, %v5396, %v5404
      %v5406 = vrot.slane %v5404, 4
      %v5408 = vshrl.u32 %v5362, 16
      %v5410 = vrot.slane %v5408, 6
      %v5411 = vshll.u32 %v5362, 16
      %v5413 = vrot.slane %v5411, 7
      %v5414 = vor.u32 %v5410, %v5413
      %v5415 = vsel %vm1384, %v5406, %v5414
      %v5416 = vrot.slane %v5414, 4
      %v5418 = vshrl.u32 %v5363, 16
      %v5420 = vrot.slane %v5418, 6
      %v5421 = vshll.u32 %v5363, 16
      %v5423 = vrot.slane %v5421, 7
      %v5424 = vor.u32 %v5420, %v5423
      %v5425 = vsel %vm1384, %v5416, %v5424
      %v5426 = vrot.slane %v5424, 4
      %v5428 = vshrl.u32 %v5364, 16
      %v5430 = vrot.slane %v5428, 6
      %v5431 = vshll.u32 %v5364, 16
      %v5433 = vrot.slane %v5431, 7
      %v5434 = vor.u32 %v5430, %v5433
      %v5435 = vsel %vm1384, %v5426, %v5434
      %v5436 = vrot.slane %v5434, 4
      %v5438 = vshrl.u32 %v5365, 16
      %v5440 = vrot.slane %v5438, 6
      %v5441 = vshll.u32 %v5365, 16
      %v5443 = vrot.slane %v5441, 7
      %v5444 = vor.u32 %v5440, %v5443
      %v5445 = vsel %vm1384, %v5436, %v5444
      %v5446 = vrot.slane %v5444, 4
      %v5448 = vshrl.u32 %v5366, 16
      %v5450 = vrot.slane %v5448, 6
      %v5451 = vshll.u32 %v5366, 16
      %v5453 = vrot.slane %v5451, 7
      %v5454 = vor.u32 %v5450, %v5453
      %v5455 = vsel %vm1384, %v5446, %v5454
      %v5456 = vrot.slane %v5454, 4
      %v5458 = vshrl.u32 %v5367, 16
      %v5460 = vrot.slane %v5458, 6
      %v5461 = vshll.u32 %v5367, 16
      %v5463 = vrot.slane %v5461, 7
      %v5464 = vor.u32 %v5460, %v5463
      %v5465 = vsel %vm1384, %v5456, %v5464
      %v5466 = vrot.slane %v5460, 4
      %vm5478 = vcmask 519169
      %vm5479 = vmand %vm5478, %vm1496
      %v5480 = vld [vmem:[#allocation7 + $0x4] sm:$0xe]
      %v5481 = vsel %vm5479, %v5375, %v5480
      %5482 = vst [vmem:[#allocation7 + $0x4] sm:$0xe] %v5481
      %5483 = vst.msk [vmem:[#allocation7 + $0x8] sm:$0xf] %vm1021, %v5385
      %5484 = vst.msk [vmem:[#allocation7 + $0xc] sm:$0xf] %vm1021, %v5395
      %5485 = vst.msk [vmem:[#allocation7 + $0x10] sm:$0xf] %vm1021, %v5405
      %5486 = vst.msk [vmem:[#allocation7 + $0x14] sm:$0xf] %vm1021, %v5415
      %5487 = vst.msk [vmem:[#allocation7 + $0x18] sm:$0xf] %vm1021, %v5425
      %5488 = vst.msk [vmem:[#allocation7 + $0x1c] sm:$0xf] %vm1021, %v5435
      %5489 = vst.msk [vmem:[#allocation7 + $0x20] sm:$0xf] %vm1021, %v5445
      %5490 = vst.msk [vmem:[#allocation7 + $0x24] sm:$0xf] %vm1021, %v5455
      %5491 = vst.msk [vmem:[#allocation7 + $0x28] sm:$0xf] %vm1021, %v5465
      %vm5492 = vcmask 516096
      %vm5493 = vmand %vm5492, %vm1511
      %v5494 = vld [vmem:[#allocation7 + $0x2c] sm:$0x1]
      %v5495 = vsel %vm5493, %v5466, %v5494
      %5496 = vst [vmem:[#allocation7 + $0x2c] sm:$0x1] %v5495
      %v5497 = vld [vmem:[#allocation7] sm:$0xf]
      %v5498 = vld [vmem:[#allocation7 + $0x4] sm:$0xf]
      %v5499 = vld [vmem:[#allocation7 + $0x8] sm:$0xf]
      %v5500 = vld [vmem:[#allocation7 + $0xc] sm:$0xf]
      %v5501 = vld [vmem:[#allocation7 + $0x10] sm:$0xf]
      %v5502 = vld [vmem:[#allocation7 + $0x14] sm:$0xf]
      %v5503 = vld [vmem:[#allocation7 + $0x18] sm:$0xf]
      %v5504 = vld [vmem:[#allocation7 + $0x1c] sm:$0xf]
      %v5505 = vld [vmem:[#allocation7 + $0x20] sm:$0xf]
      %v5506 = vld [vmem:[#allocation7 + $0x24] sm:$0x7]
      %v5507 = vld [vmem:[#allocation7 + $0x24] sm:$0xf]
      %v5508 = vld [vmem:[#allocation7] sm:$0xe]
      %v5509 = vld [vmem:[#allocation7 + $0x4] sm:$0xe]
      %v5510 = vld [vmem:[#allocation7 + $0x28] sm:$0xf]
      %v5511 = vld [vmem:[#allocation7 + $0x2c] sm:$0x1]
      %v5512 = vld [vmem:[#allocation7 + $0x4] sm:$0xc]
      %v5513 = vld [vmem:[#allocation7 + $0x8] sm:$0xc]
      %v5514 = vld [vmem:[#allocation7 + $0x2c] sm:$0xf]
      %v5515 = vld [vmem:[#allocation7 + $0x30] sm:$0x1]
      %v5516 = vld [vmem:[#allocation7 + $0x30] sm:$0x3]
      %v5517 = vld [vmem:[#allocation7 + $0x8] sm:$0x8]
      %v5528 = vunpack.c.l.b16 %v5497
      %v5529 = vunpack.c.l.b16 %v5498
      %v5530 = vunpack.c.l.b16 %v5499
      %v5531 = vunpack.c.l.b16 %v5500
      %v5532 = vunpack.c.l.b16 %v5501
      %v5533 = vunpack.c.l.b16 %v5502
      %v5534 = vunpack.c.l.b16 %v5503
      %v5535 = vunpack.c.l.b16 %v5504
      %v5536 = vunpack.c.l.b16 %v5505
      %v5537 = vunpack.c.l.b16 %v5506
      %v5538 = vpack.c.b16 %v5529, %v5528
      %v5539 = vpack.c.b16 %v5531, %v5530
      %v5540 = vpack.c.b16 %v5533, %v5532
      %v5541 = vpack.c.b16 %v5535, %v5534
      %v5542 = vpack.c.b16 %v5537, %v5536
      %v5544 = vunpack.c.l.b16 %v5507
      %v5545 = vpack.c.b16 %v5544, %v5536
      %v5547 = vshrl.u32 %v5538, 16
      %v5549 = vshll.u32 %v5538, 16
      %v5551 = vrot.slane %v5549, 1
      %v5552 = vor.u32 %v5547, %v5551
      %v5554 = vshll.u32 %v5539, 16
      %v5556 = vrot.slane %v5554, 1
      %v5557 = vsel %vm1563, %v5552, %v5556
      %v5558 = vshrl.u32 %v5539, 16
      %v5560 = vor.u32 %v5558, %v5556
      %v5562 = vshll.u32 %v5540, 16
      %v5564 = vrot.slane %v5562, 1
      %v5565 = vsel %vm1563, %v5560, %v5564
      %v5566 = vshrl.u32 %v5540, 16
      %v5568 = vor.u32 %v5566, %v5564
      %v5570 = vshll.u32 %v5541, 16
      %v5572 = vrot.slane %v5570, 1
      %v5573 = vsel %vm1563, %v5568, %v5572
      %v5574 = vshrl.u32 %v5541, 16
      %v5576 = vor.u32 %v5574, %v5572
      %v5578 = vshll.u32 %v5545, 16
      %v5580 = vrot.slane %v5578, 1
      %v5581 = vsel %vm1563, %v5576, %v5580
      %v5582 = vshrl.u32 %v5545, 16
      %v5584 = vor.u32 %v5582, %v5580
      %5585 = vrot.lane.b32.xlu0 %v5557, 64
      %v5586 = vpop.permute.xlu0 %5585
      %5587 = vrot.lane.b32.xlu0 %v5565, 64
      %v5588 = vpop.permute.xlu0 %5587
      %5589 = vrot.lane.b32.xlu0 %v5573, 64
      %v5590 = vpop.permute.xlu0 %5589
      %5591 = vrot.lane.b32.xlu0 %v5581, 64
      %v5592 = vpop.permute.xlu0 %5591
      %5593 = vrot.lane.b32.xlu0 %v5584, 64
      %v5594 = vpop.permute.xlu0 %5593
      %v5596 = vunpack.c.l.b16 %v5508
      %v5597 = vpack.c.b16 %v5529, %v5596
      %v5598 = vrot.slane %v5597, 1
      %v5599 = vrot.slane %v5539, 1
      %v5600 = vsel %vm1617, %v5598, %v5599
      %v5601 = vrot.slane %v5540, 1
      %v5602 = vsel %vm1617, %v5599, %v5601
      %v5603 = vrot.slane %v5541, 1
      %v5604 = vsel %vm1617, %v5601, %v5603
      %v5605 = vrot.slane %v5545, 1
      %v5606 = vsel %vm1617, %v5603, %v5605
      %v5609 = vunpack.c.l.b16 %v5509
      %v5610 = vunpack.c.l.b16 %v5510
      %v5611 = vpack.c.b16 %v5530, %v5609
      %v5612 = vpack.c.b16 %v5532, %v5531
      %v5613 = vpack.c.b16 %v5534, %v5533
      %v5614 = vpack.c.b16 %v5536, %v5535
      %v5615 = vpack.c.b16 %v5610, %v5544
      %v5616 = vrot.slane %v5611, 1
      %v5617 = vrot.slane %v5612, 1
      %v5618 = vsel %vm1617, %v5616, %v5617
      %v5619 = vrot.slane %v5613, 1
      %v5620 = vsel %vm1617, %v5617, %v5619
      %v5621 = vrot.slane %v5614, 1
      %v5622 = vsel %vm1617, %v5619, %v5621
      %v5623 = vrot.slane %v5615, 1
      %v5624 = vsel %vm1617, %v5621, %v5623
      %5625 = vrot.lane.b32.xlu0 %v5618, 64
      %v5626 = vpop.permute.xlu0 %5625
      %5627 = vrot.lane.b32.xlu0 %v5620, 64
      %v5628 = vpop.permute.xlu0 %5627
      %5629 = vrot.lane.b32.xlu0 %v5622, 64
      %v5630 = vpop.permute.xlu0 %5629
      %5631 = vrot.lane.b32.xlu0 %v5624, 64
      %v5632 = vpop.permute.xlu0 %5631
      %5633 = vrot.lane.b32.xlu0 %v5623, 64
      %v5634 = vpop.permute.xlu0 %5633
      %v5636 = vunpack.c.l.b16 %v5511
      %v5637 = vpack.c.b16 %v5636, %v5636
      %v5639 = vshrl.u32 %v5611, 16
      %v5641 = vrot.slane %v5639, 1
      %v5642 = vshll.u32 %v5611, 16
      %v5644 = vrot.slane %v5642, 2
      %v5645 = vor.u32 %v5641, %v5644
      %v5647 = vshrl.u32 %v5612, 16
      %v5649 = vrot.slane %v5647, 1
      %v5650 = vshll.u32 %v5612, 16
      %v5652 = vrot.slane %v5650, 2
      %v5653 = vor.u32 %v5649, %v5652
      %v5654 = vsel %vm1097, %v5645, %v5653
      %v5656 = vshrl.u32 %v5613, 16
      %v5658 = vrot.slane %v5656, 1
      %v5659 = vshll.u32 %v5613, 16
      %v5661 = vrot.slane %v5659, 2
      %v5662 = vor.u32 %v5658, %v5661
      %v5663 = vsel %vm1097, %v5653, %v5662
      %v5665 = vshrl.u32 %v5614, 16
      %v5667 = vrot.slane %v5665, 1
      %v5668 = vshll.u32 %v5614, 16
      %v5670 = vrot.slane %v5668, 2
      %v5671 = vor.u32 %v5667, %v5670
      %v5672 = vsel %vm1097, %v5662, %v5671
      %v5674 = vshrl.u32 %v5615, 16
      %v5676 = vrot.slane %v5674, 1
      %v5677 = vshll.u32 %v5615, 16
      %v5679 = vrot.slane %v5677, 2
      %v5680 = vor.u32 %v5676, %v5679
      %v5681 = vsel %vm1097, %v5671, %v5680
      %v5683 = vshll.u32 %v5637, 16
      %v5685 = vrot.slane %v5683, 2
      %v5686 = vsel %vm1097, %v5680, %v5685
      %v5688 = vunpack.c.l.b16 %v5512
      %v5689 = vpack.c.b16 %v5530, %v5688
      %v5690 = vrot.slane %v5689, 2
      %v5691 = vrot.slane %v5612, 2
      %v5692 = vsel %vm2507, %v5690, %v5691
      %v5693 = vrot.slane %v5613, 2
      %v5694 = vsel %vm2507, %v5691, %v5693
      %v5695 = vrot.slane %v5614, 2
      %v5696 = vsel %vm2507, %v5693, %v5695
      %v5697 = vrot.slane %v5615, 2
      %v5698 = vsel %vm2507, %v5695, %v5697
      %v5699 = vrot.slane %v5637, 2
      %v5700 = vsel %vm2507, %v5697, %v5699
      %5701 = vrot.lane.b32.xlu0 %v5692, 64
      %v5702 = vpop.permute.xlu0 %5701
      %5703 = vrot.lane.b32.xlu0 %v5694, 64
      %v5704 = vpop.permute.xlu0 %5703
      %5705 = vrot.lane.b32.xlu0 %v5696, 64
      %v5706 = vpop.permute.xlu0 %5705
      %5707 = vrot.lane.b32.xlu0 %v5698, 64
      %v5708 = vpop.permute.xlu0 %5707
      %5709 = vrot.lane.b32.xlu0 %v5700, 64
      %v5710 = vpop.permute.xlu0 %5709
      %v5714 = vunpack.c.l.b16 %v5513
      %v5715 = vunpack.c.l.b16 %v5514
      %v5716 = vunpack.c.l.b16 %v5515
      %v5717 = vpack.c.b16 %v5531, %v5714
      %v5718 = vpack.c.b16 %v5715, %v5610
      %v5719 = vpack.c.b16 %v5716, %v5716
      %v5720 = vrot.slane %v5717, 2
      %v5721 = vrot.slane %v5540, 2
      %v5722 = vsel %vm2507, %v5720, %v5721
      %v5723 = vrot.slane %v5541, 2
      %v5724 = vsel %vm2507, %v5721, %v5723
      %v5725 = vrot.slane %v5545, 2
      %v5726 = vsel %vm2507, %v5723, %v5725
      %v5727 = vrot.slane %v5718, 2
      %v5728 = vsel %vm2507, %v5725, %v5727
      %v5729 = vrot.slane %v5719, 2
      %v5730 = vsel %vm2507, %v5727, %v5729
      %v5732 = vunpack.c.l.b16 %v5516
      %v5733 = vpack.c.b16 %v5732, %v5732
      %v5735 = vshrl.u32 %v5717, 16
      %v5737 = vrot.slane %v5735, 2
      %v5738 = vshll.u32 %v5717, 16
      %v5740 = vrot.slane %v5738, 3
      %v5741 = vor.u32 %v5737, %v5740
      %v5742 = vrot.slane %v5566, 2
      %v5743 = vrot.slane %v5562, 3
      %v5744 = vor.u32 %v5742, %v5743
      %v5745 = vsel %vm2562, %v5741, %v5744
      %v5746 = vrot.slane %v5574, 2
      %v5747 = vrot.slane %v5570, 3
      %v5748 = vor.u32 %v5746, %v5747
      %v5749 = vsel %vm2562, %v5744, %v5748
      %v5750 = vrot.slane %v5582, 2
      %v5751 = vrot.slane %v5578, 3
      %v5752 = vor.u32 %v5750, %v5751
      %v5753 = vsel %vm2562, %v5748, %v5752
      %v5755 = vshrl.u32 %v5718, 16
      %v5757 = vrot.slane %v5755, 2
      %v5758 = vshll.u32 %v5718, 16
      %v5760 = vrot.slane %v5758, 3
      %v5761 = vor.u32 %v5757, %v5760
      %v5762 = vsel %vm2562, %v5752, %v5761
      %v5764 = vshrl.u32 %v5733, 16
      %v5766 = vrot.slane %v5764, 2
      %v5767 = vshll.u32 %v5733, 16
      %v5769 = vrot.slane %v5767, 3
      %v5770 = vor.u32 %v5766, %v5769
      %v5771 = vsel %vm2562, %v5761, %v5770
      %5772 = vrot.lane.b32.xlu0 %v5745, 64
      %v5773 = vpop.permute.xlu0 %5772
      %5774 = vrot.lane.b32.xlu0 %v5749, 64
      %v5775 = vpop.permute.xlu0 %5774
      %5776 = vrot.lane.b32.xlu0 %v5753, 64
      %v5777 = vpop.permute.xlu0 %5776
      %5778 = vrot.lane.b32.xlu0 %v5762, 64
      %v5779 = vpop.permute.xlu0 %5778
      %5780 = vrot.lane.b32.xlu0 %v5771, 64
      %v5781 = vpop.permute.xlu0 %5780
      %v5783 = vunpack.c.l.b16 %v5517
      %v5784 = vpack.c.b16 %v5531, %v5783
      %v5785 = vrot.slane %v5784, 3
      %v5786 = vrot.slane %v5540, 3
      %v5787 = vsel %vm2614, %v5785, %v5786
      %v5788 = vrot.slane %v5541, 3
      %v5789 = vsel %vm2614, %v5786, %v5788
      %v5790 = vrot.slane %v5545, 3
      %v5791 = vsel %vm2614, %v5788, %v5790
      %v5792 = vrot.slane %v5718, 3
      %v5793 = vsel %vm2614, %v5790, %v5792
      %v5794 = vrot.slane %v5733, 3
      %v5795 = vsel %vm2614, %v5792, %v5794
      %v5797 = vsel %vm2637, %v5538, %v5586
      %v5800 = vsel %vm2637, %v5539, %v5588
      %v5803 = vsel %vm2637, %v5540, %v5590
      %v5806 = vsel %vm2637, %v5541, %v5592
      %v5810 = vsel %vm2637, %v5542, %v5594
      %v5814 = vsel %vm2637, %v5600, %v5626
      %v5818 = vsel %vm2637, %v5602, %v5628
      %v5822 = vsel %vm2637, %v5604, %v5630
      %v5826 = vsel %vm2637, %v5606, %v5632
      %v5830 = vsel %vm2637, %v5605, %v5634
      %v5834 = vsel %vm2637, %v5654, %v5702
      %v5838 = vsel %vm2637, %v5663, %v5704
      %v5842 = vsel %vm2637, %v5672, %v5706
      %v5846 = vsel %vm2637, %v5681, %v5708
      %v5850 = vsel %vm2637, %v5686, %v5710
      %v5854 = vsel %vm2637, %v5722, %v5773
      %v5858 = vsel %vm2637, %v5724, %v5775
      %v5862 = vsel %vm2637, %v5726, %v5777
      %v5866 = vsel %vm2637, %v5728, %v5779
      %v5870 = vsel %vm2637, %v5730, %v5781
      %v5872 = vld [vmem:[%s51] sm:$0xf]
      %v5873 = vld [vmem:[%s51 + $0x4] sm:$0xf]
      %v5874 = vld [vmem:[%s51 + $0x8] sm:$0xf]
      %v5875 = vld [vmem:[%s51 + $0xc] sm:$0xf]
      %v5876 = vld [vmem:[%s51 + $0x10] sm:$0xf]
      %v5877 = vld [vmem:[%s51 + $0x14] sm:$0xf]
      %v5878 = vld [vmem:[%s51 + $0x18] sm:$0xf]
      %v5879 = vld [vmem:[%s51 + $0x1c] sm:$0xf]
      %v5880 = vld [vmem:[%s51 + $0x20] sm:$0xf]
      %v5881 = vld [vmem:[%s51 + $0x24] sm:$0xf]
      %v5882 = vld [vmem:[%s51 + $0x28] sm:$0xf]
      %v5883 = vld [vmem:[%s51 + $0x2c] sm:$0xf]
      %v5884 = vld [vmem:[%s51 + $0x30] sm:$0xf]
      %v5885 = vld [vmem:[%s51 + $0x34] sm:$0xf]
      %v5886 = vld [vmem:[%s51 + $0x38] sm:$0xf]
      %v5887 = vld [vmem:[%s51 + $0x3c] sm:$0xf]
      %v5888 = vld [vmem:[%s51 + $0x40] sm:$0xf]
      %v5889 = vld [vmem:[%s51 + $0x44] sm:$0xf]
      %v5890 = vld [vmem:[%s51 + $0x48] sm:$0xf]
      %v5891 = vld [vmem:[%s51 + $0x4c] sm:$0xf]
      %v5892 = vld [vmem:[%s51 + $0x50] sm:$0xf]
      %v5893 = vld [vmem:[%s51 + $0x54] sm:$0xf]
      %v5894 = vld [vmem:[%s51 + $0x58] sm:$0xf]
      %v5895 = vld [vmem:[%s51 + $0x5c] sm:$0xf]
      %v5896 = vld [vmem:[%s51 + $0x60] sm:$0xf]
      %v5897 = vld [vmem:[%s51 + $0x64] sm:$0xf]
      %v5898 = vld [vmem:[%s51 + $0x68] sm:$0xf]
      %v5899 = vld [vmem:[%s51 + $0x6c] sm:$0xf]
      %v5900 = vld [vmem:[%s51 + $0x70] sm:$0xf]
      %v5901 = vld [vmem:[%s51 + $0x74] sm:$0xf]
      %v5902 = vld [vmem:[%s51 + $0x78] sm:$0xf]
      %v5903 = vld [vmem:[%s51 + $0x7c] sm:$0xf]
      %v5904 = vld [vmem:[%s51 + $0x80] sm:$0xf]
      %v5905 = vld [vmem:[%s51 + $0x84] sm:$0xf]
      %v5906 = vld [vmem:[%s51 + $0x88] sm:$0xf]
      %v5907 = vld [vmem:[%s51 + $0x8c] sm:$0xf]
      %v5908 = vld [vmem:[%s51 + $0x90] sm:$0xf]
      %v5909 = vld [vmem:[%s51 + $0x94] sm:$0xf]
      %v5910 = vld [vmem:[%s51 + $0x98] sm:$0xf]
      %v5911 = vld [vmem:[%s51 + $0x9c] sm:$0xf]
      %v5912 = vld [vmem:[%s51 + $0xa0] sm:$0xf]
      %v5913 = vld [vmem:[%s51 + $0xa4] sm:$0xf]
      %v5914 = vld [vmem:[%s51 + $0xa8] sm:$0xf]
      %v5915 = vld [vmem:[%s51 + $0xac] sm:$0xf]
      %v5916 = vld [vmem:[%s51 + $0xb0] sm:$0xf]
      %v5917 = vld [vmem:[%s51 + $0xb4] sm:$0xf]
      %v5918 = vld [vmem:[%s51 + $0xb8] sm:$0xf]
      %v5919 = vld [vmem:[%s51 + $0xbc] sm:$0xf]
      %v5920 = vld [vmem:[%s51 + $0xc0] sm:$0xf]
      %v5921 = vld [vmem:[%s51 + $0xc4] sm:$0xf]
      %v5922 = vld [vmem:[%s51 + $0xc8] sm:$0xf]
      %v5923 = vld [vmem:[%s51 + $0xcc] sm:$0xf]
      %v5924 = vld [vmem:[%s51 + $0xd0] sm:$0xf]
      %v5925 = vld [vmem:[%s51 + $0xd4] sm:$0xf]
      %v5926 = vld [vmem:[%s51 + $0xd8] sm:$0xf]
      %v5927 = vld [vmem:[%s51 + $0xdc] sm:$0xf]
      %v5928 = vld [vmem:[%s51 + $0xe0] sm:$0xf]
      %v5929 = vld [vmem:[%s51 + $0xe4] sm:$0xf]
      %v5930 = vld [vmem:[%s51 + $0xe8] sm:$0xf]
      %v5931 = vld [vmem:[%s51 + $0xec] sm:$0xf]
      %v5932 = vld [vmem:[%s51 + $0xf0] sm:$0xf]
      %v5933 = vld [vmem:[%s51 + $0xf4] sm:$0xf]
      %v5934 = vld [vmem:[%s51 + $0xf8] sm:$0xf]
      %v5935 = vld [vmem:[%s51 + $0xfc] sm:$0xf]
      %v5936 = vld [vmem:[%s51 + $0x100] sm:$0xf]
      %v5937 = vld [vmem:[%s51 + $0x104] sm:$0xf]
      %v5938 = vld [vmem:[%s51 + $0x108] sm:$0xf]
      %v5939 = vld [vmem:[%s51 + $0x10c] sm:$0xf]
      %v5940 = vld [vmem:[%s51 + $0x110] sm:$0xf]
      %v5941 = vld [vmem:[%s51 + $0x114] sm:$0xf]
      %v5942 = vld [vmem:[%s51 + $0x118] sm:$0xf]
      %v5943 = vld [vmem:[%s51 + $0x11c] sm:$0xf]
      %v6016 = vunpack.c.l.b16 %v5872
      %v6017 = vunpack.c.l.b16 %v5873
      %v6018 = vunpack.c.l.b16 %v5874
      %v6019 = vunpack.c.l.b16 %v5875
      %v6020 = vunpack.c.l.b16 %v5876
      %v6021 = vunpack.c.l.b16 %v5877
      %v6022 = vunpack.c.l.b16 %v5878
      %v6023 = vunpack.c.l.b16 %v5879
      %v6024 = vunpack.c.l.b16 %v5880
      %v6025 = vunpack.c.l.b16 %v5881
      %v6026 = vunpack.c.l.b16 %v5882
      %v6027 = vunpack.c.l.b16 %v5883
      %v6028 = vunpack.c.l.b16 %v5884
      %v6029 = vunpack.c.l.b16 %v5885
      %v6030 = vunpack.c.l.b16 %v5886
      %v6031 = vunpack.c.l.b16 %v5887
      %v6032 = vunpack.c.l.b16 %v5888
      %v6033 = vunpack.c.l.b16 %v5889
      %v6034 = vunpack.c.l.b16 %v5890
      %v6035 = vunpack.c.l.b16 %v5891
      %v6036 = vunpack.c.l.b16 %v5892
      %v6037 = vunpack.c.l.b16 %v5893
      %v6038 = vunpack.c.l.b16 %v5894
      %v6039 = vunpack.c.l.b16 %v5895
      %v6040 = vunpack.c.l.b16 %v5896
      %v6041 = vunpack.c.l.b16 %v5897
      %v6042 = vunpack.c.l.b16 %v5898
      %v6043 = vunpack.c.l.b16 %v5899
      %v6044 = vunpack.c.l.b16 %v5900
      %v6045 = vunpack.c.l.b16 %v5901
      %v6046 = vunpack.c.l.b16 %v5902
      %v6047 = vunpack.c.l.b16 %v5903
      %v6048 = vunpack.c.l.b16 %v5904
      %v6049 = vunpack.c.l.b16 %v5905
      %v6050 = vunpack.c.l.b16 %v5906
      %v6051 = vunpack.c.l.b16 %v5907
      %v6052 = vunpack.c.l.b16 %v5908
      %v6053 = vunpack.c.l.b16 %v5909
      %v6054 = vunpack.c.l.b16 %v5910
      %v6055 = vunpack.c.l.b16 %v5911
      %v6056 = vunpack.c.l.b16 %v5912
      %v6057 = vunpack.c.l.b16 %v5913
      %v6058 = vunpack.c.l.b16 %v5914
      %v6059 = vunpack.c.l.b16 %v5915
      %v6060 = vunpack.c.l.b16 %v5916
      %v6061 = vunpack.c.l.b16 %v5917
      %v6062 = vunpack.c.l.b16 %v5918
      %v6063 = vunpack.c.l.b16 %v5919
      %v6064 = vunpack.c.l.b16 %v5920
      %v6065 = vunpack.c.l.b16 %v5921
      %v6066 = vunpack.c.l.b16 %v5922
      %v6067 = vunpack.c.l.b16 %v5923
      %v6068 = vunpack.c.l.b16 %v5924
      %v6069 = vunpack.c.l.b16 %v5925
      %v6070 = vunpack.c.l.b16 %v5926
      %v6071 = vunpack.c.l.b16 %v5927
      %v6072 = vunpack.c.l.b16 %v5928
      %v6073 = vunpack.c.l.b16 %v5929
      %v6074 = vunpack.c.l.b16 %v5930
      %v6075 = vunpack.c.l.b16 %v5931
      %v6076 = vunpack.c.l.b16 %v5932
      %v6077 = vunpack.c.l.b16 %v5933
      %v6078 = vunpack.c.l.b16 %v5934
      %v6079 = vunpack.c.l.b16 %v5935
      %v6080 = vunpack.c.l.b16 %v5936
      %v6081 = vunpack.c.l.b16 %v5937
      %v6082 = vunpack.c.l.b16 %v5938
      %v6083 = vunpack.c.l.b16 %v5939
      %v6084 = vunpack.c.l.b16 %v5940
      %v6085 = vunpack.c.l.b16 %v5941
      %v6086 = vunpack.c.l.b16 %v5942
      %v6087 = vunpack.c.l.b16 %v5943
      %v6088 = vpack.c.b16 %v6017, %v6016
      %v6089 = vpack.c.b16 %v6019, %v6018
      %v6090 = vpack.c.b16 %v6021, %v6020
      %v6091 = vpack.c.b16 %v6023, %v6022
      %v6092 = vpack.c.b16 %v6025, %v6024
      %v6093 = vpack.c.b16 %v6027, %v6026
      %v6094 = vpack.c.b16 %v6029, %v6028
      %v6095 = vpack.c.b16 %v6031, %v6030
      %v6096 = vpack.c.b16 %v6033, %v6032
      %v6097 = vpack.c.b16 %v6035, %v6034
      %v6098 = vpack.c.b16 %v6037, %v6036
      %v6099 = vpack.c.b16 %v6039, %v6038
      %v6100 = vpack.c.b16 %v6041, %v6040
      %v6101 = vpack.c.b16 %v6043, %v6042
      %v6102 = vpack.c.b16 %v6045, %v6044
      %v6103 = vpack.c.b16 %v6047, %v6046
      %v6104 = vpack.c.b16 %v6049, %v6048
      %v6105 = vpack.c.b16 %v6051, %v6050
      %v6106 = vpack.c.b16 %v6053, %v6052
      %v6107 = vpack.c.b16 %v6055, %v6054
      %v6108 = vpack.c.b16 %v6057, %v6056
      %v6109 = vpack.c.b16 %v6059, %v6058
      %v6110 = vpack.c.b16 %v6061, %v6060
      %v6111 = vpack.c.b16 %v6063, %v6062
      %v6112 = vpack.c.b16 %v6065, %v6064
      %v6113 = vpack.c.b16 %v6067, %v6066
      %v6114 = vpack.c.b16 %v6069, %v6068
      %v6115 = vpack.c.b16 %v6071, %v6070
      %v6116 = vpack.c.b16 %v6073, %v6072
      %v6117 = vpack.c.b16 %v6075, %v6074
      %v6118 = vpack.c.b16 %v6077, %v6076
      %v6119 = vpack.c.b16 %v6079, %v6078
      %v6120 = vpack.c.b16 %v6081, %v6080
      %v6121 = vpack.c.b16 %v6083, %v6082
      %v6122 = vpack.c.b16 %v6085, %v6084
      %v6123 = vpack.c.b16 %v6087, %v6086
      %v6161 = vsel %vm2637, %v5787, 0
      %v6164 = vsel %vm2637, %v5789, 0
      %v6167 = vsel %vm2637, %v5791, 0
      %v6170 = vsel %vm2637, %v5793, 0
      %v6173 = vsel %vm2637, %v5795, 0
      %6175 = vmatprep.subr.bf16.mxu0 0
      %6176 = vmatpush1.bf16.msra.mxu0 %v6088
      %6177 = vmatprep.subr.bf16.mxu0 0
      %6178 = vmatpush1.bf16.msra.mxu0 %v6089
      %6179 = vmatprep.subr.bf16.mxu0 0
      %6180 = vmatpush1.bf16.msra.mxu0 %v6090
      %6181 = vmatprep.subr.bf16.mxu0 0
      %6182 = vmatpush1.bf16.msra.mxu0 %v6091
      %6183 = vmatprep.subr.bf16.mxu0 0
      %6184 = vmatpush1.bf16.msra.mxu0 %v6092
      %6185 = vmatprep.subr.bf16.mxu0 0
      %6186 = vmatpush1.bf16.msra.mxu0 %v6093
      %6187 = vmatprep.subr.bf16.mxu0 0
      %6188 = vmatpush1.bf16.msra.mxu0 %v6094
      %6189 = vmatprep.subr.bf16.mxu0 0
      %6190 = vmatpush1.bf16.msra.mxu0 %v6095
      %6191 = vmatprep.subr.bf16.mxu0 0
      %6192 = vmatpush1.bf16.msra.mxu0 %v6096
      %6193 = vmatprep.subr.bf16.mxu0 0
      %6194 = vmatpush1.bf16.msra.mxu0 %v6097
      %6195 = vmatprep.subr.bf16.mxu0 0
      %6196 = vmatpush1.bf16.msra.mxu0 %v6098
      %6197 = vmatprep.subr.bf16.mxu0 0
      %6198 = vmatpush1.bf16.msra.mxu0 %v6099
      %6199 = vmatprep.subr.bf16.mxu0 0
      %6200 = vmatpush1.bf16.msra.mxu0 %v6100
      %6201 = vmatprep.subr.bf16.mxu0 0
      %6202 = vmatpush1.bf16.msra.mxu0 %v6101
      %6203 = vmatprep.subr.bf16.mxu0 0
      %6204 = vmatpush1.bf16.msra.mxu0 %v6102
      %6205 = vmatprep.subr.bf16.mxu0 0
      %6206 = vmatpush1.bf16.msra.mxu0 %v6103
      %6207 = vmatprep.mubr.bf16.mxu0 %v5814
      %6208 = vmatmul.mubr.bf16.gmra.mrb[0].mxu0 %v5797
      %v6209 = vpop.f32.mrb[0].mxu0
      %v6210 = vadd.f32 0.0, %v6209
      %v6211 = vpop.f32.mrb[0].mxu0
      %v6212 = vpop.f32.mrb[0].mxu0
      %v6213 = vadd.f32 0.0, %v6212
      %v6214 = vpop.f32.mrb[0].mxu0
      %6215 = vmatprep.mubr.bf16.mxu0 %v5818
      %6216 = vmatmul.mubr.bf16.gmra.mrb[0].mxu0 %v5800
      %v6217 = vpop.f32.mrb[0].mxu0
      %v6218 = vadd.f32 0.0, %v6217
      %v6219 = vpop.f32.mrb[0].mxu0
      %v6220 = vpop.f32.mrb[0].mxu0
      %v6221 = vadd.f32 0.0, %v6220
      %v6222 = vpop.f32.mrb[0].mxu0
      %6223 = vmatprep.mubr.bf16.mxu0 %v5822
      %6224 = vmatmul.mubr.bf16.gmra.mrb[0].mxu0 %v5803
      %v6225 = vpop.f32.mrb[0].mxu0
      %v6226 = vadd.f32 0.0, %v6225
      %v6227 = vpop.f32.mrb[0].mxu0
      %v6228 = vpop.f32.mrb[0].mxu0
      %v6229 = vadd.f32 0.0, %v6228
      %v6230 = vpop.f32.mrb[0].mxu0
      %6231 = vmatprep.mubr.bf16.mxu0 %v5826
      %6232 = vmatmul.mubr.bf16.gmra.mrb[0].mxu0 %v5806
      %v6233 = vpop.f32.mrb[0].mxu0
      %v6234 = vadd.f32 0.0, %v6233
      %v6235 = vpop.f32.mrb[0].mxu0
      %v6236 = vpop.f32.mrb[0].mxu0
      %v6237 = vadd.f32 0.0, %v6236
      %v6238 = vpop.f32.mrb[0].mxu0
      %6239 = vmatprep.mubr.bf16.mxu0 %v5830
      %6240 = vmatmul.mubr.bf16.gmra.mrb[0].mxu0 %v5810
      %v6241 = vpop.f32.mrb[0].mxu0
      %v6242 = vadd.f32 0.0, %v6241
      %v6243 = vpop.f32.mrb[0].mxu0
      %v6244 = vpop.f32.mrb[0].mxu0
      %v6245 = vadd.f32 0.0, %v6244
      %v6246 = vpop.f32.mrb[0].mxu0
      %6247 = vdwg.mxu0
      %6248 = vmatprep.subr.bf16.mxu0 0
      %6249 = vmatpush1.bf16.msra.mxu0 %v6104
      %6250 = vmatprep.subr.bf16.mxu0 0
      %6251 = vmatpush1.bf16.msra.mxu0 %v6105
      %6252 = vmatprep.subr.bf16.mxu0 0
      %6253 = vmatpush1.bf16.msra.mxu0 %v6106
      %6254 = vmatprep.subr.bf16.mxu0 0
      %6255 = vmatpush1.bf16.msra.mxu0 %v6107
      %6256 = vmatprep.subr.bf16.mxu0 0
      %6257 = vmatpush1.bf16.msra.mxu0 %v6108
      %6258 = vmatprep.subr.bf16.mxu0 0
      %6259 = vmatpush1.bf16.msra.mxu0 %v6109
      %6260 = vmatprep.subr.bf16.mxu0 0
      %6261 = vmatpush1.bf16.msra.mxu0 %v6110
      %6262 = vmatprep.subr.bf16.mxu0 0
      %6263 = vmatpush1.bf16.msra.mxu0 %v6111
      %6264 = vmatprep.subr.bf16.mxu0 0
      %6265 = vmatpush1.bf16.msra.mxu0 %v6112
      %6266 = vmatprep.subr.bf16.mxu0 0
      %6267 = vmatpush1.bf16.msra.mxu0 %v6113
      %6268 = vmatprep.subr.bf16.mxu0 0
      %6269 = vmatpush1.bf16.msra.mxu0 %v6114
      %6270 = vmatprep.subr.bf16.mxu0 0
      %6271 = vmatpush1.bf16.msra.mxu0 %v6115
      %6272 = vmatprep.subr.bf16.mxu0 0
      %6273 = vmatpush1.bf16.msra.mxu0 %v6116
      %6274 = vmatprep.subr.bf16.mxu0 0
      %6275 = vmatpush1.bf16.msra.mxu0 %v6117
      %6276 = vmatprep.subr.bf16.mxu0 0
      %6277 = vmatpush1.bf16.msra.mxu0 %v6118
      %6278 = vmatprep.subr.bf16.mxu0 0
      %6279 = vmatpush1.bf16.msra.mxu0 %v6119
      %6280 = vmatprep.mubr.bf16.mxu0 %v5854
      %6281 = vmatmul.mubr.bf16.gmra.mrb[0].mxu0 %v5834
      %v6282 = vpop.f32.mrb[0].mxu0
      %v6283 = vadd.f32 %v6210, %v6282
      %v6284 = vpop.f32.mrb[0].mxu0
      %v6285 = vpop.f32.mrb[0].mxu0
      %v6286 = vadd.f32 %v6213, %v6285
      %v6287 = vpop.f32.mrb[0].mxu0
      %6288 = vmatprep.mubr.bf16.mxu0 %v5858
      %6289 = vmatmul.mubr.bf16.gmra.mrb[0].mxu0 %v5838
      %v6290 = vpop.f32.mrb[0].mxu0
      %v6291 = vadd.f32 %v6218, %v6290
      %v6292 = vpop.f32.mrb[0].mxu0
      %v6293 = vpop.f32.mrb[0].mxu0
      %v6294 = vadd.f32 %v6221, %v6293
      %v6295 = vpop.f32.mrb[0].mxu0
      %6296 = vmatprep.mubr.bf16.mxu0 %v5862
      %6297 = vmatmul.mubr.bf16.gmra.mrb[0].mxu0 %v5842
      %v6298 = vpop.f32.mrb[0].mxu0
      %v6299 = vadd.f32 %v6226, %v6298
      %v6300 = vpop.f32.mrb[0].mxu0
      %v6301 = vpop.f32.mrb[0].mxu0
      %v6302 = vadd.f32 %v6229, %v6301
      %v6303 = vpop.f32.mrb[0].mxu0
      %6304 = vmatprep.mubr.bf16.mxu0 %v5866
      %6305 = vmatmul.mubr.bf16.gmra.mrb[0].mxu0 %v5846
      %v6306 = vpop.f32.mrb[0].mxu0
      %v6307 = vadd.f32 %v6234, %v6306
      %v6308 = vpop.f32.mrb[0].mxu0
      %v6309 = vpop.f32.mrb[0].mxu0
      %v6310 = vadd.f32 %v6237, %v6309
      %v6311 = vpop.f32.mrb[0].mxu0
      %6312 = vmatprep.mubr.bf16.mxu0 %v5870
      %6313 = vmatmul.mubr.bf16.gmra.mrb[0].mxu0 %v5850
      %v6314 = vpop.f32.mrb[0].mxu0
      %v6315 = vadd.f32 %v6242, %v6314
      %v6316 = vpop.f32.mrb[0].mxu0
      %v6317 = vpop.f32.mrb[0].mxu0
      %v6318 = vadd.f32 %v6245, %v6317
      %v6319 = vpop.f32.mrb[0].mxu0
      %6320 = vdwg.mxu0
      %6321 = vmatprep.subr.bf16.mxu0 0
      %6322 = vmatpush1.bf16.msra.mxu0 %v6120
      %6323 = vmatprep.subr.bf16.mxu0 0
      %6324 = vmatpush1.bf16.msra.mxu0 %v6121
      %6325 = vmatprep.subr.bf16.mxu0 0
      %6326 = vmatpush1.bf16.msra.mxu0 %v6122
      %6327 = vmatprep.subr.bf16.mxu0 0
      %6328 = vmatpush1.bf16.msra.mxu0 %v6123
      %6329 = vmatprep.subr.bf16.mxu0 0
      %6330 = vmatpush1.bf16.msra.mxu0 0
      %6331 = vmatprep.subr.bf16.mxu0 0
      %6332 = vmatpush1.bf16.msra.mxu0 0
      %6333 = vmatprep.subr.bf16.mxu0 0
      %6334 = vmatpush1.bf16.msra.mxu0 0
      %6335 = vmatprep.subr.bf16.mxu0 0
      %6336 = vmatpush1.bf16.msra.mxu0 0
      %6337 = vmatprep.subr.bf16.mxu0 0
      %6338 = vmatpush1.bf16.msra.mxu0 0
      %6339 = vmatprep.subr.bf16.mxu0 0
      %6340 = vmatpush1.bf16.msra.mxu0 0
      %6341 = vmatprep.subr.bf16.mxu0 0
      %6342 = vmatpush1.bf16.msra.mxu0 0
      %6343 = vmatprep.subr.bf16.mxu0 0
      %6344 = vmatpush1.bf16.msra.mxu0 0
      %6345 = vmatprep.subr.bf16.mxu0 0
      %6346 = vmatpush1.bf16.msra.mxu0 0
      %6347 = vmatprep.subr.bf16.mxu0 0
      %6348 = vmatpush1.bf16.msra.mxu0 0
      %6349 = vmatprep.subr.bf16.mxu0 0
      %6350 = vmatpush1.bf16.msra.mxu0 0
      %6351 = vmatprep.subr.bf16.mxu0 0
      %6352 = vmatpush1.bf16.msra.mxu0 0
      %6353 = vmatprep.mubr.bf16.mxu0 0
      %6354 = vmatmul.mubr.bf16.gmra.mrb[0].mxu0 %v6161
      %v6355 = vpop.f32.mrb[0].mxu0
      %v6356 = vadd.f32 %v6283, %v6355
      %v6357 = vpop.f32.mrb[0].mxu0
      %v6358 = vpop.f32.mrb[0].mxu0
      %v6359 = vadd.f32 %v6286, %v6358
      %v6360 = vpop.f32.mrb[0].mxu0
      %6361 = vmatprep.mubr.bf16.mxu0 0
      %6362 = vmatmul.mubr.bf16.gmra.mrb[0].mxu0 %v6164
      %v6363 = vpop.f32.mrb[0].mxu0
      %v6364 = vadd.f32 %v6291, %v6363
      %v6365 = vpop.f32.mrb[0].mxu0
      %v6366 = vpop.f32.mrb[0].mxu0
      %v6367 = vadd.f32 %v6294, %v6366
      %v6368 = vpop.f32.mrb[0].mxu0
      %6369 = vmatprep.mubr.bf16.mxu0 0
      %6370 = vmatmul.mubr.bf16.gmra.mrb[0].mxu0 %v6167
      %v6371 = vpop.f32.mrb[0].mxu0
      %v6372 = vadd.f32 %v6299, %v6371
      %v6373 = vpop.f32.mrb[0].mxu0
      %v6374 = vpop.f32.mrb[0].mxu0
      %v6375 = vadd.f32 %v6302, %v6374
      %v6376 = vpop.f32.mrb[0].mxu0
      %6377 = vmatprep.mubr.bf16.mxu0 0
      %6378 = vmatmul.mubr.bf16.gmra.mrb[0].mxu0 %v6170
      %v6379 = vpop.f32.mrb[0].mxu0
      %v6380 = vadd.f32 %v6307, %v6379
      %v6381 = vpop.f32.mrb[0].mxu0
      %v6382 = vpop.f32.mrb[0].mxu0
      %v6383 = vadd.f32 %v6310, %v6382
      %v6384 = vpop.f32.mrb[0].mxu0
      %6385 = vmatprep.mubr.bf16.mxu0 0
      %6386 = vmatmul.mubr.bf16.gmra.mrb[0].mxu0 %v6173
      %v6387 = vpop.f32.mrb[0].mxu0
      %v6388 = vadd.f32 %v6315, %v6387
      %v6389 = vpop.f32.mrb[0].mxu0
      %v6390 = vpop.f32.mrb[0].mxu0
      %v6391 = vadd.f32 %v6318, %v6390
      %v6392 = vpop.f32.mrb[0].mxu0
      %6393 = vdwg.mxu0
      %v6394 = vld [vmem:[%s53] sm:$0x1]
      %v6396 = vlaneseq
      %v6397 = vshrl.u32 %v6396, 7
      %v6398 = vsub.s32 0, %v6397
      %v6399 = vrot.slane %v6394, %v6398
      %v6401 = vmul.f32 %v6356, %v6399
      %v6402 = vmul.f32 %v6359, %v6399
      %v6403 = vmul.f32 %v6364, %v6399
      %v6404 = vmul.f32 %v6367, %v6399
      %v6405 = vmul.f32 %v6372, %v6399
      %v6406 = vmul.f32 %v6375, %v6399
      %v6407 = vmul.f32 %v6380, %v6399
      %v6408 = vmul.f32 %v6383, %v6399
      %v6409 = vmul.f32 %v6388, %v6399
      %v6410 = vmul.f32 %v6391, %v6399
      %v6411 = vld [vmem:[%s55] sm:$0x1]
      %v6413 = vlaneseq
      %v6414 = vshrl.u32 %v6413, 7
      %v6415 = vsub.s32 0, %v6414
      %v6416 = vrot.slane %v6411, %v6415
      %v6418 = vadd.f32 %v6401, %v6416
      %v6419 = vadd.f32 %v6402, %v6416
      %v6420 = vadd.f32 %v6403, %v6416
      %v6421 = vadd.f32 %v6404, %v6416
      %v6422 = vadd.f32 %v6405, %v6416
      %v6423 = vadd.f32 %v6406, %v6416
      %v6424 = vadd.f32 %v6407, %v6416
      %v6425 = vadd.f32 %v6408, %v6416
      %v6426 = vadd.f32 %v6409, %v6416
      %v6427 = vadd.f32 %v6410, %v6416
      %v6428 = vmax.f32 %v6418, 0.0
      %v6429 = vmax.f32 %v6419, 0.0
      %v6430 = vmax.f32 %v6420, 0.0
      %v6431 = vmax.f32 %v6421, 0.0
      %v6432 = vmax.f32 %v6422, 0.0
      %v6433 = vmax.f32 %v6423, 0.0
      %v6434 = vmax.f32 %v6424, 0.0
      %v6435 = vmax.f32 %v6425, 0.0
      %v6436 = vmax.f32 %v6426, 0.0
      %v6437 = vmax.f32 %v6427, 0.0
      %v6438 = vpack.c.bf16 %v6429, %v6428
      %v6439 = vpack.c.bf16 %v6431, %v6430
      %v6440 = vpack.c.bf16 %v6433, %v6432
      %v6441 = vpack.c.bf16 %v6435, %v6434
      %v6442 = vpack.c.bf16 %v6437, %v6436
      %v6443 = vld [vmem:[%s57] sm:$0xf]
      %v6444 = vld [vmem:[%s57 + $0x4] sm:$0xf]
      %v6445 = vld [vmem:[%s57 + $0x8] sm:$0xf]
      %v6446 = vld [vmem:[%s57 + $0xc] sm:$0xf]
      %v6447 = vld [vmem:[%s57 + $0x10] sm:$0xf]
      %v6448 = vld [vmem:[%s57 + $0x14] sm:$0xf]
      %v6449 = vld [vmem:[%s57 + $0x18] sm:$0xf]
      %v6450 = vld [vmem:[%s57 + $0x1c] sm:$0xf]
      %v6451 = vld [vmem:[%s59] sm:$0x1]
      %v6453 = vlaneseq
      %v6454 = vshrl.u32 %v6453, 7
      %v6455 = vsub.s32 0, %v6454
      %v6456 = vrot.slane %v6451, %v6455
      %v6466 = vunpack.c.l.b16 %v6443
      %v6467 = vunpack.c.l.b16 %v6444
      %v6468 = vunpack.c.l.b16 %v6445
      %v6469 = vunpack.c.l.b16 %v6446
      %v6470 = vunpack.c.l.b16 %v6447
      %v6471 = vunpack.c.l.b16 %v6448
      %v6472 = vunpack.c.l.b16 %v6449
      %v6473 = vunpack.c.l.b16 %v6450
      %v6474 = vpack.c.b16 %v6467, %v6466
      %v6475 = vpack.c.b16 %v6469, %v6468
      %v6476 = vpack.c.b16 %v6471, %v6470
      %v6477 = vpack.c.b16 %v6473, %v6472
      %v6483 = vsel %vm2637, %v6438, 0
      %v6486 = vsel %vm2637, %v6439, 0
      %v6489 = vsel %vm2637, %v6440, 0
      %v6492 = vsel %vm2637, %v6441, 0
      %v6495 = vsel %vm2637, %v6442, 0
      %6497 = vmatprep.subr.bf16.mxu0 0
      %6498 = vmatpush1.bf16.msra.mxu0 %v6474
      %6499 = vmatprep.subr.bf16.mxu0 0
      %6500 = vmatpush1.bf16.msra.mxu0 %v6475
      %6501 = vmatprep.subr.bf16.mxu0 0
      %6502 = vmatpush1.bf16.msra.mxu0 %v6476
      %6503 = vmatprep.subr.bf16.mxu0 0
      %6504 = vmatpush1.bf16.msra.mxu0 %v6477
      %6505 = vmatprep.subr.bf16.mxu0 0
      %6506 = vmatpush1.bf16.msra.mxu0 0
      %6507 = vmatprep.subr.bf16.mxu0 0
      %6508 = vmatpush1.bf16.msra.mxu0 0
      %6509 = vmatprep.subr.bf16.mxu0 0
      %6510 = vmatpush1.bf16.msra.mxu0 0
      %6511 = vmatprep.subr.bf16.mxu0 0
      %6512 = vmatpush1.bf16.msra.mxu0 0
      %6513 = vmatprep.subr.bf16.mxu0 0
      %6514 = vmatpush1.bf16.msra.mxu0 0
      %6515 = vmatprep.subr.bf16.mxu0 0
      %6516 = vmatpush1.bf16.msra.mxu0 0
      %6517 = vmatprep.subr.bf16.mxu0 0
      %6518 = vmatpush1.bf16.msra.mxu0 0
      %6519 = vmatprep.subr.bf16.mxu0 0
      %6520 = vmatpush1.bf16.msra.mxu0 0
      %6521 = vmatprep.subr.bf16.mxu0 0
      %6522 = vmatpush1.bf16.msra.mxu0 0
      %6523 = vmatprep.subr.bf16.mxu0 0
      %6524 = vmatpush1.bf16.msra.mxu0 0
      %6525 = vmatprep.subr.bf16.mxu0 0
      %6526 = vmatpush1.bf16.msra.mxu0 0
      %6527 = vmatprep.subr.bf16.mxu0 0
      %6528 = vmatpush1.bf16.msra.mxu0 0
      %6529 = vmatprep.mubr.bf16.mxu0 0
      %6530 = vmatmul.mubr.bf16.gmra.mrb[0].mxu0 %v6483
      %v6531 = vpop.f32.mrb[0].mxu0
      %v6532 = vadd.f32 %v6456, %v6531
      %v6533 = vpop.f32.mrb[0].mxu0
      %v6534 = vpop.f32.mrb[0].mxu0
      %v6535 = vadd.f32 %v6456, %v6534
      %v6536 = vpop.f32.mrb[0].mxu0
      %6537 = vmatprep.mubr.bf16.mxu0 0
      %6538 = vmatmul.mubr.bf16.gmra.mrb[0].mxu0 %v6486
      %v6539 = vpop.f32.mrb[0].mxu0
      %v6540 = vadd.f32 %v6456, %v6539
      %v6541 = vpop.f32.mrb[0].mxu0
      %v6542 = vpop.f32.mrb[0].mxu0
      %v6543 = vadd.f32 %v6456, %v6542
      %v6544 = vpop.f32.mrb[0].mxu0
      %6545 = vmatprep.mubr.bf16.mxu0 0
      %6546 = vmatmul.mubr.bf16.gmra.mrb[0].mxu0 %v6489
      %v6547 = vpop.f32.mrb[0].mxu0
      %v6548 = vadd.f32 %v6456, %v6547
      %v6549 = vpop.f32.mrb[0].mxu0
      %v6550 = vpop.f32.mrb[0].mxu0
      %v6551 = vadd.f32 %v6456, %v6550
      %v6552 = vpop.f32.mrb[0].mxu0
      %6553 = vmatprep.mubr.bf16.mxu0 0
      %6554 = vmatmul.mubr.bf16.gmra.mrb[0].mxu0 %v6492
      %v6555 = vpop.f32.mrb[0].mxu0
      %v6556 = vadd.f32 %v6456, %v6555
      %v6557 = vpop.f32.mrb[0].mxu0
      %v6558 = vpop.f32.mrb[0].mxu0
      %v6559 = vadd.f32 %v6456, %v6558
      %v6560 = vpop.f32.mrb[0].mxu0
      %6561 = vmatprep.mubr.bf16.mxu0 0
      %6562 = vmatmul.mubr.bf16.gmra.mrb[0].mxu0 %v6495
      %v6563 = vpop.f32.mrb[0].mxu0
      %v6564 = vadd.f32 %v6456, %v6563
      %v6565 = vpop.f32.mrb[0].mxu0
      %v6566 = vpop.f32.mrb[0].mxu0
      %v6567 = vadd.f32 %v6456, %v6566
      %v6568 = vpop.f32.mrb[0].mxu0
      %6569 = vdwg.mxu0
      %6570 = vst [vmem:[%s986] sm:$0xff] %v6532
      %6571 = vst [vmem:[%s986 + $0x6] sm:$0xfc] %v6535
      %6572 = vst [vmem:[%s986 + $0xe] sm:$0x3] %v6540
      %6573 = vst [vmem:[%s986 + $0xc] sm:$0xf0] %v6540
      %6574 = vst [vmem:[%s986 + $0x14] sm:$0xf] %v6543
      %6575 = vst [vmem:[%s986 + $0x12] sm:$0xc0] %v6543
      %6576 = vst [vmem:[%s986 + $0x1a] sm:$0x3f] %v6548
      %6577 = vst [vmem:[%s986 + $0x20] sm:$0xff] %v6551
      %6578 = vst [vmem:[%s986 + $0x26] sm:$0xfc] %v6556
      %6579 = vst [vmem:[%s986 + $0x2e] sm:$0x3] %v6559
      %6580 = vst [vmem:[%s986 + $0x2c] sm:$0xf0] %v6559
      %6581 = vst [vmem:[%s986 + $0x34] sm:$0xf] %v6564
      %6582 = vst [vmem:[%s986 + $0x32] sm:$0xc0] %v6564
      %6583 = vst [vmem:[%s986 + $0x3a] sm:$0x3f] %v6567
      %p6584 = scmp.lt.s32.totalorder %s76, 1
      %s6585 = scalar_select %p6584, %s76, 1
      %s6586 = smul.addr %s6585, 8
      %s6587 = smul.addr %s6586, 8
      %s6588 = scalar_lea.vmem %s65, %s6587
      // Predicated region
      $region149: #{forward.1} parent=147 // pred_check
        %p6589 = pneg %p771
      $region150: #{forward.1} parent=147 // pred_check_branch
        %6591 = sbr.rel (%p6589) target = $region152
      $region151: #{forward.1} parent=147 // pred_region
        _
      $region152: #{forward.1} parent=147 // pred_fallthru
        _
    $region148: #{forward.1} parent=5 // pred_fallthru
      _
    %p6592 = scmp.le.s32.totalorder 2, %s71
    // Predicated region
    $region153: #{forward.1} parent=5 // pred_check
      %p6593 = pneg %p6592
    $region154: #{forward.1} parent=5 // pred_check_branch
      %6595 = sbr.rel (%p6593) target = $region156
    $region155: #{forward.1} parent=5 // pred_region
      %s6596 = ssub.s32 %s71, 2
      // Predicated region
      $region157: #{forward.1} parent=155 // pred_check
        %p6597 = pneg %p777
      $region158: #{forward.1} parent=155 // pred_check_branch
        %6599 = sbr.rel (%p6597) target = $region160
      $region159: #{forward.1} parent=155 // pred_region
        %p6600 = scmp.lt.s32.totalorder %s77, 1
        %s6601 = scalar_select %p6600, %s77, 1
        %s6602 = smul.addr %s6601, 8
        %s6603 = smul.addr %s6602, 8
        %s6604 = scalar_lea.vmem %s65, %s6603
      $region160: #{forward.1} parent=155 // pred_fallthru
        _
    $region156: #{forward.1} parent=5 // pred_fallthru
      _
  $region6: #{forward.1} parent=0 // loop_footer
    %s75 = sadd.s32 1, %s71
  $region7: #{forward.1} parent=0 // loop_footer_branch
    %70 = sbr.rel target = $region3
  $region8: #{forward.1} parent=0 // loop_exit
    _

</llo_original>
